<compile_context>
chip_gen: v6e
topology: v6e:2x2x1
jax: 0.10.0
libtpu: 0.0.40
codegen_flags: <defaults>
</compile_context>

<pallas_src>
import functools
import math

import jax
import jax.numpy as jnp
from jax.experimental import pallas as pl
from jax.experimental.pallas import tpu as pltpu


def _round_up(x, m):
    return (x + m - 1) // m * m


# --------------------------------------------------------------------------
# Pallas kernel 1: linear layer  out = x @ W + b   (bf16 operands, f32 accum)
# --------------------------------------------------------------------------
def _linear_kernel(x_ref, w_ref, b_ref, o_ref):
    x = x_ref[...].astype(jnp.bfloat16)                   # cast in-kernel (no host pass)
    acc = jnp.dot(x, w_ref[...], preferred_element_type=jnp.float32)
    o_ref[...] = (acc + b_ref[...]).astype(o_ref.dtype)


def linear(x, packed, out_dtype=jnp.bfloat16):
    """x: (M, K); packed['w']: (K, NP) bf16 (padded at init); returns (M, NP)."""
    M, K = x.shape
    KW, NP = packed['w'].shape
    assert K == KW, (K, KW)

    # Row tile: full rows when M is not 8-aligned (full-extent blocks are always
    # legal), otherwise aim for >=2 parallel grid steps (v7x megacore), cap 256.
    if M % 8 != 0:
        tm = M
    else:
        tm = min(256, M)
        while M % tm:
            tm -= 8
        if tm == M and M >= 16 and (M // 2) % 8 == 0:
            tm = M // 2
    # 512-wide N tiles feed the 256-wide MXU on v6e/v7x (v5e would cap at 256).
    tn = min(512, NP)
    while NP % tn:
        tn -= 128

    grid = (M // tm, NP // tn)
    return pl.pallas_call(
        _linear_kernel,
        out_shape=jax.ShapeDtypeStruct((M, NP), out_dtype),
        grid=grid,
        in_specs=[
            # Full-K block: no activation padding and no K loop needed at these
            # sizes (for very large E a K grid axis + f32 scratch would be added).
            pl.BlockSpec((tm, K), lambda i, j: (i, 0)),
            pl.BlockSpec((K, tn), lambda i, j: (0, j)),
            pl.BlockSpec((1, tn), lambda i, j: (0, j)),
        ],
        out_specs=pl.BlockSpec((tm, tn), lambda i, j: (i, j)),
        compiler_params=pltpu.CompilerParams(
            dimension_semantics=("parallel", "parallel")),
    )(x, packed['w'], packed['b'])


# --------------------------------------------------------------------------
# Pallas kernel 2: multi-head attention core
#   q/k/v blocks: (tile, N, NP) bf16, NP = 128-padded embedding dim.
#   Heads are selected with 0/1 lane masks -> full-width, lane-dense matmuls.
# --------------------------------------------------------------------------
def _attn_kernel(mask_ref, q_ref, k_ref, v_ref, o_ref, *, num_heads, batch):
    for n in range(batch):
        q_n = q_ref[:, n, :]                              # (TL, NP) bf16 (q pre-scaled)
        k_n = k_ref[:, n, :]                              # (S,  NP) bf16
        v_n = v_ref[:, n, :]                              # (S,  NP) bf16
        out_n = jnp.zeros(q_n.shape, jnp.float32)
        for h in range(num_heads):
            m_h = mask_ref[h:h + 1, :]                    # (1, NP) 0/1 bf16
            # Masked full-width contraction == per-head q_h @ k_h^T (exact),
            # but with 128-lane MXU-native operands instead of Dh-wide slices.
            s = jax.lax.dot_general(q_n * m_h, k_n, (((1,), (1,)), ((), ())),
                                    preferred_element_type=jnp.float32)   # (TL, S)
            mx = jnp.max(s, axis=-1, keepdims=True)
            p = jnp.exp(s - mx)
            denom = jnp.sum(p, axis=-1, keepdims=True)
            p = (p * pl.reciprocal(denom, approx=True)).astype(jnp.bfloat16)
            # Only head-h columns of the masked v are nonzero -> this writes the
            # head-h slice of the concatenated output; accumulate over heads.
            out_n = out_n + jnp.dot(p, v_n * m_h,
                                    preferred_element_type=jnp.float32)  # (TL, NP)
        o_ref[:, n, :] = out_n.astype(o_ref.dtype)


def attention_core(q, k, v, *, num_heads, head_dim):
    """q: (L, N, NP) bf16; k, v: (S, N, NP) bf16; returns (L, N, NP) bf16."""
    L, N, NP = q.shape
    S = k.shape[0]

    # Query-row tiling: >=2 parallel grid steps when L allows (v7x megacore).
    # k/v blocks are grid-invariant, so they are DMA'd once and reused.
    tl = L // 2 if (L % 2 == 0 and L >= 2) else L
    if tl > 128 and L % 128 == 0:
        tl = 128
    grid = (L // tl,)

    # 0/1 head-selection masks over the (padded) embedding columns; padded
    # columns (>= num_heads*head_dim) are never selected.
    cols = jnp.arange(NP)
    mask = (cols[None, :] // head_dim == jnp.arange(num_heads)[:, None]) & \
           (cols[None, :] < num_heads * head_dim)
    mask = mask.astype(jnp.bfloat16)

    kernel = functools.partial(_attn_kernel, num_heads=num_heads, batch=N)
    return pl.pallas_call(
        kernel,
        out_shape=jax.ShapeDtypeStruct((L, N, NP), jnp.bfloat16),
        grid=grid,
        in_specs=[
            pl.BlockSpec((num_heads, NP), lambda i: (0, 0)),
            pl.BlockSpec((tl, N, NP), lambda i: (i, 0, 0)),
            pl.BlockSpec((S, N, NP), lambda i: (0, 0, 0)),
            pl.BlockSpec((S, N, NP), lambda i: (0, 0, 0)),
        ],
        out_specs=pl.BlockSpec((tl, N, NP), lambda i: (i, 0, 0)),
        compiler_params=pltpu.CompilerParams(
            dimension_semantics=("parallel",)),
    )(mask, q, k, v)


# --------------------------------------------------------------------------
# CrossAttention forward (no host transposes, no per-call activation padding)
# --------------------------------------------------------------------------
def cross_attention_forward(params, query, key, value, *, num_heads):
    L, N, E = query.shape
    S = key.shape[0]
    head_dim = E // num_heads

    # Input projections: bf16 outputs (feed the attention core directly).
    # NOTE: key and value are distinct tensors in cross-attention, so K/V cannot
    # share one activation matmul in general (fusable only when key is value).
    q = linear(query.reshape(L * N, E), params['q_proj'])   # (L*N, NP), q pre-scaled
    k = linear(key.reshape(S * N, E), params['k_proj'])     # (S*N, NP)
    v = linear(value.reshape(S * N, E), params['v_proj'])   # (S*N, NP)

    NP = q.shape[1]
    # Head split is pure (free) reshape: row order stays (t, n); the head
    # structure lives in the lane dimension and is selected in-kernel by masks.
    qh = q.reshape(L, N, NP)
    kh = k.reshape(S, N, NP)
    vh = v.reshape(S, N, NP)

    # TODO(synk): nn.MultiheadAttention dropout(p=0.1) on the attention weights
    # is a training-mode op; eval/inference semantics (no dropout) implemented.
    o = attention_core(qh, kh, vh, num_heads=num_heads, head_dim=head_dim)

    # Output projection consumes the NP-wide (zero-padded) activation directly;
    # padded rows of Wo are zero, so no intermediate slicing is required.
    out = linear(o.reshape(L * N, NP), params['out_proj'], out_dtype=jnp.float32)
    return out[:, :E].reshape(L, N, E)        # single slice of the final output


# --------------------------------------------------------------------------
# Parameters: padded + bf16-cast ONCE at init (hoisted out of the forward pass)
# --------------------------------------------------------------------------
def pack_linear(w, b, *, scale=1.0, in_pad_to=None):
    """PyTorch (out,in) weight -> (in_pad, out_pad) bf16 operand + (1, out_pad) f32 bias.

    `scale` folds the 1/sqrt(head_dim) query scaling into the packed weights so
    the kernels never multiply by it at run time.
    """
    out_dim, in_dim = w.shape
    kp = in_dim if in_pad_to is None else in_pad_to
    np_ = _round_up(out_dim, 128)
    wp = jnp.zeros((kp, np_), jnp.bfloat16)
    wp = wp.at[:in_dim, :out_dim].set((w.T * scale).astype(jnp.bfloat16))
    bp = jnp.zeros((1, np_), jnp.float32).at[0, :out_dim].set(b * scale)
    return dict(w=wp, b=bp)


def init_params(seed, dim, num_heads):
    rng = jax.random.PRNGKey(seed)
    k_in, k_out = jax.random.split(rng)
    # PyTorch MHA defaults: xavier_uniform for in_proj, zero in_proj bias,
    # uniform(-1/sqrt(dim), 1/sqrt(dim)) for out_proj weight, zero out bias.
    lim = math.sqrt(6.0 / (dim + dim))
    in_proj_w = jax.random.uniform(k_in, (3 * dim, dim), jnp.float32, -lim, lim)
    lim_o = 1.0 / math.sqrt(dim)
    out_w = jax.random.uniform(k_out, (dim, dim), jnp.float32, -lim_o, lim_o)
    out_b = jnp.zeros((dim,), jnp.float32)
    bz = jnp.zeros((dim,), jnp.float32)

    wq, wk, wv = in_proj_w[:dim], in_proj_w[dim:2 * dim], in_proj_w[2 * dim:]
    scale = 1.0 / math.sqrt(dim // num_heads)
    np_ = _round_up(dim, 128)
    return dict(
        q_proj=pack_linear(wq, bz, scale=scale),
        k_proj=pack_linear(wk, bz),
        v_proj=pack_linear(wv, bz),
        out_proj=pack_linear(out_w, out_b, in_pad_to=np_),
        raw=dict(wq=wq, wk=wk, wv=wv, wo=out_w, bo=out_b),
    )


# Pure-JAX f32 reference for a sanity check
def reference_mha(raw, query, key, value, num_heads):
    L, N, E = query.shape
    S = key.shape[0]
    H, Dh = num_heads, E // num_heads
    scale = 1.0 / math.sqrt(Dh)

    def lin(x, w, b=None):
        y = jnp.einsum('...i,oi->...o', x, w)
        return y if b is None else y + b

    q = lin(query, raw['wq']) * scale
    k = lin(key, raw['wk'])
    v = lin(value, raw['wv'])

    def heads(t, T):
        return t.reshape(T, N, H, Dh).transpose(1, 2, 0, 3)   # (N, H, T, Dh)

    qh, kh, vh = heads(q, L), heads(k, S), heads(v, S)
    s = jnp.einsum('nhld,nhsd->nhls', qh, kh)
    p = jax.nn.softmax(s, axis=-1)
    o = jnp.einsum('nhls,nhsd->nhld', p, vh)
    o = o.transpose(2, 0, 1, 3).reshape(L, N, E)
    return lin(o, raw['wo'], raw['bo'])


if __name__ == "__main__":
    dim, num_heads = 64, 8
    L, S, N = 8, 16, 2      # target seq, source seq, batch (batch_first=False)

    rng = jax.random.PRNGKey(0)
    kq, kk, kv = jax.random.split(rng, 3)
    query = jax.random.normal(kq, (L, N, dim), jnp.float32)
    key_in = jax.random.normal(kk, (S, N, dim), jnp.float32)
    value = jax.random.normal(kv, (S, N, dim), jnp.float32)

    params = init_params(0, dim, num_heads)

    fwd = jax.jit(functools.partial(cross_attention_forward, num_heads=num_heads))
    out = fwd(params, query, key_in, value)
    out = jax.block_until_ready(out)

    assert out.shape == (L, N, dim)
    ref = reference_mha(params['raw'], query, key_in, value, num_heads)
    max_err = float(jnp.max(jnp.abs(out - ref)))
    assert jnp.allclose(out, ref, atol=5e-2, rtol=5e-2), f"max_err={max_err}"
    print("KERNEL_OK")
</pallas_src>

<mosaic_0001>
module attributes {stable_mosaic.version = 11 : i64} {
  func.func @_attn_kernel(%arg0: i32, %arg1: memref<8x128xbf16, #tpu.memory_space<vmem>>, %arg2: memref<4x2x128xbf16, #tpu.memory_space<vmem>>, %arg3: memref<16x2x128xbf16, #tpu.memory_space<vmem>>, %arg4: memref<16x2x128xbf16, #tpu.memory_space<vmem>>, %arg5: memref<4x2x128xbf16, #tpu.memory_space<vmem>>) attributes {dimension_semantics = [#tpu.dimension_semantics<parallel>], iteration_bounds = array<i64: 2>, scalar_prefetch = 0 : i64, scratch_operands = 0 : i64, tpu.core_type = #tpu.core_type<tc>, window_params = [{pipeline_mode = #tpu.pipeline_mode<synchronous>, transform_indices = @transform_0, window_bounds = array<i64: 8, 128>}, {transform_indices = @transform_1, window_bounds = array<i64: 4, 2, 128>}, {pipeline_mode = #tpu.pipeline_mode<synchronous>, transform_indices = @transform_2, window_bounds = array<i64: 16, 2, 128>}, {pipeline_mode = #tpu.pipeline_mode<synchronous>, transform_indices = @transform_3, window_bounds = array<i64: 16, 2, 128>}, {transform_indices = @transform_4, window_bounds = array<i64: 4, 2, 128>}]} {
    %c0 = arith.constant 0 : index
    %c0_0 = arith.constant 0 : index
    %c0_1 = arith.constant 0 : index
    %0 = vector.load %arg2[%c0, %c0_0, %c0_1] : memref<4x2x128xbf16, #tpu.memory_space<vmem>>, vector<4x1x128xbf16>
    %1 = vector.shape_cast %0 : vector<4x1x128xbf16> to vector<4x128xbf16>
    %c0_2 = arith.constant 0 : index
    %c0_3 = arith.constant 0 : index
    %c0_4 = arith.constant 0 : index
    %2 = vector.load %arg3[%c0_2, %c0_3, %c0_4] : memref<16x2x128xbf16, #tpu.memory_space<vmem>>, vector<16x1x128xbf16>
    %3 = vector.shape_cast %2 : vector<16x1x128xbf16> to vector<16x128xbf16>
    %c0_5 = arith.constant 0 : index
    %c0_6 = arith.constant 0 : index
    %c0_7 = arith.constant 0 : index
    %4 = vector.load %arg4[%c0_5, %c0_6, %c0_7] : memref<16x2x128xbf16, #tpu.memory_space<vmem>>, vector<16x1x128xbf16>
    %5 = vector.shape_cast %4 : vector<16x1x128xbf16> to vector<16x128xbf16>
    %cst = arith.constant 0.000000e+00 : f32
    %6 = vector.broadcast %cst : f32 to vector<4x128xf32>
    %c0_8 = arith.constant 0 : index
    %c0_9 = arith.constant 0 : index
    %7 = vector.load %arg1[%c0_8, %c0_9] : memref<8x128xbf16, #tpu.memory_space<vmem>>, vector<1x128xbf16>
    %8 = vector.broadcast %7 : vector<1x128xbf16> to vector<4x128xbf16>
    %9 = arith.mulf %1, %8 : vector<4x128xbf16>
    %cst_10 = arith.constant dense<0.000000e+00> : vector<4x16xf32>
    %10 = tpu.matmul %9, %3, %cst_10 {dimension_numbers = #tpu.dot_dimension_numbers<[1], [1], [0], [0], [0, 0, 1, 0], [], []>} : vector<4x128xbf16>, vector<16x128xbf16>, vector<4x16xf32> -> vector<4x16xf32>
    %cst_11 = arith.constant dense<0xFF800000> : vector<4xf32>
    %11 = vector.multi_reduction <maximumf>, %10, %cst_11 [1] : vector<4x16xf32> to vector<4xf32>
    %12 = vector.shape_cast %11 : vector<4xf32> to vector<4x1xf32>
    %13 = vector.broadcast %12 : vector<4x1xf32> to vector<4x16xf32>
    %14 = arith.subf %10, %13 : vector<4x16xf32>
    %15 = math.exp %14 : vector<4x16xf32>
    %cst_12 = arith.constant dense<0.000000e+00> : vector<4xf32>
    %16 = vector.multi_reduction <add>, %15, %cst_12 [1] : vector<4x16xf32> to vector<4xf32>
    %17 = vector.shape_cast %16 : vector<4xf32> to vector<4x1xf32>
    %18 = tpu.reciprocal %17 {approx = true} : vector<4x1xf32> -> vector<4x1xf32>
    %19 = vector.broadcast %18 : vector<4x1xf32> to vector<4x16xf32>
    %20 = arith.mulf %15, %19 : vector<4x16xf32>
    %21 = arith.truncf %20 : vector<4x16xf32> to vector<4x16xbf16>
    %22 = vector.broadcast %7 : vector<1x128xbf16> to vector<16x128xbf16>
    %23 = arith.mulf %5, %22 : vector<16x128xbf16>
    %cst_13 = arith.constant dense<0.000000e+00> : vector<4x128xf32>
    %24 = tpu.matmul %21, %23, %cst_13 {dimension_numbers = #tpu.dot_dimension_numbers<[1], [0], [0], [1], [0, 0, 1, 1], [], []>} : vector<4x16xbf16>, vector<16x128xbf16>, vector<4x128xf32> -> vector<4x128xf32>
    %25 = arith.addf %6, %24 : vector<4x128xf32>
    %c1 = arith.constant 1 : index
    %c0_14 = arith.constant 0 : index
    %26 = vector.load %arg1[%c1, %c0_14] : memref<8x128xbf16, #tpu.memory_space<vmem>>, vector<1x128xbf16>
    %27 = vector.broadcast %26 : vector<1x128xbf16> to vector<4x128xbf16>
    %28 = arith.mulf %1, %27 : vector<4x128xbf16>
    %cst_15 = arith.constant dense<0.000000e+00> : vector<4x16xf32>
    %29 = tpu.matmul %28, %3, %cst_15 {dimension_numbers = #tpu.dot_dimension_numbers<[1], [1], [0], [0], [0, 0, 1, 0], [], []>} : vector<4x128xbf16>, vector<16x128xbf16>, vector<4x16xf32> -> vector<4x16xf32>
    %cst_16 = arith.constant dense<0xFF800000> : vector<4xf32>
    %30 = vector.multi_reduction <maximumf>, %29, %cst_16 [1] : vector<4x16xf32> to vector<4xf32>
    %31 = vector.shape_cast %30 : vector<4xf32> to vector<4x1xf32>
    %32 = vector.broadcast %31 : vector<4x1xf32> to vector<4x16xf32>
    %33 = arith.subf %29, %32 : vector<4x16xf32>
    %34 = math.exp %33 : vector<4x16xf32>
    %cst_17 = arith.constant dense<0.000000e+00> : vector<4xf32>
    %35 = vector.multi_reduction <add>, %34, %cst_17 [1] : vector<4x16xf32> to vector<4xf32>
    %36 = vector.shape_cast %35 : vector<4xf32> to vector<4x1xf32>
    %37 = tpu.reciprocal %36 {approx = true} : vector<4x1xf32> -> vector<4x1xf32>
    %38 = vector.broadcast %37 : vector<4x1xf32> to vector<4x16xf32>
    %39 = arith.mulf %34, %38 : vector<4x16xf32>
    %40 = arith.truncf %39 : vector<4x16xf32> to vector<4x16xbf16>
    %41 = vector.broadcast %26 : vector<1x128xbf16> to vector<16x128xbf16>
    %42 = arith.mulf %5, %41 : vector<16x128xbf16>
    %cst_18 = arith.constant dense<0.000000e+00> : vector<4x128xf32>
    %43 = tpu.matmul %40, %42, %cst_18 {dimension_numbers = #tpu.dot_dimension_numbers<[1], [0], [0], [1], [0, 0, 1, 1], [], []>} : vector<4x16xbf16>, vector<16x128xbf16>, vector<4x128xf32> -> vector<4x128xf32>
    %44 = arith.addf %25, %43 : vector<4x128xf32>
    %c2 = arith.constant 2 : index
    %c0_19 = arith.constant 0 : index
    %45 = vector.load %arg1[%c2, %c0_19] : memref<8x128xbf16, #tpu.memory_space<vmem>>, vector<1x128xbf16>
    %46 = vector.broadcast %45 : vector<1x128xbf16> to vector<4x128xbf16>
    %47 = arith.mulf %1, %46 : vector<4x128xbf16>
    %cst_20 = arith.constant dense<0.000000e+00> : vector<4x16xf32>
    %48 = tpu.matmul %47, %3, %cst_20 {dimension_numbers = #tpu.dot_dimension_numbers<[1], [1], [0], [0], [0, 0, 1, 0], [], []>} : vector<4x128xbf16>, vector<16x128xbf16>, vector<4x16xf32> -> vector<4x16xf32>
    %cst_21 = arith.constant dense<0xFF800000> : vector<4xf32>
    %49 = vector.multi_reduction <maximumf>, %48, %cst_21 [1] : vector<4x16xf32> to vector<4xf32>
    %50 = vector.shape_cast %49 : vector<4xf32> to vector<4x1xf32>
    %51 = vector.broadcast %50 : vector<4x1xf32> to vector<4x16xf32>
    %52 = arith.subf %48, %51 : vector<4x16xf32>
    %53 = math.exp %52 : vector<4x16xf32>
    %cst_22 = arith.constant dense<0.000000e+00> : vector<4xf32>
    %54 = vector.multi_reduction <add>, %53, %cst_22 [1] : vector<4x16xf32> to vector<4xf32>
    %55 = vector.shape_cast %54 : vector<4xf32> to vector<4x1xf32>
    %56 = tpu.reciprocal %55 {approx = true} : vector<4x1xf32> -> vector<4x1xf32>
    %57 = vector.broadcast %56 : vector<4x1xf32> to vector<4x16xf32>
    %58 = arith.mulf %53, %57 : vector<4x16xf32>
    %59 = arith.truncf %58 : vector<4x16xf32> to vector<4x16xbf16>
    %60 = vector.broadcast %45 : vector<1x128xbf16> to vector<16x128xbf16>
    %61 = arith.mulf %5, %60 : vector<16x128xbf16>
    %cst_23 = arith.constant dense<0.000000e+00> : vector<4x128xf32>
    %62 = tpu.matmul %59, %61, %cst_23 {dimension_numbers = #tpu.dot_dimension_numbers<[1], [0], [0], [1], [0, 0, 1, 1], [], []>} : vector<4x16xbf16>, vector<16x128xbf16>, vector<4x128xf32> -> vector<4x128xf32>
    %63 = arith.addf %44, %62 : vector<4x128xf32>
    %c3 = arith.constant 3 : index
    %c0_24 = arith.constant 0 : index
    %64 = vector.load %arg1[%c3, %c0_24] : memref<8x128xbf16, #tpu.memory_space<vmem>>, vector<1x128xbf16>
    %65 = vector.broadcast %64 : vector<1x128xbf16> to vector<4x128xbf16>
    %66 = arith.mulf %1, %65 : vector<4x128xbf16>
    %cst_25 = arith.constant dense<0.000000e+00> : vector<4x16xf32>
    %67 = tpu.matmul %66, %3, %cst_25 {dimension_numbers = #tpu.dot_dimension_numbers<[1], [1], [0], [0], [0, 0, 1, 0], [], []>} : vector<4x128xbf16>, vector<16x128xbf16>, vector<4x16xf32> -> vector<4x16xf32>
    %cst_26 = arith.constant dense<0xFF800000> : vector<4xf32>
    %68 = vector.multi_reduction <maximumf>, %67, %cst_26 [1] : vector<4x16xf32> to vector<4xf32>
    %69 = vector.shape_cast %68 : vector<4xf32> to vector<4x1xf32>
    %70 = vector.broadcast %69 : vector<4x1xf32> to vector<4x16xf32>
    %71 = arith.subf %67, %70 : vector<4x16xf32>
    %72 = math.exp %71 : vector<4x16xf32>
    %cst_27 = arith.constant dense<0.000000e+00> : vector<4xf32>
    %73 = vector.multi_reduction <add>, %72, %cst_27 [1] : vector<4x16xf32> to vector<4xf32>
    %74 = vector.shape_cast %73 : vector<4xf32> to vector<4x1xf32>
    %75 = tpu.reciprocal %74 {approx = true} : vector<4x1xf32> -> vector<4x1xf32>
    %76 = vector.broadcast %75 : vector<4x1xf32> to vector<4x16xf32>
    %77 = arith.mulf %72, %76 : vector<4x16xf32>
    %78 = arith.truncf %77 : vector<4x16xf32> to vector<4x16xbf16>
    %79 = vector.broadcast %64 : vector<1x128xbf16> to vector<16x128xbf16>
    %80 = arith.mulf %5, %79 : vector<16x128xbf16>
    %cst_28 = arith.constant dense<0.000000e+00> : vector<4x128xf32>
    %81 = tpu.matmul %78, %80, %cst_28 {dimension_numbers = #tpu.dot_dimension_numbers<[1], [0], [0], [1], [0, 0, 1, 1], [], []>} : vector<4x16xbf16>, vector<16x128xbf16>, vector<4x128xf32> -> vector<4x128xf32>
    %82 = arith.addf %63, %81 : vector<4x128xf32>
    %c4 = arith.constant 4 : index
    %c0_29 = arith.constant 0 : index
    %83 = vector.load %arg1[%c4, %c0_29] : memref<8x128xbf16, #tpu.memory_space<vmem>>, vector<1x128xbf16>
    %84 = vector.broadcast %83 : vector<1x128xbf16> to vector<4x128xbf16>
    %85 = arith.mulf %1, %84 : vector<4x128xbf16>
    %cst_30 = arith.constant dense<0.000000e+00> : vector<4x16xf32>
    %86 = tpu.matmul %85, %3, %cst_30 {dimension_numbers = #tpu.dot_dimension_numbers<[1], [1], [0], [0], [0, 0, 1, 0], [], []>} : vector<4x128xbf16>, vector<16x128xbf16>, vector<4x16xf32> -> vector<4x16xf32>
    %cst_31 = arith.constant dense<0xFF800000> : vector<4xf32>
    %87 = vector.multi_reduction <maximumf>, %86, %cst_31 [1] : vector<4x16xf32> to vector<4xf32>
    %88 = vector.shape_cast %87 : vector<4xf32> to vector<4x1xf32>
    %89 = vector.broadcast %88 : vector<4x1xf32> to vector<4x16xf32>
    %90 = arith.subf %86, %89 : vector<4x16xf32>
    %91 = math.exp %90 : vector<4x16xf32>
    %cst_32 = arith.constant dense<0.000000e+00> : vector<4xf32>
    %92 = vector.multi_reduction <add>, %91, %cst_32 [1] : vector<4x16xf32> to vector<4xf32>
    %93 = vector.shape_cast %92 : vector<4xf32> to vector<4x1xf32>
    %94 = tpu.reciprocal %93 {approx = true} : vector<4x1xf32> -> vector<4x1xf32>
    %95 = vector.broadcast %94 : vector<4x1xf32> to vector<4x16xf32>
    %96 = arith.mulf %91, %95 : vector<4x16xf32>
    %97 = arith.truncf %96 : vector<4x16xf32> to vector<4x16xbf16>
    %98 = vector.broadcast %83 : vector<1x128xbf16> to vector<16x128xbf16>
    %99 = arith.mulf %5, %98 : vector<16x128xbf16>
    %cst_33 = arith.constant dense<0.000000e+00> : vector<4x128xf32>
    %100 = tpu.matmul %97, %99, %cst_33 {dimension_numbers = #tpu.dot_dimension_numbers<[1], [0], [0], [1], [0, 0, 1, 1], [], []>} : vector<4x16xbf16>, vector<16x128xbf16>, vector<4x128xf32> -> vector<4x128xf32>
    %101 = arith.addf %82, %100 : vector<4x128xf32>
    %c5 = arith.constant 5 : index
    %c0_34 = arith.constant 0 : index
    %102 = vector.load %arg1[%c5, %c0_34] : memref<8x128xbf16, #tpu.memory_space<vmem>>, vector<1x128xbf16>
    %103 = vector.broadcast %102 : vector<1x128xbf16> to vector<4x128xbf16>
    %104 = arith.mulf %1, %103 : vector<4x128xbf16>
    %cst_35 = arith.constant dense<0.000000e+00> : vector<4x16xf32>
    %105 = tpu.matmul %104, %3, %cst_35 {dimension_numbers = #tpu.dot_dimension_numbers<[1], [1], [0], [0], [0, 0, 1, 0], [], []>} : vector<4x128xbf16>, vector<16x128xbf16>, vector<4x16xf32> -> vector<4x16xf32>
    %cst_36 = arith.constant dense<0xFF800000> : vector<4xf32>
    %106 = vector.multi_reduction <maximumf>, %105, %cst_36 [1] : vector<4x16xf32> to vector<4xf32>
    %107 = vector.shape_cast %106 : vector<4xf32> to vector<4x1xf32>
    %108 = vector.broadcast %107 : vector<4x1xf32> to vector<4x16xf32>
    %109 = arith.subf %105, %108 : vector<4x16xf32>
    %110 = math.exp %109 : vector<4x16xf32>
    %cst_37 = arith.constant dense<0.000000e+00> : vector<4xf32>
    %111 = vector.multi_reduction <add>, %110, %cst_37 [1] : vector<4x16xf32> to vector<4xf32>
    %112 = vector.shape_cast %111 : vector<4xf32> to vector<4x1xf32>
    %113 = tpu.reciprocal %112 {approx = true} : vector<4x1xf32> -> vector<4x1xf32>
    %114 = vector.broadcast %113 : vector<4x1xf32> to vector<4x16xf32>
    %115 = arith.mulf %110, %114 : vector<4x16xf32>
    %116 = arith.truncf %115 : vector<4x16xf32> to vector<4x16xbf16>
    %117 = vector.broadcast %102 : vector<1x128xbf16> to vector<16x128xbf16>
    %118 = arith.mulf %5, %117 : vector<16x128xbf16>
    %cst_38 = arith.constant dense<0.000000e+00> : vector<4x128xf32>
    %119 = tpu.matmul %116, %118, %cst_38 {dimension_numbers = #tpu.dot_dimension_numbers<[1], [0], [0], [1], [0, 0, 1, 1], [], []>} : vector<4x16xbf16>, vector<16x128xbf16>, vector<4x128xf32> -> vector<4x128xf32>
    %120 = arith.addf %101, %119 : vector<4x128xf32>
    %c6 = arith.constant 6 : index
    %c0_39 = arith.constant 0 : index
    %121 = vector.load %arg1[%c6, %c0_39] : memref<8x128xbf16, #tpu.memory_space<vmem>>, vector<1x128xbf16>
    %122 = vector.broadcast %121 : vector<1x128xbf16> to vector<4x128xbf16>
    %123 = arith.mulf %1, %122 : vector<4x128xbf16>
    %cst_40 = arith.constant dense<0.000000e+00> : vector<4x16xf32>
    %124 = tpu.matmul %123, %3, %cst_40 {dimension_numbers = #tpu.dot_dimension_numbers<[1], [1], [0], [0], [0, 0, 1, 0], [], []>} : vector<4x128xbf16>, vector<16x128xbf16>, vector<4x16xf32> -> vector<4x16xf32>
    %cst_41 = arith.constant dense<0xFF800000> : vector<4xf32>
    %125 = vector.multi_reduction <maximumf>, %124, %cst_41 [1] : vector<4x16xf32> to vector<4xf32>
    %126 = vector.shape_cast %125 : vector<4xf32> to vector<4x1xf32>
    %127 = vector.broadcast %126 : vector<4x1xf32> to vector<4x16xf32>
    %128 = arith.subf %124, %127 : vector<4x16xf32>
    %129 = math.exp %128 : vector<4x16xf32>
    %cst_42 = arith.constant dense<0.000000e+00> : vector<4xf32>
    %130 = vector.multi_reduction <add>, %129, %cst_42 [1] : vector<4x16xf32> to vector<4xf32>
    %131 = vector.shape_cast %130 : vector<4xf32> to vector<4x1xf32>
    %132 = tpu.reciprocal %131 {approx = true} : vector<4x1xf32> -> vector<4x1xf32>
    %133 = vector.broadcast %132 : vector<4x1xf32> to vector<4x16xf32>
    %134 = arith.mulf %129, %133 : vector<4x16xf32>
    %135 = arith.truncf %134 : vector<4x16xf32> to vector<4x16xbf16>
    %136 = vector.broadcast %121 : vector<1x128xbf16> to vector<16x128xbf16>
    %137 = arith.mulf %5, %136 : vector<16x128xbf16>
    %cst_43 = arith.constant dense<0.000000e+00> : vector<4x128xf32>
    %138 = tpu.matmul %135, %137, %cst_43 {dimension_numbers = #tpu.dot_dimension_numbers<[1], [0], [0], [1], [0, 0, 1, 1], [], []>} : vector<4x16xbf16>, vector<16x128xbf16>, vector<4x128xf32> -> vector<4x128xf32>
    %139 = arith.addf %120, %138 : vector<4x128xf32>
    %c7 = arith.constant 7 : index
    %c0_44 = arith.constant 0 : index
    %140 = vector.load %arg1[%c7, %c0_44] : memref<8x128xbf16, #tpu.memory_space<vmem>>, vector<1x128xbf16>
    %141 = vector.broadcast %140 : vector<1x128xbf16> to vector<4x128xbf16>
    %142 = arith.mulf %1, %141 : vector<4x128xbf16>
    %cst_45 = arith.constant dense<0.000000e+00> : vector<4x16xf32>
    %143 = tpu.matmul %142, %3, %cst_45 {dimension_numbers = #tpu.dot_dimension_numbers<[1], [1], [0], [0], [0, 0, 1, 0], [], []>} : vector<4x128xbf16>, vector<16x128xbf16>, vector<4x16xf32> -> vector<4x16xf32>
    %cst_46 = arith.constant dense<0xFF800000> : vector<4xf32>
    %144 = vector.multi_reduction <maximumf>, %143, %cst_46 [1] : vector<4x16xf32> to vector<4xf32>
    %145 = vector.shape_cast %144 : vector<4xf32> to vector<4x1xf32>
    %146 = vector.broadcast %145 : vector<4x1xf32> to vector<4x16xf32>
    %147 = arith.subf %143, %146 : vector<4x16xf32>
    %148 = math.exp %147 : vector<4x16xf32>
    %cst_47 = arith.constant dense<0.000000e+00> : vector<4xf32>
    %149 = vector.multi_reduction <add>, %148, %cst_47 [1] : vector<4x16xf32> to vector<4xf32>
    %150 = vector.shape_cast %149 : vector<4xf32> to vector<4x1xf32>
    %151 = tpu.reciprocal %150 {approx = true} : vector<4x1xf32> -> vector<4x1xf32>
    %152 = vector.broadcast %151 : vector<4x1xf32> to vector<4x16xf32>
    %153 = arith.mulf %148, %152 : vector<4x16xf32>
    %154 = arith.truncf %153 : vector<4x16xf32> to vector<4x16xbf16>
    %155 = vector.broadcast %140 : vector<1x128xbf16> to vector<16x128xbf16>
    %156 = arith.mulf %5, %155 : vector<16x128xbf16>
    %cst_48 = arith.constant dense<0.000000e+00> : vector<4x128xf32>
    %157 = tpu.matmul %154, %156, %cst_48 {dimension_numbers = #tpu.dot_dimension_numbers<[1], [0], [0], [1], [0, 0, 1, 1], [], []>} : vector<4x16xbf16>, vector<16x128xbf16>, vector<4x128xf32> -> vector<4x128xf32>
    %158 = arith.addf %139, %157 : vector<4x128xf32>
    %159 = arith.truncf %158 : vector<4x128xf32> to vector<4x128xbf16>
    %c0_49 = arith.constant 0 : index
    %c0_50 = arith.constant 0 : index
    %c0_51 = arith.constant 0 : index
    %160 = vector.load %arg5[%c0_49, %c0_50, %c0_51] : memref<4x2x128xbf16, #tpu.memory_space<vmem>>, vector<4x1x128xbf16>
    %161 = vector.shape_cast %160 : vector<4x1x128xbf16> to vector<4x128xbf16>
    %162 = vector.shape_cast %159 : vector<4x128xbf16> to vector<4x1x128xbf16>
    tpu.vector_store %arg5[%c0_49, %c0_50, %c0_51], %162 {strides = array<i32>} : memref<4x2x128xbf16, #tpu.memory_space<vmem>>, vector<4x1x128xbf16>,
    %c0_52 = arith.constant 0 : index
    %c1_53 = arith.constant 1 : index
    %c0_54 = arith.constant 0 : index
    %163 = vector.load %arg2[%c0_52, %c1_53, %c0_54] : memref<4x2x128xbf16, #tpu.memory_space<vmem>>, vector<4x1x128xbf16>
    %164 = vector.shape_cast %163 : vector<4x1x128xbf16> to vector<4x128xbf16>
    %c0_55 = arith.constant 0 : index
    %c1_56 = arith.constant 1 : index
    %c0_57 = arith.constant 0 : index
    %165 = vector.load %arg3[%c0_55, %c1_56, %c0_57] : memref<16x2x128xbf16, #tpu.memory_space<vmem>>, vector<16x1x128xbf16>
    %166 = vector.shape_cast %165 : vector<16x1x128xbf16> to vector<16x128xbf16>
    %c0_58 = arith.constant 0 : index
    %c1_59 = arith.constant 1 : index
    %c0_60 = arith.constant 0 : index
    %167 = vector.load %arg4[%c0_58, %c1_59, %c0_60] : memref<16x2x128xbf16, #tpu.memory_space<vmem>>, vector<16x1x128xbf16>
    %168 = vector.shape_cast %167 : vector<16x1x128xbf16> to vector<16x128xbf16>
    %cst_61 = arith.constant 0.000000e+00 : f32
    %169 = vector.broadcast %cst_61 : f32 to vector<4x128xf32>
    %c0_62 = arith.constant 0 : index
    %c0_63 = arith.constant 0 : index
    %170 = vector.load %arg1[%c0_62, %c0_63] : memref<8x128xbf16, #tpu.memory_space<vmem>>, vector<1x128xbf16>
    %171 = vector.broadcast %170 : vector<1x128xbf16> to vector<4x128xbf16>
    %172 = arith.mulf %164, %171 : vector<4x128xbf16>
    %cst_64 = arith.constant dense<0.000000e+00> : vector<4x16xf32>
    %173 = tpu.matmul %172, %166, %cst_64 {dimension_numbers = #tpu.dot_dimension_numbers<[1], [1], [0], [0], [0, 0, 1, 0], [], []>} : vector<4x128xbf16>, vector<16x128xbf16>, vector<4x16xf32> -> vector<4x16xf32>
    %cst_65 = arith.constant dense<0xFF800000> : vector<4xf32>
    %174 = vector.multi_reduction <maximumf>, %173, %cst_65 [1] : vector<4x16xf32> to vector<4xf32>
    %175 = vector.shape_cast %174 : vector<4xf32> to vector<4x1xf32>
    %176 = vector.broadcast %175 : vector<4x1xf32> to vector<4x16xf32>
    %177 = arith.subf %173, %176 : vector<4x16xf32>
    %178 = math.exp %177 : vector<4x16xf32>
    %cst_66 = arith.constant dense<0.000000e+00> : vector<4xf32>
    %179 = vector.multi_reduction <add>, %178, %cst_66 [1] : vector<4x16xf32> to vector<4xf32>
    %180 = vector.shape_cast %179 : vector<4xf32> to vector<4x1xf32>
    %181 = tpu.reciprocal %180 {approx = true} : vector<4x1xf32> -> vector<4x1xf32>
    %182 = vector.broadcast %181 : vector<4x1xf32> to vector<4x16xf32>
    %183 = arith.mulf %178, %182 : vector<4x16xf32>
    %184 = arith.truncf %183 : vector<4x16xf32> to vector<4x16xbf16>
    %185 = vector.broadcast %170 : vector<1x128xbf16> to vector<16x128xbf16>
    %186 = arith.mulf %168, %185 : vector<16x128xbf16>
    %cst_67 = arith.constant dense<0.000000e+00> : vector<4x128xf32>
    %187 = tpu.matmul %184, %186, %cst_67 {dimension_numbers = #tpu.dot_dimension_numbers<[1], [0], [0], [1], [0, 0, 1, 1], [], []>} : vector<4x16xbf16>, vector<16x128xbf16>, vector<4x128xf32> -> vector<4x128xf32>
    %188 = arith.addf %169, %187 : vector<4x128xf32>
    %c1_68 = arith.constant 1 : index
    %c0_69 = arith.constant 0 : index
    %189 = vector.load %arg1[%c1_68, %c0_69] : memref<8x128xbf16, #tpu.memory_space<vmem>>, vector<1x128xbf16>
    %190 = vector.broadcast %189 : vector<1x128xbf16> to vector<4x128xbf16>
    %191 = arith.mulf %164, %190 : vector<4x128xbf16>
    %cst_70 = arith.constant dense<0.000000e+00> : vector<4x16xf32>
    %192 = tpu.matmul %191, %166, %cst_70 {dimension_numbers = #tpu.dot_dimension_numbers<[1], [1], [0], [0], [0, 0, 1, 0], [], []>} : vector<4x128xbf16>, vector<16x128xbf16>, vector<4x16xf32> -> vector<4x16xf32>
    %cst_71 = arith.constant dense<0xFF800000> : vector<4xf32>
    %193 = vector.multi_reduction <maximumf>, %192, %cst_71 [1] : vector<4x16xf32> to vector<4xf32>
    %194 = vector.shape_cast %193 : vector<4xf32> to vector<4x1xf32>
    %195 = vector.broadcast %194 : vector<4x1xf32> to vector<4x16xf32>
    %196 = arith.subf %192, %195 : vector<4x16xf32>
    %197 = math.exp %196 : vector<4x16xf32>
    %cst_72 = arith.constant dense<0.000000e+00> : vector<4xf32>
    %198 = vector.multi_reduction <add>, %197, %cst_72 [1] : vector<4x16xf32> to vector<4xf32>
    %199 = vector.shape_cast %198 : vector<4xf32> to vector<4x1xf32>
    %200 = tpu.reciprocal %199 {approx = true} : vector<4x1xf32> -> vector<4x1xf32>
    %201 = vector.broadcast %200 : vector<4x1xf32> to vector<4x16xf32>
    %202 = arith.mulf %197, %201 : vector<4x16xf32>
    %203 = arith.truncf %202 : vector<4x16xf32> to vector<4x16xbf16>
    %204 = vector.broadcast %189 : vector<1x128xbf16> to vector<16x128xbf16>
    %205 = arith.mulf %168, %204 : vector<16x128xbf16>
    %cst_73 = arith.constant dense<0.000000e+00> : vector<4x128xf32>
    %206 = tpu.matmul %203, %205, %cst_73 {dimension_numbers = #tpu.dot_dimension_numbers<[1], [0], [0], [1], [0, 0, 1, 1], [], []>} : vector<4x16xbf16>, vector<16x128xbf16>, vector<4x128xf32> -> vector<4x128xf32>
    %207 = arith.addf %188, %206 : vector<4x128xf32>
    %c2_74 = arith.constant 2 : index
    %c0_75 = arith.constant 0 : index
    %208 = vector.load %arg1[%c2_74, %c0_75] : memref<8x128xbf16, #tpu.memory_space<vmem>>, vector<1x128xbf16>
    %209 = vector.broadcast %208 : vector<1x128xbf16> to vector<4x128xbf16>
    %210 = arith.mulf %164, %209 : vector<4x128xbf16>
    %cst_76 = arith.constant dense<0.000000e+00> : vector<4x16xf32>
    %211 = tpu.matmul %210, %166, %cst_76 {dimension_numbers = #tpu.dot_dimension_numbers<[1], [1], [0], [0], [0, 0, 1, 0], [], []>} : vector<4x128xbf16>, vector<16x128xbf16>, vector<4x16xf32> -> vector<4x16xf32>
    %cst_77 = arith.constant dense<0xFF800000> : vector<4xf32>
    %212 = vector.multi_reduction <maximumf>, %211, %cst_77 [1] : vector<4x16xf32> to vector<4xf32>
    %213 = vector.shape_cast %212 : vector<4xf32> to vector<4x1xf32>
    %214 = vector.broadcast %213 : vector<4x1xf32> to vector<4x16xf32>
    %215 = arith.subf %211, %214 : vector<4x16xf32>
    %216 = math.exp %215 : vector<4x16xf32>
    %cst_78 = arith.constant dense<0.000000e+00> : vector<4xf32>
    %217 = vector.multi_reduction <add>, %216, %cst_78 [1] : vector<4x16xf32> to vector<4xf32>
    %218 = vector.shape_cast %217 : vector<4xf32> to vector<4x1xf32>
    %219 = tpu.reciprocal %218 {approx = true} : vector<4x1xf32> -> vector<4x1xf32>
    %220 = vector.broadcast %219 : vector<4x1xf32> to vector<4x16xf32>
    %221 = arith.mulf %216, %220 : vector<4x16xf32>
    %222 = arith.truncf %221 : vector<4x16xf32> to vector<4x16xbf16>
    %223 = vector.broadcast %208 : vector<1x128xbf16> to vector<16x128xbf16>
    %224 = arith.mulf %168, %223 : vector<16x128xbf16>
    %cst_79 = arith.constant dense<0.000000e+00> : vector<4x128xf32>
    %225 = tpu.matmul %222, %224, %cst_79 {dimension_numbers = #tpu.dot_dimension_numbers<[1], [0], [0], [1], [0, 0, 1, 1], [], []>} : vector<4x16xbf16>, vector<16x128xbf16>, vector<4x128xf32> -> vector<4x128xf32>
    %226 = arith.addf %207, %225 : vector<4x128xf32>
    %c3_80 = arith.constant 3 : index
    %c0_81 = arith.constant 0 : index
    %227 = vector.load %arg1[%c3_80, %c0_81] : memref<8x128xbf16, #tpu.memory_space<vmem>>, vector<1x128xbf16>
    %228 = vector.broadcast %227 : vector<1x128xbf16> to vector<4x128xbf16>
    %229 = arith.mulf %164, %228 : vector<4x128xbf16>
    %cst_82 = arith.constant dense<0.000000e+00> : vector<4x16xf32>
    %230 = tpu.matmul %229, %166, %cst_82 {dimension_numbers = #tpu.dot_dimension_numbers<[1], [1], [0], [0], [0, 0, 1, 0], [], []>} : vector<4x128xbf16>, vector<16x128xbf16>, vector<4x16xf32> -> vector<4x16xf32>
    %cst_83 = arith.constant dense<0xFF800000> : vector<4xf32>
    %231 = vector.multi_reduction <maximumf>, %230, %cst_83 [1] : vector<4x16xf32> to vector<4xf32>
    %232 = vector.shape_cast %231 : vector<4xf32> to vector<4x1xf32>
    %233 = vector.broadcast %232 : vector<4x1xf32> to vector<4x16xf32>
    %234 = arith.subf %230, %233 : vector<4x16xf32>
    %235 = math.exp %234 : vector<4x16xf32>
    %cst_84 = arith.constant dense<0.000000e+00> : vector<4xf32>
    %236 = vector.multi_reduction <add>, %235, %cst_84 [1] : vector<4x16xf32> to vector<4xf32>
    %237 = vector.shape_cast %236 : vector<4xf32> to vector<4x1xf32>
    %238 = tpu.reciprocal %237 {approx = true} : vector<4x1xf32> -> vector<4x1xf32>
    %239 = vector.broadcast %238 : vector<4x1xf32> to vector<4x16xf32>
    %240 = arith.mulf %235, %239 : vector<4x16xf32>
    %241 = arith.truncf %240 : vector<4x16xf32> to vector<4x16xbf16>
    %242 = vector.broadcast %227 : vector<1x128xbf16> to vector<16x128xbf16>
    %243 = arith.mulf %168, %242 : vector<16x128xbf16>
    %cst_85 = arith.constant dense<0.000000e+00> : vector<4x128xf32>
    %244 = tpu.matmul %241, %243, %cst_85 {dimension_numbers = #tpu.dot_dimension_numbers<[1], [0], [0], [1], [0, 0, 1, 1], [], []>} : vector<4x16xbf16>, vector<16x128xbf16>, vector<4x128xf32> -> vector<4x128xf32>
    %245 = arith.addf %226, %244 : vector<4x128xf32>
    %c4_86 = arith.constant 4 : index
    %c0_87 = arith.constant 0 : index
    %246 = vector.load %arg1[%c4_86, %c0_87] : memref<8x128xbf16, #tpu.memory_space<vmem>>, vector<1x128xbf16>
    %247 = vector.broadcast %246 : vector<1x128xbf16> to vector<4x128xbf16>
    %248 = arith.mulf %164, %247 : vector<4x128xbf16>
    %cst_88 = arith.constant dense<0.000000e+00> : vector<4x16xf32>
    %249 = tpu.matmul %248, %166, %cst_88 {dimension_numbers = #tpu.dot_dimension_numbers<[1], [1], [0], [0], [0, 0, 1, 0], [], []>} : vector<4x128xbf16>, vector<16x128xbf16>, vector<4x16xf32> -> vector<4x16xf32>
    %cst_89 = arith.constant dense<0xFF800000> : vector<4xf32>
    %250 = vector.multi_reduction <maximumf>, %249, %cst_89 [1] : vector<4x16xf32> to vector<4xf32>
    %251 = vector.shape_cast %250 : vector<4xf32> to vector<4x1xf32>
    %252 = vector.broadcast %251 : vector<4x1xf32> to vector<4x16xf32>
    %253 = arith.subf %249, %252 : vector<4x16xf32>
    %254 = math.exp %253 : vector<4x16xf32>
    %cst_90 = arith.constant dense<0.000000e+00> : vector<4xf32>
    %255 = vector.multi_reduction <add>, %254, %cst_90 [1] : vector<4x16xf32> to vector<4xf32>
    %256 = vector.shape_cast %255 : vector<4xf32> to vector<4x1xf32>
    %257 = tpu.reciprocal %256 {approx = true} : vector<4x1xf32> -> vector<4x1xf32>
    %258 = vector.broadcast %257 : vector<4x1xf32> to vector<4x16xf32>
    %259 = arith.mulf %254, %258 : vector<4x16xf32>
    %260 = arith.truncf %259 : vector<4x16xf32> to vector<4x16xbf16>
    %261 = vector.broadcast %246 : vector<1x128xbf16> to vector<16x128xbf16>
    %262 = arith.mulf %168, %261 : vector<16x128xbf16>
    %cst_91 = arith.constant dense<0.000000e+00> : vector<4x128xf32>
    %263 = tpu.matmul %260, %262, %cst_91 {dimension_numbers = #tpu.dot_dimension_numbers<[1], [0], [0], [1], [0, 0, 1, 1], [], []>} : vector<4x16xbf16>, vector<16x128xbf16>, vector<4x128xf32> -> vector<4x128xf32>
    %264 = arith.addf %245, %263 : vector<4x128xf32>
    %c5_92 = arith.constant 5 : index
    %c0_93 = arith.constant 0 : index
    %265 = vector.load %arg1[%c5_92, %c0_93] : memref<8x128xbf16, #tpu.memory_space<vmem>>, vector<1x128xbf16>
    %266 = vector.broadcast %265 : vector<1x128xbf16> to vector<4x128xbf16>
    %267 = arith.mulf %164, %266 : vector<4x128xbf16>
    %cst_94 = arith.constant dense<0.000000e+00> : vector<4x16xf32>
    %268 = tpu.matmul %267, %166, %cst_94 {dimension_numbers = #tpu.dot_dimension_numbers<[1], [1], [0], [0], [0, 0, 1, 0], [], []>} : vector<4x128xbf16>, vector<16x128xbf16>, vector<4x16xf32> -> vector<4x16xf32>
    %cst_95 = arith.constant dense<0xFF800000> : vector<4xf32>
    %269 = vector.multi_reduction <maximumf>, %268, %cst_95 [1] : vector<4x16xf32> to vector<4xf32>
    %270 = vector.shape_cast %269 : vector<4xf32> to vector<4x1xf32>
    %271 = vector.broadcast %270 : vector<4x1xf32> to vector<4x16xf32>
    %272 = arith.subf %268, %271 : vector<4x16xf32>
    %273 = math.exp %272 : vector<4x16xf32>
    %cst_96 = arith.constant dense<0.000000e+00> : vector<4xf32>
    %274 = vector.multi_reduction <add>, %273, %cst_96 [1] : vector<4x16xf32> to vector<4xf32>
    %275 = vector.shape_cast %274 : vector<4xf32> to vector<4x1xf32>
    %276 = tpu.reciprocal %275 {approx = true} : vector<4x1xf32> -> vector<4x1xf32>
    %277 = vector.broadcast %276 : vector<4x1xf32> to vector<4x16xf32>
    %278 = arith.mulf %273, %277 : vector<4x16xf32>
    %279 = arith.truncf %278 : vector<4x16xf32> to vector<4x16xbf16>
    %280 = vector.broadcast %265 : vector<1x128xbf16> to vector<16x128xbf16>
    %281 = arith.mulf %168, %280 : vector<16x128xbf16>
    %cst_97 = arith.constant dense<0.000000e+00> : vector<4x128xf32>
    %282 = tpu.matmul %279, %281, %cst_97 {dimension_numbers = #tpu.dot_dimension_numbers<[1], [0], [0], [1], [0, 0, 1, 1], [], []>} : vector<4x16xbf16>, vector<16x128xbf16>, vector<4x128xf32> -> vector<4x128xf32>
    %283 = arith.addf %264, %282 : vector<4x128xf32>
    %c6_98 = arith.constant 6 : index
    %c0_99 = arith.constant 0 : index
    %284 = vector.load %arg1[%c6_98, %c0_99] : memref<8x128xbf16, #tpu.memory_space<vmem>>, vector<1x128xbf16>
    %285 = vector.broadcast %284 : vector<1x128xbf16> to vector<4x128xbf16>
    %286 = arith.mulf %164, %285 : vector<4x128xbf16>
    %cst_100 = arith.constant dense<0.000000e+00> : vector<4x16xf32>
    %287 = tpu.matmul %286, %166, %cst_100 {dimension_numbers = #tpu.dot_dimension_numbers<[1], [1], [0], [0], [0, 0, 1, 0], [], []>} : vector<4x128xbf16>, vector<16x128xbf16>, vector<4x16xf32> -> vector<4x16xf32>
    %cst_101 = arith.constant dense<0xFF800000> : vector<4xf32>
    %288 = vector.multi_reduction <maximumf>, %287, %cst_101 [1] : vector<4x16xf32> to vector<4xf32>
    %289 = vector.shape_cast %288 : vector<4xf32> to vector<4x1xf32>
    %290 = vector.broadcast %289 : vector<4x1xf32> to vector<4x16xf32>
    %291 = arith.subf %287, %290 : vector<4x16xf32>
    %292 = math.exp %291 : vector<4x16xf32>
    %cst_102 = arith.constant dense<0.000000e+00> : vector<4xf32>
    %293 = vector.multi_reduction <add>, %292, %cst_102 [1] : vector<4x16xf32> to vector<4xf32>
    %294 = vector.shape_cast %293 : vector<4xf32> to vector<4x1xf32>
    %295 = tpu.reciprocal %294 {approx = true} : vector<4x1xf32> -> vector<4x1xf32>
    %296 = vector.broadcast %295 : vector<4x1xf32> to vector<4x16xf32>
    %297 = arith.mulf %292, %296 : vector<4x16xf32>
    %298 = arith.truncf %297 : vector<4x16xf32> to vector<4x16xbf16>
    %299 = vector.broadcast %284 : vector<1x128xbf16> to vector<16x128xbf16>
    %300 = arith.mulf %168, %299 : vector<16x128xbf16>
    %cst_103 = arith.constant dense<0.000000e+00> : vector<4x128xf32>
    %301 = tpu.matmul %298, %300, %cst_103 {dimension_numbers = #tpu.dot_dimension_numbers<[1], [0], [0], [1], [0, 0, 1, 1], [], []>} : vector<4x16xbf16>, vector<16x128xbf16>, vector<4x128xf32> -> vector<4x128xf32>
    %302 = arith.addf %283, %301 : vector<4x128xf32>
    %c7_104 = arith.constant 7 : index
    %c0_105 = arith.constant 0 : index
    %303 = vector.load %arg1[%c7_104, %c0_105] : memref<8x128xbf16, #tpu.memory_space<vmem>>, vector<1x128xbf16>
    %304 = vector.broadcast %303 : vector<1x128xbf16> to vector<4x128xbf16>
    %305 = arith.mulf %164, %304 : vector<4x128xbf16>
    %cst_106 = arith.constant dense<0.000000e+00> : vector<4x16xf32>
    %306 = tpu.matmul %305, %166, %cst_106 {dimension_numbers = #tpu.dot_dimension_numbers<[1], [1], [0], [0], [0, 0, 1, 0], [], []>} : vector<4x128xbf16>, vector<16x128xbf16>, vector<4x16xf32> -> vector<4x16xf32>
    %cst_107 = arith.constant dense<0xFF800000> : vector<4xf32>
    %307 = vector.multi_reduction <maximumf>, %306, %cst_107 [1] : vector<4x16xf32> to vector<4xf32>
    %308 = vector.shape_cast %307 : vector<4xf32> to vector<4x1xf32>
    %309 = vector.broadcast %308 : vector<4x1xf32> to vector<4x16xf32>
    %310 = arith.subf %306, %309 : vector<4x16xf32>
    %311 = math.exp %310 : vector<4x16xf32>
    %cst_108 = arith.constant dense<0.000000e+00> : vector<4xf32>
    %312 = vector.multi_reduction <add>, %311, %cst_108 [1] : vector<4x16xf32> to vector<4xf32>
    %313 = vector.shape_cast %312 : vector<4xf32> to vector<4x1xf32>
    %314 = tpu.reciprocal %313 {approx = true} : vector<4x1xf32> -> vector<4x1xf32>
    %315 = vector.broadcast %314 : vector<4x1xf32> to vector<4x16xf32>
    %316 = arith.mulf %311, %315 : vector<4x16xf32>
    %317 = arith.truncf %316 : vector<4x16xf32> to vector<4x16xbf16>
    %318 = vector.broadcast %303 : vector<1x128xbf16> to vector<16x128xbf16>
    %319 = arith.mulf %168, %318 : vector<16x128xbf16>
    %cst_109 = arith.constant dense<0.000000e+00> : vector<4x128xf32>
    %320 = tpu.matmul %317, %319, %cst_109 {dimension_numbers = #tpu.dot_dimension_numbers<[1], [0], [0], [1], [0, 0, 1, 1], [], []>} : vector<4x16xbf16>, vector<16x128xbf16>, vector<4x128xf32> -> vector<4x128xf32>
    %321 = arith.addf %302, %320 : vector<4x128xf32>
    %322 = arith.truncf %321 : vector<4x128xf32> to vector<4x128xbf16>
    %c0_110 = arith.constant 0 : index
    %c1_111 = arith.constant 1 : index
    %c0_112 = arith.constant 0 : index
    %323 = vector.load %arg5[%c0_110, %c1_111, %c0_112] : memref<4x2x128xbf16, #tpu.memory_space<vmem>>, vector<4x1x128xbf16>
    %324 = vector.shape_cast %323 : vector<4x1x128xbf16> to vector<4x128xbf16>
    %325 = vector.shape_cast %322 : vector<4x128xbf16> to vector<4x1x128xbf16>
    tpu.vector_store %arg5[%c0_110, %c1_111, %c0_112], %325 {strides = array<i32>} : memref<4x2x128xbf16, #tpu.memory_space<vmem>>, vector<4x1x128xbf16>,
    return
  }
  func.func @transform_0(%arg0: i32) -> (i32, i32) {
    %c0_i32 = arith.constant 0 : i32
    %c0_i32_0 = arith.constant 0 : i32
    %c0_i32_1 = arith.constant 0 : i32
    return %c0_i32, %c0_i32_0 : i32, i32
  }
  func.func @transform_1(%arg0: i32) -> (i32, i32, i32) {
    %c0_i32 = arith.constant 0 : i32
    %c0_i32_0 = arith.constant 0 : i32
    %c0_i32_1 = arith.constant 0 : i32
    return %arg0, %c0_i32, %c0_i32_0 : i32, i32, i32
  }
  func.func @transform_2(%arg0: i32) -> (i32, i32, i32) {
    %c0_i32 = arith.constant 0 : i32
    %c0_i32_0 = arith.constant 0 : i32
    %c0_i32_1 = arith.constant 0 : i32
    %c0_i32_2 = arith.constant 0 : i32
    return %c0_i32, %c0_i32_0, %c0_i32_1 : i32, i32, i32
  }
  func.func @transform_3(%arg0: i32) -> (i32, i32, i32) {
    %c0_i32 = arith.constant 0 : i32
    %c0_i32_0 = arith.constant 0 : i32
    %c0_i32_1 = arith.constant 0 : i32
    %c0_i32_2 = arith.constant 0 : i32
    return %c0_i32, %c0_i32_0, %c0_i32_1 : i32, i32, i32
  }
  func.func @transform_4(%arg0: i32) -> (i32, i32, i32) {
    %c0_i32 = arith.constant 0 : i32
    %c0_i32_0 = arith.constant 0 : i32
    %c0_i32_1 = arith.constant 0 : i32
    return %arg0, %c0_i32, %c0_i32_0 : i32, i32, i32
  }
}

module attributes {stable_mosaic.version = 11 : i64} {
  func.func @_linear_kernel(%arg0: i32, %arg1: i32, %arg2: memref<8x64xf32, #tpu.memory_space<vmem>>, %arg3: memref<64x128xbf16, #tpu.memory_space<vmem>>, %arg4: memref<1x128xf32, #tpu.memory_space<vmem>>, %arg5: memref<8x128xbf16, #tpu.memory_space<vmem>>) attributes {dimension_semantics = [#tpu.dimension_semantics<parallel>, #tpu.dimension_semantics<parallel>], iteration_bounds = array<i64: 2, 1>, scalar_prefetch = 0 : i64, scratch_operands = 0 : i64, tpu.core_type = #tpu.core_type<tc>, window_params = [{transform_indices = @transform_0, window_bounds = array<i64: 8, 64>}, {transform_indices = @transform_1, window_bounds = array<i64: 64, 128>}, {transform_indices = @transform_2, window_bounds = array<i64: 1, 128>}, {transform_indices = @transform_3, window_bounds = array<i64: 8, 128>}]} {
    %c0 = arith.constant 0 : index
    %c0_0 = arith.constant 0 : index
    %0 = vector.load %arg2[%c0, %c0_0] : memref<8x64xf32, #tpu.memory_space<vmem>>, vector<8x64xf32>
    %1 = arith.truncf %0 : vector<8x64xf32> to vector<8x64xbf16>
    %c0_1 = arith.constant 0 : index
    %c0_2 = arith.constant 0 : index
    %2 = vector.load %arg3[%c0_1, %c0_2] : memref<64x128xbf16, #tpu.memory_space<vmem>>, vector<64x128xbf16>
    %cst = arith.constant dense<0.000000e+00> : vector<8x128xf32>
    %3 = tpu.matmul %1, %2, %cst {dimension_numbers = #tpu.dot_dimension_numbers<[1], [0], [0], [1], [0, 0, 1, 1], [], []>} : vector<8x64xbf16>, vector<64x128xbf16>, vector<8x128xf32> -> vector<8x128xf32>
    %c0_3 = arith.constant 0 : index
    %c0_4 = arith.constant 0 : index
    %4 = vector.load %arg4[%c0_3, %c0_4] : memref<1x128xf32, #tpu.memory_space<vmem>>, vector<1x128xf32>
    %5 = vector.broadcast %4 : vector<1x128xf32> to vector<8x128xf32>
    %6 = arith.addf %3, %5 : vector<8x128xf32>
    %7 = arith.truncf %6 : vector<8x128xf32> to vector<8x128xbf16>
    %c0_5 = arith.constant 0 : index
    %c0_6 = arith.constant 0 : index
    %8 = vector.load %arg5[%c0_5, %c0_6] : memref<8x128xbf16, #tpu.memory_space<vmem>>, vector<8x128xbf16>
    tpu.vector_store %arg5[%c0_5, %c0_6], %7 {strides = array<i32>} : memref<8x128xbf16, #tpu.memory_space<vmem>>, vector<8x128xbf16>,
    return
  }
  func.func @transform_0(%arg0: i32, %arg1: i32) -> (i32, i32) {
    %c0_i32 = arith.constant 0 : i32
    %c0_i32_0 = arith.constant 0 : i32
    return %arg0, %c0_i32 : i32, i32
  }
  func.func @transform_1(%arg0: i32, %arg1: i32) -> (i32, i32) {
    %c0_i32 = arith.constant 0 : i32
    %c0_i32_0 = arith.constant 0 : i32
    return %c0_i32, %arg1 : i32, i32
  }
  func.func @transform_2(%arg0: i32, %arg1: i32) -> (i32, i32) {
    %c0_i32 = arith.constant 0 : i32
    %c0_i32_0 = arith.constant 0 : i32
    return %c0_i32, %arg1 : i32, i32
  }
  func.func @transform_3(%arg0: i32, %arg1: i32) -> (i32, i32) {
    %c0_i32 = arith.constant 0 : i32
    return %arg0, %arg1 : i32, i32
  }
}

module attributes {stable_mosaic.version = 11 : i64} {
  func.func @_linear_kernel(%arg0: i32, %arg1: i32, %arg2: memref<8x128xbf16, #tpu.memory_space<vmem>>, %arg3: memref<128x128xbf16, #tpu.memory_space<vmem>>, %arg4: memref<1x128xf32, #tpu.memory_space<vmem>>, %arg5: memref<8x128xf32, #tpu.memory_space<vmem>>) attributes {dimension_semantics = [#tpu.dimension_semantics<parallel>, #tpu.dimension_semantics<parallel>], iteration_bounds = array<i64: 2, 1>, scalar_prefetch = 0 : i64, scratch_operands = 0 : i64, tpu.core_type = #tpu.core_type<tc>, window_params = [{transform_indices = @transform_0, window_bounds = array<i64: 8, 128>}, {transform_indices = @transform_1, window_bounds = array<i64: 128, 128>}, {transform_indices = @transform_2, window_bounds = array<i64: 1, 128>}, {transform_indices = @transform_3, window_bounds = array<i64: 8, 128>}]} {
    %c0 = arith.constant 0 : index
    %c0_0 = arith.constant 0 : index
    %0 = vector.load %arg2[%c0, %c0_0] : memref<8x128xbf16, #tpu.memory_space<vmem>>, vector<8x128xbf16>
    %c0_1 = arith.constant 0 : index
    %c0_2 = arith.constant 0 : index
    %1 = vector.load %arg3[%c0_1, %c0_2] : memref<128x128xbf16, #tpu.memory_space<vmem>>, vector<128x128xbf16>
    %cst = arith.constant dense<0.000000e+00> : vector<8x128xf32>
    %2 = tpu.matmul %0, %1, %cst {dimension_numbers = #tpu.dot_dimension_numbers<[1], [0], [0], [1], [0, 0, 1, 1], [], []>} : vector<8x128xbf16>, vector<128x128xbf16>, vector<8x128xf32> -> vector<8x128xf32>
    %c0_3 = arith.constant 0 : index
    %c0_4 = arith.constant 0 : index
    %3 = vector.load %arg4[%c0_3, %c0_4] : memref<1x128xf32, #tpu.memory_space<vmem>>, vector<1x128xf32>
    %4 = vector.broadcast %3 : vector<1x128xf32> to vector<8x128xf32>
    %5 = arith.addf %2, %4 : vector<8x128xf32>
    %c0_5 = arith.constant 0 : index
    %c0_6 = arith.constant 0 : index
    %6 = vector.load %arg5[%c0_5, %c0_6] : memref<8x128xf32, #tpu.memory_space<vmem>>, vector<8x128xf32>
    tpu.vector_store %arg5[%c0_5, %c0_6], %5 {strides = array<i32>} : memref<8x128xf32, #tpu.memory_space<vmem>>, vector<8x128xf32>,
    return
  }
  func.func @transform_0(%arg0: i32, %arg1: i32) -> (i32, i32) {
    %c0_i32 = arith.constant 0 : i32
    %c0_i32_0 = arith.constant 0 : i32
    return %arg0, %c0_i32 : i32, i32
  }
  func.func @transform_1(%arg0: i32, %arg1: i32) -> (i32, i32) {
    %c0_i32 = arith.constant 0 : i32
    %c0_i32_0 = arith.constant 0 : i32
    return %c0_i32, %arg1 : i32, i32
  }
  func.func @transform_2(%arg0: i32, %arg1: i32) -> (i32, i32) {
    %c0_i32 = arith.constant 0 : i32
    %c0_i32_0 = arith.constant 0 : i32
    return %c0_i32, %arg1 : i32, i32
  }
  func.func @transform_3(%arg0: i32, %arg1: i32) -> (i32, i32) {
    %c0_i32 = arith.constant 0 : i32
    return %arg0, %arg1 : i32, i32
  }
}

module attributes {stable_mosaic.version = 11 : i64} {
  func.func @_linear_kernel(%arg0: i32, %arg1: i32, %arg2: memref<16x64xf32, #tpu.memory_space<vmem>>, %arg3: memref<64x128xbf16, #tpu.memory_space<vmem>>, %arg4: memref<1x128xf32, #tpu.memory_space<vmem>>, %arg5: memref<16x128xbf16, #tpu.memory_space<vmem>>) attributes {dimension_semantics = [#tpu.dimension_semantics<parallel>, #tpu.dimension_semantics<parallel>], iteration_bounds = array<i64: 2, 1>, scalar_prefetch = 0 : i64, scratch_operands = 0 : i64, tpu.core_type = #tpu.core_type<tc>, window_params = [{transform_indices = @transform_0, window_bounds = array<i64: 16, 64>}, {transform_indices = @transform_1, window_bounds = array<i64: 64, 128>}, {transform_indices = @transform_2, window_bounds = array<i64: 1, 128>}, {transform_indices = @transform_3, window_bounds = array<i64: 16, 128>}]} {
    %c0 = arith.constant 0 : index
    %c0_0 = arith.constant 0 : index
    %0 = vector.load %arg2[%c0, %c0_0] : memref<16x64xf32, #tpu.memory_space<vmem>>, vector<16x64xf32>
    %1 = arith.truncf %0 : vector<16x64xf32> to vector<16x64xbf16>
    %c0_1 = arith.constant 0 : index
    %c0_2 = arith.constant 0 : index
    %2 = vector.load %arg3[%c0_1, %c0_2] : memref<64x128xbf16, #tpu.memory_space<vmem>>, vector<64x128xbf16>
    %cst = arith.constant dense<0.000000e+00> : vector<16x128xf32>
    %3 = tpu.matmul %1, %2, %cst {dimension_numbers = #tpu.dot_dimension_numbers<[1], [0], [0], [1], [0, 0, 1, 1], [], []>} : vector<16x64xbf16>, vector<64x128xbf16>, vector<16x128xf32> -> vector<16x128xf32>
    %c0_3 = arith.constant 0 : index
    %c0_4 = arith.constant 0 : index
    %4 = vector.load %arg4[%c0_3, %c0_4] : memref<1x128xf32, #tpu.memory_space<vmem>>, vector<1x128xf32>
    %5 = vector.broadcast %4 : vector<1x128xf32> to vector<16x128xf32>
    %6 = arith.addf %3, %5 : vector<16x128xf32>
    %7 = arith.truncf %6 : vector<16x128xf32> to vector<16x128xbf16>
    %c0_5 = arith.constant 0 : index
    %c0_6 = arith.constant 0 : index
    %8 = vector.load %arg5[%c0_5, %c0_6] : memref<16x128xbf16, #tpu.memory_space<vmem>>, vector<16x128xbf16>
    tpu.vector_store %arg5[%c0_5, %c0_6], %7 {strides = array<i32>} : memref<16x128xbf16, #tpu.memory_space<vmem>>, vector<16x128xbf16>,
    return
  }
  func.func @transform_0(%arg0: i32, %arg1: i32) -> (i32, i32) {
    %c0_i32 = arith.constant 0 : i32
    %c0_i32_0 = arith.constant 0 : i32
    return %arg0, %c0_i32 : i32, i32
  }
  func.func @transform_1(%arg0: i32, %arg1: i32) -> (i32, i32) {
    %c0_i32 = arith.constant 0 : i32
    %c0_i32_0 = arith.constant 0 : i32
    return %c0_i32, %arg1 : i32, i32
  }
  func.func @transform_2(%arg0: i32, %arg1: i32) -> (i32, i32) {
    %c0_i32 = arith.constant 0 : i32
    %c0_i32_0 = arith.constant 0 : i32
    return %c0_i32, %arg1 : i32, i32
  }
  func.func @transform_3(%arg0: i32, %arg1: i32) -> (i32, i32) {
    %c0_i32 = arith.constant 0 : i32
    return %arg0, %arg1 : i32, i32
  }
}

</mosaic_0001>

<llo_original>
// kernel: cross_attention_forward.9
$region0: #{cross_attention_forward.9}
  #allocation0 [shape = 'u32[]', space=smem, size = 0x4, offset = 0x4, fixed_abs, tag = 'smem constant byte address 0x4 - core index']
  #allocation1 [shape = 'u32[144,128]{1,0:T(1,128)}', space=vmem, size = 0x12000, scoped, tag = 'internal scratch']
  %s0 = inlined_call_operand.vmem [shape: bf16[16,128], index: 0, kind: input, shape index: {}]
  %s1 = inlined_call_operand.vmem [shape: bf16[128,128], index: 1, kind: input, shape index: {}]
  %s2 = inlined_call_operand.vmem [shape: f32[1,128], index: 2, kind: input, shape index: {}]
  %s3 = inlined_call_operand.hbm [shape: f32[16,128], index: 3, kind: output, shape index: {}]
  %s4 = sld [smem:[#allocation0]]
  $region45: #{cross_attention_forward.9} parent=0
    _
  %s6 = ssub.s32 1, %s4
  %s7 = scalar_select 0, %s6, %s4
  $region1: #{cross_attention_forward.9} parent=0
    #allocation2 [shape = 'u8[8192]{0}', space=vmem, size = 0x2000, scoped, tag = 'output window, operand 0']
    #allocation3 [shape = 's32[2]{0}', space=sflag, size = 0x8, scoped, tag = 'scoped memory for cross_attention_forward.9']
    %8 = vsyncpa [#allocation3], 0
    %s9 = scalar_lea.sflag [#allocation3], 1
    %10 = vsyncpa %s9, 0
    loop: start=0, step=1, limit=4
    $region2: #{cross_attention_forward.9} parent=1 // loop_pre_header
      _
    $region3: #{cross_attention_forward.9} parent=1 // loop_header
      %s12 = sphi 0, %s16
      %p13 = scmp.ge.s32.totalorder %s12, 4
      %s19 = sphi 0, %s31
      %s20 = sphi 0, %s27
      %s21 = sphi 0, %s19
      %s22 = sphi 0, %s20
      %s23 = sphi 0, %s21
      %s24 = sphi 0, %s22
      %s34 = sphi 0, %s36
      %s37 = sphi 0, %s34
      %s38 = sphi 0, %s37
      %s54 = sphi 0, %s38
      %s60 = sphi 0, %s62
      %s63 = sphi 0, %s60
      %s64 = sphi 0, %s63
      %s80 = sphi 0, %s64
      %s86 = sphi 0, %s88
      %s89 = sphi 0, %s86
      %s90 = sphi 0, %s89
      %s106 = sphi 0, %s90
      %s114 = sphi 0, %s116
      %s117 = sphi 0, %s114
      %s118 = sphi 0, %s117
      %s134 = sphi 0, %s118
    $region4: #{cross_attention_forward.9} parent=1 // loop_header_branch
      %15 = sbr.rel (%p13) target = $region8
    $region5: #{cross_attention_forward.9} parent=1 // loop_body
      %s17 = ssub.s32 %s12, 1
      %s18 = ssub.s32 %s12, 2
      %s25 = sadd.s32 1, %s20
      %p26 = scmp.ge.s32.totalorder %s25, 1
      %s27 = scalar_select %p26, 0, %s25
      %s28 = sadd.s32 1, %s19
      %s29 = scalar_select %p26, %s28, %s19
      %p30 = scmp.ge.s32.totalorder %s29, 2
      %s31 = scalar_select %p30, 0, %s29
      %s32 = ssub.s32 %s19, %s31
      %p33 = scmp.eq.s32.totalorder %s32, 0
      %s35 = sadd.s32 %s34, 1
      %s36 = scalar_select %p33, %s34, %s35
      %p39 = pneg %p33
      %p40 = scmp.eq.s32.totalorder %s12, 1
      %p41 = por %p39, %p40
      %p42 = scmp.ne.s32.totalorder %s34, %s37
      %p43 = scmp.eq.s32.totalorder %s12, 0
      %p44 = por %p42, %p43
      %p45 = scmp.ne.s32.totalorder %s34, %s37
      %p46 = scmp.eq.s32.totalorder %s17, 1
      %p47 = por %p45, %p46
      %p48 = scmp.ne.s32.totalorder %s37, %s38
      %p49 = scmp.eq.s32.totalorder %s17, 0
      %p50 = por %p48, %p49
      %p51 = scmp.ne.s32.totalorder %s37, %s38
      %p52 = scmp.eq.s32.totalorder %s18, 1
      %p53 = por %p51, %p52
      %p55 = scmp.ne.s32.totalorder %s38, %s54
      %p56 = scmp.eq.s32.totalorder %s18, 0
      %p57 = por %p55, %p56
      %s58 = ssub.s32 %s20, %s27
      %p59 = scmp.eq.s32.totalorder %s58, 0
      %s61 = sadd.s32 %s60, 1
      %s62 = scalar_select %p59, %s60, %s61
      %p65 = pneg %p59
      %p66 = scmp.eq.s32.totalorder %s12, 1
      %p67 = por %p65, %p66
      %p68 = scmp.ne.s32.totalorder %s60, %s63
      %p69 = scmp.eq.s32.totalorder %s12, 0
      %p70 = por %p68, %p69
      %p71 = scmp.ne.s32.totalorder %s60, %s63
      %p72 = scmp.eq.s32.totalorder %s17, 1
      %p73 = por %p71, %p72
      %p74 = scmp.ne.s32.totalorder %s63, %s64
      %p75 = scmp.eq.s32.totalorder %s17, 0
      %p76 = por %p74, %p75
      %p77 = scmp.ne.s32.totalorder %s63, %s64
      %p78 = scmp.eq.s32.totalorder %s18, 1
      %p79 = por %p77, %p78
      %p81 = scmp.ne.s32.totalorder %s64, %s80
      %p82 = scmp.eq.s32.totalorder %s18, 0
      %p83 = por %p81, %p82
      %s84 = ssub.s32 %s20, %s27
      %p85 = scmp.eq.s32.totalorder %s84, 0
      %s87 = sadd.s32 %s86, 1
      %s88 = scalar_select %p85, %s86, %s87
      %p91 = pneg %p85
      %p92 = scmp.eq.s32.totalorder %s12, 1
      %p93 = por %p91, %p92
      %p94 = scmp.ne.s32.totalorder %s86, %s89
      %p95 = scmp.eq.s32.totalorder %s12, 0
      %p96 = por %p94, %p95
      %p97 = scmp.ne.s32.totalorder %s86, %s89
      %p98 = scmp.eq.s32.totalorder %s17, 1
      %p99 = por %p97, %p98
      %p100 = scmp.ne.s32.totalorder %s89, %s90
      %p101 = scmp.eq.s32.totalorder %s17, 0
      %p102 = por %p100, %p101
      %p103 = scmp.ne.s32.totalorder %s89, %s90
      %p104 = scmp.eq.s32.totalorder %s18, 1
      %p105 = por %p103, %p104
      %p107 = scmp.ne.s32.totalorder %s90, %s106
      %p108 = scmp.eq.s32.totalorder %s18, 0
      %p109 = por %p107, %p108
      %s110 = ssub.s32 %s19, %s31
      %s111 = ssub.s32 %s20, %s27
      %s112 = sor.u32 %s110, %s111
      %p113 = scmp.eq.s32.totalorder %s112, 0
      %s115 = sadd.s32 %s114, 1
      %s116 = scalar_select %p113, %s114, %s115
      %p119 = pneg %p113
      %p120 = scmp.eq.s32.totalorder %s12, 1
      %p121 = por %p119, %p120
      %p122 = scmp.ne.s32.totalorder %s114, %s117
      %p123 = scmp.eq.s32.totalorder %s12, 0
      %p124 = por %p122, %p123
      %p125 = scmp.ne.s32.totalorder %s114, %s117
      %p126 = scmp.eq.s32.totalorder %s17, 1
      %p127 = por %p125, %p126
      %p128 = scmp.ne.s32.totalorder %s117, %s118
      %p129 = scmp.eq.s32.totalorder %s17, 0
      %p130 = por %p128, %p129
      %p131 = scmp.ne.s32.totalorder %s117, %s118
      %p132 = scmp.eq.s32.totalorder %s18, 1
      %p133 = por %p131, %p132
      %p135 = scmp.ne.s32.totalorder %s118, %s134
      %p136 = scmp.eq.s32.totalorder %s18, 0
      %p137 = por %p135, %p136
      %p138 = scmp.le.s32.totalorder 1, %s12
      %p139 = scmp.lt.s32.totalorder %s12, 3
      %p140 = pnand %p138, %p139
      %p141 = pneg %p140
      // Predicated region
      $region9: #{cross_attention_forward.9} parent=5 // pred_check
        _
      $region10: #{cross_attention_forward.9} parent=5 // pred_check_branch
        %143 = sbr.rel (%p140) target = $region12
      $region11: #{cross_attention_forward.9} parent=5 // pred_region
        %s144 = ssub.s32 %s12, 1
        // Predicated region
        $region13: #{cross_attention_forward.9} parent=11 // pred_check
          %p145 = pneg %p76
        $region14: #{cross_attention_forward.9} parent=11 // pred_check_branch
          %147 = sbr.rel (%p145) target = $region16
        $region15: #{cross_attention_forward.9} parent=11 // pred_region
          %p148 = scmp.lt.s32.totalorder %s22, 0
          %s149 = scalar_select %p148, %s22, 0
          %s150 = smul.addr %s149, 4
          %s151 = scalar_lea.vmem %s1, %s150
        $region16: #{cross_attention_forward.9} parent=11 // pred_fallthru
          _
        // Predicated region
        $region17: #{cross_attention_forward.9} parent=11 // pred_check
          %p152 = pneg %p102
        $region18: #{cross_attention_forward.9} parent=11 // pred_check_branch
          %154 = sbr.rel (%p152) target = $region20
        $region19: #{cross_attention_forward.9} parent=11 // pred_region
          %p155 = scmp.lt.s32.totalorder %s22, 0
          %s156 = scalar_select %p155, %s22, 0
          %s157 = scalar_lea.vmem %s2, %s156
        $region20: #{cross_attention_forward.9} parent=11 // pred_fallthru
          _
      $region12: #{cross_attention_forward.9} parent=5 // pred_fallthru
        _
      %p158 = scmp.lt.s32.totalorder %s12, 2
      // Predicated region
      $region21: #{cross_attention_forward.9} parent=5 // pred_check
        %p159 = pneg %p158
      $region22: #{cross_attention_forward.9} parent=5 // pred_check_branch
        %161 = sbr.rel (%p159) target = $region24
      $region23: #{cross_attention_forward.9} parent=5 // pred_region
        // Predicated region
        $region25: #{cross_attention_forward.9} parent=23 // pred_check
          %p162 = pneg %p44
        $region26: #{cross_attention_forward.9} parent=23 // pred_check_branch
          %164 = sbr.rel (%p162) target = $region28
        $region27: #{cross_attention_forward.9} parent=23 // pred_region
          %p165 = scmp.lt.s32.totalorder %s19, 1
          %s166 = scalar_select %p165, %s19, 1
          %s167 = smul.addr %s166, 4
          %s168 = scalar_lea.vmem %s0, %s167
        $region28: #{cross_attention_forward.9} parent=23 // pred_fallthru
          _
      $region24: #{cross_attention_forward.9} parent=5 // pred_fallthru
        _
      %p169 = scmp.le.s32.totalorder 1, %s12
      %p170 = scmp.lt.s32.totalorder %s12, 3
      %p171 = pnand %p169, %p170
      %p172 = pneg %p171
      // Predicated region
      $region29: #{cross_attention_forward.9} parent=5 // pred_check
        _
      $region30: #{cross_attention_forward.9} parent=5 // pred_check_branch
        %174 = sbr.rel (%p171) target = $region32
      $region31: #{cross_attention_forward.9} parent=5 // pred_region
        %s175 = ssub.s32 %s12, 1
        %p176 = scmp.lt.s32.totalorder %s21, 1
        %s177 = scalar_select %p176, %s21, 1
        %s178 = smul.addr %s177, 4
        %s179 = scalar_lea.vmem %s0, %s178
        %p180 = pneg %p50
        %p181 = pneg %p47
        %p182 = scmp.lt.s32.totalorder %s22, 0
        %s183 = scalar_select %p182, %s22, 0
        %s184 = smul.addr %s183, 4
        %s185 = scalar_lea.vmem %s1, %s184
        %p186 = pneg %p76
        %p187 = pneg %p73
        %p188 = scmp.lt.s32.totalorder %s22, 0
        %s189 = scalar_select %p188, %s22, 0
        %s190 = scalar_lea.vmem %s2, %s189
        %p191 = pneg %p102
        %p192 = pneg %p99
        %p193 = pneg %p130
        %p194 = pneg %p127
        %s195 = sand.u32 %s117, 1
        %s196 = scalar_lea.sflag [#allocation3], %s195
        %s197 = sand.u32 %s117, 1
        %s198 = smul.addr %s197, 8
        %s199 = scalar_lea.vmem [#allocation2], %s198
        %p200 = scmp.lt.s32.totalorder %s21, 1
        %s201 = scalar_select %p200, %s21, 1
        %s202 = smul.addr %s201, 4
        %s203 = scalar_lea.vmem %s0, %s202
        %p204 = scmp.lt.s32.totalorder %s22, 0
        %s205 = scalar_select %p204, %s22, 0
        %s206 = smul.addr %s205, 4
        %s207 = scalar_lea.vmem %s1, %s206
        %p208 = scmp.lt.s32.totalorder %s22, 0
        %s209 = scalar_select %p208, %s22, 0
        %s210 = scalar_lea.vmem %s2, %s209
        %v212 = vld [vmem:[%s203] sm:$0xf]
        %v213 = vld [vmem:[%s207] sm:$0xf]
        %v214 = vld [vmem:[%s207 + $0x4] sm:$0xf]
        %v215 = vld [vmem:[%s207 + $0x8] sm:$0xf]
        %v216 = vld [vmem:[%s207 + $0xc] sm:$0xf]
        %v217 = vld [vmem:[%s207 + $0x10] sm:$0xf]
        %v218 = vld [vmem:[%s207 + $0x14] sm:$0xf]
        %v219 = vld [vmem:[%s207 + $0x18] sm:$0xf]
        %v220 = vld [vmem:[%s207 + $0x1c] sm:$0xf]
        %v221 = vld [vmem:[%s207 + $0x20] sm:$0xf]
        %v222 = vld [vmem:[%s207 + $0x24] sm:$0xf]
        %v223 = vld [vmem:[%s207 + $0x28] sm:$0xf]
        %v224 = vld [vmem:[%s207 + $0x2c] sm:$0xf]
        %v225 = vld [vmem:[%s207 + $0x30] sm:$0xf]
        %v226 = vld [vmem:[%s207 + $0x34] sm:$0xf]
        %v227 = vld [vmem:[%s207 + $0x38] sm:$0xf]
        %v228 = vld [vmem:[%s207 + $0x3c] sm:$0xf]
        %v229 = vld [vmem:[%s210] sm:$0x1]
        %v231 = vlaneseq
        %v232 = vshrl.u32 %v231, 7
        %v233 = vsub.s32 0, %v232
        %v234 = vrot.slane %v229, %v233
        %v252 = vunpack.c.l.b16 %v213
        %v253 = vunpack.c.l.b16 %v214
        %v254 = vunpack.c.l.b16 %v215
        %v255 = vunpack.c.l.b16 %v216
        %v256 = vunpack.c.l.b16 %v217
        %v257 = vunpack.c.l.b16 %v218
        %v258 = vunpack.c.l.b16 %v219
        %v259 = vunpack.c.l.b16 %v220
        %v260 = vunpack.c.l.b16 %v221
        %v261 = vunpack.c.l.b16 %v222
        %v262 = vunpack.c.l.b16 %v223
        %v263 = vunpack.c.l.b16 %v224
        %v264 = vunpack.c.l.b16 %v225
        %v265 = vunpack.c.l.b16 %v226
        %v266 = vunpack.c.l.b16 %v227
        %v267 = vunpack.c.l.b16 %v228
        %v268 = vpack.c.b16 %v253, %v252
        %v269 = vpack.c.b16 %v255, %v254
        %v270 = vpack.c.b16 %v257, %v256
        %v271 = vpack.c.b16 %v259, %v258
        %v272 = vpack.c.b16 %v261, %v260
        %v273 = vpack.c.b16 %v263, %v262
        %v274 = vpack.c.b16 %v265, %v264
        %v275 = vpack.c.b16 %v267, %v266
        %284 = vmatprep.subr.bf16.mxu0 0
        %285 = vmatpush1.bf16.msra.mxu0 %v275
        %286 = vmatprep.subr.bf16.mxu0 0
        %287 = vmatpush1.bf16.msra.mxu0 %v274
        %288 = vmatprep.subr.bf16.mxu0 0
        %289 = vmatpush1.bf16.msra.mxu0 %v273
        %290 = vmatprep.subr.bf16.mxu0 0
        %291 = vmatpush1.bf16.msra.mxu0 %v272
        %292 = vmatprep.subr.bf16.mxu0 0
        %293 = vmatpush1.bf16.msra.mxu0 %v271
        %294 = vmatprep.subr.bf16.mxu0 0
        %295 = vmatpush1.bf16.msra.mxu0 %v270
        %296 = vmatprep.subr.bf16.mxu0 0
        %297 = vmatpush1.bf16.msra.mxu0 %v269
        %298 = vmatprep.subr.bf16.mxu0 0
        %299 = vmatpush1.bf16.msra.mxu0 %v268
        %300 = vmatprep.subr.bf16.mxu0 0
        %301 = vmatpush2.bf16.msra.mxu0 0
        %302 = vmatprep.subr.bf16.mxu0 0
        %303 = vmatpush2.bf16.msra.mxu0 0
        %304 = vmatprep.subr.bf16.mxu0 0
        %305 = vmatpush2.bf16.msra.mxu0 0
        %306 = vmatprep.subr.bf16.mxu0 0
        %307 = vmatpush2.bf16.msra.mxu0 0
        %308 = vmatprep.subr.bf16.mxu0 0
        %309 = vmatpush2.bf16.msra.mxu0 0
        %310 = vmatprep.subr.bf16.mxu0 0
        %311 = vmatpush2.bf16.msra.mxu0 0
        %312 = vmatprep.subr.bf16.mxu0 0
        %313 = vmatpush2.bf16.msra.mxu0 0
        %314 = vmatprep.subr.bf16.mxu0 0
        %315 = vmatpush2.bf16.msra.mxu0 0
        %316 = vmatprep.mubr.bf16.mxu0 0
        %317 = vmatmul.mubr.bf16.gmra.mxu0 %v212
        %v318 = vpop.f32.mrf.mxu0
        %v319 = vadd.f32 %v234, %v318
        %v320 = vpop.f32.mrf.mxu0
        %v321 = vpop.f32.mrf.mxu0
        %v322 = vpop.f32.mrf.mxu0
        %323 = vdwg.mxu0
        %324 = vst [vmem:[%s199] sm:$0xff] %v319
        %s325 = sand.u32 %s117, 1
        %s326 = scalar_lea.sflag [#allocation3], %s325
        %s327 = sand.u32 %s117, 1
        %s328 = smul.addr %s327, 8
        %s329 = scalar_lea.vmem [#allocation2], %s328
        // Predicated region
        $region33: #{cross_attention_forward.9} parent=31 // pred_check
          %p330 = pneg %p127
        $region34: #{cross_attention_forward.9} parent=31 // pred_check_branch
          %332 = sbr.rel (%p330) target = $region36
        $region35: #{cross_attention_forward.9} parent=31 // pred_region
          %s334 = ssub.s32 128, 128
          %335 = vsyncadd %s326, %s334
          %s336 = sadd.s32 %s22, %s21
          %s337 = smul.addr %s336, 128
          %s338 = scalar_lea.hbm %s3, %s337
          %s340 = sshll.u32 %s329, 4
          %s341 = int_to_ptr.vmem [resolvable:$true] %s340
          %343 = dma.vmem_to_hbm [thread:$0]  %s341, 128, %s338, %s326
        $region36: #{cross_attention_forward.9} parent=31 // pred_fallthru
          _
      $region32: #{cross_attention_forward.9} parent=5 // pred_fallthru
        _
      %p344 = scmp.le.s32.totalorder 2, %s12
      // Predicated region
      $region37: #{cross_attention_forward.9} parent=5 // pred_check
        %p345 = pneg %p344
      $region38: #{cross_attention_forward.9} parent=5 // pred_check_branch
        %347 = sbr.rel (%p345) target = $region40
      $region39: #{cross_attention_forward.9} parent=5 // pred_region
        %s348 = ssub.s32 %s12, 2
        // Predicated region
        $region41: #{cross_attention_forward.9} parent=39 // pred_check
          %p349 = pneg %p133
        $region42: #{cross_attention_forward.9} parent=39 // pred_check_branch
          %351 = sbr.rel (%p349) target = $region44
        $region43: #{cross_attention_forward.9} parent=39 // pred_region
          %s352 = sand.u32 %s118, 1
          %s353 = scalar_lea.sflag [#allocation3], %s352
          %s354 = sand.u32 %s118, 1
          %s355 = smul.addr %s354, 8
          %s356 = scalar_lea.vmem [#allocation2], %s355
          %357 = dma.done %s353, 128
        $region44: #{cross_attention_forward.9} parent=39 // pred_fallthru
          _
      $region40: #{cross_attention_forward.9} parent=5 // pred_fallthru
        _
    $region6: #{cross_attention_forward.9} parent=1 // loop_footer
      %s16 = sadd.s32 1, %s12
    $region7: #{cross_attention_forward.9} parent=1 // loop_footer_branch
      %11 = sbr.rel target = $region3
    $region8: #{cross_attention_forward.9} parent=1 // loop_exit
      _
    %358 = vsyncpa [#allocation3], 1
    %s359 = scalar_lea.sflag [#allocation3], 1
    %360 = vsyncpa %s359, 1

// kernel: cross_attention_forward.5
$region0: #{cross_attention_forward.5}
  #allocation0 [shape = 'u32[]', space=smem, size = 0x4, offset = 0x4, fixed_abs, tag = 'smem constant byte address 0x4 - core index']
  #allocation1 [shape = 'u32[144,128]{1,0:T(1,128)}', space=vmem, size = 0x12000, scoped, tag = 'internal scratch']
  %s0 = inlined_call_operand.vmem [shape: f32[16,64], index: 0, kind: input, shape index: {}]
  %s1 = inlined_call_operand.hbm [shape: bf16[64,128], index: 1, kind: input, shape index: {}]
  %s2 = inlined_call_operand.vmem [shape: f32[1,128], index: 2, kind: input, shape index: {}]
  %s3 = inlined_call_operand.vmem [shape: bf16[16,128], index: 3, kind: output, shape index: {}]
  %s4 = sld [smem:[#allocation0]]
  $region49: #{cross_attention_forward.5} parent=0
    _
  %s6 = ssub.s32 1, %s4
  %s7 = scalar_select 0, %s6, %s4
  $region1: #{cross_attention_forward.5} parent=0
    #allocation2 [shape = 'u8[16384]{0}', space=vmem, size = 0x4000, scoped, tag = 'input window, operand 1, single buffered']
    #allocation3 [shape = 's32[2]{0}', space=sflag, size = 0x8, scoped, tag = 'scoped memory for cross_attention_forward.5']
    %8 = vsyncpa [#allocation3], 0
    loop: start=0, step=1, limit=4
    $region2: #{cross_attention_forward.5} parent=1 // loop_pre_header
      _
    $region3: #{cross_attention_forward.5} parent=1 // loop_header
      %s10 = sphi 0, %s14
      %p11 = scmp.ge.s32.totalorder %s10, 4
      %s17 = sphi 0, %s29
      %s18 = sphi 0, %s25
      %s19 = sphi 0, %s17
      %s20 = sphi 0, %s18
      %s21 = sphi 0, %s19
      %s22 = sphi 0, %s20
      %s32 = sphi 0, %s34
      %s35 = sphi 0, %s32
      %s36 = sphi 0, %s35
      %s52 = sphi 0, %s36
      %s58 = sphi 0, %s60
      %s61 = sphi 0, %s58
      %s62 = sphi 0, %s61
      %s78 = sphi 0, %s62
      %s84 = sphi 0, %s86
      %s87 = sphi 0, %s84
      %s88 = sphi 0, %s87
      %s104 = sphi 0, %s88
      %s112 = sphi 0, %s114
      %s115 = sphi 0, %s112
      %s116 = sphi 0, %s115
      %s132 = sphi 0, %s116
    $region4: #{cross_attention_forward.5} parent=1 // loop_header_branch
      %13 = sbr.rel (%p11) target = $region8
    $region5: #{cross_attention_forward.5} parent=1 // loop_body
      %s15 = ssub.s32 %s10, 1
      %s16 = ssub.s32 %s10, 2
      %s23 = sadd.s32 1, %s18
      %p24 = scmp.ge.s32.totalorder %s23, 1
      %s25 = scalar_select %p24, 0, %s23
      %s26 = sadd.s32 1, %s17
      %s27 = scalar_select %p24, %s26, %s17
      %p28 = scmp.ge.s32.totalorder %s27, 2
      %s29 = scalar_select %p28, 0, %s27
      %s30 = ssub.s32 %s17, %s29
      %p31 = scmp.eq.s32.totalorder %s30, 0
      %s33 = sadd.s32 %s32, 1
      %s34 = scalar_select %p31, %s32, %s33
      %p37 = pneg %p31
      %p38 = scmp.eq.s32.totalorder %s10, 1
      %p39 = por %p37, %p38
      %p40 = scmp.ne.s32.totalorder %s32, %s35
      %p41 = scmp.eq.s32.totalorder %s10, 0
      %p42 = por %p40, %p41
      %p43 = scmp.ne.s32.totalorder %s32, %s35
      %p44 = scmp.eq.s32.totalorder %s15, 1
      %p45 = por %p43, %p44
      %p46 = scmp.ne.s32.totalorder %s35, %s36
      %p47 = scmp.eq.s32.totalorder %s15, 0
      %p48 = por %p46, %p47
      %p49 = scmp.ne.s32.totalorder %s35, %s36
      %p50 = scmp.eq.s32.totalorder %s16, 1
      %p51 = por %p49, %p50
      %p53 = scmp.ne.s32.totalorder %s36, %s52
      %p54 = scmp.eq.s32.totalorder %s16, 0
      %p55 = por %p53, %p54
      %s56 = ssub.s32 %s18, %s25
      %p57 = scmp.eq.s32.totalorder %s56, 0
      %s59 = sadd.s32 %s58, 1
      %s60 = scalar_select %p57, %s58, %s59
      %p63 = pneg %p57
      %p64 = scmp.eq.s32.totalorder %s10, 1
      %p65 = por %p63, %p64
      %p66 = scmp.ne.s32.totalorder %s58, %s61
      %p67 = scmp.eq.s32.totalorder %s10, 0
      %p68 = por %p66, %p67
      %p69 = scmp.ne.s32.totalorder %s58, %s61
      %p70 = scmp.eq.s32.totalorder %s15, 1
      %p71 = por %p69, %p70
      %p72 = scmp.ne.s32.totalorder %s61, %s62
      %p73 = scmp.eq.s32.totalorder %s15, 0
      %p74 = por %p72, %p73
      %p75 = scmp.ne.s32.totalorder %s61, %s62
      %p76 = scmp.eq.s32.totalorder %s16, 1
      %p77 = por %p75, %p76
      %p79 = scmp.ne.s32.totalorder %s62, %s78
      %p80 = scmp.eq.s32.totalorder %s16, 0
      %p81 = por %p79, %p80
      %s82 = ssub.s32 %s18, %s25
      %p83 = scmp.eq.s32.totalorder %s82, 0
      %s85 = sadd.s32 %s84, 1
      %s86 = scalar_select %p83, %s84, %s85
      %p89 = pneg %p83
      %p90 = scmp.eq.s32.totalorder %s10, 1
      %p91 = por %p89, %p90
      %p92 = scmp.ne.s32.totalorder %s84, %s87
      %p93 = scmp.eq.s32.totalorder %s10, 0
      %p94 = por %p92, %p93
      %p95 = scmp.ne.s32.totalorder %s84, %s87
      %p96 = scmp.eq.s32.totalorder %s15, 1
      %p97 = por %p95, %p96
      %p98 = scmp.ne.s32.totalorder %s87, %s88
      %p99 = scmp.eq.s32.totalorder %s15, 0
      %p100 = por %p98, %p99
      %p101 = scmp.ne.s32.totalorder %s87, %s88
      %p102 = scmp.eq.s32.totalorder %s16, 1
      %p103 = por %p101, %p102
      %p105 = scmp.ne.s32.totalorder %s88, %s104
      %p106 = scmp.eq.s32.totalorder %s16, 0
      %p107 = por %p105, %p106
      %s108 = ssub.s32 %s17, %s29
      %s109 = ssub.s32 %s18, %s25
      %s110 = sor.u32 %s108, %s109
      %p111 = scmp.eq.s32.totalorder %s110, 0
      %s113 = sadd.s32 %s112, 1
      %s114 = scalar_select %p111, %s112, %s113
      %p117 = pneg %p111
      %p118 = scmp.eq.s32.totalorder %s10, 1
      %p119 = por %p117, %p118
      %p120 = scmp.ne.s32.totalorder %s112, %s115
      %p121 = scmp.eq.s32.totalorder %s10, 0
      %p122 = por %p120, %p121
      %p123 = scmp.ne.s32.totalorder %s112, %s115
      %p124 = scmp.eq.s32.totalorder %s15, 1
      %p125 = por %p123, %p124
      %p126 = scmp.ne.s32.totalorder %s115, %s116
      %p127 = scmp.eq.s32.totalorder %s15, 0
      %p128 = por %p126, %p127
      %p129 = scmp.ne.s32.totalorder %s115, %s116
      %p130 = scmp.eq.s32.totalorder %s16, 1
      %p131 = por %p129, %p130
      %p133 = scmp.ne.s32.totalorder %s116, %s132
      %p134 = scmp.eq.s32.totalorder %s16, 0
      %p135 = por %p133, %p134
      %p136 = scmp.le.s32.totalorder 1, %s10
      %p137 = scmp.lt.s32.totalorder %s10, 3
      %p138 = pnand %p136, %p137
      %p139 = pneg %p138
      // Predicated region
      $region9: #{cross_attention_forward.5} parent=5 // pred_check
        _
      $region10: #{cross_attention_forward.5} parent=5 // pred_check_branch
        %141 = sbr.rel (%p138) target = $region12
      $region11: #{cross_attention_forward.5} parent=5 // pred_region
        %s142 = ssub.s32 %s10, 1
        // Predicated region
        $region13: #{cross_attention_forward.5} parent=11 // pred_check
          %p143 = pneg %p74
        $region14: #{cross_attention_forward.5} parent=11 // pred_check_branch
          %145 = sbr.rel (%p143) target = $region16
        $region15: #{cross_attention_forward.5} parent=11 // pred_region
          %s147 = ssub.s32 512, 512
          %148 = vsyncadd [#allocation3], %s147
          %s149 = smul.addr %s20, 64
          %s150 = scalar_lea.hbm %s1, %s149
          %s151 = sshll.u32 [#allocation2], 4
          %s152 = int_to_ptr.vmem [resolvable:$true] %s151
          %157 = dma.hbm_to_vmem [thread:$0]  %s150, 512, %s152, [#allocation3], 64, 64, 4
        $region16: #{cross_attention_forward.5} parent=11 // pred_fallthru
          _
        // Predicated region
        $region17: #{cross_attention_forward.5} parent=11 // pred_check
          %p158 = pneg %p100
        $region18: #{cross_attention_forward.5} parent=11 // pred_check_branch
          %160 = sbr.rel (%p158) target = $region20
        $region19: #{cross_attention_forward.5} parent=11 // pred_region
          %p161 = scmp.lt.s32.totalorder %s20, 0
          %s162 = scalar_select %p161, %s20, 0
          %s163 = scalar_lea.vmem %s2, %s162
        $region20: #{cross_attention_forward.5} parent=11 // pred_fallthru
          _
      $region12: #{cross_attention_forward.5} parent=5 // pred_fallthru
        _
      %p164 = scmp.lt.s32.totalorder %s10, 2
      // Predicated region
      $region21: #{cross_attention_forward.5} parent=5 // pred_check
        %p165 = pneg %p164
      $region22: #{cross_attention_forward.5} parent=5 // pred_check_branch
        %167 = sbr.rel (%p165) target = $region24
      $region23: #{cross_attention_forward.5} parent=5 // pred_region
        // Predicated region
        $region25: #{cross_attention_forward.5} parent=23 // pred_check
          %p168 = pneg %p42
        $region26: #{cross_attention_forward.5} parent=23 // pred_check_branch
          %170 = sbr.rel (%p168) target = $region28
        $region27: #{cross_attention_forward.5} parent=23 // pred_region
          %p171 = scmp.lt.s32.totalorder %s17, 1
          %s172 = scalar_select %p171, %s17, 1
          %s173 = smul.addr %s172, 8
          %s174 = scalar_lea.vmem %s0, %s173
        $region28: #{cross_attention_forward.5} parent=23 // pred_fallthru
          _
      $region24: #{cross_attention_forward.5} parent=5 // pred_fallthru
        _
      %p175 = scmp.le.s32.totalorder 1, %s10
      %p176 = scmp.lt.s32.totalorder %s10, 3
      %p177 = pnand %p175, %p176
      %p178 = pneg %p177
      // Predicated region
      $region29: #{cross_attention_forward.5} parent=5 // pred_check
        _
      $region30: #{cross_attention_forward.5} parent=5 // pred_check_branch
        %180 = sbr.rel (%p177) target = $region32
      $region31: #{cross_attention_forward.5} parent=5 // pred_region
        %s181 = ssub.s32 %s10, 1
        // Predicated region
        $region33: #{cross_attention_forward.5} parent=31 // pred_check
          %p182 = pneg %p74
        $region34: #{cross_attention_forward.5} parent=31 // pred_check_branch
          %184 = sbr.rel (%p182) target = $region36
        $region35: #{cross_attention_forward.5} parent=31 // pred_region
          %185 = dma.done [#allocation3], 512
        $region36: #{cross_attention_forward.5} parent=31 // pred_fallthru
          _
        %p186 = scmp.lt.s32.totalorder %s19, 1
        %s187 = scalar_select %p186, %s19, 1
        %s188 = smul.addr %s187, 8
        %s189 = scalar_lea.vmem %s0, %s188
        %p190 = pneg %p48
        %p191 = pneg %p45
        %p192 = pneg %p74
        %p193 = pneg %p71
        %p194 = scmp.lt.s32.totalorder %s20, 0
        %s195 = scalar_select %p194, %s20, 0
        %s196 = scalar_lea.vmem %s2, %s195
        %p197 = pneg %p100
        %p198 = pneg %p97
        %p199 = pneg %p128
        %p200 = pneg %p125
        %p201 = scmp.lt.s32.totalorder %s19, 1
        %s202 = scalar_select %p201, %s19, 1
        %p203 = scmp.lt.s32.totalorder %s20, 0
        %s204 = scalar_select %p203, %s20, 0
        %s205 = sadd.s32 %s204, %s202
        %s206 = smul.addr %s205, 4
        %s207 = scalar_lea.vmem %s3, %s206
        %p208 = scmp.lt.s32.totalorder %s19, 1
        %s209 = scalar_select %p208, %s19, 1
        %s210 = smul.addr %s209, 8
        %s211 = scalar_lea.vmem %s0, %s210
        %p212 = scmp.lt.s32.totalorder %s20, 0
        %s213 = scalar_select %p212, %s20, 0
        %s214 = scalar_lea.vmem %s2, %s213
        %p215 = scmp.lt.s32.totalorder %s19, 1
        %s216 = scalar_select %p215, %s19, 1
        %p217 = scmp.lt.s32.totalorder %s20, 0
        %s218 = scalar_select %p217, %s20, 0
        %s219 = sadd.s32 %s218, %s216
        %s220 = smul.addr %s219, 4
        %s221 = scalar_lea.vmem %s3, %s220
        %v223 = vld [vmem:[%s211] sm:$0xff]
        %v224 = vpack.c.bf16 %v223, %v223
        %v225 = vld [vmem:[#allocation2] sm:$0xf]
        %v226 = vld [vmem:[#allocation2 + $0x4] sm:$0xf]
        %v227 = vld [vmem:[#allocation2 + $0x8] sm:$0xf]
        %v228 = vld [vmem:[#allocation2 + $0xc] sm:$0xf]
        %v229 = vld [vmem:[#allocation2 + $0x10] sm:$0xf]
        %v230 = vld [vmem:[#allocation2 + $0x14] sm:$0xf]
        %v231 = vld [vmem:[#allocation2 + $0x18] sm:$0xf]
        %v232 = vld [vmem:[#allocation2 + $0x1c] sm:$0xf]
        %v233 = vld [vmem:[%s214] sm:$0x1]
        %v235 = vlaneseq
        %v236 = vshrl.u32 %v235, 7
        %v237 = vsub.s32 0, %v236
        %v238 = vrot.slane %v233, %v237
        %v248 = vunpack.c.l.b16 %v225
        %v249 = vunpack.c.l.b16 %v226
        %v250 = vunpack.c.l.b16 %v227
        %v251 = vunpack.c.l.b16 %v228
        %v252 = vunpack.c.l.b16 %v229
        %v253 = vunpack.c.l.b16 %v230
        %v254 = vunpack.c.l.b16 %v231
        %v255 = vunpack.c.l.b16 %v232
        %v256 = vpack.c.b16 %v249, %v248
        %v257 = vpack.c.b16 %v251, %v250
        %v258 = vpack.c.b16 %v253, %v252
        %v259 = vpack.c.b16 %v255, %v254
        %vm264 = vcmask 523264
        %v266 = vsel %vm264, %v224, 0
        %268 = vmatprep.subr.bf16.mxu0 0
        %269 = vmatpush1.bf16.msra.mxu0 0
        %270 = vmatprep.subr.bf16.mxu0 0
        %271 = vmatpush1.bf16.msra.mxu0 0
        %272 = vmatprep.subr.bf16.mxu0 0
        %273 = vmatpush1.bf16.msra.mxu0 0
        %274 = vmatprep.subr.bf16.mxu0 0
        %275 = vmatpush1.bf16.msra.mxu0 0
        %276 = vmatprep.subr.bf16.mxu0 0
        %277 = vmatpush1.bf16.msra.mxu0 %v259
        %278 = vmatprep.subr.bf16.mxu0 0
        %279 = vmatpush1.bf16.msra.mxu0 %v258
        %280 = vmatprep.subr.bf16.mxu0 0
        %281 = vmatpush1.bf16.msra.mxu0 %v257
        %282 = vmatprep.subr.bf16.mxu0 0
        %283 = vmatpush1.bf16.msra.mxu0 %v256
        %284 = vmatprep.subr.bf16.mxu0 0
        %285 = vmatpush2.bf16.msra.mxu0 0
        %286 = vmatprep.subr.bf16.mxu0 0
        %287 = vmatpush2.bf16.msra.mxu0 0
        %288 = vmatprep.subr.bf16.mxu0 0
        %289 = vmatpush2.bf16.msra.mxu0 0
        %290 = vmatprep.subr.bf16.mxu0 0
        %291 = vmatpush2.bf16.msra.mxu0 0
        %292 = vmatprep.subr.bf16.mxu0 0
        %293 = vmatpush2.bf16.msra.mxu0 0
        %294 = vmatprep.subr.bf16.mxu0 0
        %295 = vmatpush2.bf16.msra.mxu0 0
        %296 = vmatprep.subr.bf16.mxu0 0
        %297 = vmatpush2.bf16.msra.mxu0 0
        %298 = vmatprep.subr.bf16.mxu0 0
        %299 = vmatpush2.bf16.msra.mxu0 0
        %300 = vmatprep.mubr.bf16.mxu0 0
        %301 = vmatmul.mubr.bf16.gmra.mxu0 %v266
        %v302 = vpop.f32.mrf.mxu0
        %v303 = vadd.f32 %v238, %v302
        %v304 = vpop.f32.mrf.mxu0
        %v305 = vpop.f32.mrf.mxu0
        %v306 = vpop.f32.mrf.mxu0
        %307 = vdwg.mxu0
        %v308 = vpack.c.bf16 %v303, %v303
        %309 = vst [vmem:[%s221] sm:$0xf] %v308
        %p310 = scmp.lt.s32.totalorder %s19, 1
        %s311 = scalar_select %p310, %s19, 1
        %p312 = scmp.lt.s32.totalorder %s20, 0
        %s313 = scalar_select %p312, %s20, 0
        %s314 = sadd.s32 %s313, %s311
        %s315 = smul.addr %s314, 4
        %s316 = scalar_lea.vmem %s3, %s315
        // Predicated region
        $region37: #{cross_attention_forward.5} parent=31 // pred_check
          %p317 = pneg %p125
        $region38: #{cross_attention_forward.5} parent=31 // pred_check_branch
          %319 = sbr.rel (%p317) target = $region40
        $region39: #{cross_attention_forward.5} parent=31 // pred_region
          _
        $region40: #{cross_attention_forward.5} parent=31 // pred_fallthru
          _
      $region32: #{cross_attention_forward.5} parent=5 // pred_fallthru
        _
      %p320 = scmp.le.s32.totalorder 2, %s10
      // Predicated region
      $region41: #{cross_attention_forward.5} parent=5 // pred_check
        %p321 = pneg %p320
      $region42: #{cross_attention_forward.5} parent=5 // pred_check_branch
        %323 = sbr.rel (%p321) target = $region44
      $region43: #{cross_attention_forward.5} parent=5 // pred_region
        %s324 = ssub.s32 %s10, 2
        // Predicated region
        $region45: #{cross_attention_forward.5} parent=43 // pred_check
          %p325 = pneg %p131
        $region46: #{cross_attention_forward.5} parent=43 // pred_check_branch
          %327 = sbr.rel (%p325) target = $region48
        $region47: #{cross_attention_forward.5} parent=43 // pred_region
          %p328 = scmp.lt.s32.totalorder %s21, 1
          %s329 = scalar_select %p328, %s21, 1
          %p330 = scmp.lt.s32.totalorder %s22, 0
          %s331 = scalar_select %p330, %s22, 0
          %s332 = sadd.s32 %s331, %s329
          %s333 = smul.addr %s332, 4
          %s334 = scalar_lea.vmem %s3, %s333
        $region48: #{cross_attention_forward.5} parent=43 // pred_fallthru
          _
      $region44: #{cross_attention_forward.5} parent=5 // pred_fallthru
        _
    $region6: #{cross_attention_forward.5} parent=1 // loop_footer
      %s14 = sadd.s32 1, %s10
    $region7: #{cross_attention_forward.5} parent=1 // loop_footer_branch
      %9 = sbr.rel target = $region3
    $region8: #{cross_attention_forward.5} parent=1 // loop_exit
      _
    %335 = vsyncpa [#allocation3], 1
    %s336 = scalar_lea.sflag [#allocation3], 1
    %337 = vsyncpa %s336, 1

// kernel: cross_attention_forward.6
$region0: #{cross_attention_forward.6}
  #allocation0 [shape = 'u32[]', space=smem, size = 0x4, offset = 0x4, fixed_abs, tag = 'smem constant byte address 0x4 - core index']
  #allocation1 [shape = 'u32[144,128]{1,0:T(1,128)}', space=vmem, size = 0x12000, scoped, tag = 'internal scratch']
  %s0 = inlined_call_operand.vmem [shape: f32[32,64], index: 0, kind: input, shape index: {}]
  %s1 = inlined_call_operand.vmem [shape: bf16[64,128], index: 1, kind: input, shape index: {}]
  %s2 = inlined_call_operand.vmem [shape: f32[1,128], index: 2, kind: input, shape index: {}]
  %s3 = inlined_call_operand.vmem [shape: bf16[32,128], index: 3, kind: output, shape index: {}]
  %s4 = sld [smem:[#allocation0]]
  $region45: #{cross_attention_forward.6} parent=0
    _
  %s6 = ssub.s32 1, %s4
  %s7 = scalar_select 0, %s6, %s4
  loop: start=0, step=1, limit=4
  $region2: #{cross_attention_forward.6} parent=0 // loop_pre_header
    _
  $region3: #{cross_attention_forward.6} parent=0 // loop_header
    %s9 = sphi 0, %s13
    %p10 = scmp.ge.s32.totalorder %s9, 4
    %s16 = sphi 0, %s28
    %s17 = sphi 0, %s24
    %s18 = sphi 0, %s16
    %s19 = sphi 0, %s17
    %s20 = sphi 0, %s18
    %s21 = sphi 0, %s19
    %s31 = sphi 0, %s33
    %s34 = sphi 0, %s31
    %s35 = sphi 0, %s34
    %s51 = sphi 0, %s35
    %s57 = sphi 0, %s59
    %s60 = sphi 0, %s57
    %s61 = sphi 0, %s60
    %s77 = sphi 0, %s61
    %s83 = sphi 0, %s85
    %s86 = sphi 0, %s83
    %s87 = sphi 0, %s86
    %s103 = sphi 0, %s87
    %s111 = sphi 0, %s113
    %s114 = sphi 0, %s111
    %s115 = sphi 0, %s114
    %s131 = sphi 0, %s115
  $region4: #{cross_attention_forward.6} parent=0 // loop_header_branch
    %12 = sbr.rel (%p10) target = $region8
  $region5: #{cross_attention_forward.6} parent=0 // loop_body
    %s14 = ssub.s32 %s9, 1
    %s15 = ssub.s32 %s9, 2
    %s22 = sadd.s32 1, %s17
    %p23 = scmp.ge.s32.totalorder %s22, 1
    %s24 = scalar_select %p23, 0, %s22
    %s25 = sadd.s32 1, %s16
    %s26 = scalar_select %p23, %s25, %s16
    %p27 = scmp.ge.s32.totalorder %s26, 2
    %s28 = scalar_select %p27, 0, %s26
    %s29 = ssub.s32 %s16, %s28
    %p30 = scmp.eq.s32.totalorder %s29, 0
    %s32 = sadd.s32 %s31, 1
    %s33 = scalar_select %p30, %s31, %s32
    %p36 = pneg %p30
    %p37 = scmp.eq.s32.totalorder %s9, 1
    %p38 = por %p36, %p37
    %p39 = scmp.ne.s32.totalorder %s31, %s34
    %p40 = scmp.eq.s32.totalorder %s9, 0
    %p41 = por %p39, %p40
    %p42 = scmp.ne.s32.totalorder %s31, %s34
    %p43 = scmp.eq.s32.totalorder %s14, 1
    %p44 = por %p42, %p43
    %p45 = scmp.ne.s32.totalorder %s34, %s35
    %p46 = scmp.eq.s32.totalorder %s14, 0
    %p47 = por %p45, %p46
    %p48 = scmp.ne.s32.totalorder %s34, %s35
    %p49 = scmp.eq.s32.totalorder %s15, 1
    %p50 = por %p48, %p49
    %p52 = scmp.ne.s32.totalorder %s35, %s51
    %p53 = scmp.eq.s32.totalorder %s15, 0
    %p54 = por %p52, %p53
    %s55 = ssub.s32 %s17, %s24
    %p56 = scmp.eq.s32.totalorder %s55, 0
    %s58 = sadd.s32 %s57, 1
    %s59 = scalar_select %p56, %s57, %s58
    %p62 = pneg %p56
    %p63 = scmp.eq.s32.totalorder %s9, 1
    %p64 = por %p62, %p63
    %p65 = scmp.ne.s32.totalorder %s57, %s60
    %p66 = scmp.eq.s32.totalorder %s9, 0
    %p67 = por %p65, %p66
    %p68 = scmp.ne.s32.totalorder %s57, %s60
    %p69 = scmp.eq.s32.totalorder %s14, 1
    %p70 = por %p68, %p69
    %p71 = scmp.ne.s32.totalorder %s60, %s61
    %p72 = scmp.eq.s32.totalorder %s14, 0
    %p73 = por %p71, %p72
    %p74 = scmp.ne.s32.totalorder %s60, %s61
    %p75 = scmp.eq.s32.totalorder %s15, 1
    %p76 = por %p74, %p75
    %p78 = scmp.ne.s32.totalorder %s61, %s77
    %p79 = scmp.eq.s32.totalorder %s15, 0
    %p80 = por %p78, %p79
    %s81 = ssub.s32 %s17, %s24
    %p82 = scmp.eq.s32.totalorder %s81, 0
    %s84 = sadd.s32 %s83, 1
    %s85 = scalar_select %p82, %s83, %s84
    %p88 = pneg %p82
    %p89 = scmp.eq.s32.totalorder %s9, 1
    %p90 = por %p88, %p89
    %p91 = scmp.ne.s32.totalorder %s83, %s86
    %p92 = scmp.eq.s32.totalorder %s9, 0
    %p93 = por %p91, %p92
    %p94 = scmp.ne.s32.totalorder %s83, %s86
    %p95 = scmp.eq.s32.totalorder %s14, 1
    %p96 = por %p94, %p95
    %p97 = scmp.ne.s32.totalorder %s86, %s87
    %p98 = scmp.eq.s32.totalorder %s14, 0
    %p99 = por %p97, %p98
    %p100 = scmp.ne.s32.totalorder %s86, %s87
    %p101 = scmp.eq.s32.totalorder %s15, 1
    %p102 = por %p100, %p101
    %p104 = scmp.ne.s32.totalorder %s87, %s103
    %p105 = scmp.eq.s32.totalorder %s15, 0
    %p106 = por %p104, %p105
    %s107 = ssub.s32 %s16, %s28
    %s108 = ssub.s32 %s17, %s24
    %s109 = sor.u32 %s107, %s108
    %p110 = scmp.eq.s32.totalorder %s109, 0
    %s112 = sadd.s32 %s111, 1
    %s113 = scalar_select %p110, %s111, %s112
    %p116 = pneg %p110
    %p117 = scmp.eq.s32.totalorder %s9, 1
    %p118 = por %p116, %p117
    %p119 = scmp.ne.s32.totalorder %s111, %s114
    %p120 = scmp.eq.s32.totalorder %s9, 0
    %p121 = por %p119, %p120
    %p122 = scmp.ne.s32.totalorder %s111, %s114
    %p123 = scmp.eq.s32.totalorder %s14, 1
    %p124 = por %p122, %p123
    %p125 = scmp.ne.s32.totalorder %s114, %s115
    %p126 = scmp.eq.s32.totalorder %s14, 0
    %p127 = por %p125, %p126
    %p128 = scmp.ne.s32.totalorder %s114, %s115
    %p129 = scmp.eq.s32.totalorder %s15, 1
    %p130 = por %p128, %p129
    %p132 = scmp.ne.s32.totalorder %s115, %s131
    %p133 = scmp.eq.s32.totalorder %s15, 0
    %p134 = por %p132, %p133
    %p135 = scmp.le.s32.totalorder 1, %s9
    %p136 = scmp.lt.s32.totalorder %s9, 3
    %p137 = pnand %p135, %p136
    %p138 = pneg %p137
    // Predicated region
    $region9: #{cross_attention_forward.6} parent=5 // pred_check
      _
    $region10: #{cross_attention_forward.6} parent=5 // pred_check_branch
      %140 = sbr.rel (%p137) target = $region12
    $region11: #{cross_attention_forward.6} parent=5 // pred_region
      %s141 = ssub.s32 %s9, 1
      // Predicated region
      $region13: #{cross_attention_forward.6} parent=11 // pred_check
        %p142 = pneg %p73
      $region14: #{cross_attention_forward.6} parent=11 // pred_check_branch
        %144 = sbr.rel (%p142) target = $region16
      $region15: #{cross_attention_forward.6} parent=11 // pred_region
        %p145 = scmp.lt.s32.totalorder %s19, 0
        %s146 = scalar_select %p145, %s19, 0
        %s147 = smul.addr %s146, 4
        %s148 = scalar_lea.vmem %s1, %s147
      $region16: #{cross_attention_forward.6} parent=11 // pred_fallthru
        _
      // Predicated region
      $region17: #{cross_attention_forward.6} parent=11 // pred_check
        %p149 = pneg %p99
      $region18: #{cross_attention_forward.6} parent=11 // pred_check_branch
        %151 = sbr.rel (%p149) target = $region20
      $region19: #{cross_attention_forward.6} parent=11 // pred_region
        %p152 = scmp.lt.s32.totalorder %s19, 0
        %s153 = scalar_select %p152, %s19, 0
        %s154 = scalar_lea.vmem %s2, %s153
      $region20: #{cross_attention_forward.6} parent=11 // pred_fallthru
        _
    $region12: #{cross_attention_forward.6} parent=5 // pred_fallthru
      _
    %p155 = scmp.lt.s32.totalorder %s9, 2
    // Predicated region
    $region21: #{cross_attention_forward.6} parent=5 // pred_check
      %p156 = pneg %p155
    $region22: #{cross_attention_forward.6} parent=5 // pred_check_branch
      %158 = sbr.rel (%p156) target = $region24
    $region23: #{cross_attention_forward.6} parent=5 // pred_region
      // Predicated region
      $region25: #{cross_attention_forward.6} parent=23 // pred_check
        %p159 = pneg %p41
      $region26: #{cross_attention_forward.6} parent=23 // pred_check_branch
        %161 = sbr.rel (%p159) target = $region28
      $region27: #{cross_attention_forward.6} parent=23 // pred_region
        %s162 = smul.u32 2, %s16
        %p163 = scmp.lt.s32.totalorder %s162, 3
        %s164 = scalar_select %p163, %s162, 3
        %s165 = smul.addr %s164, 8
        %s166 = scalar_lea.vmem %s0, %s165
        %s167 = smul.u32 2, %s16
      $region28: #{cross_attention_forward.6} parent=23 // pred_fallthru
        _
    $region24: #{cross_attention_forward.6} parent=5 // pred_fallthru
      _
    %p168 = scmp.le.s32.totalorder 1, %s9
    %p169 = scmp.lt.s32.totalorder %s9, 3
    %p170 = pnand %p168, %p169
    %p171 = pneg %p170
    // Predicated region
    $region29: #{cross_attention_forward.6} parent=5 // pred_check
      _
    $region30: #{cross_attention_forward.6} parent=5 // pred_check_branch
      %173 = sbr.rel (%p170) target = $region32
    $region31: #{cross_attention_forward.6} parent=5 // pred_region
      %s174 = ssub.s32 %s9, 1
      %s175 = smul.u32 2, %s18
      %p176 = scmp.lt.s32.totalorder %s175, 3
      %s177 = scalar_select %p176, %s175, 3
      %s178 = smul.addr %s177, 8
      %s179 = scalar_lea.vmem %s0, %s178
      %p180 = pneg %p47
      %p181 = pneg %p44
      %p182 = scmp.lt.s32.totalorder %s19, 0
      %s183 = scalar_select %p182, %s19, 0
      %s184 = smul.addr %s183, 4
      %s185 = scalar_lea.vmem %s1, %s184
      %p186 = pneg %p73
      %p187 = pneg %p70
      %p188 = scmp.lt.s32.totalorder %s19, 0
      %s189 = scalar_select %p188, %s19, 0
      %s190 = scalar_lea.vmem %s2, %s189
      %p191 = pneg %p99
      %p192 = pneg %p96
      %p193 = pneg %p127
      %p194 = pneg %p124
      %s195 = smul.u32 2, %s18
      %p196 = scmp.lt.s32.totalorder %s195, 3
      %s197 = scalar_select %p196, %s195, 3
      %p198 = scmp.lt.s32.totalorder %s19, 0
      %s199 = scalar_select %p198, %s19, 0
      %s200 = sadd.s32 %s199, %s197
      %s201 = smul.addr %s200, 4
      %s202 = scalar_lea.vmem %s3, %s201
      %s203 = smul.u32 2, %s18
      %p204 = scmp.lt.s32.totalorder %s203, 3
      %s205 = scalar_select %p204, %s203, 3
      %s206 = smul.addr %s205, 8
      %s207 = scalar_lea.vmem %s0, %s206
      %s208 = smul.u32 2, %s18
      %p209 = scmp.lt.s32.totalorder %s19, 0
      %s210 = scalar_select %p209, %s19, 0
      %s211 = smul.addr %s210, 4
      %s212 = scalar_lea.vmem %s1, %s211
      %p213 = scmp.lt.s32.totalorder %s19, 0
      %s214 = scalar_select %p213, %s19, 0
      %s215 = scalar_lea.vmem %s2, %s214
      %s216 = smul.u32 2, %s18
      %p217 = scmp.lt.s32.totalorder %s216, 3
      %s218 = scalar_select %p217, %s216, 3
      %p219 = scmp.lt.s32.totalorder %s19, 0
      %s220 = scalar_select %p219, %s19, 0
      %s221 = sadd.s32 %s220, %s218
      %s222 = smul.addr %s221, 4
      %s223 = scalar_lea.vmem %s3, %s222
      %s224 = smul.u32 2, %s18
      %v226 = vld [vmem:[%s207] sm:$0xff]
      %v227 = vld [vmem:[%s207 + $0x8] sm:$0xff]
      %v228 = vpack.c.bf16 %v227, %v226
      %v229 = vld [vmem:[%s212] sm:$0xf]
      %v230 = vld [vmem:[%s212 + $0x4] sm:$0xf]
      %v231 = vld [vmem:[%s212 + $0x8] sm:$0xf]
      %v232 = vld [vmem:[%s212 + $0xc] sm:$0xf]
      %v233 = vld [vmem:[%s212 + $0x10] sm:$0xf]
      %v234 = vld [vmem:[%s212 + $0x14] sm:$0xf]
      %v235 = vld [vmem:[%s212 + $0x18] sm:$0xf]
      %v236 = vld [vmem:[%s212 + $0x1c] sm:$0xf]
      %v237 = vld [vmem:[%s215] sm:$0x1]
      %v239 = vlaneseq
      %v240 = vshrl.u32 %v239, 7
      %v241 = vsub.s32 0, %v240
      %v242 = vrot.slane %v237, %v241
      %v252 = vunpack.c.l.b16 %v229
      %v253 = vunpack.c.l.b16 %v230
      %v254 = vunpack.c.l.b16 %v231
      %v255 = vunpack.c.l.b16 %v232
      %v256 = vunpack.c.l.b16 %v233
      %v257 = vunpack.c.l.b16 %v234
      %v258 = vunpack.c.l.b16 %v235
      %v259 = vunpack.c.l.b16 %v236
      %v260 = vpack.c.b16 %v253, %v252
      %v261 = vpack.c.b16 %v255, %v254
      %v262 = vpack.c.b16 %v257, %v256
      %v263 = vpack.c.b16 %v259, %v258
      %vm268 = vcmask 523264
      %v270 = vsel %vm268, %v228, 0
      %272 = vmatprep.subr.bf16.mxu0 0
      %273 = vmatpush1.bf16.msra.mxu0 0
      %274 = vmatprep.subr.bf16.mxu0 0
      %275 = vmatpush1.bf16.msra.mxu0 0
      %276 = vmatprep.subr.bf16.mxu0 0
      %277 = vmatpush1.bf16.msra.mxu0 0
      %278 = vmatprep.subr.bf16.mxu0 0
      %279 = vmatpush1.bf16.msra.mxu0 0
      %280 = vmatprep.subr.bf16.mxu0 0
      %281 = vmatpush1.bf16.msra.mxu0 %v263
      %282 = vmatprep.subr.bf16.mxu0 0
      %283 = vmatpush1.bf16.msra.mxu0 %v262
      %284 = vmatprep.subr.bf16.mxu0 0
      %285 = vmatpush1.bf16.msra.mxu0 %v261
      %286 = vmatprep.subr.bf16.mxu0 0
      %287 = vmatpush1.bf16.msra.mxu0 %v260
      %288 = vmatprep.subr.bf16.mxu0 0
      %289 = vmatpush2.bf16.msra.mxu0 0
      %290 = vmatprep.subr.bf16.mxu0 0
      %291 = vmatpush2.bf16.msra.mxu0 0
      %292 = vmatprep.subr.bf16.mxu0 0
      %293 = vmatpush2.bf16.msra.mxu0 0
      %294 = vmatprep.subr.bf16.mxu0 0
      %295 = vmatpush2.bf16.msra.mxu0 0
      %296 = vmatprep.subr.bf16.mxu0 0
      %297 = vmatpush2.bf16.msra.mxu0 0
      %298 = vmatprep.subr.bf16.mxu0 0
      %299 = vmatpush2.bf16.msra.mxu0 0
      %300 = vmatprep.subr.bf16.mxu0 0
      %301 = vmatpush2.bf16.msra.mxu0 0
      %302 = vmatprep.subr.bf16.mxu0 0
      %303 = vmatpush2.bf16.msra.mxu0 0
      %304 = vmatprep.mubr.bf16.mxu0 0
      %305 = vmatmul.mubr.bf16.gmra.mxu0 %v270
      %v306 = vpop.f32.mrf.mxu0
      %v307 = vadd.f32 %v242, %v306
      %v308 = vpop.f32.mrf.mxu0
      %v309 = vpop.f32.mrf.mxu0
      %v310 = vadd.f32 %v242, %v309
      %v311 = vpop.f32.mrf.mxu0
      %312 = vdwg.mxu0
      %v313 = vpack.c.bf16 %v310, %v307
      %v315 = vunpack.c.l.b16 %v313
      %v316 = vunpack.c.h.b16 %v313
      %v317 = vpack.c.b16 %v315, %v315
      %v318 = vpack.c.b16 %v316, %v316
      %321 = vst [vmem:[%s223] sm:$0xf] %v317
      %322 = vst [vmem:[%s223 + $0x4] sm:$0xf] %v318
      %s323 = smul.u32 2, %s18
      %p324 = scmp.lt.s32.totalorder %s323, 3
      %s325 = scalar_select %p324, %s323, 3
      %p326 = scmp.lt.s32.totalorder %s19, 0
      %s327 = scalar_select %p326, %s19, 0
      %s328 = sadd.s32 %s327, %s325
      %s329 = smul.addr %s328, 4
      %s330 = scalar_lea.vmem %s3, %s329
      // Predicated region
      $region33: #{cross_attention_forward.6} parent=31 // pred_check
        %p331 = pneg %p124
      $region34: #{cross_attention_forward.6} parent=31 // pred_check_branch
        %333 = sbr.rel (%p331) target = $region36
      $region35: #{cross_attention_forward.6} parent=31 // pred_region
        %s334 = smul.u32 2, %s18
      $region36: #{cross_attention_forward.6} parent=31 // pred_fallthru
        _
    $region32: #{cross_attention_forward.6} parent=5 // pred_fallthru
      _
    %p335 = scmp.le.s32.totalorder 2, %s9
    // Predicated region
    $region37: #{cross_attention_forward.6} parent=5 // pred_check
      %p336 = pneg %p335
    $region38: #{cross_attention_forward.6} parent=5 // pred_check_branch
      %338 = sbr.rel (%p336) target = $region40
    $region39: #{cross_attention_forward.6} parent=5 // pred_region
      %s339 = ssub.s32 %s9, 2
      // Predicated region
      $region41: #{cross_attention_forward.6} parent=39 // pred_check
        %p340 = pneg %p130
      $region42: #{cross_attention_forward.6} parent=39 // pred_check_branch
        %342 = sbr.rel (%p340) target = $region44
      $region43: #{cross_attention_forward.6} parent=39 // pred_region
        %s343 = smul.u32 2, %s20
        %p344 = scmp.lt.s32.totalorder %s343, 3
        %s345 = scalar_select %p344, %s343, 3
        %p346 = scmp.lt.s32.totalorder %s21, 0
        %s347 = scalar_select %p346, %s21, 0
        %s348 = sadd.s32 %s347, %s345
        %s349 = smul.addr %s348, 4
        %s350 = scalar_lea.vmem %s3, %s349
      $region44: #{cross_attention_forward.6} parent=39 // pred_fallthru
        _
    $region40: #{cross_attention_forward.6} parent=5 // pred_fallthru
      _
  $region6: #{cross_attention_forward.6} parent=0 // loop_footer
    %s13 = sadd.s32 1, %s9
  $region7: #{cross_attention_forward.6} parent=0 // loop_footer_branch
    %8 = sbr.rel target = $region3
  $region8: #{cross_attention_forward.6} parent=0 // loop_exit
    _

// kernel: cross_attention_forward.8
$region0: #{cross_attention_forward.8}
  #allocation0 [shape = 'u32[]', space=smem, size = 0x4, offset = 0x4, fixed_abs, tag = 'smem constant byte address 0x4 - core index']
  #allocation1 [shape = 'u32[144,128]{1,0:T(1,128)}', space=vmem, size = 0x12000, scoped, tag = 'internal scratch']
  %s0 = inlined_call_operand.vmem [shape: bf16[8,128], index: 0, kind: input, shape index: {}]
  %s1 = inlined_call_operand.vmem [shape: bf16[8,2,128], index: 1, kind: input, shape index: {}]
  %s2 = inlined_call_operand.vmem [shape: bf16[16,2,128], index: 2, kind: input, shape index: {}]
  %s3 = inlined_call_operand.vmem [shape: bf16[16,2,128], index: 3, kind: input, shape index: {}]
  %s4 = inlined_call_operand.vmem [shape: bf16[8,2,128], index: 4, kind: output, shape index: {}]
  %s5 = sld [smem:[#allocation0]]
  $region49: #{cross_attention_forward.8} parent=0
    _
  %s7 = ssub.s32 1, %s5
  %s8 = scalar_select 0, %s7, %s5
  loop: start=0, step=1, limit=4
  $region2: #{cross_attention_forward.8} parent=0 // loop_pre_header
    _
  $region3: #{cross_attention_forward.8} parent=0 // loop_header
    %s10 = sphi 0, %s14
    %p11 = scmp.ge.s32.totalorder %s10, 4
    %s18 = sphi 0, %s18
    %s20 = sphi 0, %s18
    %s21 = sphi 0, %s20
    %s35 = sphi 0, %s21
    %s41 = sphi 0, %s43
    %s44 = sphi 0, %s41
    %s45 = sphi 0, %s44
    %s61 = sphi 0, %s45
    %s65 = sphi 0, %s65
    %s67 = sphi 0, %s65
    %s68 = sphi 0, %s67
    %s82 = sphi 0, %s68
    %s86 = sphi 0, %s86
    %s88 = sphi 0, %s86
    %s89 = sphi 0, %s88
    %s103 = sphi 0, %s89
    %s109 = sphi 0, %s111
    %s112 = sphi 0, %s109
    %s113 = sphi 0, %s112
    %s129 = sphi 0, %s113
  $region4: #{cross_attention_forward.8} parent=0 // loop_header_branch
    %13 = sbr.rel (%p11) target = $region8
  $region5: #{cross_attention_forward.8} parent=0 // loop_body
    %s15 = ssub.s32 %s10, 1
    %s16 = ssub.s32 %s10, 2
    %s17 = sadd.s32 %s10, 1
    %s19 = sadd.s32 %s18, 1
    %p22 = scmp.eq.s32.totalorder %s10, 1
    %p23 = scmp.ne.s32.totalorder %s18, %s20
    %p24 = scmp.eq.s32.totalorder %s10, 0
    %p25 = por %p23, %p24
    %p26 = scmp.ne.s32.totalorder %s18, %s20
    %p27 = scmp.eq.s32.totalorder %s15, 1
    %p28 = por %p26, %p27
    %p29 = scmp.ne.s32.totalorder %s20, %s21
    %p30 = scmp.eq.s32.totalorder %s15, 0
    %p31 = por %p29, %p30
    %p32 = scmp.ne.s32.totalorder %s20, %s21
    %p33 = scmp.eq.s32.totalorder %s16, 1
    %p34 = por %p32, %p33
    %p36 = scmp.ne.s32.totalorder %s21, %s35
    %p37 = scmp.eq.s32.totalorder %s16, 0
    %p38 = por %p36, %p37
    %s39 = ssub.s32 %s10, %s17
    %p40 = scmp.eq.s32.totalorder %s39, 0
    %s42 = sadd.s32 %s41, 1
    %s43 = scalar_select %p40, %s41, %s42
    %p46 = pneg %p40
    %p47 = scmp.eq.s32.totalorder %s10, 1
    %p48 = por %p46, %p47
    %p49 = scmp.ne.s32.totalorder %s41, %s44
    %p50 = scmp.eq.s32.totalorder %s10, 0
    %p51 = por %p49, %p50
    %p52 = scmp.ne.s32.totalorder %s41, %s44
    %p53 = scmp.eq.s32.totalorder %s15, 1
    %p54 = por %p52, %p53
    %p55 = scmp.ne.s32.totalorder %s44, %s45
    %p56 = scmp.eq.s32.totalorder %s15, 0
    %p57 = por %p55, %p56
    %p58 = scmp.ne.s32.totalorder %s44, %s45
    %p59 = scmp.eq.s32.totalorder %s16, 1
    %p60 = por %p58, %p59
    %p62 = scmp.ne.s32.totalorder %s45, %s61
    %p63 = scmp.eq.s32.totalorder %s16, 0
    %p64 = por %p62, %p63
    %s66 = sadd.s32 %s65, 1
    %p69 = scmp.eq.s32.totalorder %s10, 1
    %p70 = scmp.ne.s32.totalorder %s65, %s67
    %p71 = scmp.eq.s32.totalorder %s10, 0
    %p72 = por %p70, %p71
    %p73 = scmp.ne.s32.totalorder %s65, %s67
    %p74 = scmp.eq.s32.totalorder %s15, 1
    %p75 = por %p73, %p74
    %p76 = scmp.ne.s32.totalorder %s67, %s68
    %p77 = scmp.eq.s32.totalorder %s15, 0
    %p78 = por %p76, %p77
    %p79 = scmp.ne.s32.totalorder %s67, %s68
    %p80 = scmp.eq.s32.totalorder %s16, 1
    %p81 = por %p79, %p80
    %p83 = scmp.ne.s32.totalorder %s68, %s82
    %p84 = scmp.eq.s32.totalorder %s16, 0
    %p85 = por %p83, %p84
    %s87 = sadd.s32 %s86, 1
    %p90 = scmp.eq.s32.totalorder %s10, 1
    %p91 = scmp.ne.s32.totalorder %s86, %s88
    %p92 = scmp.eq.s32.totalorder %s10, 0
    %p93 = por %p91, %p92
    %p94 = scmp.ne.s32.totalorder %s86, %s88
    %p95 = scmp.eq.s32.totalorder %s15, 1
    %p96 = por %p94, %p95
    %p97 = scmp.ne.s32.totalorder %s88, %s89
    %p98 = scmp.eq.s32.totalorder %s15, 0
    %p99 = por %p97, %p98
    %p100 = scmp.ne.s32.totalorder %s88, %s89
    %p101 = scmp.eq.s32.totalorder %s16, 1
    %p102 = por %p100, %p101
    %p104 = scmp.ne.s32.totalorder %s89, %s103
    %p105 = scmp.eq.s32.totalorder %s16, 0
    %p106 = por %p104, %p105
    %s107 = ssub.s32 %s10, %s17
    %p108 = scmp.eq.s32.totalorder %s107, 0
    %s110 = sadd.s32 %s109, 1
    %s111 = scalar_select %p108, %s109, %s110
    %p114 = pneg %p108
    %p115 = scmp.eq.s32.totalorder %s10, 1
    %p116 = por %p114, %p115
    %p117 = scmp.ne.s32.totalorder %s109, %s112
    %p118 = scmp.eq.s32.totalorder %s10, 0
    %p119 = por %p117, %p118
    %p120 = scmp.ne.s32.totalorder %s109, %s112
    %p121 = scmp.eq.s32.totalorder %s15, 1
    %p122 = por %p120, %p121
    %p123 = scmp.ne.s32.totalorder %s112, %s113
    %p124 = scmp.eq.s32.totalorder %s15, 0
    %p125 = por %p123, %p124
    %p126 = scmp.ne.s32.totalorder %s112, %s113
    %p127 = scmp.eq.s32.totalorder %s16, 1
    %p128 = por %p126, %p127
    %p130 = scmp.ne.s32.totalorder %s113, %s129
    %p131 = scmp.eq.s32.totalorder %s16, 0
    %p132 = por %p130, %p131
    %p133 = scmp.le.s32.totalorder 1, %s10
    %p134 = scmp.lt.s32.totalorder %s10, 3
    %p135 = pnand %p133, %p134
    %p136 = pneg %p135
    // Predicated region
    $region9: #{cross_attention_forward.8} parent=5 // pred_check
      _
    $region10: #{cross_attention_forward.8} parent=5 // pred_check_branch
      %138 = sbr.rel (%p135) target = $region12
    $region11: #{cross_attention_forward.8} parent=5 // pred_region
      %s139 = ssub.s32 %s10, 1
      // Predicated region
      $region13: #{cross_attention_forward.8} parent=11 // pred_check
        %p140 = pneg %p31
      $region14: #{cross_attention_forward.8} parent=11 // pred_check_branch
        %142 = sbr.rel (%p140) target = $region16
      $region15: #{cross_attention_forward.8} parent=11 // pred_region
        _
      $region16: #{cross_attention_forward.8} parent=11 // pred_fallthru
        _
      // Predicated region
      $region17: #{cross_attention_forward.8} parent=11 // pred_check
        %p143 = pneg %p78
      $region18: #{cross_attention_forward.8} parent=11 // pred_check_branch
        %145 = sbr.rel (%p143) target = $region20
      $region19: #{cross_attention_forward.8} parent=11 // pred_region
        _
      $region20: #{cross_attention_forward.8} parent=11 // pred_fallthru
        _
      // Predicated region
      $region21: #{cross_attention_forward.8} parent=11 // pred_check
        %p146 = pneg %p99
      $region22: #{cross_attention_forward.8} parent=11 // pred_check_branch
        %148 = sbr.rel (%p146) target = $region24
      $region23: #{cross_attention_forward.8} parent=11 // pred_region
        _
      $region24: #{cross_attention_forward.8} parent=11 // pred_fallthru
        _
    $region12: #{cross_attention_forward.8} parent=5 // pred_fallthru
      _
    %p149 = scmp.lt.s32.totalorder %s10, 2
    // Predicated region
    $region25: #{cross_attention_forward.8} parent=5 // pred_check
      %p150 = pneg %p149
    $region26: #{cross_attention_forward.8} parent=5 // pred_check_branch
      %152 = sbr.rel (%p150) target = $region28
    $region27: #{cross_attention_forward.8} parent=5 // pred_region
      // Predicated region
      $region29: #{cross_attention_forward.8} parent=27 // pred_check
        %p153 = pneg %p51
      $region30: #{cross_attention_forward.8} parent=27 // pred_check_branch
        %155 = sbr.rel (%p153) target = $region32
      $region31: #{cross_attention_forward.8} parent=27 // pred_region
        %s156 = smul.u32 4, %s10
        %p157 = scmp.lt.s32.totalorder %s156, 7
        %s158 = scalar_select %p157, %s156, 7
        %s159 = scalar_lea.vmem %s1, %s158
        %s160 = smul.u32 4, %s10
      $region32: #{cross_attention_forward.8} parent=27 // pred_fallthru
        _
    $region28: #{cross_attention_forward.8} parent=5 // pred_fallthru
      _
    %p161 = scmp.le.s32.totalorder 1, %s10
    %p162 = scmp.lt.s32.totalorder %s10, 3
    %p163 = pnand %p161, %p162
    %p164 = pneg %p163
    // Predicated region
    $region33: #{cross_attention_forward.8} parent=5 // pred_check
      _
    $region34: #{cross_attention_forward.8} parent=5 // pred_check_branch
      %166 = sbr.rel (%p163) target = $region36
    $region35: #{cross_attention_forward.8} parent=5 // pred_region
      %s167 = ssub.s32 %s10, 1
      %p168 = pneg %p31
      %p169 = pneg %p28
      %s170 = smul.u32 4, %s15
      %p171 = scmp.lt.s32.totalorder %s170, 7
      %s172 = scalar_select %p171, %s170, 7
      %s173 = scalar_lea.vmem %s1, %s172
      %p174 = pneg %p57
      %p175 = pneg %p54
      %p176 = pneg %p78
      %p177 = pneg %p75
      %p178 = pneg %p99
      %p179 = pneg %p96
      %p180 = pneg %p125
      %p181 = pneg %p122
      %s182 = smul.u32 4, %s15
      %p183 = scmp.lt.s32.totalorder %s182, 7
      %s184 = scalar_select %p183, %s182, 7
      %s185 = scalar_lea.vmem %s4, %s184
      %s186 = smul.u32 4, %s15
      %p187 = scmp.lt.s32.totalorder %s186, 7
      %s188 = scalar_select %p187, %s186, 7
      %s189 = scalar_lea.vmem %s1, %s188
      %s190 = smul.u32 4, %s15
      %s191 = smul.u32 4, %s15
      %p192 = scmp.lt.s32.totalorder %s191, 7
      %s193 = scalar_select %p192, %s191, 7
      %s194 = scalar_lea.vmem %s4, %s193
      %s195 = smul.u32 4, %s15
      %v197 = vld [vmem:[%s189] sm:$0x1]
      %v198 = vld [vmem:[%s189 + $0x1] sm:$0x1]
      %v199 = vld [vmem:[%s189 + $0x2] sm:$0x1]
      %v200 = vld [vmem:[%s189 + $0x3] sm:$0x1]
      %v201 = vld [vmem:[%s2] sm:$0x1]
      %v202 = vld [vmem:[%s2 + $0x1] sm:$0x1]
      %v203 = vld [vmem:[%s2 + $0x2] sm:$0x1]
      %v204 = vld [vmem:[%s2 + $0x3] sm:$0x1]
      %v205 = vld [vmem:[%s2 + $0x4] sm:$0x1]
      %v206 = vld [vmem:[%s2 + $0x5] sm:$0x1]
      %v207 = vld [vmem:[%s2 + $0x6] sm:$0x1]
      %v208 = vld [vmem:[%s2 + $0x7] sm:$0x1]
      %v209 = vld [vmem:[%s2 + $0x8] sm:$0x1]
      %v210 = vld [vmem:[%s2 + $0x9] sm:$0x1]
      %v211 = vld [vmem:[%s2 + $0xa] sm:$0x1]
      %v212 = vld [vmem:[%s2 + $0xb] sm:$0x1]
      %v213 = vld [vmem:[%s2 + $0xc] sm:$0x1]
      %v214 = vld [vmem:[%s2 + $0xd] sm:$0x1]
      %v215 = vld [vmem:[%s2 + $0xe] sm:$0x1]
      %v216 = vld [vmem:[%s2 + $0xf] sm:$0x1]
      %v217 = vld [vmem:[%s3] sm:$0x1]
      %v218 = vld [vmem:[%s3 + $0x1] sm:$0x1]
      %v219 = vld [vmem:[%s3 + $0x2] sm:$0x1]
      %v220 = vld [vmem:[%s3 + $0x3] sm:$0x1]
      %v221 = vld [vmem:[%s3 + $0x4] sm:$0x1]
      %v222 = vld [vmem:[%s3 + $0x5] sm:$0x1]
      %v223 = vld [vmem:[%s3 + $0x6] sm:$0x1]
      %v224 = vld [vmem:[%s3 + $0x7] sm:$0x1]
      %v225 = vld [vmem:[%s3 + $0x8] sm:$0x1]
      %v226 = vld [vmem:[%s3 + $0x9] sm:$0x1]
      %v227 = vld [vmem:[%s3 + $0xa] sm:$0x1]
      %v228 = vld [vmem:[%s3 + $0xb] sm:$0x1]
      %v229 = vld [vmem:[%s3 + $0xc] sm:$0x1]
      %v230 = vld [vmem:[%s3 + $0xd] sm:$0x1]
      %v231 = vld [vmem:[%s3 + $0xe] sm:$0x1]
      %v232 = vld [vmem:[%s3 + $0xf] sm:$0x1]
      %v233 = vld [vmem:[%s0] sm:$0x1]
      %v235 = vpack.i.b16 %v233, %v233
      %v237 = vlaneseq
      %v238 = vshrl.u32 %v237, 7
      %v239 = vsub.s32 0, %v238
      %v240 = vrot.slane %v235, %v239
      %v243 = vunpack.c.l.s4 1966171168
      %v244 = vunpack.c.0.s8 %v243
      %v245 = vlaneseq
      %v246 = vshrl.u32 %v245, 7
      %v247 = vsub.s32 %v244, %v246
      %v248 = vrot.slane %v240, %v247
      %v249 = vcombine.high %v248, %v248
      %v251 = vunpack.c.l.s4 1966171168
      %v252 = vunpack.c.0.s8 %v251
      %v253 = vlaneseq
      %v254 = vshrl.u32 %v253, 7
      %v255 = vsub.s32 %v252, %v254
      %v256 = vrot.slane %v248, %v255
      %v258 = vunpack.c.l.s4 1966171168
      %v259 = vunpack.c.0.s8 %v258
      %v260 = vlaneseq
      %v261 = vshrl.u32 %v260, 7
      %v262 = vsub.s32 %v259, %v261
      %v263 = vrot.slane %v249, %v262
      %v265 = vshrl.u32 %v256, 16
      %v268 = vshrl.u32 %v263, 16
      %v274 = vmul.bf16 %v197, %v256
      %v275 = vmul.bf16 %v198, %v265
      %v276 = vmul.bf16 %v199, %v263
      %v277 = vmul.bf16 %v200, %v268
      %v283 = vunpack.c.l.s4 1966171168
      %v284 = vunpack.c.0.s8 %v283
      %v285 = vlaneseq
      %v286 = vshrl.u32 %v285, 7
      %v287 = vsub.s32 %v284, %v286
      %v288 = vrot.slane %v274, %v287
      %v290 = vunpack.c.l.s4 1966171168
      %v291 = vunpack.c.0.s8 %v290
      %v292 = vlaneseq
      %v293 = vshrl.u32 %v292, 7
      %v294 = vsub.s32 %v291, %v293
      %v295 = vrot.slane %v288, %v294
      %v297 = vunpack.c.l.s4 1966171168
      %v298 = vunpack.c.0.s8 %v297
      %v299 = vlaneseq
      %v300 = vshrl.u32 %v299, 7
      %v301 = vsub.s32 %v298, %v300
      %v302 = vrot.slane %v275, %v301
      %v304 = vunpack.c.l.s4 1966171168
      %v305 = vunpack.c.0.s8 %v304
      %v306 = vlaneseq
      %v307 = vshrl.u32 %v306, 7
      %v308 = vsub.s32 %v305, %v307
      %v309 = vrot.slane %v302, %v308
      %v311 = vunpack.c.l.s4 1966171168
      %v312 = vunpack.c.0.s8 %v311
      %v313 = vlaneseq
      %v314 = vshrl.u32 %v313, 7
      %v315 = vsub.s32 %v312, %v314
      %v316 = vrot.slane %v276, %v315
      %v318 = vunpack.c.l.s4 1966171168
      %v319 = vunpack.c.0.s8 %v318
      %v320 = vlaneseq
      %v321 = vshrl.u32 %v320, 7
      %v322 = vsub.s32 %v319, %v321
      %v323 = vrot.slane %v316, %v322
      %v325 = vunpack.c.l.s4 1966171168
      %v326 = vunpack.c.0.s8 %v325
      %v327 = vlaneseq
      %v328 = vshrl.u32 %v327, 7
      %v329 = vsub.s32 %v326, %v328
      %v330 = vrot.slane %v277, %v329
      %v332 = vunpack.c.l.s4 1966171168
      %v333 = vunpack.c.0.s8 %v332
      %v334 = vlaneseq
      %v335 = vshrl.u32 %v334, 7
      %v336 = vsub.s32 %v333, %v335
      %v337 = vrot.slane %v330, %v336
      %v338 = vunpack.c.l.b16 %v295
      %v339 = vunpack.c.l.b16 %v309
      %v340 = vunpack.c.l.b16 %v323
      %v341 = vunpack.c.l.b16 %v337
      %v342 = vrot.slane %v339, 7
      %vm343 = vcmask 1041409
      %v344 = vsel %vm343, %v342, %v338
      %v345 = vrot.slane %v340, 6
      %vm346 = vcmask 1042434
      %v347 = vsel %vm346, %v345, %v344
      %v348 = vrot.slane %v341, 5
      %vm349 = vcmask 1043459
      %v350 = vsel %vm349, %v348, %v347
      %v351 = vpack.c.b16 %v350, %v350
      %v370 = vunpack.c.l.s4 1966171168
      %v371 = vunpack.c.0.s8 %v370
      %v372 = vlaneseq
      %v373 = vshrl.u32 %v372, 7
      %v374 = vsub.s32 %v371, %v373
      %v375 = vrot.slane %v201, %v374
      %v377 = vunpack.c.l.s4 1966171168
      %v378 = vunpack.c.0.s8 %v377
      %v379 = vlaneseq
      %v380 = vshrl.u32 %v379, 7
      %v381 = vsub.s32 %v378, %v380
      %v382 = vrot.slane %v375, %v381
      %v384 = vunpack.c.l.s4 1966171168
      %v385 = vunpack.c.0.s8 %v384
      %v386 = vlaneseq
      %v387 = vshrl.u32 %v386, 7
      %v388 = vsub.s32 %v385, %v387
      %v389 = vrot.slane %v202, %v388
      %v391 = vunpack.c.l.s4 1966171168
      %v392 = vunpack.c.0.s8 %v391
      %v393 = vlaneseq
      %v394 = vshrl.u32 %v393, 7
      %v395 = vsub.s32 %v392, %v394
      %v396 = vrot.slane %v389, %v395
      %v398 = vunpack.c.l.s4 1966171168
      %v399 = vunpack.c.0.s8 %v398
      %v400 = vlaneseq
      %v401 = vshrl.u32 %v400, 7
      %v402 = vsub.s32 %v399, %v401
      %v403 = vrot.slane %v203, %v402
      %v405 = vunpack.c.l.s4 1966171168
      %v406 = vunpack.c.0.s8 %v405
      %v407 = vlaneseq
      %v408 = vshrl.u32 %v407, 7
      %v409 = vsub.s32 %v406, %v408
      %v410 = vrot.slane %v403, %v409
      %v412 = vunpack.c.l.s4 1966171168
      %v413 = vunpack.c.0.s8 %v412
      %v414 = vlaneseq
      %v415 = vshrl.u32 %v414, 7
      %v416 = vsub.s32 %v413, %v415
      %v417 = vrot.slane %v204, %v416
      %v419 = vunpack.c.l.s4 1966171168
      %v420 = vunpack.c.0.s8 %v419
      %v421 = vlaneseq
      %v422 = vshrl.u32 %v421, 7
      %v423 = vsub.s32 %v420, %v422
      %v424 = vrot.slane %v417, %v423
      %v426 = vunpack.c.l.s4 1966171168
      %v427 = vunpack.c.0.s8 %v426
      %v428 = vlaneseq
      %v429 = vshrl.u32 %v428, 7
      %v430 = vsub.s32 %v427, %v429
      %v431 = vrot.slane %v205, %v430
      %v433 = vunpack.c.l.s4 1966171168
      %v434 = vunpack.c.0.s8 %v433
      %v435 = vlaneseq
      %v436 = vshrl.u32 %v435, 7
      %v437 = vsub.s32 %v434, %v436
      %v438 = vrot.slane %v431, %v437
      %v440 = vunpack.c.l.s4 1966171168
      %v441 = vunpack.c.0.s8 %v440
      %v442 = vlaneseq
      %v443 = vshrl.u32 %v442, 7
      %v444 = vsub.s32 %v441, %v443
      %v445 = vrot.slane %v206, %v444
      %v447 = vunpack.c.l.s4 1966171168
      %v448 = vunpack.c.0.s8 %v447
      %v449 = vlaneseq
      %v450 = vshrl.u32 %v449, 7
      %v451 = vsub.s32 %v448, %v450
      %v452 = vrot.slane %v445, %v451
      %v454 = vunpack.c.l.s4 1966171168
      %v455 = vunpack.c.0.s8 %v454
      %v456 = vlaneseq
      %v457 = vshrl.u32 %v456, 7
      %v458 = vsub.s32 %v455, %v457
      %v459 = vrot.slane %v207, %v458
      %v461 = vunpack.c.l.s4 1966171168
      %v462 = vunpack.c.0.s8 %v461
      %v463 = vlaneseq
      %v464 = vshrl.u32 %v463, 7
      %v465 = vsub.s32 %v462, %v464
      %v466 = vrot.slane %v459, %v465
      %v468 = vunpack.c.l.s4 1966171168
      %v469 = vunpack.c.0.s8 %v468
      %v470 = vlaneseq
      %v471 = vshrl.u32 %v470, 7
      %v472 = vsub.s32 %v469, %v471
      %v473 = vrot.slane %v208, %v472
      %v475 = vunpack.c.l.s4 1966171168
      %v476 = vunpack.c.0.s8 %v475
      %v477 = vlaneseq
      %v478 = vshrl.u32 %v477, 7
      %v479 = vsub.s32 %v476, %v478
      %v480 = vrot.slane %v473, %v479
      %v482 = vunpack.c.l.s4 1966171168
      %v483 = vunpack.c.0.s8 %v482
      %v484 = vlaneseq
      %v485 = vshrl.u32 %v484, 7
      %v486 = vsub.s32 %v483, %v485
      %v487 = vrot.slane %v209, %v486
      %v489 = vunpack.c.l.s4 1966171168
      %v490 = vunpack.c.0.s8 %v489
      %v491 = vlaneseq
      %v492 = vshrl.u32 %v491, 7
      %v493 = vsub.s32 %v490, %v492
      %v494 = vrot.slane %v487, %v493
      %v496 = vunpack.c.l.s4 1966171168
      %v497 = vunpack.c.0.s8 %v496
      %v498 = vlaneseq
      %v499 = vshrl.u32 %v498, 7
      %v500 = vsub.s32 %v497, %v499
      %v501 = vrot.slane %v210, %v500
      %v503 = vunpack.c.l.s4 1966171168
      %v504 = vunpack.c.0.s8 %v503
      %v505 = vlaneseq
      %v506 = vshrl.u32 %v505, 7
      %v507 = vsub.s32 %v504, %v506
      %v508 = vrot.slane %v501, %v507
      %v510 = vunpack.c.l.s4 1966171168
      %v511 = vunpack.c.0.s8 %v510
      %v512 = vlaneseq
      %v513 = vshrl.u32 %v512, 7
      %v514 = vsub.s32 %v511, %v513
      %v515 = vrot.slane %v211, %v514
      %v517 = vunpack.c.l.s4 1966171168
      %v518 = vunpack.c.0.s8 %v517
      %v519 = vlaneseq
      %v520 = vshrl.u32 %v519, 7
      %v521 = vsub.s32 %v518, %v520
      %v522 = vrot.slane %v515, %v521
      %v524 = vunpack.c.l.s4 1966171168
      %v525 = vunpack.c.0.s8 %v524
      %v526 = vlaneseq
      %v527 = vshrl.u32 %v526, 7
      %v528 = vsub.s32 %v525, %v527
      %v529 = vrot.slane %v212, %v528
      %v531 = vunpack.c.l.s4 1966171168
      %v532 = vunpack.c.0.s8 %v531
      %v533 = vlaneseq
      %v534 = vshrl.u32 %v533, 7
      %v535 = vsub.s32 %v532, %v534
      %v536 = vrot.slane %v529, %v535
      %v538 = vunpack.c.l.s4 1966171168
      %v539 = vunpack.c.0.s8 %v538
      %v540 = vlaneseq
      %v541 = vshrl.u32 %v540, 7
      %v542 = vsub.s32 %v539, %v541
      %v543 = vrot.slane %v213, %v542
      %v545 = vunpack.c.l.s4 1966171168
      %v546 = vunpack.c.0.s8 %v545
      %v547 = vlaneseq
      %v548 = vshrl.u32 %v547, 7
      %v549 = vsub.s32 %v546, %v548
      %v550 = vrot.slane %v543, %v549
      %v552 = vunpack.c.l.s4 1966171168
      %v553 = vunpack.c.0.s8 %v552
      %v554 = vlaneseq
      %v555 = vshrl.u32 %v554, 7
      %v556 = vsub.s32 %v553, %v555
      %v557 = vrot.slane %v214, %v556
      %v559 = vunpack.c.l.s4 1966171168
      %v560 = vunpack.c.0.s8 %v559
      %v561 = vlaneseq
      %v562 = vshrl.u32 %v561, 7
      %v563 = vsub.s32 %v560, %v562
      %v564 = vrot.slane %v557, %v563
      %v566 = vunpack.c.l.s4 1966171168
      %v567 = vunpack.c.0.s8 %v566
      %v568 = vlaneseq
      %v569 = vshrl.u32 %v568, 7
      %v570 = vsub.s32 %v567, %v569
      %v571 = vrot.slane %v215, %v570
      %v573 = vunpack.c.l.s4 1966171168
      %v574 = vunpack.c.0.s8 %v573
      %v575 = vlaneseq
      %v576 = vshrl.u32 %v575, 7
      %v577 = vsub.s32 %v574, %v576
      %v578 = vrot.slane %v571, %v577
      %v580 = vunpack.c.l.s4 1966171168
      %v581 = vunpack.c.0.s8 %v580
      %v582 = vlaneseq
      %v583 = vshrl.u32 %v582, 7
      %v584 = vsub.s32 %v581, %v583
      %v585 = vrot.slane %v216, %v584
      %v587 = vunpack.c.l.s4 1966171168
      %v588 = vunpack.c.0.s8 %v587
      %v589 = vlaneseq
      %v590 = vshrl.u32 %v589, 7
      %v591 = vsub.s32 %v588, %v590
      %v592 = vrot.slane %v585, %v591
      %v593 = vunpack.c.l.b16 %v382
      %v594 = vunpack.c.l.b16 %v396
      %v595 = vunpack.c.l.b16 %v410
      %v596 = vunpack.c.l.b16 %v424
      %v597 = vunpack.c.l.b16 %v438
      %v598 = vunpack.c.l.b16 %v452
      %v599 = vunpack.c.l.b16 %v466
      %v600 = vunpack.c.l.b16 %v480
      %v601 = vunpack.c.l.b16 %v494
      %v602 = vunpack.c.l.b16 %v508
      %v603 = vunpack.c.l.b16 %v522
      %v604 = vunpack.c.l.b16 %v536
      %v605 = vunpack.c.l.b16 %v550
      %v606 = vunpack.c.l.b16 %v564
      %v607 = vunpack.c.l.b16 %v578
      %v608 = vunpack.c.l.b16 %v592
      %v609 = vrot.slane %v594, 7
      %v610 = vsel %vm343, %v609, %v593
      %v611 = vrot.slane %v595, 6
      %v612 = vsel %vm346, %v611, %v610
      %v613 = vrot.slane %v596, 5
      %v614 = vsel %vm349, %v613, %v612
      %v615 = vrot.slane %v597, 4
      %vm616 = vcmask 1044484
      %v617 = vsel %vm616, %v615, %v614
      %v618 = vrot.slane %v598, 3
      %vm619 = vcmask 1045509
      %v620 = vsel %vm619, %v618, %v617
      %v621 = vrot.slane %v599, 2
      %vm622 = vcmask 1046534
      %v623 = vsel %vm622, %v621, %v620
      %v624 = vrot.slane %v600, 1
      %vm625 = vcmask 1047559
      %v626 = vsel %vm625, %v624, %v623
      %v627 = vrot.slane %v602, 7
      %v628 = vsel %vm343, %v627, %v601
      %v629 = vrot.slane %v603, 6
      %v630 = vsel %vm346, %v629, %v628
      %v631 = vrot.slane %v604, 5
      %v632 = vsel %vm349, %v631, %v630
      %v633 = vrot.slane %v605, 4
      %v634 = vsel %vm616, %v633, %v632
      %v635 = vrot.slane %v606, 3
      %v636 = vsel %vm619, %v635, %v634
      %v637 = vrot.slane %v607, 2
      %v638 = vsel %vm622, %v637, %v636
      %v639 = vrot.slane %v608, 1
      %v640 = vsel %vm625, %v639, %v638
      %v641 = vpack.c.b16 %v640, %v626
      %643 = vmatprep.subr.bf16.mxu0 0
      %644 = vmatpush1.bf16.xpose.msra.mxu0 0
      %645 = vmatprep.subr.bf16.mxu0 0
      %646 = vmatpush1.bf16.xpose.msra.mxu0 0
      %647 = vmatprep.subr.bf16.mxu0 0
      %648 = vmatpush1.bf16.xpose.msra.mxu0 0
      %649 = vmatprep.subr.bf16.mxu0 0
      %650 = vmatpush1.bf16.xpose.msra.mxu0 0
      %651 = vmatprep.subr.bf16.mxu0 0
      %652 = vmatpush1.bf16.xpose.msra.mxu0 0
      %653 = vmatprep.subr.bf16.mxu0 0
      %654 = vmatpush1.bf16.xpose.msra.mxu0 0
      %655 = vmatprep.subr.bf16.mxu0 0
      %656 = vmatpush1.bf16.xpose.msra.mxu0 0
      %657 = vmatprep.subr.bf16.mxu0 0
      %658 = vmatpush1.bf16.xpose.msra.mxu0 %v641
      %659 = vmatprep.subr.bf16.mxu0 0
      %660 = vmatpush2.bf16.xpose.msra.mxu0 0
      %661 = vmatprep.subr.bf16.mxu0 0
      %662 = vmatpush2.bf16.xpose.msra.mxu0 0
      %663 = vmatprep.subr.bf16.mxu0 0
      %664 = vmatpush2.bf16.xpose.msra.mxu0 0
      %665 = vmatprep.subr.bf16.mxu0 0
      %666 = vmatpush2.bf16.xpose.msra.mxu0 0
      %667 = vmatprep.subr.bf16.mxu0 0
      %668 = vmatpush2.bf16.xpose.msra.mxu0 0
      %669 = vmatprep.subr.bf16.mxu0 0
      %670 = vmatpush2.bf16.xpose.msra.mxu0 0
      %671 = vmatprep.subr.bf16.mxu0 0
      %672 = vmatpush2.bf16.xpose.msra.mxu0 0
      %673 = vmatprep.subr.bf16.mxu0 0
      %674 = vmatpush2.bf16.xpose.msra.mxu0 0
      %675 = vmatprep.mubr.bf16.mxu0 0
      %676 = vmatmul.mubr.bf16.gmra.mxu0 %v351
      %v677 = vpop.f32.mrf.mxu0
      %v678 = vadd.f32 0.0, %v677
      %v679 = vpop.f32.mrf.mxu0
      %v680 = vpop.f32.mrf.mxu0
      %v681 = vpop.f32.mrf.mxu0
      %682 = vdwg.mxu0
      %vm683 = vcmask 125952
      %v684 = vsel %vm683, %v678, -inf
      %685 = vmax.xlane.f32.xlu0 %v684
      %v686 = vpop.xlane.xlu0 %685
      %v687 = vsub.f32 %v678, %v686
      %v688 = vmul.f32 %v687, 1.442695
      %v689 = vpow.pop %v688
      %v690 = vsel %vm683, %v689, 0.0
      %691 = vadd.xlane.f32.xlu0 %v690
      %v692 = vpop.xlane.xlu0 %691
      %v693 = vrcp.pop %v692
      %v694 = vmul.f32 %v689, %v693
      %v695 = vpack.c.bf16 %v694, %v694
      %v696 = vcombine.high %v240, %v240
      %v698 = vunpack.c.l.s4 1966171168
      %v699 = vunpack.c.0.s8 %v698
      %v700 = vlaneseq
      %v701 = vshrl.u32 %v700, 7
      %v702 = vsub.s32 %v699, %v701
      %v703 = vrot.slane %v696, %v702
      %v704 = vcombine.high %v703, %v703
      %v706 = vunpack.c.l.s4 1966171168
      %v707 = vunpack.c.0.s8 %v706
      %v708 = vlaneseq
      %v709 = vshrl.u32 %v708, 7
      %v710 = vsub.s32 %v707, %v709
      %v711 = vrot.slane %v703, %v710
      %v713 = vunpack.c.l.s4 1966171168
      %v714 = vunpack.c.0.s8 %v713
      %v715 = vlaneseq
      %v716 = vshrl.u32 %v715, 7
      %v717 = vsub.s32 %v714, %v716
      %v718 = vrot.slane %v704, %v717
      %v719 = vcombine.high %v256, %v256
      %v720 = vcombine.high %v711, %v711
      %v721 = vcombine.high %v263, %v263
      %v722 = vcombine.high %v718, %v718
      %v724 = vshrl.u32 %v719, 16
      %v727 = vshrl.u32 %v721, 16
      %v730 = vshrl.u32 %v711, 16
      %v733 = vshrl.u32 %v718, 16
      %v736 = vshrl.u32 %v720, 16
      %v739 = vshrl.u32 %v722, 16
      %v753 = vmul.bf16 %v217, %v256
      %v754 = vmul.bf16 %v218, %v265
      %v755 = vmul.bf16 %v219, %v263
      %v756 = vmul.bf16 %v220, %v268
      %v757 = vmul.bf16 %v221, %v719
      %v758 = vmul.bf16 %v222, %v724
      %v759 = vmul.bf16 %v223, %v721
      %v760 = vmul.bf16 %v224, %v727
      %v761 = vmul.bf16 %v225, %v711
      %v762 = vmul.bf16 %v226, %v730
      %v763 = vmul.bf16 %v227, %v718
      %v764 = vmul.bf16 %v228, %v733
      %v765 = vmul.bf16 %v229, %v720
      %v766 = vmul.bf16 %v230, %v736
      %v767 = vmul.bf16 %v231, %v722
      %v768 = vmul.bf16 %v232, %v739
      %v769 = vld [vmem:[%s0] sm:$0x1]
      %v771 = vshrl.u32 %v769, 16
      %v772 = vpack.i.b16 %v771, %v771
      %v774 = vlaneseq
      %v775 = vshrl.u32 %v774, 7
      %v776 = vsub.s32 0, %v775
      %v777 = vrot.slane %v772, %v776
      %v780 = vunpack.c.l.s4 1966171168
      %v781 = vunpack.c.0.s8 %v780
      %v782 = vlaneseq
      %v783 = vshrl.u32 %v782, 7
      %v784 = vsub.s32 %v781, %v783
      %v785 = vrot.slane %v777, %v784
      %v786 = vcombine.high %v785, %v785
      %v788 = vunpack.c.l.s4 1966171168
      %v789 = vunpack.c.0.s8 %v788
      %v790 = vlaneseq
      %v791 = vshrl.u32 %v790, 7
      %v792 = vsub.s32 %v789, %v791
      %v793 = vrot.slane %v785, %v792
      %v795 = vunpack.c.l.s4 1966171168
      %v796 = vunpack.c.0.s8 %v795
      %v797 = vlaneseq
      %v798 = vshrl.u32 %v797, 7
      %v799 = vsub.s32 %v796, %v798
      %v800 = vrot.slane %v786, %v799
      %v802 = vshrl.u32 %v793, 16
      %v805 = vshrl.u32 %v800, 16
      %v811 = vmul.bf16 %v197, %v793
      %v812 = vmul.bf16 %v198, %v802
      %v813 = vmul.bf16 %v199, %v800
      %v814 = vmul.bf16 %v200, %v805
      %v820 = vunpack.c.l.s4 1966171168
      %v821 = vunpack.c.0.s8 %v820
      %v822 = vlaneseq
      %v823 = vshrl.u32 %v822, 7
      %v824 = vsub.s32 %v821, %v823
      %v825 = vrot.slane %v811, %v824
      %v827 = vunpack.c.l.s4 1966171168
      %v828 = vunpack.c.0.s8 %v827
      %v829 = vlaneseq
      %v830 = vshrl.u32 %v829, 7
      %v831 = vsub.s32 %v828, %v830
      %v832 = vrot.slane %v825, %v831
      %v834 = vunpack.c.l.s4 1966171168
      %v835 = vunpack.c.0.s8 %v834
      %v836 = vlaneseq
      %v837 = vshrl.u32 %v836, 7
      %v838 = vsub.s32 %v835, %v837
      %v839 = vrot.slane %v812, %v838
      %v841 = vunpack.c.l.s4 1966171168
      %v842 = vunpack.c.0.s8 %v841
      %v843 = vlaneseq
      %v844 = vshrl.u32 %v843, 7
      %v845 = vsub.s32 %v842, %v844
      %v846 = vrot.slane %v839, %v845
      %v848 = vunpack.c.l.s4 1966171168
      %v849 = vunpack.c.0.s8 %v848
      %v850 = vlaneseq
      %v851 = vshrl.u32 %v850, 7
      %v852 = vsub.s32 %v849, %v851
      %v853 = vrot.slane %v813, %v852
      %v855 = vunpack.c.l.s4 1966171168
      %v856 = vunpack.c.0.s8 %v855
      %v857 = vlaneseq
      %v858 = vshrl.u32 %v857, 7
      %v859 = vsub.s32 %v856, %v858
      %v860 = vrot.slane %v853, %v859
      %v862 = vunpack.c.l.s4 1966171168
      %v863 = vunpack.c.0.s8 %v862
      %v864 = vlaneseq
      %v865 = vshrl.u32 %v864, 7
      %v866 = vsub.s32 %v863, %v865
      %v867 = vrot.slane %v814, %v866
      %v869 = vunpack.c.l.s4 1966171168
      %v870 = vunpack.c.0.s8 %v869
      %v871 = vlaneseq
      %v872 = vshrl.u32 %v871, 7
      %v873 = vsub.s32 %v870, %v872
      %v874 = vrot.slane %v867, %v873
      %v875 = vunpack.c.l.b16 %v832
      %v876 = vunpack.c.l.b16 %v846
      %v877 = vunpack.c.l.b16 %v860
      %v878 = vunpack.c.l.b16 %v874
      %v879 = vrot.slane %v876, 7
      %v880 = vsel %vm343, %v879, %v875
      %v881 = vrot.slane %v877, 6
      %v882 = vsel %vm346, %v881, %v880
      %v883 = vrot.slane %v878, 5
      %v884 = vsel %vm349, %v883, %v882
      %v885 = vpack.c.b16 %v884, %v884
      %887 = vmatprep.subr.bf16.mxu0 0
      %888 = vmatpush1.bf16.xpose.msra.mxu0 0
      %889 = vmatprep.subr.bf16.mxu0 0
      %890 = vmatpush1.bf16.xpose.msra.mxu0 0
      %891 = vmatprep.subr.bf16.mxu0 0
      %892 = vmatpush1.bf16.xpose.msra.mxu0 0
      %893 = vmatprep.subr.bf16.mxu0 0
      %894 = vmatpush1.bf16.xpose.msra.mxu0 0
      %895 = vmatprep.subr.bf16.mxu0 0
      %896 = vmatpush1.bf16.xpose.msra.mxu0 0
      %897 = vmatprep.subr.bf16.mxu0 0
      %898 = vmatpush1.bf16.xpose.msra.mxu0 0
      %899 = vmatprep.subr.bf16.mxu0 0
      %900 = vmatpush1.bf16.xpose.msra.mxu0 0
      %901 = vmatprep.subr.bf16.mxu0 0
      %902 = vmatpush1.bf16.xpose.msra.mxu0 %v641
      %903 = vmatprep.subr.bf16.mxu0 0
      %904 = vmatpush2.bf16.xpose.msra.mxu0 0
      %905 = vmatprep.subr.bf16.mxu0 0
      %906 = vmatpush2.bf16.xpose.msra.mxu0 0
      %907 = vmatprep.subr.bf16.mxu0 0
      %908 = vmatpush2.bf16.xpose.msra.mxu0 0
      %909 = vmatprep.subr.bf16.mxu0 0
      %910 = vmatpush2.bf16.xpose.msra.mxu0 0
      %911 = vmatprep.subr.bf16.mxu0 0
      %912 = vmatpush2.bf16.xpose.msra.mxu0 0
      %913 = vmatprep.subr.bf16.mxu0 0
      %914 = vmatpush2.bf16.xpose.msra.mxu0 0
      %915 = vmatprep.subr.bf16.mxu0 0
      %916 = vmatpush2.bf16.xpose.msra.mxu0 0
      %917 = vmatprep.subr.bf16.mxu0 0
      %918 = vmatpush2.bf16.xpose.msra.mxu0 0
      %919 = vmatprep.mubr.bf16.mxu0 0
      %920 = vmatmul.mubr.bf16.gmra.mxu0 %v885
      %v921 = vpop.f32.mrf.mxu0
      %v922 = vadd.f32 0.0, %v921
      %v923 = vpop.f32.mrf.mxu0
      %v924 = vpop.f32.mrf.mxu0
      %v925 = vpop.f32.mrf.mxu0
      %926 = vdwg.mxu0
      %v927 = vsel %vm683, %v922, -inf
      %928 = vmax.xlane.f32.xlu0 %v927
      %v929 = vpop.xlane.xlu0 %928
      %v930 = vsub.f32 %v922, %v929
      %v931 = vmul.f32 %v930, 1.442695
      %v932 = vpow.pop %v931
      %v933 = vsel %vm683, %v932, 0.0
      %934 = vadd.xlane.f32.xlu0 %v933
      %v935 = vpop.xlane.xlu0 %934
      %v936 = vrcp.pop %v935
      %v937 = vmul.f32 %v932, %v936
      %v938 = vpack.c.bf16 %v937, %v937
      %v939 = vcombine.high %v777, %v777
      %v941 = vunpack.c.l.s4 1966171168
      %v942 = vunpack.c.0.s8 %v941
      %v943 = vlaneseq
      %v944 = vshrl.u32 %v943, 7
      %v945 = vsub.s32 %v942, %v944
      %v946 = vrot.slane %v939, %v945
      %v947 = vcombine.high %v946, %v946
      %v949 = vunpack.c.l.s4 1966171168
      %v950 = vunpack.c.0.s8 %v949
      %v951 = vlaneseq
      %v952 = vshrl.u32 %v951, 7
      %v953 = vsub.s32 %v950, %v952
      %v954 = vrot.slane %v946, %v953
      %v956 = vunpack.c.l.s4 1966171168
      %v957 = vunpack.c.0.s8 %v956
      %v958 = vlaneseq
      %v959 = vshrl.u32 %v958, 7
      %v960 = vsub.s32 %v957, %v959
      %v961 = vrot.slane %v947, %v960
      %v962 = vcombine.high %v793, %v793
      %v963 = vcombine.high %v954, %v954
      %v964 = vcombine.high %v800, %v800
      %v965 = vcombine.high %v961, %v961
      %v967 = vshrl.u32 %v962, 16
      %v970 = vshrl.u32 %v964, 16
      %v973 = vshrl.u32 %v954, 16
      %v976 = vshrl.u32 %v961, 16
      %v979 = vshrl.u32 %v963, 16
      %v982 = vshrl.u32 %v965, 16
      %v996 = vmul.bf16 %v217, %v793
      %v997 = vmul.bf16 %v218, %v802
      %v998 = vmul.bf16 %v219, %v800
      %v999 = vmul.bf16 %v220, %v805
      %v1000 = vmul.bf16 %v221, %v962
      %v1001 = vmul.bf16 %v222, %v967
      %v1002 = vmul.bf16 %v223, %v964
      %v1003 = vmul.bf16 %v224, %v970
      %v1004 = vmul.bf16 %v225, %v954
      %v1005 = vmul.bf16 %v226, %v973
      %v1006 = vmul.bf16 %v227, %v961
      %v1007 = vmul.bf16 %v228, %v976
      %v1008 = vmul.bf16 %v229, %v963
      %v1009 = vmul.bf16 %v230, %v979
      %v1010 = vmul.bf16 %v231, %v965
      %v1011 = vmul.bf16 %v232, %v982
      %v1029 = vunpack.c.l.s4 1966171168
      %v1030 = vunpack.c.0.s8 %v1029
      %v1031 = vlaneseq
      %v1032 = vshrl.u32 %v1031, 7
      %v1033 = vsub.s32 %v1030, %v1032
      %v1034 = vrot.slane %v996, %v1033
      %v1036 = vunpack.c.l.s4 1966171168
      %v1037 = vunpack.c.0.s8 %v1036
      %v1038 = vlaneseq
      %v1039 = vshrl.u32 %v1038, 7
      %v1040 = vsub.s32 %v1037, %v1039
      %v1041 = vrot.slane %v1034, %v1040
      %v1043 = vunpack.c.l.s4 1966171168
      %v1044 = vunpack.c.0.s8 %v1043
      %v1045 = vlaneseq
      %v1046 = vshrl.u32 %v1045, 7
      %v1047 = vsub.s32 %v1044, %v1046
      %v1048 = vrot.slane %v997, %v1047
      %v1050 = vunpack.c.l.s4 1966171168
      %v1051 = vunpack.c.0.s8 %v1050
      %v1052 = vlaneseq
      %v1053 = vshrl.u32 %v1052, 7
      %v1054 = vsub.s32 %v1051, %v1053
      %v1055 = vrot.slane %v1048, %v1054
      %v1057 = vunpack.c.l.s4 1966171168
      %v1058 = vunpack.c.0.s8 %v1057
      %v1059 = vlaneseq
      %v1060 = vshrl.u32 %v1059, 7
      %v1061 = vsub.s32 %v1058, %v1060
      %v1062 = vrot.slane %v998, %v1061
      %v1064 = vunpack.c.l.s4 1966171168
      %v1065 = vunpack.c.0.s8 %v1064
      %v1066 = vlaneseq
      %v1067 = vshrl.u32 %v1066, 7
      %v1068 = vsub.s32 %v1065, %v1067
      %v1069 = vrot.slane %v1062, %v1068
      %v1071 = vunpack.c.l.s4 1966171168
      %v1072 = vunpack.c.0.s8 %v1071
      %v1073 = vlaneseq
      %v1074 = vshrl.u32 %v1073, 7
      %v1075 = vsub.s32 %v1072, %v1074
      %v1076 = vrot.slane %v999, %v1075
      %v1078 = vunpack.c.l.s4 1966171168
      %v1079 = vunpack.c.0.s8 %v1078
      %v1080 = vlaneseq
      %v1081 = vshrl.u32 %v1080, 7
      %v1082 = vsub.s32 %v1079, %v1081
      %v1083 = vrot.slane %v1076, %v1082
      %v1085 = vunpack.c.l.s4 1966171168
      %v1086 = vunpack.c.0.s8 %v1085
      %v1087 = vlaneseq
      %v1088 = vshrl.u32 %v1087, 7
      %v1089 = vsub.s32 %v1086, %v1088
      %v1090 = vrot.slane %v1000, %v1089
      %v1092 = vunpack.c.l.s4 1966171168
      %v1093 = vunpack.c.0.s8 %v1092
      %v1094 = vlaneseq
      %v1095 = vshrl.u32 %v1094, 7
      %v1096 = vsub.s32 %v1093, %v1095
      %v1097 = vrot.slane %v1090, %v1096
      %v1099 = vunpack.c.l.s4 1966171168
      %v1100 = vunpack.c.0.s8 %v1099
      %v1101 = vlaneseq
      %v1102 = vshrl.u32 %v1101, 7
      %v1103 = vsub.s32 %v1100, %v1102
      %v1104 = vrot.slane %v1001, %v1103
      %v1106 = vunpack.c.l.s4 1966171168
      %v1107 = vunpack.c.0.s8 %v1106
      %v1108 = vlaneseq
      %v1109 = vshrl.u32 %v1108, 7
      %v1110 = vsub.s32 %v1107, %v1109
      %v1111 = vrot.slane %v1104, %v1110
      %v1113 = vunpack.c.l.s4 1966171168
      %v1114 = vunpack.c.0.s8 %v1113
      %v1115 = vlaneseq
      %v1116 = vshrl.u32 %v1115, 7
      %v1117 = vsub.s32 %v1114, %v1116
      %v1118 = vrot.slane %v1002, %v1117
      %v1120 = vunpack.c.l.s4 1966171168
      %v1121 = vunpack.c.0.s8 %v1120
      %v1122 = vlaneseq
      %v1123 = vshrl.u32 %v1122, 7
      %v1124 = vsub.s32 %v1121, %v1123
      %v1125 = vrot.slane %v1118, %v1124
      %v1127 = vunpack.c.l.s4 1966171168
      %v1128 = vunpack.c.0.s8 %v1127
      %v1129 = vlaneseq
      %v1130 = vshrl.u32 %v1129, 7
      %v1131 = vsub.s32 %v1128, %v1130
      %v1132 = vrot.slane %v1003, %v1131
      %v1134 = vunpack.c.l.s4 1966171168
      %v1135 = vunpack.c.0.s8 %v1134
      %v1136 = vlaneseq
      %v1137 = vshrl.u32 %v1136, 7
      %v1138 = vsub.s32 %v1135, %v1137
      %v1139 = vrot.slane %v1132, %v1138
      %v1141 = vunpack.c.l.s4 1966171168
      %v1142 = vunpack.c.0.s8 %v1141
      %v1143 = vlaneseq
      %v1144 = vshrl.u32 %v1143, 7
      %v1145 = vsub.s32 %v1142, %v1144
      %v1146 = vrot.slane %v1004, %v1145
      %v1148 = vunpack.c.l.s4 1966171168
      %v1149 = vunpack.c.0.s8 %v1148
      %v1150 = vlaneseq
      %v1151 = vshrl.u32 %v1150, 7
      %v1152 = vsub.s32 %v1149, %v1151
      %v1153 = vrot.slane %v1146, %v1152
      %v1155 = vunpack.c.l.s4 1966171168
      %v1156 = vunpack.c.0.s8 %v1155
      %v1157 = vlaneseq
      %v1158 = vshrl.u32 %v1157, 7
      %v1159 = vsub.s32 %v1156, %v1158
      %v1160 = vrot.slane %v1005, %v1159
      %v1162 = vunpack.c.l.s4 1966171168
      %v1163 = vunpack.c.0.s8 %v1162
      %v1164 = vlaneseq
      %v1165 = vshrl.u32 %v1164, 7
      %v1166 = vsub.s32 %v1163, %v1165
      %v1167 = vrot.slane %v1160, %v1166
      %v1169 = vunpack.c.l.s4 1966171168
      %v1170 = vunpack.c.0.s8 %v1169
      %v1171 = vlaneseq
      %v1172 = vshrl.u32 %v1171, 7
      %v1173 = vsub.s32 %v1170, %v1172
      %v1174 = vrot.slane %v1006, %v1173
      %v1176 = vunpack.c.l.s4 1966171168
      %v1177 = vunpack.c.0.s8 %v1176
      %v1178 = vlaneseq
      %v1179 = vshrl.u32 %v1178, 7
      %v1180 = vsub.s32 %v1177, %v1179
      %v1181 = vrot.slane %v1174, %v1180
      %v1183 = vunpack.c.l.s4 1966171168
      %v1184 = vunpack.c.0.s8 %v1183
      %v1185 = vlaneseq
      %v1186 = vshrl.u32 %v1185, 7
      %v1187 = vsub.s32 %v1184, %v1186
      %v1188 = vrot.slane %v1007, %v1187
      %v1190 = vunpack.c.l.s4 1966171168
      %v1191 = vunpack.c.0.s8 %v1190
      %v1192 = vlaneseq
      %v1193 = vshrl.u32 %v1192, 7
      %v1194 = vsub.s32 %v1191, %v1193
      %v1195 = vrot.slane %v1188, %v1194
      %v1197 = vunpack.c.l.s4 1966171168
      %v1198 = vunpack.c.0.s8 %v1197
      %v1199 = vlaneseq
      %v1200 = vshrl.u32 %v1199, 7
      %v1201 = vsub.s32 %v1198, %v1200
      %v1202 = vrot.slane %v1008, %v1201
      %v1204 = vunpack.c.l.s4 1966171168
      %v1205 = vunpack.c.0.s8 %v1204
      %v1206 = vlaneseq
      %v1207 = vshrl.u32 %v1206, 7
      %v1208 = vsub.s32 %v1205, %v1207
      %v1209 = vrot.slane %v1202, %v1208
      %v1211 = vunpack.c.l.s4 1966171168
      %v1212 = vunpack.c.0.s8 %v1211
      %v1213 = vlaneseq
      %v1214 = vshrl.u32 %v1213, 7
      %v1215 = vsub.s32 %v1212, %v1214
      %v1216 = vrot.slane %v1009, %v1215
      %v1218 = vunpack.c.l.s4 1966171168
      %v1219 = vunpack.c.0.s8 %v1218
      %v1220 = vlaneseq
      %v1221 = vshrl.u32 %v1220, 7
      %v1222 = vsub.s32 %v1219, %v1221
      %v1223 = vrot.slane %v1216, %v1222
      %v1225 = vunpack.c.l.s4 1966171168
      %v1226 = vunpack.c.0.s8 %v1225
      %v1227 = vlaneseq
      %v1228 = vshrl.u32 %v1227, 7
      %v1229 = vsub.s32 %v1226, %v1228
      %v1230 = vrot.slane %v1010, %v1229
      %v1232 = vunpack.c.l.s4 1966171168
      %v1233 = vunpack.c.0.s8 %v1232
      %v1234 = vlaneseq
      %v1235 = vshrl.u32 %v1234, 7
      %v1236 = vsub.s32 %v1233, %v1235
      %v1237 = vrot.slane %v1230, %v1236
      %v1239 = vunpack.c.l.s4 1966171168
      %v1240 = vunpack.c.0.s8 %v1239
      %v1241 = vlaneseq
      %v1242 = vshrl.u32 %v1241, 7
      %v1243 = vsub.s32 %v1240, %v1242
      %v1244 = vrot.slane %v1011, %v1243
      %v1246 = vunpack.c.l.s4 1966171168
      %v1247 = vunpack.c.0.s8 %v1246
      %v1248 = vlaneseq
      %v1249 = vshrl.u32 %v1248, 7
      %v1250 = vsub.s32 %v1247, %v1249
      %v1251 = vrot.slane %v1244, %v1250
      %v1252 = vunpack.c.l.b16 %v1041
      %v1253 = vunpack.c.l.b16 %v1055
      %v1254 = vunpack.c.l.b16 %v1069
      %v1255 = vunpack.c.l.b16 %v1083
      %v1256 = vunpack.c.l.b16 %v1097
      %v1257 = vunpack.c.l.b16 %v1111
      %v1258 = vunpack.c.l.b16 %v1125
      %v1259 = vunpack.c.l.b16 %v1139
      %v1260 = vunpack.c.l.b16 %v1153
      %v1261 = vunpack.c.l.b16 %v1167
      %v1262 = vunpack.c.l.b16 %v1181
      %v1263 = vunpack.c.l.b16 %v1195
      %v1264 = vunpack.c.l.b16 %v1209
      %v1265 = vunpack.c.l.b16 %v1223
      %v1266 = vunpack.c.l.b16 %v1237
      %v1267 = vunpack.c.l.b16 %v1251
      %v1268 = vrot.slane %v1253, 7
      %v1269 = vsel %vm343, %v1268, %v1252
      %v1270 = vrot.slane %v1254, 6
      %v1271 = vsel %vm346, %v1270, %v1269
      %v1272 = vrot.slane %v1255, 5
      %v1273 = vsel %vm349, %v1272, %v1271
      %v1274 = vrot.slane %v1256, 4
      %v1275 = vsel %vm616, %v1274, %v1273
      %v1276 = vrot.slane %v1257, 3
      %v1277 = vsel %vm619, %v1276, %v1275
      %v1278 = vrot.slane %v1258, 2
      %v1279 = vsel %vm622, %v1278, %v1277
      %v1280 = vrot.slane %v1259, 1
      %v1281 = vsel %vm625, %v1280, %v1279
      %v1282 = vrot.slane %v1261, 7
      %v1283 = vsel %vm343, %v1282, %v1260
      %v1284 = vrot.slane %v1262, 6
      %v1285 = vsel %vm346, %v1284, %v1283
      %v1286 = vrot.slane %v1263, 5
      %v1287 = vsel %vm349, %v1286, %v1285
      %v1288 = vrot.slane %v1264, 4
      %v1289 = vsel %vm616, %v1288, %v1287
      %v1290 = vrot.slane %v1265, 3
      %v1291 = vsel %vm619, %v1290, %v1289
      %v1292 = vrot.slane %v1266, 2
      %v1293 = vsel %vm622, %v1292, %v1291
      %v1294 = vrot.slane %v1267, 1
      %v1295 = vsel %vm625, %v1294, %v1293
      %v1296 = vpack.c.b16 %v1295, %v1281
      %vm1298 = vcmask 130048
      %v1300 = vsel %vm1298, %v938, 0
      %1302 = vmatprep.subr.bf16.mxu0 0
      %1303 = vmatpush1.bf16.msra.mxu0 0
      %1304 = vmatprep.subr.bf16.mxu0 0
      %1305 = vmatpush1.bf16.msra.mxu0 0
      %1306 = vmatprep.subr.bf16.mxu0 0
      %1307 = vmatpush1.bf16.msra.mxu0 0
      %1308 = vmatprep.subr.bf16.mxu0 0
      %1309 = vmatpush1.bf16.msra.mxu0 0
      %1310 = vmatprep.subr.bf16.mxu0 0
      %1311 = vmatpush1.bf16.msra.mxu0 0
      %1312 = vmatprep.subr.bf16.mxu0 0
      %1313 = vmatpush1.bf16.msra.mxu0 0
      %1314 = vmatprep.subr.bf16.mxu0 0
      %1315 = vmatpush1.bf16.msra.mxu0 0
      %1316 = vmatprep.subr.bf16.mxu0 0
      %1317 = vmatpush1.bf16.msra.mxu0 %v1296
      %1318 = vmatprep.subr.bf16.mxu0 0
      %1319 = vmatpush2.bf16.msra.mxu0 0
      %1320 = vmatprep.subr.bf16.mxu0 0
      %1321 = vmatpush2.bf16.msra.mxu0 0
      %1322 = vmatprep.subr.bf16.mxu0 0
      %1323 = vmatpush2.bf16.msra.mxu0 0
      %1324 = vmatprep.subr.bf16.mxu0 0
      %1325 = vmatpush2.bf16.msra.mxu0 0
      %1326 = vmatprep.subr.bf16.mxu0 0
      %1327 = vmatpush2.bf16.msra.mxu0 0
      %1328 = vmatprep.subr.bf16.mxu0 0
      %1329 = vmatpush2.bf16.msra.mxu0 0
      %1330 = vmatprep.subr.bf16.mxu0 0
      %1331 = vmatpush2.bf16.msra.mxu0 0
      %1332 = vmatprep.subr.bf16.mxu0 0
      %1333 = vmatpush2.bf16.msra.mxu0 0
      %1334 = vmatprep.mubr.bf16.mxu0 0
      %1335 = vmatmul.mubr.bf16.gmra.mxu0 %v1300
      %v1336 = vpop.f32.mrf.mxu0
      %v1337 = vadd.f32 0.0, %v1336
      %v1338 = vpop.f32.mrf.mxu0
      %v1339 = vpop.f32.mrf.mxu0
      %v1340 = vpop.f32.mrf.mxu0
      %1341 = vdwg.mxu0
      %v1359 = vunpack.c.l.s4 1966171168
      %v1360 = vunpack.c.0.s8 %v1359
      %v1361 = vlaneseq
      %v1362 = vshrl.u32 %v1361, 7
      %v1363 = vsub.s32 %v1360, %v1362
      %v1364 = vrot.slane %v753, %v1363
      %v1366 = vunpack.c.l.s4 1966171168
      %v1367 = vunpack.c.0.s8 %v1366
      %v1368 = vlaneseq
      %v1369 = vshrl.u32 %v1368, 7
      %v1370 = vsub.s32 %v1367, %v1369
      %v1371 = vrot.slane %v1364, %v1370
      %v1373 = vunpack.c.l.s4 1966171168
      %v1374 = vunpack.c.0.s8 %v1373
      %v1375 = vlaneseq
      %v1376 = vshrl.u32 %v1375, 7
      %v1377 = vsub.s32 %v1374, %v1376
      %v1378 = vrot.slane %v754, %v1377
      %v1380 = vunpack.c.l.s4 1966171168
      %v1381 = vunpack.c.0.s8 %v1380
      %v1382 = vlaneseq
      %v1383 = vshrl.u32 %v1382, 7
      %v1384 = vsub.s32 %v1381, %v1383
      %v1385 = vrot.slane %v1378, %v1384
      %v1387 = vunpack.c.l.s4 1966171168
      %v1388 = vunpack.c.0.s8 %v1387
      %v1389 = vlaneseq
      %v1390 = vshrl.u32 %v1389, 7
      %v1391 = vsub.s32 %v1388, %v1390
      %v1392 = vrot.slane %v755, %v1391
      %v1394 = vunpack.c.l.s4 1966171168
      %v1395 = vunpack.c.0.s8 %v1394
      %v1396 = vlaneseq
      %v1397 = vshrl.u32 %v1396, 7
      %v1398 = vsub.s32 %v1395, %v1397
      %v1399 = vrot.slane %v1392, %v1398
      %v1401 = vunpack.c.l.s4 1966171168
      %v1402 = vunpack.c.0.s8 %v1401
      %v1403 = vlaneseq
      %v1404 = vshrl.u32 %v1403, 7
      %v1405 = vsub.s32 %v1402, %v1404
      %v1406 = vrot.slane %v756, %v1405
      %v1408 = vunpack.c.l.s4 1966171168
      %v1409 = vunpack.c.0.s8 %v1408
      %v1410 = vlaneseq
      %v1411 = vshrl.u32 %v1410, 7
      %v1412 = vsub.s32 %v1409, %v1411
      %v1413 = vrot.slane %v1406, %v1412
      %v1415 = vunpack.c.l.s4 1966171168
      %v1416 = vunpack.c.0.s8 %v1415
      %v1417 = vlaneseq
      %v1418 = vshrl.u32 %v1417, 7
      %v1419 = vsub.s32 %v1416, %v1418
      %v1420 = vrot.slane %v757, %v1419
      %v1422 = vunpack.c.l.s4 1966171168
      %v1423 = vunpack.c.0.s8 %v1422
      %v1424 = vlaneseq
      %v1425 = vshrl.u32 %v1424, 7
      %v1426 = vsub.s32 %v1423, %v1425
      %v1427 = vrot.slane %v1420, %v1426
      %v1429 = vunpack.c.l.s4 1966171168
      %v1430 = vunpack.c.0.s8 %v1429
      %v1431 = vlaneseq
      %v1432 = vshrl.u32 %v1431, 7
      %v1433 = vsub.s32 %v1430, %v1432
      %v1434 = vrot.slane %v758, %v1433
      %v1436 = vunpack.c.l.s4 1966171168
      %v1437 = vunpack.c.0.s8 %v1436
      %v1438 = vlaneseq
      %v1439 = vshrl.u32 %v1438, 7
      %v1440 = vsub.s32 %v1437, %v1439
      %v1441 = vrot.slane %v1434, %v1440
      %v1443 = vunpack.c.l.s4 1966171168
      %v1444 = vunpack.c.0.s8 %v1443
      %v1445 = vlaneseq
      %v1446 = vshrl.u32 %v1445, 7
      %v1447 = vsub.s32 %v1444, %v1446
      %v1448 = vrot.slane %v759, %v1447
      %v1450 = vunpack.c.l.s4 1966171168
      %v1451 = vunpack.c.0.s8 %v1450
      %v1452 = vlaneseq
      %v1453 = vshrl.u32 %v1452, 7
      %v1454 = vsub.s32 %v1451, %v1453
      %v1455 = vrot.slane %v1448, %v1454
      %v1457 = vunpack.c.l.s4 1966171168
      %v1458 = vunpack.c.0.s8 %v1457
      %v1459 = vlaneseq
      %v1460 = vshrl.u32 %v1459, 7
      %v1461 = vsub.s32 %v1458, %v1460
      %v1462 = vrot.slane %v760, %v1461
      %v1464 = vunpack.c.l.s4 1966171168
      %v1465 = vunpack.c.0.s8 %v1464
      %v1466 = vlaneseq
      %v1467 = vshrl.u32 %v1466, 7
      %v1468 = vsub.s32 %v1465, %v1467
      %v1469 = vrot.slane %v1462, %v1468
      %v1471 = vunpack.c.l.s4 1966171168
      %v1472 = vunpack.c.0.s8 %v1471
      %v1473 = vlaneseq
      %v1474 = vshrl.u32 %v1473, 7
      %v1475 = vsub.s32 %v1472, %v1474
      %v1476 = vrot.slane %v761, %v1475
      %v1478 = vunpack.c.l.s4 1966171168
      %v1479 = vunpack.c.0.s8 %v1478
      %v1480 = vlaneseq
      %v1481 = vshrl.u32 %v1480, 7
      %v1482 = vsub.s32 %v1479, %v1481
      %v1483 = vrot.slane %v1476, %v1482
      %v1485 = vunpack.c.l.s4 1966171168
      %v1486 = vunpack.c.0.s8 %v1485
      %v1487 = vlaneseq
      %v1488 = vshrl.u32 %v1487, 7
      %v1489 = vsub.s32 %v1486, %v1488
      %v1490 = vrot.slane %v762, %v1489
      %v1492 = vunpack.c.l.s4 1966171168
      %v1493 = vunpack.c.0.s8 %v1492
      %v1494 = vlaneseq
      %v1495 = vshrl.u32 %v1494, 7
      %v1496 = vsub.s32 %v1493, %v1495
      %v1497 = vrot.slane %v1490, %v1496
      %v1499 = vunpack.c.l.s4 1966171168
      %v1500 = vunpack.c.0.s8 %v1499
      %v1501 = vlaneseq
      %v1502 = vshrl.u32 %v1501, 7
      %v1503 = vsub.s32 %v1500, %v1502
      %v1504 = vrot.slane %v763, %v1503
      %v1506 = vunpack.c.l.s4 1966171168
      %v1507 = vunpack.c.0.s8 %v1506
      %v1508 = vlaneseq
      %v1509 = vshrl.u32 %v1508, 7
      %v1510 = vsub.s32 %v1507, %v1509
      %v1511 = vrot.slane %v1504, %v1510
      %v1513 = vunpack.c.l.s4 1966171168
      %v1514 = vunpack.c.0.s8 %v1513
      %v1515 = vlaneseq
      %v1516 = vshrl.u32 %v1515, 7
      %v1517 = vsub.s32 %v1514, %v1516
      %v1518 = vrot.slane %v764, %v1517
      %v1520 = vunpack.c.l.s4 1966171168
      %v1521 = vunpack.c.0.s8 %v1520
      %v1522 = vlaneseq
      %v1523 = vshrl.u32 %v1522, 7
      %v1524 = vsub.s32 %v1521, %v1523
      %v1525 = vrot.slane %v1518, %v1524
      %v1527 = vunpack.c.l.s4 1966171168
      %v1528 = vunpack.c.0.s8 %v1527
      %v1529 = vlaneseq
      %v1530 = vshrl.u32 %v1529, 7
      %v1531 = vsub.s32 %v1528, %v1530
      %v1532 = vrot.slane %v765, %v1531
      %v1534 = vunpack.c.l.s4 1966171168
      %v1535 = vunpack.c.0.s8 %v1534
      %v1536 = vlaneseq
      %v1537 = vshrl.u32 %v1536, 7
      %v1538 = vsub.s32 %v1535, %v1537
      %v1539 = vrot.slane %v1532, %v1538
      %v1541 = vunpack.c.l.s4 1966171168
      %v1542 = vunpack.c.0.s8 %v1541
      %v1543 = vlaneseq
      %v1544 = vshrl.u32 %v1543, 7
      %v1545 = vsub.s32 %v1542, %v1544
      %v1546 = vrot.slane %v766, %v1545
      %v1548 = vunpack.c.l.s4 1966171168
      %v1549 = vunpack.c.0.s8 %v1548
      %v1550 = vlaneseq
      %v1551 = vshrl.u32 %v1550, 7
      %v1552 = vsub.s32 %v1549, %v1551
      %v1553 = vrot.slane %v1546, %v1552
      %v1555 = vunpack.c.l.s4 1966171168
      %v1556 = vunpack.c.0.s8 %v1555
      %v1557 = vlaneseq
      %v1558 = vshrl.u32 %v1557, 7
      %v1559 = vsub.s32 %v1556, %v1558
      %v1560 = vrot.slane %v767, %v1559
      %v1562 = vunpack.c.l.s4 1966171168
      %v1563 = vunpack.c.0.s8 %v1562
      %v1564 = vlaneseq
      %v1565 = vshrl.u32 %v1564, 7
      %v1566 = vsub.s32 %v1563, %v1565
      %v1567 = vrot.slane %v1560, %v1566
      %v1569 = vunpack.c.l.s4 1966171168
      %v1570 = vunpack.c.0.s8 %v1569
      %v1571 = vlaneseq
      %v1572 = vshrl.u32 %v1571, 7
      %v1573 = vsub.s32 %v1570, %v1572
      %v1574 = vrot.slane %v768, %v1573
      %v1576 = vunpack.c.l.s4 1966171168
      %v1577 = vunpack.c.0.s8 %v1576
      %v1578 = vlaneseq
      %v1579 = vshrl.u32 %v1578, 7
      %v1580 = vsub.s32 %v1577, %v1579
      %v1581 = vrot.slane %v1574, %v1580
      %v1582 = vunpack.c.l.b16 %v1371
      %v1583 = vunpack.c.l.b16 %v1385
      %v1584 = vunpack.c.l.b16 %v1399
      %v1585 = vunpack.c.l.b16 %v1413
      %v1586 = vunpack.c.l.b16 %v1427
      %v1587 = vunpack.c.l.b16 %v1441
      %v1588 = vunpack.c.l.b16 %v1455
      %v1589 = vunpack.c.l.b16 %v1469
      %v1590 = vunpack.c.l.b16 %v1483
      %v1591 = vunpack.c.l.b16 %v1497
      %v1592 = vunpack.c.l.b16 %v1511
      %v1593 = vunpack.c.l.b16 %v1525
      %v1594 = vunpack.c.l.b16 %v1539
      %v1595 = vunpack.c.l.b16 %v1553
      %v1596 = vunpack.c.l.b16 %v1567
      %v1597 = vunpack.c.l.b16 %v1581
      %v1598 = vrot.slane %v1583, 7
      %v1599 = vsel %vm343, %v1598, %v1582
      %v1600 = vrot.slane %v1584, 6
      %v1601 = vsel %vm346, %v1600, %v1599
      %v1602 = vrot.slane %v1585, 5
      %v1603 = vsel %vm349, %v1602, %v1601
      %v1604 = vrot.slane %v1586, 4
      %v1605 = vsel %vm616, %v1604, %v1603
      %v1606 = vrot.slane %v1587, 3
      %v1607 = vsel %vm619, %v1606, %v1605
      %v1608 = vrot.slane %v1588, 2
      %v1609 = vsel %vm622, %v1608, %v1607
      %v1610 = vrot.slane %v1589, 1
      %v1611 = vsel %vm625, %v1610, %v1609
      %v1612 = vrot.slane %v1591, 7
      %v1613 = vsel %vm343, %v1612, %v1590
      %v1614 = vrot.slane %v1592, 6
      %v1615 = vsel %vm346, %v1614, %v1613
      %v1616 = vrot.slane %v1593, 5
      %v1617 = vsel %vm349, %v1616, %v1615
      %v1618 = vrot.slane %v1594, 4
      %v1619 = vsel %vm616, %v1618, %v1617
      %v1620 = vrot.slane %v1595, 3
      %v1621 = vsel %vm619, %v1620, %v1619
      %v1622 = vrot.slane %v1596, 2
      %v1623 = vsel %vm622, %v1622, %v1621
      %v1624 = vrot.slane %v1597, 1
      %v1625 = vsel %vm625, %v1624, %v1623
      %v1626 = vpack.c.b16 %v1625, %v1611
      %v1629 = vsel %vm1298, %v695, 0
      %1631 = vmatprep.subr.bf16.mxu0 0
      %1632 = vmatpush1.bf16.msra.mxu0 0
      %1633 = vmatprep.subr.bf16.mxu0 0
      %1634 = vmatpush1.bf16.msra.mxu0 0
      %1635 = vmatprep.subr.bf16.mxu0 0
      %1636 = vmatpush1.bf16.msra.mxu0 0
      %1637 = vmatprep.subr.bf16.mxu0 0
      %1638 = vmatpush1.bf16.msra.mxu0 0
      %1639 = vmatprep.subr.bf16.mxu0 0
      %1640 = vmatpush1.bf16.msra.mxu0 0
      %1641 = vmatprep.subr.bf16.mxu0 0
      %1642 = vmatpush1.bf16.msra.mxu0 0
      %1643 = vmatprep.subr.bf16.mxu0 0
      %1644 = vmatpush1.bf16.msra.mxu0 0
      %1645 = vmatprep.subr.bf16.mxu0 0
      %1646 = vmatpush1.bf16.msra.mxu0 %v1626
      %1647 = vmatprep.subr.bf16.mxu0 0
      %1648 = vmatpush2.bf16.msra.mxu0 0
      %1649 = vmatprep.subr.bf16.mxu0 0
      %1650 = vmatpush2.bf16.msra.mxu0 0
      %1651 = vmatprep.subr.bf16.mxu0 0
      %1652 = vmatpush2.bf16.msra.mxu0 0
      %1653 = vmatprep.subr.bf16.mxu0 0
      %1654 = vmatpush2.bf16.msra.mxu0 0
      %1655 = vmatprep.subr.bf16.mxu0 0
      %1656 = vmatpush2.bf16.msra.mxu0 0
      %1657 = vmatprep.subr.bf16.mxu0 0
      %1658 = vmatpush2.bf16.msra.mxu0 0
      %1659 = vmatprep.subr.bf16.mxu0 0
      %1660 = vmatpush2.bf16.msra.mxu0 0
      %1661 = vmatprep.subr.bf16.mxu0 0
      %1662 = vmatpush2.bf16.msra.mxu0 0
      %1663 = vmatprep.mubr.bf16.mxu0 0
      %1664 = vmatmul.mubr.bf16.gmra.mxu0 %v1629
      %v1665 = vpop.f32.mrf.mxu0
      %v1666 = vadd.f32 %v1337, %v1665
      %v1667 = vpop.f32.mrf.mxu0
      %v1668 = vpop.f32.mrf.mxu0
      %v1669 = vpop.f32.mrf.mxu0
      %1670 = vdwg.mxu0
      %v1671 = vld [vmem:[%s0] sm:$0x2]
      %v1673 = vpack.i.b16 %v1671, %v1671
      %v1675 = vlaneseq
      %v1676 = vshrl.u32 %v1675, 7
      %v1677 = vsub.s32 1, %v1676
      %v1678 = vrot.slane %v1673, %v1677
      %v1681 = vunpack.c.l.s4 1966171168
      %v1682 = vunpack.c.0.s8 %v1681
      %v1683 = vlaneseq
      %v1684 = vshrl.u32 %v1683, 7
      %v1685 = vsub.s32 %v1682, %v1684
      %v1686 = vrot.slane %v1678, %v1685
      %v1687 = vcombine.high %v1686, %v1686
      %v1689 = vunpack.c.l.s4 1966171168
      %v1690 = vunpack.c.0.s8 %v1689
      %v1691 = vlaneseq
      %v1692 = vshrl.u32 %v1691, 7
      %v1693 = vsub.s32 %v1690, %v1692
      %v1694 = vrot.slane %v1686, %v1693
      %v1696 = vunpack.c.l.s4 1966171168
      %v1697 = vunpack.c.0.s8 %v1696
      %v1698 = vlaneseq
      %v1699 = vshrl.u32 %v1698, 7
      %v1700 = vsub.s32 %v1697, %v1699
      %v1701 = vrot.slane %v1687, %v1700
      %v1703 = vshrl.u32 %v1694, 16
      %v1706 = vshrl.u32 %v1701, 16
      %v1712 = vmul.bf16 %v197, %v1694
      %v1713 = vmul.bf16 %v198, %v1703
      %v1714 = vmul.bf16 %v199, %v1701
      %v1715 = vmul.bf16 %v200, %v1706
      %v1721 = vunpack.c.l.s4 1966171168
      %v1722 = vunpack.c.0.s8 %v1721
      %v1723 = vlaneseq
      %v1724 = vshrl.u32 %v1723, 7
      %v1725 = vsub.s32 %v1722, %v1724
      %v1726 = vrot.slane %v1712, %v1725
      %v1728 = vunpack.c.l.s4 1966171168
      %v1729 = vunpack.c.0.s8 %v1728
      %v1730 = vlaneseq
      %v1731 = vshrl.u32 %v1730, 7
      %v1732 = vsub.s32 %v1729, %v1731
      %v1733 = vrot.slane %v1726, %v1732
      %v1735 = vunpack.c.l.s4 1966171168
      %v1736 = vunpack.c.0.s8 %v1735
      %v1737 = vlaneseq
      %v1738 = vshrl.u32 %v1737, 7
      %v1739 = vsub.s32 %v1736, %v1738
      %v1740 = vrot.slane %v1713, %v1739
      %v1742 = vunpack.c.l.s4 1966171168
      %v1743 = vunpack.c.0.s8 %v1742
      %v1744 = vlaneseq
      %v1745 = vshrl.u32 %v1744, 7
      %v1746 = vsub.s32 %v1743, %v1745
      %v1747 = vrot.slane %v1740, %v1746
      %v1749 = vunpack.c.l.s4 1966171168
      %v1750 = vunpack.c.0.s8 %v1749
      %v1751 = vlaneseq
      %v1752 = vshrl.u32 %v1751, 7
      %v1753 = vsub.s32 %v1750, %v1752
      %v1754 = vrot.slane %v1714, %v1753
      %v1756 = vunpack.c.l.s4 1966171168
      %v1757 = vunpack.c.0.s8 %v1756
      %v1758 = vlaneseq
      %v1759 = vshrl.u32 %v1758, 7
      %v1760 = vsub.s32 %v1757, %v1759
      %v1761 = vrot.slane %v1754, %v1760
      %v1763 = vunpack.c.l.s4 1966171168
      %v1764 = vunpack.c.0.s8 %v1763
      %v1765 = vlaneseq
      %v1766 = vshrl.u32 %v1765, 7
      %v1767 = vsub.s32 %v1764, %v1766
      %v1768 = vrot.slane %v1715, %v1767
      %v1770 = vunpack.c.l.s4 1966171168
      %v1771 = vunpack.c.0.s8 %v1770
      %v1772 = vlaneseq
      %v1773 = vshrl.u32 %v1772, 7
      %v1774 = vsub.s32 %v1771, %v1773
      %v1775 = vrot.slane %v1768, %v1774
      %v1776 = vunpack.c.l.b16 %v1733
      %v1777 = vunpack.c.l.b16 %v1747
      %v1778 = vunpack.c.l.b16 %v1761
      %v1779 = vunpack.c.l.b16 %v1775
      %v1780 = vrot.slane %v1777, 7
      %v1781 = vsel %vm343, %v1780, %v1776
      %v1782 = vrot.slane %v1778, 6
      %v1783 = vsel %vm346, %v1782, %v1781
      %v1784 = vrot.slane %v1779, 5
      %v1785 = vsel %vm349, %v1784, %v1783
      %v1786 = vpack.c.b16 %v1785, %v1785
      %1788 = vmatprep.subr.bf16.mxu0 0
      %1789 = vmatpush1.bf16.xpose.msra.mxu0 0
      %1790 = vmatprep.subr.bf16.mxu0 0
      %1791 = vmatpush1.bf16.xpose.msra.mxu0 0
      %1792 = vmatprep.subr.bf16.mxu0 0
      %1793 = vmatpush1.bf16.xpose.msra.mxu0 0
      %1794 = vmatprep.subr.bf16.mxu0 0
      %1795 = vmatpush1.bf16.xpose.msra.mxu0 0
      %1796 = vmatprep.subr.bf16.mxu0 0
      %1797 = vmatpush1.bf16.xpose.msra.mxu0 0
      %1798 = vmatprep.subr.bf16.mxu0 0
      %1799 = vmatpush1.bf16.xpose.msra.mxu0 0
      %1800 = vmatprep.subr.bf16.mxu0 0
      %1801 = vmatpush1.bf16.xpose.msra.mxu0 0
      %1802 = vmatprep.subr.bf16.mxu0 0
      %1803 = vmatpush1.bf16.xpose.msra.mxu0 %v641
      %1804 = vmatprep.subr.bf16.mxu0 0
      %1805 = vmatpush2.bf16.xpose.msra.mxu0 0
      %1806 = vmatprep.subr.bf16.mxu0 0
      %1807 = vmatpush2.bf16.xpose.msra.mxu0 0
      %1808 = vmatprep.subr.bf16.mxu0 0
      %1809 = vmatpush2.bf16.xpose.msra.mxu0 0
      %1810 = vmatprep.subr.bf16.mxu0 0
      %1811 = vmatpush2.bf16.xpose.msra.mxu0 0
      %1812 = vmatprep.subr.bf16.mxu0 0
      %1813 = vmatpush2.bf16.xpose.msra.mxu0 0
      %1814 = vmatprep.subr.bf16.mxu0 0
      %1815 = vmatpush2.bf16.xpose.msra.mxu0 0
      %1816 = vmatprep.subr.bf16.mxu0 0
      %1817 = vmatpush2.bf16.xpose.msra.mxu0 0
      %1818 = vmatprep.subr.bf16.mxu0 0
      %1819 = vmatpush2.bf16.xpose.msra.mxu0 0
      %1820 = vmatprep.mubr.bf16.mxu0 0
      %1821 = vmatmul.mubr.bf16.gmra.mxu0 %v1786
      %v1822 = vpop.f32.mrf.mxu0
      %v1823 = vadd.f32 0.0, %v1822
      %v1824 = vpop.f32.mrf.mxu0
      %v1825 = vpop.f32.mrf.mxu0
      %v1826 = vpop.f32.mrf.mxu0
      %1827 = vdwg.mxu0
      %v1828 = vsel %vm683, %v1823, -inf
      %1829 = vmax.xlane.f32.xlu0 %v1828
      %v1830 = vpop.xlane.xlu0 %1829
      %v1831 = vsub.f32 %v1823, %v1830
      %v1832 = vmul.f32 %v1831, 1.442695
      %v1833 = vpow.pop %v1832
      %v1834 = vsel %vm683, %v1833, 0.0
      %1835 = vadd.xlane.f32.xlu0 %v1834
      %v1836 = vpop.xlane.xlu0 %1835
      %v1837 = vrcp.pop %v1836
      %v1838 = vmul.f32 %v1833, %v1837
      %v1839 = vpack.c.bf16 %v1838, %v1838
      %v1840 = vcombine.high %v1678, %v1678
      %v1842 = vunpack.c.l.s4 1966171168
      %v1843 = vunpack.c.0.s8 %v1842
      %v1844 = vlaneseq
      %v1845 = vshrl.u32 %v1844, 7
      %v1846 = vsub.s32 %v1843, %v1845
      %v1847 = vrot.slane %v1840, %v1846
      %v1848 = vcombine.high %v1847, %v1847
      %v1850 = vunpack.c.l.s4 1966171168
      %v1851 = vunpack.c.0.s8 %v1850
      %v1852 = vlaneseq
      %v1853 = vshrl.u32 %v1852, 7
      %v1854 = vsub.s32 %v1851, %v1853
      %v1855 = vrot.slane %v1847, %v1854
      %v1857 = vunpack.c.l.s4 1966171168
      %v1858 = vunpack.c.0.s8 %v1857
      %v1859 = vlaneseq
      %v1860 = vshrl.u32 %v1859, 7
      %v1861 = vsub.s32 %v1858, %v1860
      %v1862 = vrot.slane %v1848, %v1861
      %v1863 = vcombine.high %v1694, %v1694
      %v1864 = vcombine.high %v1855, %v1855
      %v1865 = vcombine.high %v1701, %v1701
      %v1866 = vcombine.high %v1862, %v1862
      %v1868 = vshrl.u32 %v1863, 16
      %v1871 = vshrl.u32 %v1865, 16
      %v1874 = vshrl.u32 %v1855, 16
      %v1877 = vshrl.u32 %v1862, 16
      %v1880 = vshrl.u32 %v1864, 16
      %v1883 = vshrl.u32 %v1866, 16
      %v1897 = vmul.bf16 %v217, %v1694
      %v1898 = vmul.bf16 %v218, %v1703
      %v1899 = vmul.bf16 %v219, %v1701
      %v1900 = vmul.bf16 %v220, %v1706
      %v1901 = vmul.bf16 %v221, %v1863
      %v1902 = vmul.bf16 %v222, %v1868
      %v1903 = vmul.bf16 %v223, %v1865
      %v1904 = vmul.bf16 %v224, %v1871
      %v1905 = vmul.bf16 %v225, %v1855
      %v1906 = vmul.bf16 %v226, %v1874
      %v1907 = vmul.bf16 %v227, %v1862
      %v1908 = vmul.bf16 %v228, %v1877
      %v1909 = vmul.bf16 %v229, %v1864
      %v1910 = vmul.bf16 %v230, %v1880
      %v1911 = vmul.bf16 %v231, %v1866
      %v1912 = vmul.bf16 %v232, %v1883
      %v1930 = vunpack.c.l.s4 1966171168
      %v1931 = vunpack.c.0.s8 %v1930
      %v1932 = vlaneseq
      %v1933 = vshrl.u32 %v1932, 7
      %v1934 = vsub.s32 %v1931, %v1933
      %v1935 = vrot.slane %v1897, %v1934
      %v1937 = vunpack.c.l.s4 1966171168
      %v1938 = vunpack.c.0.s8 %v1937
      %v1939 = vlaneseq
      %v1940 = vshrl.u32 %v1939, 7
      %v1941 = vsub.s32 %v1938, %v1940
      %v1942 = vrot.slane %v1935, %v1941
      %v1944 = vunpack.c.l.s4 1966171168
      %v1945 = vunpack.c.0.s8 %v1944
      %v1946 = vlaneseq
      %v1947 = vshrl.u32 %v1946, 7
      %v1948 = vsub.s32 %v1945, %v1947
      %v1949 = vrot.slane %v1898, %v1948
      %v1951 = vunpack.c.l.s4 1966171168
      %v1952 = vunpack.c.0.s8 %v1951
      %v1953 = vlaneseq
      %v1954 = vshrl.u32 %v1953, 7
      %v1955 = vsub.s32 %v1952, %v1954
      %v1956 = vrot.slane %v1949, %v1955
      %v1958 = vunpack.c.l.s4 1966171168
      %v1959 = vunpack.c.0.s8 %v1958
      %v1960 = vlaneseq
      %v1961 = vshrl.u32 %v1960, 7
      %v1962 = vsub.s32 %v1959, %v1961
      %v1963 = vrot.slane %v1899, %v1962
      %v1965 = vunpack.c.l.s4 1966171168
      %v1966 = vunpack.c.0.s8 %v1965
      %v1967 = vlaneseq
      %v1968 = vshrl.u32 %v1967, 7
      %v1969 = vsub.s32 %v1966, %v1968
      %v1970 = vrot.slane %v1963, %v1969
      %v1972 = vunpack.c.l.s4 1966171168
      %v1973 = vunpack.c.0.s8 %v1972
      %v1974 = vlaneseq
      %v1975 = vshrl.u32 %v1974, 7
      %v1976 = vsub.s32 %v1973, %v1975
      %v1977 = vrot.slane %v1900, %v1976
      %v1979 = vunpack.c.l.s4 1966171168
      %v1980 = vunpack.c.0.s8 %v1979
      %v1981 = vlaneseq
      %v1982 = vshrl.u32 %v1981, 7
      %v1983 = vsub.s32 %v1980, %v1982
      %v1984 = vrot.slane %v1977, %v1983
      %v1986 = vunpack.c.l.s4 1966171168
      %v1987 = vunpack.c.0.s8 %v1986
      %v1988 = vlaneseq
      %v1989 = vshrl.u32 %v1988, 7
      %v1990 = vsub.s32 %v1987, %v1989
      %v1991 = vrot.slane %v1901, %v1990
      %v1993 = vunpack.c.l.s4 1966171168
      %v1994 = vunpack.c.0.s8 %v1993
      %v1995 = vlaneseq
      %v1996 = vshrl.u32 %v1995, 7
      %v1997 = vsub.s32 %v1994, %v1996
      %v1998 = vrot.slane %v1991, %v1997
      %v2000 = vunpack.c.l.s4 1966171168
      %v2001 = vunpack.c.0.s8 %v2000
      %v2002 = vlaneseq
      %v2003 = vshrl.u32 %v2002, 7
      %v2004 = vsub.s32 %v2001, %v2003
      %v2005 = vrot.slane %v1902, %v2004
      %v2007 = vunpack.c.l.s4 1966171168
      %v2008 = vunpack.c.0.s8 %v2007
      %v2009 = vlaneseq
      %v2010 = vshrl.u32 %v2009, 7
      %v2011 = vsub.s32 %v2008, %v2010
      %v2012 = vrot.slane %v2005, %v2011
      %v2014 = vunpack.c.l.s4 1966171168
      %v2015 = vunpack.c.0.s8 %v2014
      %v2016 = vlaneseq
      %v2017 = vshrl.u32 %v2016, 7
      %v2018 = vsub.s32 %v2015, %v2017
      %v2019 = vrot.slane %v1903, %v2018
      %v2021 = vunpack.c.l.s4 1966171168
      %v2022 = vunpack.c.0.s8 %v2021
      %v2023 = vlaneseq
      %v2024 = vshrl.u32 %v2023, 7
      %v2025 = vsub.s32 %v2022, %v2024
      %v2026 = vrot.slane %v2019, %v2025
      %v2028 = vunpack.c.l.s4 1966171168
      %v2029 = vunpack.c.0.s8 %v2028
      %v2030 = vlaneseq
      %v2031 = vshrl.u32 %v2030, 7
      %v2032 = vsub.s32 %v2029, %v2031
      %v2033 = vrot.slane %v1904, %v2032
      %v2035 = vunpack.c.l.s4 1966171168
      %v2036 = vunpack.c.0.s8 %v2035
      %v2037 = vlaneseq
      %v2038 = vshrl.u32 %v2037, 7
      %v2039 = vsub.s32 %v2036, %v2038
      %v2040 = vrot.slane %v2033, %v2039
      %v2042 = vunpack.c.l.s4 1966171168
      %v2043 = vunpack.c.0.s8 %v2042
      %v2044 = vlaneseq
      %v2045 = vshrl.u32 %v2044, 7
      %v2046 = vsub.s32 %v2043, %v2045
      %v2047 = vrot.slane %v1905, %v2046
      %v2049 = vunpack.c.l.s4 1966171168
      %v2050 = vunpack.c.0.s8 %v2049
      %v2051 = vlaneseq
      %v2052 = vshrl.u32 %v2051, 7
      %v2053 = vsub.s32 %v2050, %v2052
      %v2054 = vrot.slane %v2047, %v2053
      %v2056 = vunpack.c.l.s4 1966171168
      %v2057 = vunpack.c.0.s8 %v2056
      %v2058 = vlaneseq
      %v2059 = vshrl.u32 %v2058, 7
      %v2060 = vsub.s32 %v2057, %v2059
      %v2061 = vrot.slane %v1906, %v2060
      %v2063 = vunpack.c.l.s4 1966171168
      %v2064 = vunpack.c.0.s8 %v2063
      %v2065 = vlaneseq
      %v2066 = vshrl.u32 %v2065, 7
      %v2067 = vsub.s32 %v2064, %v2066
      %v2068 = vrot.slane %v2061, %v2067
      %v2070 = vunpack.c.l.s4 1966171168
      %v2071 = vunpack.c.0.s8 %v2070
      %v2072 = vlaneseq
      %v2073 = vshrl.u32 %v2072, 7
      %v2074 = vsub.s32 %v2071, %v2073
      %v2075 = vrot.slane %v1907, %v2074
      %v2077 = vunpack.c.l.s4 1966171168
      %v2078 = vunpack.c.0.s8 %v2077
      %v2079 = vlaneseq
      %v2080 = vshrl.u32 %v2079, 7
      %v2081 = vsub.s32 %v2078, %v2080
      %v2082 = vrot.slane %v2075, %v2081
      %v2084 = vunpack.c.l.s4 1966171168
      %v2085 = vunpack.c.0.s8 %v2084
      %v2086 = vlaneseq
      %v2087 = vshrl.u32 %v2086, 7
      %v2088 = vsub.s32 %v2085, %v2087
      %v2089 = vrot.slane %v1908, %v2088
      %v2091 = vunpack.c.l.s4 1966171168
      %v2092 = vunpack.c.0.s8 %v2091
      %v2093 = vlaneseq
      %v2094 = vshrl.u32 %v2093, 7
      %v2095 = vsub.s32 %v2092, %v2094
      %v2096 = vrot.slane %v2089, %v2095
      %v2098 = vunpack.c.l.s4 1966171168
      %v2099 = vunpack.c.0.s8 %v2098
      %v2100 = vlaneseq
      %v2101 = vshrl.u32 %v2100, 7
      %v2102 = vsub.s32 %v2099, %v2101
      %v2103 = vrot.slane %v1909, %v2102
      %v2105 = vunpack.c.l.s4 1966171168
      %v2106 = vunpack.c.0.s8 %v2105
      %v2107 = vlaneseq
      %v2108 = vshrl.u32 %v2107, 7
      %v2109 = vsub.s32 %v2106, %v2108
      %v2110 = vrot.slane %v2103, %v2109
      %v2112 = vunpack.c.l.s4 1966171168
      %v2113 = vunpack.c.0.s8 %v2112
      %v2114 = vlaneseq
      %v2115 = vshrl.u32 %v2114, 7
      %v2116 = vsub.s32 %v2113, %v2115
      %v2117 = vrot.slane %v1910, %v2116
      %v2119 = vunpack.c.l.s4 1966171168
      %v2120 = vunpack.c.0.s8 %v2119
      %v2121 = vlaneseq
      %v2122 = vshrl.u32 %v2121, 7
      %v2123 = vsub.s32 %v2120, %v2122
      %v2124 = vrot.slane %v2117, %v2123
      %v2126 = vunpack.c.l.s4 1966171168
      %v2127 = vunpack.c.0.s8 %v2126
      %v2128 = vlaneseq
      %v2129 = vshrl.u32 %v2128, 7
      %v2130 = vsub.s32 %v2127, %v2129
      %v2131 = vrot.slane %v1911, %v2130
      %v2133 = vunpack.c.l.s4 1966171168
      %v2134 = vunpack.c.0.s8 %v2133
      %v2135 = vlaneseq
      %v2136 = vshrl.u32 %v2135, 7
      %v2137 = vsub.s32 %v2134, %v2136
      %v2138 = vrot.slane %v2131, %v2137
      %v2140 = vunpack.c.l.s4 1966171168
      %v2141 = vunpack.c.0.s8 %v2140
      %v2142 = vlaneseq
      %v2143 = vshrl.u32 %v2142, 7
      %v2144 = vsub.s32 %v2141, %v2143
      %v2145 = vrot.slane %v1912, %v2144
      %v2147 = vunpack.c.l.s4 1966171168
      %v2148 = vunpack.c.0.s8 %v2147
      %v2149 = vlaneseq
      %v2150 = vshrl.u32 %v2149, 7
      %v2151 = vsub.s32 %v2148, %v2150
      %v2152 = vrot.slane %v2145, %v2151
      %v2153 = vunpack.c.l.b16 %v1942
      %v2154 = vunpack.c.l.b16 %v1956
      %v2155 = vunpack.c.l.b16 %v1970
      %v2156 = vunpack.c.l.b16 %v1984
      %v2157 = vunpack.c.l.b16 %v1998
      %v2158 = vunpack.c.l.b16 %v2012
      %v2159 = vunpack.c.l.b16 %v2026
      %v2160 = vunpack.c.l.b16 %v2040
      %v2161 = vunpack.c.l.b16 %v2054
      %v2162 = vunpack.c.l.b16 %v2068
      %v2163 = vunpack.c.l.b16 %v2082
      %v2164 = vunpack.c.l.b16 %v2096
      %v2165 = vunpack.c.l.b16 %v2110
      %v2166 = vunpack.c.l.b16 %v2124
      %v2167 = vunpack.c.l.b16 %v2138
      %v2168 = vunpack.c.l.b16 %v2152
      %v2169 = vrot.slane %v2154, 7
      %v2170 = vsel %vm343, %v2169, %v2153
      %v2171 = vrot.slane %v2155, 6
      %v2172 = vsel %vm346, %v2171, %v2170
      %v2173 = vrot.slane %v2156, 5
      %v2174 = vsel %vm349, %v2173, %v2172
      %v2175 = vrot.slane %v2157, 4
      %v2176 = vsel %vm616, %v2175, %v2174
      %v2177 = vrot.slane %v2158, 3
      %v2178 = vsel %vm619, %v2177, %v2176
      %v2179 = vrot.slane %v2159, 2
      %v2180 = vsel %vm622, %v2179, %v2178
      %v2181 = vrot.slane %v2160, 1
      %v2182 = vsel %vm625, %v2181, %v2180
      %v2183 = vrot.slane %v2162, 7
      %v2184 = vsel %vm343, %v2183, %v2161
      %v2185 = vrot.slane %v2163, 6
      %v2186 = vsel %vm346, %v2185, %v2184
      %v2187 = vrot.slane %v2164, 5
      %v2188 = vsel %vm349, %v2187, %v2186
      %v2189 = vrot.slane %v2165, 4
      %v2190 = vsel %vm616, %v2189, %v2188
      %v2191 = vrot.slane %v2166, 3
      %v2192 = vsel %vm619, %v2191, %v2190
      %v2193 = vrot.slane %v2167, 2
      %v2194 = vsel %vm622, %v2193, %v2192
      %v2195 = vrot.slane %v2168, 1
      %v2196 = vsel %vm625, %v2195, %v2194
      %v2197 = vpack.c.b16 %v2196, %v2182
      %v2200 = vsel %vm1298, %v1839, 0
      %2202 = vmatprep.subr.bf16.mxu0 0
      %2203 = vmatpush1.bf16.msra.mxu0 0
      %2204 = vmatprep.subr.bf16.mxu0 0
      %2205 = vmatpush1.bf16.msra.mxu0 0
      %2206 = vmatprep.subr.bf16.mxu0 0
      %2207 = vmatpush1.bf16.msra.mxu0 0
      %2208 = vmatprep.subr.bf16.mxu0 0
      %2209 = vmatpush1.bf16.msra.mxu0 0
      %2210 = vmatprep.subr.bf16.mxu0 0
      %2211 = vmatpush1.bf16.msra.mxu0 0
      %2212 = vmatprep.subr.bf16.mxu0 0
      %2213 = vmatpush1.bf16.msra.mxu0 0
      %2214 = vmatprep.subr.bf16.mxu0 0
      %2215 = vmatpush1.bf16.msra.mxu0 0
      %2216 = vmatprep.subr.bf16.mxu0 0
      %2217 = vmatpush1.bf16.msra.mxu0 %v2197
      %2218 = vmatprep.subr.bf16.mxu0 0
      %2219 = vmatpush2.bf16.msra.mxu0 0
      %2220 = vmatprep.subr.bf16.mxu0 0
      %2221 = vmatpush2.bf16.msra.mxu0 0
      %2222 = vmatprep.subr.bf16.mxu0 0
      %2223 = vmatpush2.bf16.msra.mxu0 0
      %2224 = vmatprep.subr.bf16.mxu0 0
      %2225 = vmatpush2.bf16.msra.mxu0 0
      %2226 = vmatprep.subr.bf16.mxu0 0
      %2227 = vmatpush2.bf16.msra.mxu0 0
      %2228 = vmatprep.subr.bf16.mxu0 0
      %2229 = vmatpush2.bf16.msra.mxu0 0
      %2230 = vmatprep.subr.bf16.mxu0 0
      %2231 = vmatpush2.bf16.msra.mxu0 0
      %2232 = vmatprep.subr.bf16.mxu0 0
      %2233 = vmatpush2.bf16.msra.mxu0 0
      %2234 = vmatprep.mubr.bf16.mxu0 0
      %2235 = vmatmul.mubr.bf16.gmra.mxu0 %v2200
      %v2236 = vpop.f32.mrf.mxu0
      %v2237 = vadd.f32 0.0, %v2236
      %v2238 = vpop.f32.mrf.mxu0
      %v2239 = vpop.f32.mrf.mxu0
      %v2240 = vpop.f32.mrf.mxu0
      %2241 = vdwg.mxu0
      %v2242 = vadd.f32 %v1666, %v2237
      %v2243 = vld [vmem:[%s0] sm:$0x2]
      %v2245 = vshrl.u32 %v2243, 16
      %v2246 = vpack.i.b16 %v2245, %v2245
      %v2248 = vlaneseq
      %v2249 = vshrl.u32 %v2248, 7
      %v2250 = vsub.s32 1, %v2249
      %v2251 = vrot.slane %v2246, %v2250
      %v2254 = vunpack.c.l.s4 1966171168
      %v2255 = vunpack.c.0.s8 %v2254
      %v2256 = vlaneseq
      %v2257 = vshrl.u32 %v2256, 7
      %v2258 = vsub.s32 %v2255, %v2257
      %v2259 = vrot.slane %v2251, %v2258
      %v2260 = vcombine.high %v2259, %v2259
      %v2262 = vunpack.c.l.s4 1966171168
      %v2263 = vunpack.c.0.s8 %v2262
      %v2264 = vlaneseq
      %v2265 = vshrl.u32 %v2264, 7
      %v2266 = vsub.s32 %v2263, %v2265
      %v2267 = vrot.slane %v2259, %v2266
      %v2269 = vunpack.c.l.s4 1966171168
      %v2270 = vunpack.c.0.s8 %v2269
      %v2271 = vlaneseq
      %v2272 = vshrl.u32 %v2271, 7
      %v2273 = vsub.s32 %v2270, %v2272
      %v2274 = vrot.slane %v2260, %v2273
      %v2276 = vshrl.u32 %v2267, 16
      %v2279 = vshrl.u32 %v2274, 16
      %v2285 = vmul.bf16 %v197, %v2267
      %v2286 = vmul.bf16 %v198, %v2276
      %v2287 = vmul.bf16 %v199, %v2274
      %v2288 = vmul.bf16 %v200, %v2279
      %v2294 = vunpack.c.l.s4 1966171168
      %v2295 = vunpack.c.0.s8 %v2294
      %v2296 = vlaneseq
      %v2297 = vshrl.u32 %v2296, 7
      %v2298 = vsub.s32 %v2295, %v2297
      %v2299 = vrot.slane %v2285, %v2298
      %v2301 = vunpack.c.l.s4 1966171168
      %v2302 = vunpack.c.0.s8 %v2301
      %v2303 = vlaneseq
      %v2304 = vshrl.u32 %v2303, 7
      %v2305 = vsub.s32 %v2302, %v2304
      %v2306 = vrot.slane %v2299, %v2305
      %v2308 = vunpack.c.l.s4 1966171168
      %v2309 = vunpack.c.0.s8 %v2308
      %v2310 = vlaneseq
      %v2311 = vshrl.u32 %v2310, 7
      %v2312 = vsub.s32 %v2309, %v2311
      %v2313 = vrot.slane %v2286, %v2312
      %v2315 = vunpack.c.l.s4 1966171168
      %v2316 = vunpack.c.0.s8 %v2315
      %v2317 = vlaneseq
      %v2318 = vshrl.u32 %v2317, 7
      %v2319 = vsub.s32 %v2316, %v2318
      %v2320 = vrot.slane %v2313, %v2319
      %v2322 = vunpack.c.l.s4 1966171168
      %v2323 = vunpack.c.0.s8 %v2322
      %v2324 = vlaneseq
      %v2325 = vshrl.u32 %v2324, 7
      %v2326 = vsub.s32 %v2323, %v2325
      %v2327 = vrot.slane %v2287, %v2326
      %v2329 = vunpack.c.l.s4 1966171168
      %v2330 = vunpack.c.0.s8 %v2329
      %v2331 = vlaneseq
      %v2332 = vshrl.u32 %v2331, 7
      %v2333 = vsub.s32 %v2330, %v2332
      %v2334 = vrot.slane %v2327, %v2333
      %v2336 = vunpack.c.l.s4 1966171168
      %v2337 = vunpack.c.0.s8 %v2336
      %v2338 = vlaneseq
      %v2339 = vshrl.u32 %v2338, 7
      %v2340 = vsub.s32 %v2337, %v2339
      %v2341 = vrot.slane %v2288, %v2340
      %v2343 = vunpack.c.l.s4 1966171168
      %v2344 = vunpack.c.0.s8 %v2343
      %v2345 = vlaneseq
      %v2346 = vshrl.u32 %v2345, 7
      %v2347 = vsub.s32 %v2344, %v2346
      %v2348 = vrot.slane %v2341, %v2347
      %v2349 = vunpack.c.l.b16 %v2306
      %v2350 = vunpack.c.l.b16 %v2320
      %v2351 = vunpack.c.l.b16 %v2334
      %v2352 = vunpack.c.l.b16 %v2348
      %v2353 = vrot.slane %v2350, 7
      %v2354 = vsel %vm343, %v2353, %v2349
      %v2355 = vrot.slane %v2351, 6
      %v2356 = vsel %vm346, %v2355, %v2354
      %v2357 = vrot.slane %v2352, 5
      %v2358 = vsel %vm349, %v2357, %v2356
      %v2359 = vpack.c.b16 %v2358, %v2358
      %2361 = vmatprep.subr.bf16.mxu0 0
      %2362 = vmatpush1.bf16.xpose.msra.mxu0 0
      %2363 = vmatprep.subr.bf16.mxu0 0
      %2364 = vmatpush1.bf16.xpose.msra.mxu0 0
      %2365 = vmatprep.subr.bf16.mxu0 0
      %2366 = vmatpush1.bf16.xpose.msra.mxu0 0
      %2367 = vmatprep.subr.bf16.mxu0 0
      %2368 = vmatpush1.bf16.xpose.msra.mxu0 0
      %2369 = vmatprep.subr.bf16.mxu0 0
      %2370 = vmatpush1.bf16.xpose.msra.mxu0 0
      %2371 = vmatprep.subr.bf16.mxu0 0
      %2372 = vmatpush1.bf16.xpose.msra.mxu0 0
      %2373 = vmatprep.subr.bf16.mxu0 0
      %2374 = vmatpush1.bf16.xpose.msra.mxu0 0
      %2375 = vmatprep.subr.bf16.mxu0 0
      %2376 = vmatpush1.bf16.xpose.msra.mxu0 %v641
      %2377 = vmatprep.subr.bf16.mxu0 0
      %2378 = vmatpush2.bf16.xpose.msra.mxu0 0
      %2379 = vmatprep.subr.bf16.mxu0 0
      %2380 = vmatpush2.bf16.xpose.msra.mxu0 0
      %2381 = vmatprep.subr.bf16.mxu0 0
      %2382 = vmatpush2.bf16.xpose.msra.mxu0 0
      %2383 = vmatprep.subr.bf16.mxu0 0
      %2384 = vmatpush2.bf16.xpose.msra.mxu0 0
      %2385 = vmatprep.subr.bf16.mxu0 0
      %2386 = vmatpush2.bf16.xpose.msra.mxu0 0
      %2387 = vmatprep.subr.bf16.mxu0 0
      %2388 = vmatpush2.bf16.xpose.msra.mxu0 0
      %2389 = vmatprep.subr.bf16.mxu0 0
      %2390 = vmatpush2.bf16.xpose.msra.mxu0 0
      %2391 = vmatprep.subr.bf16.mxu0 0
      %2392 = vmatpush2.bf16.xpose.msra.mxu0 0
      %2393 = vmatprep.mubr.bf16.mxu0 0
      %2394 = vmatmul.mubr.bf16.gmra.mxu0 %v2359
      %v2395 = vpop.f32.mrf.mxu0
      %v2396 = vadd.f32 0.0, %v2395
      %v2397 = vpop.f32.mrf.mxu0
      %v2398 = vpop.f32.mrf.mxu0
      %v2399 = vpop.f32.mrf.mxu0
      %2400 = vdwg.mxu0
      %v2401 = vsel %vm683, %v2396, -inf
      %2402 = vmax.xlane.f32.xlu0 %v2401
      %v2403 = vpop.xlane.xlu0 %2402
      %v2404 = vsub.f32 %v2396, %v2403
      %v2405 = vmul.f32 %v2404, 1.442695
      %v2406 = vpow.pop %v2405
      %v2407 = vsel %vm683, %v2406, 0.0
      %2408 = vadd.xlane.f32.xlu0 %v2407
      %v2409 = vpop.xlane.xlu0 %2408
      %v2410 = vrcp.pop %v2409
      %v2411 = vmul.f32 %v2406, %v2410
      %v2412 = vpack.c.bf16 %v2411, %v2411
      %v2413 = vcombine.high %v2251, %v2251
      %v2415 = vunpack.c.l.s4 1966171168
      %v2416 = vunpack.c.0.s8 %v2415
      %v2417 = vlaneseq
      %v2418 = vshrl.u32 %v2417, 7
      %v2419 = vsub.s32 %v2416, %v2418
      %v2420 = vrot.slane %v2413, %v2419
      %v2421 = vcombine.high %v2420, %v2420
      %v2423 = vunpack.c.l.s4 1966171168
      %v2424 = vunpack.c.0.s8 %v2423
      %v2425 = vlaneseq
      %v2426 = vshrl.u32 %v2425, 7
      %v2427 = vsub.s32 %v2424, %v2426
      %v2428 = vrot.slane %v2420, %v2427
      %v2430 = vunpack.c.l.s4 1966171168
      %v2431 = vunpack.c.0.s8 %v2430
      %v2432 = vlaneseq
      %v2433 = vshrl.u32 %v2432, 7
      %v2434 = vsub.s32 %v2431, %v2433
      %v2435 = vrot.slane %v2421, %v2434
      %v2436 = vcombine.high %v2267, %v2267
      %v2437 = vcombine.high %v2428, %v2428
      %v2438 = vcombine.high %v2274, %v2274
      %v2439 = vcombine.high %v2435, %v2435
      %v2441 = vshrl.u32 %v2436, 16
      %v2444 = vshrl.u32 %v2438, 16
      %v2447 = vshrl.u32 %v2428, 16
      %v2450 = vshrl.u32 %v2435, 16
      %v2453 = vshrl.u32 %v2437, 16
      %v2456 = vshrl.u32 %v2439, 16
      %v2470 = vmul.bf16 %v217, %v2267
      %v2471 = vmul.bf16 %v218, %v2276
      %v2472 = vmul.bf16 %v219, %v2274
      %v2473 = vmul.bf16 %v220, %v2279
      %v2474 = vmul.bf16 %v221, %v2436
      %v2475 = vmul.bf16 %v222, %v2441
      %v2476 = vmul.bf16 %v223, %v2438
      %v2477 = vmul.bf16 %v224, %v2444
      %v2478 = vmul.bf16 %v225, %v2428
      %v2479 = vmul.bf16 %v226, %v2447
      %v2480 = vmul.bf16 %v227, %v2435
      %v2481 = vmul.bf16 %v228, %v2450
      %v2482 = vmul.bf16 %v229, %v2437
      %v2483 = vmul.bf16 %v230, %v2453
      %v2484 = vmul.bf16 %v231, %v2439
      %v2485 = vmul.bf16 %v232, %v2456
      %v2503 = vunpack.c.l.s4 1966171168
      %v2504 = vunpack.c.0.s8 %v2503
      %v2505 = vlaneseq
      %v2506 = vshrl.u32 %v2505, 7
      %v2507 = vsub.s32 %v2504, %v2506
      %v2508 = vrot.slane %v2470, %v2507
      %v2510 = vunpack.c.l.s4 1966171168
      %v2511 = vunpack.c.0.s8 %v2510
      %v2512 = vlaneseq
      %v2513 = vshrl.u32 %v2512, 7
      %v2514 = vsub.s32 %v2511, %v2513
      %v2515 = vrot.slane %v2508, %v2514
      %v2517 = vunpack.c.l.s4 1966171168
      %v2518 = vunpack.c.0.s8 %v2517
      %v2519 = vlaneseq
      %v2520 = vshrl.u32 %v2519, 7
      %v2521 = vsub.s32 %v2518, %v2520
      %v2522 = vrot.slane %v2471, %v2521
      %v2524 = vunpack.c.l.s4 1966171168
      %v2525 = vunpack.c.0.s8 %v2524
      %v2526 = vlaneseq
      %v2527 = vshrl.u32 %v2526, 7
      %v2528 = vsub.s32 %v2525, %v2527
      %v2529 = vrot.slane %v2522, %v2528
      %v2531 = vunpack.c.l.s4 1966171168
      %v2532 = vunpack.c.0.s8 %v2531
      %v2533 = vlaneseq
      %v2534 = vshrl.u32 %v2533, 7
      %v2535 = vsub.s32 %v2532, %v2534
      %v2536 = vrot.slane %v2472, %v2535
      %v2538 = vunpack.c.l.s4 1966171168
      %v2539 = vunpack.c.0.s8 %v2538
      %v2540 = vlaneseq
      %v2541 = vshrl.u32 %v2540, 7
      %v2542 = vsub.s32 %v2539, %v2541
      %v2543 = vrot.slane %v2536, %v2542
      %v2545 = vunpack.c.l.s4 1966171168
      %v2546 = vunpack.c.0.s8 %v2545
      %v2547 = vlaneseq
      %v2548 = vshrl.u32 %v2547, 7
      %v2549 = vsub.s32 %v2546, %v2548
      %v2550 = vrot.slane %v2473, %v2549
      %v2552 = vunpack.c.l.s4 1966171168
      %v2553 = vunpack.c.0.s8 %v2552
      %v2554 = vlaneseq
      %v2555 = vshrl.u32 %v2554, 7
      %v2556 = vsub.s32 %v2553, %v2555
      %v2557 = vrot.slane %v2550, %v2556
      %v2559 = vunpack.c.l.s4 1966171168
      %v2560 = vunpack.c.0.s8 %v2559
      %v2561 = vlaneseq
      %v2562 = vshrl.u32 %v2561, 7
      %v2563 = vsub.s32 %v2560, %v2562
      %v2564 = vrot.slane %v2474, %v2563
      %v2566 = vunpack.c.l.s4 1966171168
      %v2567 = vunpack.c.0.s8 %v2566
      %v2568 = vlaneseq
      %v2569 = vshrl.u32 %v2568, 7
      %v2570 = vsub.s32 %v2567, %v2569
      %v2571 = vrot.slane %v2564, %v2570
      %v2573 = vunpack.c.l.s4 1966171168
      %v2574 = vunpack.c.0.s8 %v2573
      %v2575 = vlaneseq
      %v2576 = vshrl.u32 %v2575, 7
      %v2577 = vsub.s32 %v2574, %v2576
      %v2578 = vrot.slane %v2475, %v2577
      %v2580 = vunpack.c.l.s4 1966171168
      %v2581 = vunpack.c.0.s8 %v2580
      %v2582 = vlaneseq
      %v2583 = vshrl.u32 %v2582, 7
      %v2584 = vsub.s32 %v2581, %v2583
      %v2585 = vrot.slane %v2578, %v2584
      %v2587 = vunpack.c.l.s4 1966171168
      %v2588 = vunpack.c.0.s8 %v2587
      %v2589 = vlaneseq
      %v2590 = vshrl.u32 %v2589, 7
      %v2591 = vsub.s32 %v2588, %v2590
      %v2592 = vrot.slane %v2476, %v2591
      %v2594 = vunpack.c.l.s4 1966171168
      %v2595 = vunpack.c.0.s8 %v2594
      %v2596 = vlaneseq
      %v2597 = vshrl.u32 %v2596, 7
      %v2598 = vsub.s32 %v2595, %v2597
      %v2599 = vrot.slane %v2592, %v2598
      %v2601 = vunpack.c.l.s4 1966171168
      %v2602 = vunpack.c.0.s8 %v2601
      %v2603 = vlaneseq
      %v2604 = vshrl.u32 %v2603, 7
      %v2605 = vsub.s32 %v2602, %v2604
      %v2606 = vrot.slane %v2477, %v2605
      %v2608 = vunpack.c.l.s4 1966171168
      %v2609 = vunpack.c.0.s8 %v2608
      %v2610 = vlaneseq
      %v2611 = vshrl.u32 %v2610, 7
      %v2612 = vsub.s32 %v2609, %v2611
      %v2613 = vrot.slane %v2606, %v2612
      %v2615 = vunpack.c.l.s4 1966171168
      %v2616 = vunpack.c.0.s8 %v2615
      %v2617 = vlaneseq
      %v2618 = vshrl.u32 %v2617, 7
      %v2619 = vsub.s32 %v2616, %v2618
      %v2620 = vrot.slane %v2478, %v2619
      %v2622 = vunpack.c.l.s4 1966171168
      %v2623 = vunpack.c.0.s8 %v2622
      %v2624 = vlaneseq
      %v2625 = vshrl.u32 %v2624, 7
      %v2626 = vsub.s32 %v2623, %v2625
      %v2627 = vrot.slane %v2620, %v2626
      %v2629 = vunpack.c.l.s4 1966171168
      %v2630 = vunpack.c.0.s8 %v2629
      %v2631 = vlaneseq
      %v2632 = vshrl.u32 %v2631, 7
      %v2633 = vsub.s32 %v2630, %v2632
      %v2634 = vrot.slane %v2479, %v2633
      %v2636 = vunpack.c.l.s4 1966171168
      %v2637 = vunpack.c.0.s8 %v2636
      %v2638 = vlaneseq
      %v2639 = vshrl.u32 %v2638, 7
      %v2640 = vsub.s32 %v2637, %v2639
      %v2641 = vrot.slane %v2634, %v2640
      %v2643 = vunpack.c.l.s4 1966171168
      %v2644 = vunpack.c.0.s8 %v2643
      %v2645 = vlaneseq
      %v2646 = vshrl.u32 %v2645, 7
      %v2647 = vsub.s32 %v2644, %v2646
      %v2648 = vrot.slane %v2480, %v2647
      %v2650 = vunpack.c.l.s4 1966171168
      %v2651 = vunpack.c.0.s8 %v2650
      %v2652 = vlaneseq
      %v2653 = vshrl.u32 %v2652, 7
      %v2654 = vsub.s32 %v2651, %v2653
      %v2655 = vrot.slane %v2648, %v2654
      %v2657 = vunpack.c.l.s4 1966171168
      %v2658 = vunpack.c.0.s8 %v2657
      %v2659 = vlaneseq
      %v2660 = vshrl.u32 %v2659, 7
      %v2661 = vsub.s32 %v2658, %v2660
      %v2662 = vrot.slane %v2481, %v2661
      %v2664 = vunpack.c.l.s4 1966171168
      %v2665 = vunpack.c.0.s8 %v2664
      %v2666 = vlaneseq
      %v2667 = vshrl.u32 %v2666, 7
      %v2668 = vsub.s32 %v2665, %v2667
      %v2669 = vrot.slane %v2662, %v2668
      %v2671 = vunpack.c.l.s4 1966171168
      %v2672 = vunpack.c.0.s8 %v2671
      %v2673 = vlaneseq
      %v2674 = vshrl.u32 %v2673, 7
      %v2675 = vsub.s32 %v2672, %v2674
      %v2676 = vrot.slane %v2482, %v2675
      %v2678 = vunpack.c.l.s4 1966171168
      %v2679 = vunpack.c.0.s8 %v2678
      %v2680 = vlaneseq
      %v2681 = vshrl.u32 %v2680, 7
      %v2682 = vsub.s32 %v2679, %v2681
      %v2683 = vrot.slane %v2676, %v2682
      %v2685 = vunpack.c.l.s4 1966171168
      %v2686 = vunpack.c.0.s8 %v2685
      %v2687 = vlaneseq
      %v2688 = vshrl.u32 %v2687, 7
      %v2689 = vsub.s32 %v2686, %v2688
      %v2690 = vrot.slane %v2483, %v2689
      %v2692 = vunpack.c.l.s4 1966171168
      %v2693 = vunpack.c.0.s8 %v2692
      %v2694 = vlaneseq
      %v2695 = vshrl.u32 %v2694, 7
      %v2696 = vsub.s32 %v2693, %v2695
      %v2697 = vrot.slane %v2690, %v2696
      %v2699 = vunpack.c.l.s4 1966171168
      %v2700 = vunpack.c.0.s8 %v2699
      %v2701 = vlaneseq
      %v2702 = vshrl.u32 %v2701, 7
      %v2703 = vsub.s32 %v2700, %v2702
      %v2704 = vrot.slane %v2484, %v2703
      %v2706 = vunpack.c.l.s4 1966171168
      %v2707 = vunpack.c.0.s8 %v2706
      %v2708 = vlaneseq
      %v2709 = vshrl.u32 %v2708, 7
      %v2710 = vsub.s32 %v2707, %v2709
      %v2711 = vrot.slane %v2704, %v2710
      %v2713 = vunpack.c.l.s4 1966171168
      %v2714 = vunpack.c.0.s8 %v2713
      %v2715 = vlaneseq
      %v2716 = vshrl.u32 %v2715, 7
      %v2717 = vsub.s32 %v2714, %v2716
      %v2718 = vrot.slane %v2485, %v2717
      %v2720 = vunpack.c.l.s4 1966171168
      %v2721 = vunpack.c.0.s8 %v2720
      %v2722 = vlaneseq
      %v2723 = vshrl.u32 %v2722, 7
      %v2724 = vsub.s32 %v2721, %v2723
      %v2725 = vrot.slane %v2718, %v2724
      %v2726 = vunpack.c.l.b16 %v2515
      %v2727 = vunpack.c.l.b16 %v2529
      %v2728 = vunpack.c.l.b16 %v2543
      %v2729 = vunpack.c.l.b16 %v2557
      %v2730 = vunpack.c.l.b16 %v2571
      %v2731 = vunpack.c.l.b16 %v2585
      %v2732 = vunpack.c.l.b16 %v2599
      %v2733 = vunpack.c.l.b16 %v2613
      %v2734 = vunpack.c.l.b16 %v2627
      %v2735 = vunpack.c.l.b16 %v2641
      %v2736 = vunpack.c.l.b16 %v2655
      %v2737 = vunpack.c.l.b16 %v2669
      %v2738 = vunpack.c.l.b16 %v2683
      %v2739 = vunpack.c.l.b16 %v2697
      %v2740 = vunpack.c.l.b16 %v2711
      %v2741 = vunpack.c.l.b16 %v2725
      %v2742 = vrot.slane %v2727, 7
      %v2743 = vsel %vm343, %v2742, %v2726
      %v2744 = vrot.slane %v2728, 6
      %v2745 = vsel %vm346, %v2744, %v2743
      %v2746 = vrot.slane %v2729, 5
      %v2747 = vsel %vm349, %v2746, %v2745
      %v2748 = vrot.slane %v2730, 4
      %v2749 = vsel %vm616, %v2748, %v2747
      %v2750 = vrot.slane %v2731, 3
      %v2751 = vsel %vm619, %v2750, %v2749
      %v2752 = vrot.slane %v2732, 2
      %v2753 = vsel %vm622, %v2752, %v2751
      %v2754 = vrot.slane %v2733, 1
      %v2755 = vsel %vm625, %v2754, %v2753
      %v2756 = vrot.slane %v2735, 7
      %v2757 = vsel %vm343, %v2756, %v2734
      %v2758 = vrot.slane %v2736, 6
      %v2759 = vsel %vm346, %v2758, %v2757
      %v2760 = vrot.slane %v2737, 5
      %v2761 = vsel %vm349, %v2760, %v2759
      %v2762 = vrot.slane %v2738, 4
      %v2763 = vsel %vm616, %v2762, %v2761
      %v2764 = vrot.slane %v2739, 3
      %v2765 = vsel %vm619, %v2764, %v2763
      %v2766 = vrot.slane %v2740, 2
      %v2767 = vsel %vm622, %v2766, %v2765
      %v2768 = vrot.slane %v2741, 1
      %v2769 = vsel %vm625, %v2768, %v2767
      %v2770 = vpack.c.b16 %v2769, %v2755
      %v2773 = vsel %vm1298, %v2412, 0
      %2775 = vmatprep.subr.bf16.mxu0 0
      %2776 = vmatpush1.bf16.msra.mxu0 0
      %2777 = vmatprep.subr.bf16.mxu0 0
      %2778 = vmatpush1.bf16.msra.mxu0 0
      %2779 = vmatprep.subr.bf16.mxu0 0
      %2780 = vmatpush1.bf16.msra.mxu0 0
      %2781 = vmatprep.subr.bf16.mxu0 0
      %2782 = vmatpush1.bf16.msra.mxu0 0
      %2783 = vmatprep.subr.bf16.mxu0 0
      %2784 = vmatpush1.bf16.msra.mxu0 0
      %2785 = vmatprep.subr.bf16.mxu0 0
      %2786 = vmatpush1.bf16.msra.mxu0 0
      %2787 = vmatprep.subr.bf16.mxu0 0
      %2788 = vmatpush1.bf16.msra.mxu0 0
      %2789 = vmatprep.subr.bf16.mxu0 0
      %2790 = vmatpush1.bf16.msra.mxu0 %v2770
      %2791 = vmatprep.subr.bf16.mxu0 0
      %2792 = vmatpush2.bf16.msra.mxu0 0
      %2793 = vmatprep.subr.bf16.mxu0 0
      %2794 = vmatpush2.bf16.msra.mxu0 0
      %2795 = vmatprep.subr.bf16.mxu0 0
      %2796 = vmatpush2.bf16.msra.mxu0 0
      %2797 = vmatprep.subr.bf16.mxu0 0
      %2798 = vmatpush2.bf16.msra.mxu0 0
      %2799 = vmatprep.subr.bf16.mxu0 0
      %2800 = vmatpush2.bf16.msra.mxu0 0
      %2801 = vmatprep.subr.bf16.mxu0 0
      %2802 = vmatpush2.bf16.msra.mxu0 0
      %2803 = vmatprep.subr.bf16.mxu0 0
      %2804 = vmatpush2.bf16.msra.mxu0 0
      %2805 = vmatprep.subr.bf16.mxu0 0
      %2806 = vmatpush2.bf16.msra.mxu0 0
      %2807 = vmatprep.mubr.bf16.mxu0 0
      %2808 = vmatmul.mubr.bf16.gmra.mxu0 %v2773
      %v2809 = vpop.f32.mrf.mxu0
      %v2810 = vadd.f32 0.0, %v2809
      %v2811 = vpop.f32.mrf.mxu0
      %v2812 = vpop.f32.mrf.mxu0
      %v2813 = vpop.f32.mrf.mxu0
      %2814 = vdwg.mxu0
      %v2815 = vadd.f32 %v2242, %v2810
      %v2816 = vld [vmem:[%s0] sm:$0x4]
      %v2818 = vpack.i.b16 %v2816, %v2816
      %v2820 = vlaneseq
      %v2821 = vshrl.u32 %v2820, 7
      %v2822 = vsub.s32 2, %v2821
      %v2823 = vrot.slane %v2818, %v2822
      %v2826 = vunpack.c.l.s4 1966171168
      %v2827 = vunpack.c.0.s8 %v2826
      %v2828 = vlaneseq
      %v2829 = vshrl.u32 %v2828, 7
      %v2830 = vsub.s32 %v2827, %v2829
      %v2831 = vrot.slane %v2823, %v2830
      %v2832 = vcombine.high %v2831, %v2831
      %v2834 = vunpack.c.l.s4 1966171168
      %v2835 = vunpack.c.0.s8 %v2834
      %v2836 = vlaneseq
      %v2837 = vshrl.u32 %v2836, 7
      %v2838 = vsub.s32 %v2835, %v2837
      %v2839 = vrot.slane %v2831, %v2838
      %v2841 = vunpack.c.l.s4 1966171168
      %v2842 = vunpack.c.0.s8 %v2841
      %v2843 = vlaneseq
      %v2844 = vshrl.u32 %v2843, 7
      %v2845 = vsub.s32 %v2842, %v2844
      %v2846 = vrot.slane %v2832, %v2845
      %v2848 = vshrl.u32 %v2839, 16
      %v2851 = vshrl.u32 %v2846, 16
      %v2857 = vmul.bf16 %v197, %v2839
      %v2858 = vmul.bf16 %v198, %v2848
      %v2859 = vmul.bf16 %v199, %v2846
      %v2860 = vmul.bf16 %v200, %v2851
      %v2866 = vunpack.c.l.s4 1966171168
      %v2867 = vunpack.c.0.s8 %v2866
      %v2868 = vlaneseq
      %v2869 = vshrl.u32 %v2868, 7
      %v2870 = vsub.s32 %v2867, %v2869
      %v2871 = vrot.slane %v2857, %v2870
      %v2873 = vunpack.c.l.s4 1966171168
      %v2874 = vunpack.c.0.s8 %v2873
      %v2875 = vlaneseq
      %v2876 = vshrl.u32 %v2875, 7
      %v2877 = vsub.s32 %v2874, %v2876
      %v2878 = vrot.slane %v2871, %v2877
      %v2880 = vunpack.c.l.s4 1966171168
      %v2881 = vunpack.c.0.s8 %v2880
      %v2882 = vlaneseq
      %v2883 = vshrl.u32 %v2882, 7
      %v2884 = vsub.s32 %v2881, %v2883
      %v2885 = vrot.slane %v2858, %v2884
      %v2887 = vunpack.c.l.s4 1966171168
      %v2888 = vunpack.c.0.s8 %v2887
      %v2889 = vlaneseq
      %v2890 = vshrl.u32 %v2889, 7
      %v2891 = vsub.s32 %v2888, %v2890
      %v2892 = vrot.slane %v2885, %v2891
      %v2894 = vunpack.c.l.s4 1966171168
      %v2895 = vunpack.c.0.s8 %v2894
      %v2896 = vlaneseq
      %v2897 = vshrl.u32 %v2896, 7
      %v2898 = vsub.s32 %v2895, %v2897
      %v2899 = vrot.slane %v2859, %v2898
      %v2901 = vunpack.c.l.s4 1966171168
      %v2902 = vunpack.c.0.s8 %v2901
      %v2903 = vlaneseq
      %v2904 = vshrl.u32 %v2903, 7
      %v2905 = vsub.s32 %v2902, %v2904
      %v2906 = vrot.slane %v2899, %v2905
      %v2908 = vunpack.c.l.s4 1966171168
      %v2909 = vunpack.c.0.s8 %v2908
      %v2910 = vlaneseq
      %v2911 = vshrl.u32 %v2910, 7
      %v2912 = vsub.s32 %v2909, %v2911
      %v2913 = vrot.slane %v2860, %v2912
      %v2915 = vunpack.c.l.s4 1966171168
      %v2916 = vunpack.c.0.s8 %v2915
      %v2917 = vlaneseq
      %v2918 = vshrl.u32 %v2917, 7
      %v2919 = vsub.s32 %v2916, %v2918
      %v2920 = vrot.slane %v2913, %v2919
      %v2921 = vunpack.c.l.b16 %v2878
      %v2922 = vunpack.c.l.b16 %v2892
      %v2923 = vunpack.c.l.b16 %v2906
      %v2924 = vunpack.c.l.b16 %v2920
      %v2925 = vrot.slane %v2922, 7
      %v2926 = vsel %vm343, %v2925, %v2921
      %v2927 = vrot.slane %v2923, 6
      %v2928 = vsel %vm346, %v2927, %v2926
      %v2929 = vrot.slane %v2924, 5
      %v2930 = vsel %vm349, %v2929, %v2928
      %v2931 = vpack.c.b16 %v2930, %v2930
      %2933 = vmatprep.subr.bf16.mxu0 0
      %2934 = vmatpush1.bf16.xpose.msra.mxu0 0
      %2935 = vmatprep.subr.bf16.mxu0 0
      %2936 = vmatpush1.bf16.xpose.msra.mxu0 0
      %2937 = vmatprep.subr.bf16.mxu0 0
      %2938 = vmatpush1.bf16.xpose.msra.mxu0 0
      %2939 = vmatprep.subr.bf16.mxu0 0
      %2940 = vmatpush1.bf16.xpose.msra.mxu0 0
      %2941 = vmatprep.subr.bf16.mxu0 0
      %2942 = vmatpush1.bf16.xpose.msra.mxu0 0
      %2943 = vmatprep.subr.bf16.mxu0 0
      %2944 = vmatpush1.bf16.xpose.msra.mxu0 0
      %2945 = vmatprep.subr.bf16.mxu0 0
      %2946 = vmatpush1.bf16.xpose.msra.mxu0 0
      %2947 = vmatprep.subr.bf16.mxu0 0
      %2948 = vmatpush1.bf16.xpose.msra.mxu0 %v641
      %2949 = vmatprep.subr.bf16.mxu0 0
      %2950 = vmatpush2.bf16.xpose.msra.mxu0 0
      %2951 = vmatprep.subr.bf16.mxu0 0
      %2952 = vmatpush2.bf16.xpose.msra.mxu0 0
      %2953 = vmatprep.subr.bf16.mxu0 0
      %2954 = vmatpush2.bf16.xpose.msra.mxu0 0
      %2955 = vmatprep.subr.bf16.mxu0 0
      %2956 = vmatpush2.bf16.xpose.msra.mxu0 0
      %2957 = vmatprep.subr.bf16.mxu0 0
      %2958 = vmatpush2.bf16.xpose.msra.mxu0 0
      %2959 = vmatprep.subr.bf16.mxu0 0
      %2960 = vmatpush2.bf16.xpose.msra.mxu0 0
      %2961 = vmatprep.subr.bf16.mxu0 0
      %2962 = vmatpush2.bf16.xpose.msra.mxu0 0
      %2963 = vmatprep.subr.bf16.mxu0 0
      %2964 = vmatpush2.bf16.xpose.msra.mxu0 0
      %2965 = vmatprep.mubr.bf16.mxu0 0
      %2966 = vmatmul.mubr.bf16.gmra.mxu0 %v2931
      %v2967 = vpop.f32.mrf.mxu0
      %v2968 = vadd.f32 0.0, %v2967
      %v2969 = vpop.f32.mrf.mxu0
      %v2970 = vpop.f32.mrf.mxu0
      %v2971 = vpop.f32.mrf.mxu0
      %2972 = vdwg.mxu0
      %v2973 = vsel %vm683, %v2968, -inf
      %2974 = vmax.xlane.f32.xlu0 %v2973
      %v2975 = vpop.xlane.xlu0 %2974
      %v2976 = vsub.f32 %v2968, %v2975
      %v2977 = vmul.f32 %v2976, 1.442695
      %v2978 = vpow.pop %v2977
      %v2979 = vsel %vm683, %v2978, 0.0
      %2980 = vadd.xlane.f32.xlu0 %v2979
      %v2981 = vpop.xlane.xlu0 %2980
      %v2982 = vrcp.pop %v2981
      %v2983 = vmul.f32 %v2978, %v2982
      %v2984 = vpack.c.bf16 %v2983, %v2983
      %v2985 = vcombine.high %v2823, %v2823
      %v2987 = vunpack.c.l.s4 1966171168
      %v2988 = vunpack.c.0.s8 %v2987
      %v2989 = vlaneseq
      %v2990 = vshrl.u32 %v2989, 7
      %v2991 = vsub.s32 %v2988, %v2990
      %v2992 = vrot.slane %v2985, %v2991
      %v2993 = vcombine.high %v2992, %v2992
      %v2995 = vunpack.c.l.s4 1966171168
      %v2996 = vunpack.c.0.s8 %v2995
      %v2997 = vlaneseq
      %v2998 = vshrl.u32 %v2997, 7
      %v2999 = vsub.s32 %v2996, %v2998
      %v3000 = vrot.slane %v2992, %v2999
      %v3002 = vunpack.c.l.s4 1966171168
      %v3003 = vunpack.c.0.s8 %v3002
      %v3004 = vlaneseq
      %v3005 = vshrl.u32 %v3004, 7
      %v3006 = vsub.s32 %v3003, %v3005
      %v3007 = vrot.slane %v2993, %v3006
      %v3008 = vcombine.high %v2839, %v2839
      %v3009 = vcombine.high %v3000, %v3000
      %v3010 = vcombine.high %v2846, %v2846
      %v3011 = vcombine.high %v3007, %v3007
      %v3013 = vshrl.u32 %v3008, 16
      %v3016 = vshrl.u32 %v3010, 16
      %v3019 = vshrl.u32 %v3000, 16
      %v3022 = vshrl.u32 %v3007, 16
      %v3025 = vshrl.u32 %v3009, 16
      %v3028 = vshrl.u32 %v3011, 16
      %v3042 = vmul.bf16 %v217, %v2839
      %v3043 = vmul.bf16 %v218, %v2848
      %v3044 = vmul.bf16 %v219, %v2846
      %v3045 = vmul.bf16 %v220, %v2851
      %v3046 = vmul.bf16 %v221, %v3008
      %v3047 = vmul.bf16 %v222, %v3013
      %v3048 = vmul.bf16 %v223, %v3010
      %v3049 = vmul.bf16 %v224, %v3016
      %v3050 = vmul.bf16 %v225, %v3000
      %v3051 = vmul.bf16 %v226, %v3019
      %v3052 = vmul.bf16 %v227, %v3007
      %v3053 = vmul.bf16 %v228, %v3022
      %v3054 = vmul.bf16 %v229, %v3009
      %v3055 = vmul.bf16 %v230, %v3025
      %v3056 = vmul.bf16 %v231, %v3011
      %v3057 = vmul.bf16 %v232, %v3028
      %v3075 = vunpack.c.l.s4 1966171168
      %v3076 = vunpack.c.0.s8 %v3075
      %v3077 = vlaneseq
      %v3078 = vshrl.u32 %v3077, 7
      %v3079 = vsub.s32 %v3076, %v3078
      %v3080 = vrot.slane %v3042, %v3079
      %v3082 = vunpack.c.l.s4 1966171168
      %v3083 = vunpack.c.0.s8 %v3082
      %v3084 = vlaneseq
      %v3085 = vshrl.u32 %v3084, 7
      %v3086 = vsub.s32 %v3083, %v3085
      %v3087 = vrot.slane %v3080, %v3086
      %v3089 = vunpack.c.l.s4 1966171168
      %v3090 = vunpack.c.0.s8 %v3089
      %v3091 = vlaneseq
      %v3092 = vshrl.u32 %v3091, 7
      %v3093 = vsub.s32 %v3090, %v3092
      %v3094 = vrot.slane %v3043, %v3093
      %v3096 = vunpack.c.l.s4 1966171168
      %v3097 = vunpack.c.0.s8 %v3096
      %v3098 = vlaneseq
      %v3099 = vshrl.u32 %v3098, 7
      %v3100 = vsub.s32 %v3097, %v3099
      %v3101 = vrot.slane %v3094, %v3100
      %v3103 = vunpack.c.l.s4 1966171168
      %v3104 = vunpack.c.0.s8 %v3103
      %v3105 = vlaneseq
      %v3106 = vshrl.u32 %v3105, 7
      %v3107 = vsub.s32 %v3104, %v3106
      %v3108 = vrot.slane %v3044, %v3107
      %v3110 = vunpack.c.l.s4 1966171168
      %v3111 = vunpack.c.0.s8 %v3110
      %v3112 = vlaneseq
      %v3113 = vshrl.u32 %v3112, 7
      %v3114 = vsub.s32 %v3111, %v3113
      %v3115 = vrot.slane %v3108, %v3114
      %v3117 = vunpack.c.l.s4 1966171168
      %v3118 = vunpack.c.0.s8 %v3117
      %v3119 = vlaneseq
      %v3120 = vshrl.u32 %v3119, 7
      %v3121 = vsub.s32 %v3118, %v3120
      %v3122 = vrot.slane %v3045, %v3121
      %v3124 = vunpack.c.l.s4 1966171168
      %v3125 = vunpack.c.0.s8 %v3124
      %v3126 = vlaneseq
      %v3127 = vshrl.u32 %v3126, 7
      %v3128 = vsub.s32 %v3125, %v3127
      %v3129 = vrot.slane %v3122, %v3128
      %v3131 = vunpack.c.l.s4 1966171168
      %v3132 = vunpack.c.0.s8 %v3131
      %v3133 = vlaneseq
      %v3134 = vshrl.u32 %v3133, 7
      %v3135 = vsub.s32 %v3132, %v3134
      %v3136 = vrot.slane %v3046, %v3135
      %v3138 = vunpack.c.l.s4 1966171168
      %v3139 = vunpack.c.0.s8 %v3138
      %v3140 = vlaneseq
      %v3141 = vshrl.u32 %v3140, 7
      %v3142 = vsub.s32 %v3139, %v3141
      %v3143 = vrot.slane %v3136, %v3142
      %v3145 = vunpack.c.l.s4 1966171168
      %v3146 = vunpack.c.0.s8 %v3145
      %v3147 = vlaneseq
      %v3148 = vshrl.u32 %v3147, 7
      %v3149 = vsub.s32 %v3146, %v3148
      %v3150 = vrot.slane %v3047, %v3149
      %v3152 = vunpack.c.l.s4 1966171168
      %v3153 = vunpack.c.0.s8 %v3152
      %v3154 = vlaneseq
      %v3155 = vshrl.u32 %v3154, 7
      %v3156 = vsub.s32 %v3153, %v3155
      %v3157 = vrot.slane %v3150, %v3156
      %v3159 = vunpack.c.l.s4 1966171168
      %v3160 = vunpack.c.0.s8 %v3159
      %v3161 = vlaneseq
      %v3162 = vshrl.u32 %v3161, 7
      %v3163 = vsub.s32 %v3160, %v3162
      %v3164 = vrot.slane %v3048, %v3163
      %v3166 = vunpack.c.l.s4 1966171168
      %v3167 = vunpack.c.0.s8 %v3166
      %v3168 = vlaneseq
      %v3169 = vshrl.u32 %v3168, 7
      %v3170 = vsub.s32 %v3167, %v3169
      %v3171 = vrot.slane %v3164, %v3170
      %v3173 = vunpack.c.l.s4 1966171168
      %v3174 = vunpack.c.0.s8 %v3173
      %v3175 = vlaneseq
      %v3176 = vshrl.u32 %v3175, 7
      %v3177 = vsub.s32 %v3174, %v3176
      %v3178 = vrot.slane %v3049, %v3177
      %v3180 = vunpack.c.l.s4 1966171168
      %v3181 = vunpack.c.0.s8 %v3180
      %v3182 = vlaneseq
      %v3183 = vshrl.u32 %v3182, 7
      %v3184 = vsub.s32 %v3181, %v3183
      %v3185 = vrot.slane %v3178, %v3184
      %v3187 = vunpack.c.l.s4 1966171168
      %v3188 = vunpack.c.0.s8 %v3187
      %v3189 = vlaneseq
      %v3190 = vshrl.u32 %v3189, 7
      %v3191 = vsub.s32 %v3188, %v3190
      %v3192 = vrot.slane %v3050, %v3191
      %v3194 = vunpack.c.l.s4 1966171168
      %v3195 = vunpack.c.0.s8 %v3194
      %v3196 = vlaneseq
      %v3197 = vshrl.u32 %v3196, 7
      %v3198 = vsub.s32 %v3195, %v3197
      %v3199 = vrot.slane %v3192, %v3198
      %v3201 = vunpack.c.l.s4 1966171168
      %v3202 = vunpack.c.0.s8 %v3201
      %v3203 = vlaneseq
      %v3204 = vshrl.u32 %v3203, 7
      %v3205 = vsub.s32 %v3202, %v3204
      %v3206 = vrot.slane %v3051, %v3205
      %v3208 = vunpack.c.l.s4 1966171168
      %v3209 = vunpack.c.0.s8 %v3208
      %v3210 = vlaneseq
      %v3211 = vshrl.u32 %v3210, 7
      %v3212 = vsub.s32 %v3209, %v3211
      %v3213 = vrot.slane %v3206, %v3212
      %v3215 = vunpack.c.l.s4 1966171168
      %v3216 = vunpack.c.0.s8 %v3215
      %v3217 = vlaneseq
      %v3218 = vshrl.u32 %v3217, 7
      %v3219 = vsub.s32 %v3216, %v3218
      %v3220 = vrot.slane %v3052, %v3219
      %v3222 = vunpack.c.l.s4 1966171168
      %v3223 = vunpack.c.0.s8 %v3222
      %v3224 = vlaneseq
      %v3225 = vshrl.u32 %v3224, 7
      %v3226 = vsub.s32 %v3223, %v3225
      %v3227 = vrot.slane %v3220, %v3226
      %v3229 = vunpack.c.l.s4 1966171168
      %v3230 = vunpack.c.0.s8 %v3229
      %v3231 = vlaneseq
      %v3232 = vshrl.u32 %v3231, 7
      %v3233 = vsub.s32 %v3230, %v3232
      %v3234 = vrot.slane %v3053, %v3233
      %v3236 = vunpack.c.l.s4 1966171168
      %v3237 = vunpack.c.0.s8 %v3236
      %v3238 = vlaneseq
      %v3239 = vshrl.u32 %v3238, 7
      %v3240 = vsub.s32 %v3237, %v3239
      %v3241 = vrot.slane %v3234, %v3240
      %v3243 = vunpack.c.l.s4 1966171168
      %v3244 = vunpack.c.0.s8 %v3243
      %v3245 = vlaneseq
      %v3246 = vshrl.u32 %v3245, 7
      %v3247 = vsub.s32 %v3244, %v3246
      %v3248 = vrot.slane %v3054, %v3247
      %v3250 = vunpack.c.l.s4 1966171168
      %v3251 = vunpack.c.0.s8 %v3250
      %v3252 = vlaneseq
      %v3253 = vshrl.u32 %v3252, 7
      %v3254 = vsub.s32 %v3251, %v3253
      %v3255 = vrot.slane %v3248, %v3254
      %v3257 = vunpack.c.l.s4 1966171168
      %v3258 = vunpack.c.0.s8 %v3257
      %v3259 = vlaneseq
      %v3260 = vshrl.u32 %v3259, 7
      %v3261 = vsub.s32 %v3258, %v3260
      %v3262 = vrot.slane %v3055, %v3261
      %v3264 = vunpack.c.l.s4 1966171168
      %v3265 = vunpack.c.0.s8 %v3264
      %v3266 = vlaneseq
      %v3267 = vshrl.u32 %v3266, 7
      %v3268 = vsub.s32 %v3265, %v3267
      %v3269 = vrot.slane %v3262, %v3268
      %v3271 = vunpack.c.l.s4 1966171168
      %v3272 = vunpack.c.0.s8 %v3271
      %v3273 = vlaneseq
      %v3274 = vshrl.u32 %v3273, 7
      %v3275 = vsub.s32 %v3272, %v3274
      %v3276 = vrot.slane %v3056, %v3275
      %v3278 = vunpack.c.l.s4 1966171168
      %v3279 = vunpack.c.0.s8 %v3278
      %v3280 = vlaneseq
      %v3281 = vshrl.u32 %v3280, 7
      %v3282 = vsub.s32 %v3279, %v3281
      %v3283 = vrot.slane %v3276, %v3282
      %v3285 = vunpack.c.l.s4 1966171168
      %v3286 = vunpack.c.0.s8 %v3285
      %v3287 = vlaneseq
      %v3288 = vshrl.u32 %v3287, 7
      %v3289 = vsub.s32 %v3286, %v3288
      %v3290 = vrot.slane %v3057, %v3289
      %v3292 = vunpack.c.l.s4 1966171168
      %v3293 = vunpack.c.0.s8 %v3292
      %v3294 = vlaneseq
      %v3295 = vshrl.u32 %v3294, 7
      %v3296 = vsub.s32 %v3293, %v3295
      %v3297 = vrot.slane %v3290, %v3296
      %v3298 = vunpack.c.l.b16 %v3087
      %v3299 = vunpack.c.l.b16 %v3101
      %v3300 = vunpack.c.l.b16 %v3115
      %v3301 = vunpack.c.l.b16 %v3129
      %v3302 = vunpack.c.l.b16 %v3143
      %v3303 = vunpack.c.l.b16 %v3157
      %v3304 = vunpack.c.l.b16 %v3171
      %v3305 = vunpack.c.l.b16 %v3185
      %v3306 = vunpack.c.l.b16 %v3199
      %v3307 = vunpack.c.l.b16 %v3213
      %v3308 = vunpack.c.l.b16 %v3227
      %v3309 = vunpack.c.l.b16 %v3241
      %v3310 = vunpack.c.l.b16 %v3255
      %v3311 = vunpack.c.l.b16 %v3269
      %v3312 = vunpack.c.l.b16 %v3283
      %v3313 = vunpack.c.l.b16 %v3297
      %v3314 = vrot.slane %v3299, 7
      %v3315 = vsel %vm343, %v3314, %v3298
      %v3316 = vrot.slane %v3300, 6
      %v3317 = vsel %vm346, %v3316, %v3315
      %v3318 = vrot.slane %v3301, 5
      %v3319 = vsel %vm349, %v3318, %v3317
      %v3320 = vrot.slane %v3302, 4
      %v3321 = vsel %vm616, %v3320, %v3319
      %v3322 = vrot.slane %v3303, 3
      %v3323 = vsel %vm619, %v3322, %v3321
      %v3324 = vrot.slane %v3304, 2
      %v3325 = vsel %vm622, %v3324, %v3323
      %v3326 = vrot.slane %v3305, 1
      %v3327 = vsel %vm625, %v3326, %v3325
      %v3328 = vrot.slane %v3307, 7
      %v3329 = vsel %vm343, %v3328, %v3306
      %v3330 = vrot.slane %v3308, 6
      %v3331 = vsel %vm346, %v3330, %v3329
      %v3332 = vrot.slane %v3309, 5
      %v3333 = vsel %vm349, %v3332, %v3331
      %v3334 = vrot.slane %v3310, 4
      %v3335 = vsel %vm616, %v3334, %v3333
      %v3336 = vrot.slane %v3311, 3
      %v3337 = vsel %vm619, %v3336, %v3335
      %v3338 = vrot.slane %v3312, 2
      %v3339 = vsel %vm622, %v3338, %v3337
      %v3340 = vrot.slane %v3313, 1
      %v3341 = vsel %vm625, %v3340, %v3339
      %v3342 = vpack.c.b16 %v3341, %v3327
      %v3345 = vsel %vm1298, %v2984, 0
      %3347 = vmatprep.subr.bf16.mxu0 0
      %3348 = vmatpush1.bf16.msra.mxu0 0
      %3349 = vmatprep.subr.bf16.mxu0 0
      %3350 = vmatpush1.bf16.msra.mxu0 0
      %3351 = vmatprep.subr.bf16.mxu0 0
      %3352 = vmatpush1.bf16.msra.mxu0 0
      %3353 = vmatprep.subr.bf16.mxu0 0
      %3354 = vmatpush1.bf16.msra.mxu0 0
      %3355 = vmatprep.subr.bf16.mxu0 0
      %3356 = vmatpush1.bf16.msra.mxu0 0
      %3357 = vmatprep.subr.bf16.mxu0 0
      %3358 = vmatpush1.bf16.msra.mxu0 0
      %3359 = vmatprep.subr.bf16.mxu0 0
      %3360 = vmatpush1.bf16.msra.mxu0 0
      %3361 = vmatprep.subr.bf16.mxu0 0
      %3362 = vmatpush1.bf16.msra.mxu0 %v3342
      %3363 = vmatprep.subr.bf16.mxu0 0
      %3364 = vmatpush2.bf16.msra.mxu0 0
      %3365 = vmatprep.subr.bf16.mxu0 0
      %3366 = vmatpush2.bf16.msra.mxu0 0
      %3367 = vmatprep.subr.bf16.mxu0 0
      %3368 = vmatpush2.bf16.msra.mxu0 0
      %3369 = vmatprep.subr.bf16.mxu0 0
      %3370 = vmatpush2.bf16.msra.mxu0 0
      %3371 = vmatprep.subr.bf16.mxu0 0
      %3372 = vmatpush2.bf16.msra.mxu0 0
      %3373 = vmatprep.subr.bf16.mxu0 0
      %3374 = vmatpush2.bf16.msra.mxu0 0
      %3375 = vmatprep.subr.bf16.mxu0 0
      %3376 = vmatpush2.bf16.msra.mxu0 0
      %3377 = vmatprep.subr.bf16.mxu0 0
      %3378 = vmatpush2.bf16.msra.mxu0 0
      %3379 = vmatprep.mubr.bf16.mxu0 0
      %3380 = vmatmul.mubr.bf16.gmra.mxu0 %v3345
      %v3381 = vpop.f32.mrf.mxu0
      %v3382 = vadd.f32 0.0, %v3381
      %v3383 = vpop.f32.mrf.mxu0
      %v3384 = vpop.f32.mrf.mxu0
      %v3385 = vpop.f32.mrf.mxu0
      %3386 = vdwg.mxu0
      %v3387 = vadd.f32 %v2815, %v3382
      %v3388 = vld [vmem:[%s0] sm:$0x4]
      %v3390 = vshrl.u32 %v3388, 16
      %v3391 = vpack.i.b16 %v3390, %v3390
      %v3393 = vlaneseq
      %v3394 = vshrl.u32 %v3393, 7
      %v3395 = vsub.s32 2, %v3394
      %v3396 = vrot.slane %v3391, %v3395
      %v3399 = vunpack.c.l.s4 1966171168
      %v3400 = vunpack.c.0.s8 %v3399
      %v3401 = vlaneseq
      %v3402 = vshrl.u32 %v3401, 7
      %v3403 = vsub.s32 %v3400, %v3402
      %v3404 = vrot.slane %v3396, %v3403
      %v3405 = vcombine.high %v3404, %v3404
      %v3407 = vunpack.c.l.s4 1966171168
      %v3408 = vunpack.c.0.s8 %v3407
      %v3409 = vlaneseq
      %v3410 = vshrl.u32 %v3409, 7
      %v3411 = vsub.s32 %v3408, %v3410
      %v3412 = vrot.slane %v3404, %v3411
      %v3414 = vunpack.c.l.s4 1966171168
      %v3415 = vunpack.c.0.s8 %v3414
      %v3416 = vlaneseq
      %v3417 = vshrl.u32 %v3416, 7
      %v3418 = vsub.s32 %v3415, %v3417
      %v3419 = vrot.slane %v3405, %v3418
      %v3421 = vshrl.u32 %v3412, 16
      %v3424 = vshrl.u32 %v3419, 16
      %v3430 = vmul.bf16 %v197, %v3412
      %v3431 = vmul.bf16 %v198, %v3421
      %v3432 = vmul.bf16 %v199, %v3419
      %v3433 = vmul.bf16 %v200, %v3424
      %v3439 = vunpack.c.l.s4 1966171168
      %v3440 = vunpack.c.0.s8 %v3439
      %v3441 = vlaneseq
      %v3442 = vshrl.u32 %v3441, 7
      %v3443 = vsub.s32 %v3440, %v3442
      %v3444 = vrot.slane %v3430, %v3443
      %v3446 = vunpack.c.l.s4 1966171168
      %v3447 = vunpack.c.0.s8 %v3446
      %v3448 = vlaneseq
      %v3449 = vshrl.u32 %v3448, 7
      %v3450 = vsub.s32 %v3447, %v3449
      %v3451 = vrot.slane %v3444, %v3450
      %v3453 = vunpack.c.l.s4 1966171168
      %v3454 = vunpack.c.0.s8 %v3453
      %v3455 = vlaneseq
      %v3456 = vshrl.u32 %v3455, 7
      %v3457 = vsub.s32 %v3454, %v3456
      %v3458 = vrot.slane %v3431, %v3457
      %v3460 = vunpack.c.l.s4 1966171168
      %v3461 = vunpack.c.0.s8 %v3460
      %v3462 = vlaneseq
      %v3463 = vshrl.u32 %v3462, 7
      %v3464 = vsub.s32 %v3461, %v3463
      %v3465 = vrot.slane %v3458, %v3464
      %v3467 = vunpack.c.l.s4 1966171168
      %v3468 = vunpack.c.0.s8 %v3467
      %v3469 = vlaneseq
      %v3470 = vshrl.u32 %v3469, 7
      %v3471 = vsub.s32 %v3468, %v3470
      %v3472 = vrot.slane %v3432, %v3471
      %v3474 = vunpack.c.l.s4 1966171168
      %v3475 = vunpack.c.0.s8 %v3474
      %v3476 = vlaneseq
      %v3477 = vshrl.u32 %v3476, 7
      %v3478 = vsub.s32 %v3475, %v3477
      %v3479 = vrot.slane %v3472, %v3478
      %v3481 = vunpack.c.l.s4 1966171168
      %v3482 = vunpack.c.0.s8 %v3481
      %v3483 = vlaneseq
      %v3484 = vshrl.u32 %v3483, 7
      %v3485 = vsub.s32 %v3482, %v3484
      %v3486 = vrot.slane %v3433, %v3485
      %v3488 = vunpack.c.l.s4 1966171168
      %v3489 = vunpack.c.0.s8 %v3488
      %v3490 = vlaneseq
      %v3491 = vshrl.u32 %v3490, 7
      %v3492 = vsub.s32 %v3489, %v3491
      %v3493 = vrot.slane %v3486, %v3492
      %v3494 = vunpack.c.l.b16 %v3451
      %v3495 = vunpack.c.l.b16 %v3465
      %v3496 = vunpack.c.l.b16 %v3479
      %v3497 = vunpack.c.l.b16 %v3493
      %v3498 = vrot.slane %v3495, 7
      %v3499 = vsel %vm343, %v3498, %v3494
      %v3500 = vrot.slane %v3496, 6
      %v3501 = vsel %vm346, %v3500, %v3499
      %v3502 = vrot.slane %v3497, 5
      %v3503 = vsel %vm349, %v3502, %v3501
      %v3504 = vpack.c.b16 %v3503, %v3503
      %3506 = vmatprep.subr.bf16.mxu0 0
      %3507 = vmatpush1.bf16.xpose.msra.mxu0 0
      %3508 = vmatprep.subr.bf16.mxu0 0
      %3509 = vmatpush1.bf16.xpose.msra.mxu0 0
      %3510 = vmatprep.subr.bf16.mxu0 0
      %3511 = vmatpush1.bf16.xpose.msra.mxu0 0
      %3512 = vmatprep.subr.bf16.mxu0 0
      %3513 = vmatpush1.bf16.xpose.msra.mxu0 0
      %3514 = vmatprep.subr.bf16.mxu0 0
      %3515 = vmatpush1.bf16.xpose.msra.mxu0 0
      %3516 = vmatprep.subr.bf16.mxu0 0
      %3517 = vmatpush1.bf16.xpose.msra.mxu0 0
      %3518 = vmatprep.subr.bf16.mxu0 0
      %3519 = vmatpush1.bf16.xpose.msra.mxu0 0
      %3520 = vmatprep.subr.bf16.mxu0 0
      %3521 = vmatpush1.bf16.xpose.msra.mxu0 %v641
      %3522 = vmatprep.subr.bf16.mxu0 0
      %3523 = vmatpush2.bf16.xpose.msra.mxu0 0
      %3524 = vmatprep.subr.bf16.mxu0 0
      %3525 = vmatpush2.bf16.xpose.msra.mxu0 0
      %3526 = vmatprep.subr.bf16.mxu0 0
      %3527 = vmatpush2.bf16.xpose.msra.mxu0 0
      %3528 = vmatprep.subr.bf16.mxu0 0
      %3529 = vmatpush2.bf16.xpose.msra.mxu0 0
      %3530 = vmatprep.subr.bf16.mxu0 0
      %3531 = vmatpush2.bf16.xpose.msra.mxu0 0
      %3532 = vmatprep.subr.bf16.mxu0 0
      %3533 = vmatpush2.bf16.xpose.msra.mxu0 0
      %3534 = vmatprep.subr.bf16.mxu0 0
      %3535 = vmatpush2.bf16.xpose.msra.mxu0 0
      %3536 = vmatprep.subr.bf16.mxu0 0
      %3537 = vmatpush2.bf16.xpose.msra.mxu0 0
      %3538 = vmatprep.mubr.bf16.mxu0 0
      %3539 = vmatmul.mubr.bf16.gmra.mxu0 %v3504
      %v3540 = vpop.f32.mrf.mxu0
      %v3541 = vadd.f32 0.0, %v3540
      %v3542 = vpop.f32.mrf.mxu0
      %v3543 = vpop.f32.mrf.mxu0
      %v3544 = vpop.f32.mrf.mxu0
      %3545 = vdwg.mxu0
      %v3546 = vsel %vm683, %v3541, -inf
      %3547 = vmax.xlane.f32.xlu0 %v3546
      %v3548 = vpop.xlane.xlu0 %3547
      %v3549 = vsub.f32 %v3541, %v3548
      %v3550 = vmul.f32 %v3549, 1.442695
      %v3551 = vpow.pop %v3550
      %v3552 = vsel %vm683, %v3551, 0.0
      %3553 = vadd.xlane.f32.xlu0 %v3552
      %v3554 = vpop.xlane.xlu0 %3553
      %v3555 = vrcp.pop %v3554
      %v3556 = vmul.f32 %v3551, %v3555
      %v3557 = vpack.c.bf16 %v3556, %v3556
      %v3558 = vcombine.high %v3396, %v3396
      %v3560 = vunpack.c.l.s4 1966171168
      %v3561 = vunpack.c.0.s8 %v3560
      %v3562 = vlaneseq
      %v3563 = vshrl.u32 %v3562, 7
      %v3564 = vsub.s32 %v3561, %v3563
      %v3565 = vrot.slane %v3558, %v3564
      %v3566 = vcombine.high %v3565, %v3565
      %v3568 = vunpack.c.l.s4 1966171168
      %v3569 = vunpack.c.0.s8 %v3568
      %v3570 = vlaneseq
      %v3571 = vshrl.u32 %v3570, 7
      %v3572 = vsub.s32 %v3569, %v3571
      %v3573 = vrot.slane %v3565, %v3572
      %v3575 = vunpack.c.l.s4 1966171168
      %v3576 = vunpack.c.0.s8 %v3575
      %v3577 = vlaneseq
      %v3578 = vshrl.u32 %v3577, 7
      %v3579 = vsub.s32 %v3576, %v3578
      %v3580 = vrot.slane %v3566, %v3579
      %v3581 = vcombine.high %v3412, %v3412
      %v3582 = vcombine.high %v3573, %v3573
      %v3583 = vcombine.high %v3419, %v3419
      %v3584 = vcombine.high %v3580, %v3580
      %v3586 = vshrl.u32 %v3581, 16
      %v3589 = vshrl.u32 %v3583, 16
      %v3592 = vshrl.u32 %v3573, 16
      %v3595 = vshrl.u32 %v3580, 16
      %v3598 = vshrl.u32 %v3582, 16
      %v3601 = vshrl.u32 %v3584, 16
      %v3615 = vmul.bf16 %v217, %v3412
      %v3616 = vmul.bf16 %v218, %v3421
      %v3617 = vmul.bf16 %v219, %v3419
      %v3618 = vmul.bf16 %v220, %v3424
      %v3619 = vmul.bf16 %v221, %v3581
      %v3620 = vmul.bf16 %v222, %v3586
      %v3621 = vmul.bf16 %v223, %v3583
      %v3622 = vmul.bf16 %v224, %v3589
      %v3623 = vmul.bf16 %v225, %v3573
      %v3624 = vmul.bf16 %v226, %v3592
      %v3625 = vmul.bf16 %v227, %v3580
      %v3626 = vmul.bf16 %v228, %v3595
      %v3627 = vmul.bf16 %v229, %v3582
      %v3628 = vmul.bf16 %v230, %v3598
      %v3629 = vmul.bf16 %v231, %v3584
      %v3630 = vmul.bf16 %v232, %v3601
      %v3648 = vunpack.c.l.s4 1966171168
      %v3649 = vunpack.c.0.s8 %v3648
      %v3650 = vlaneseq
      %v3651 = vshrl.u32 %v3650, 7
      %v3652 = vsub.s32 %v3649, %v3651
      %v3653 = vrot.slane %v3615, %v3652
      %v3655 = vunpack.c.l.s4 1966171168
      %v3656 = vunpack.c.0.s8 %v3655
      %v3657 = vlaneseq
      %v3658 = vshrl.u32 %v3657, 7
      %v3659 = vsub.s32 %v3656, %v3658
      %v3660 = vrot.slane %v3653, %v3659
      %v3662 = vunpack.c.l.s4 1966171168
      %v3663 = vunpack.c.0.s8 %v3662
      %v3664 = vlaneseq
      %v3665 = vshrl.u32 %v3664, 7
      %v3666 = vsub.s32 %v3663, %v3665
      %v3667 = vrot.slane %v3616, %v3666
      %v3669 = vunpack.c.l.s4 1966171168
      %v3670 = vunpack.c.0.s8 %v3669
      %v3671 = vlaneseq
      %v3672 = vshrl.u32 %v3671, 7
      %v3673 = vsub.s32 %v3670, %v3672
      %v3674 = vrot.slane %v3667, %v3673
      %v3676 = vunpack.c.l.s4 1966171168
      %v3677 = vunpack.c.0.s8 %v3676
      %v3678 = vlaneseq
      %v3679 = vshrl.u32 %v3678, 7
      %v3680 = vsub.s32 %v3677, %v3679
      %v3681 = vrot.slane %v3617, %v3680
      %v3683 = vunpack.c.l.s4 1966171168
      %v3684 = vunpack.c.0.s8 %v3683
      %v3685 = vlaneseq
      %v3686 = vshrl.u32 %v3685, 7
      %v3687 = vsub.s32 %v3684, %v3686
      %v3688 = vrot.slane %v3681, %v3687
      %v3690 = vunpack.c.l.s4 1966171168
      %v3691 = vunpack.c.0.s8 %v3690
      %v3692 = vlaneseq
      %v3693 = vshrl.u32 %v3692, 7
      %v3694 = vsub.s32 %v3691, %v3693
      %v3695 = vrot.slane %v3618, %v3694
      %v3697 = vunpack.c.l.s4 1966171168
      %v3698 = vunpack.c.0.s8 %v3697
      %v3699 = vlaneseq
      %v3700 = vshrl.u32 %v3699, 7
      %v3701 = vsub.s32 %v3698, %v3700
      %v3702 = vrot.slane %v3695, %v3701
      %v3704 = vunpack.c.l.s4 1966171168
      %v3705 = vunpack.c.0.s8 %v3704
      %v3706 = vlaneseq
      %v3707 = vshrl.u32 %v3706, 7
      %v3708 = vsub.s32 %v3705, %v3707
      %v3709 = vrot.slane %v3619, %v3708
      %v3711 = vunpack.c.l.s4 1966171168
      %v3712 = vunpack.c.0.s8 %v3711
      %v3713 = vlaneseq
      %v3714 = vshrl.u32 %v3713, 7
      %v3715 = vsub.s32 %v3712, %v3714
      %v3716 = vrot.slane %v3709, %v3715
      %v3718 = vunpack.c.l.s4 1966171168
      %v3719 = vunpack.c.0.s8 %v3718
      %v3720 = vlaneseq
      %v3721 = vshrl.u32 %v3720, 7
      %v3722 = vsub.s32 %v3719, %v3721
      %v3723 = vrot.slane %v3620, %v3722
      %v3725 = vunpack.c.l.s4 1966171168
      %v3726 = vunpack.c.0.s8 %v3725
      %v3727 = vlaneseq
      %v3728 = vshrl.u32 %v3727, 7
      %v3729 = vsub.s32 %v3726, %v3728
      %v3730 = vrot.slane %v3723, %v3729
      %v3732 = vunpack.c.l.s4 1966171168
      %v3733 = vunpack.c.0.s8 %v3732
      %v3734 = vlaneseq
      %v3735 = vshrl.u32 %v3734, 7
      %v3736 = vsub.s32 %v3733, %v3735
      %v3737 = vrot.slane %v3621, %v3736
      %v3739 = vunpack.c.l.s4 1966171168
      %v3740 = vunpack.c.0.s8 %v3739
      %v3741 = vlaneseq
      %v3742 = vshrl.u32 %v3741, 7
      %v3743 = vsub.s32 %v3740, %v3742
      %v3744 = vrot.slane %v3737, %v3743
      %v3746 = vunpack.c.l.s4 1966171168
      %v3747 = vunpack.c.0.s8 %v3746
      %v3748 = vlaneseq
      %v3749 = vshrl.u32 %v3748, 7
      %v3750 = vsub.s32 %v3747, %v3749
      %v3751 = vrot.slane %v3622, %v3750
      %v3753 = vunpack.c.l.s4 1966171168
      %v3754 = vunpack.c.0.s8 %v3753
      %v3755 = vlaneseq
      %v3756 = vshrl.u32 %v3755, 7
      %v3757 = vsub.s32 %v3754, %v3756
      %v3758 = vrot.slane %v3751, %v3757
      %v3760 = vunpack.c.l.s4 1966171168
      %v3761 = vunpack.c.0.s8 %v3760
      %v3762 = vlaneseq
      %v3763 = vshrl.u32 %v3762, 7
      %v3764 = vsub.s32 %v3761, %v3763
      %v3765 = vrot.slane %v3623, %v3764
      %v3767 = vunpack.c.l.s4 1966171168
      %v3768 = vunpack.c.0.s8 %v3767
      %v3769 = vlaneseq
      %v3770 = vshrl.u32 %v3769, 7
      %v3771 = vsub.s32 %v3768, %v3770
      %v3772 = vrot.slane %v3765, %v3771
      %v3774 = vunpack.c.l.s4 1966171168
      %v3775 = vunpack.c.0.s8 %v3774
      %v3776 = vlaneseq
      %v3777 = vshrl.u32 %v3776, 7
      %v3778 = vsub.s32 %v3775, %v3777
      %v3779 = vrot.slane %v3624, %v3778
      %v3781 = vunpack.c.l.s4 1966171168
      %v3782 = vunpack.c.0.s8 %v3781
      %v3783 = vlaneseq
      %v3784 = vshrl.u32 %v3783, 7
      %v3785 = vsub.s32 %v3782, %v3784
      %v3786 = vrot.slane %v3779, %v3785
      %v3788 = vunpack.c.l.s4 1966171168
      %v3789 = vunpack.c.0.s8 %v3788
      %v3790 = vlaneseq
      %v3791 = vshrl.u32 %v3790, 7
      %v3792 = vsub.s32 %v3789, %v3791
      %v3793 = vrot.slane %v3625, %v3792
      %v3795 = vunpack.c.l.s4 1966171168
      %v3796 = vunpack.c.0.s8 %v3795
      %v3797 = vlaneseq
      %v3798 = vshrl.u32 %v3797, 7
      %v3799 = vsub.s32 %v3796, %v3798
      %v3800 = vrot.slane %v3793, %v3799
      %v3802 = vunpack.c.l.s4 1966171168
      %v3803 = vunpack.c.0.s8 %v3802
      %v3804 = vlaneseq
      %v3805 = vshrl.u32 %v3804, 7
      %v3806 = vsub.s32 %v3803, %v3805
      %v3807 = vrot.slane %v3626, %v3806
      %v3809 = vunpack.c.l.s4 1966171168
      %v3810 = vunpack.c.0.s8 %v3809
      %v3811 = vlaneseq
      %v3812 = vshrl.u32 %v3811, 7
      %v3813 = vsub.s32 %v3810, %v3812
      %v3814 = vrot.slane %v3807, %v3813
      %v3816 = vunpack.c.l.s4 1966171168
      %v3817 = vunpack.c.0.s8 %v3816
      %v3818 = vlaneseq
      %v3819 = vshrl.u32 %v3818, 7
      %v3820 = vsub.s32 %v3817, %v3819
      %v3821 = vrot.slane %v3627, %v3820
      %v3823 = vunpack.c.l.s4 1966171168
      %v3824 = vunpack.c.0.s8 %v3823
      %v3825 = vlaneseq
      %v3826 = vshrl.u32 %v3825, 7
      %v3827 = vsub.s32 %v3824, %v3826
      %v3828 = vrot.slane %v3821, %v3827
      %v3830 = vunpack.c.l.s4 1966171168
      %v3831 = vunpack.c.0.s8 %v3830
      %v3832 = vlaneseq
      %v3833 = vshrl.u32 %v3832, 7
      %v3834 = vsub.s32 %v3831, %v3833
      %v3835 = vrot.slane %v3628, %v3834
      %v3837 = vunpack.c.l.s4 1966171168
      %v3838 = vunpack.c.0.s8 %v3837
      %v3839 = vlaneseq
      %v3840 = vshrl.u32 %v3839, 7
      %v3841 = vsub.s32 %v3838, %v3840
      %v3842 = vrot.slane %v3835, %v3841
      %v3844 = vunpack.c.l.s4 1966171168
      %v3845 = vunpack.c.0.s8 %v3844
      %v3846 = vlaneseq
      %v3847 = vshrl.u32 %v3846, 7
      %v3848 = vsub.s32 %v3845, %v3847
      %v3849 = vrot.slane %v3629, %v3848
      %v3851 = vunpack.c.l.s4 1966171168
      %v3852 = vunpack.c.0.s8 %v3851
      %v3853 = vlaneseq
      %v3854 = vshrl.u32 %v3853, 7
      %v3855 = vsub.s32 %v3852, %v3854
      %v3856 = vrot.slane %v3849, %v3855
      %v3858 = vunpack.c.l.s4 1966171168
      %v3859 = vunpack.c.0.s8 %v3858
      %v3860 = vlaneseq
      %v3861 = vshrl.u32 %v3860, 7
      %v3862 = vsub.s32 %v3859, %v3861
      %v3863 = vrot.slane %v3630, %v3862
      %v3865 = vunpack.c.l.s4 1966171168
      %v3866 = vunpack.c.0.s8 %v3865
      %v3867 = vlaneseq
      %v3868 = vshrl.u32 %v3867, 7
      %v3869 = vsub.s32 %v3866, %v3868
      %v3870 = vrot.slane %v3863, %v3869
      %v3871 = vunpack.c.l.b16 %v3660
      %v3872 = vunpack.c.l.b16 %v3674
      %v3873 = vunpack.c.l.b16 %v3688
      %v3874 = vunpack.c.l.b16 %v3702
      %v3875 = vunpack.c.l.b16 %v3716
      %v3876 = vunpack.c.l.b16 %v3730
      %v3877 = vunpack.c.l.b16 %v3744
      %v3878 = vunpack.c.l.b16 %v3758
      %v3879 = vunpack.c.l.b16 %v3772
      %v3880 = vunpack.c.l.b16 %v3786
      %v3881 = vunpack.c.l.b16 %v3800
      %v3882 = vunpack.c.l.b16 %v3814
      %v3883 = vunpack.c.l.b16 %v3828
      %v3884 = vunpack.c.l.b16 %v3842
      %v3885 = vunpack.c.l.b16 %v3856
      %v3886 = vunpack.c.l.b16 %v3870
      %v3887 = vrot.slane %v3872, 7
      %v3888 = vsel %vm343, %v3887, %v3871
      %v3889 = vrot.slane %v3873, 6
      %v3890 = vsel %vm346, %v3889, %v3888
      %v3891 = vrot.slane %v3874, 5
      %v3892 = vsel %vm349, %v3891, %v3890
      %v3893 = vrot.slane %v3875, 4
      %v3894 = vsel %vm616, %v3893, %v3892
      %v3895 = vrot.slane %v3876, 3
      %v3896 = vsel %vm619, %v3895, %v3894
      %v3897 = vrot.slane %v3877, 2
      %v3898 = vsel %vm622, %v3897, %v3896
      %v3899 = vrot.slane %v3878, 1
      %v3900 = vsel %vm625, %v3899, %v3898
      %v3901 = vrot.slane %v3880, 7
      %v3902 = vsel %vm343, %v3901, %v3879
      %v3903 = vrot.slane %v3881, 6
      %v3904 = vsel %vm346, %v3903, %v3902
      %v3905 = vrot.slane %v3882, 5
      %v3906 = vsel %vm349, %v3905, %v3904
      %v3907 = vrot.slane %v3883, 4
      %v3908 = vsel %vm616, %v3907, %v3906
      %v3909 = vrot.slane %v3884, 3
      %v3910 = vsel %vm619, %v3909, %v3908
      %v3911 = vrot.slane %v3885, 2
      %v3912 = vsel %vm622, %v3911, %v3910
      %v3913 = vrot.slane %v3886, 1
      %v3914 = vsel %vm625, %v3913, %v3912
      %v3915 = vpack.c.b16 %v3914, %v3900
      %v3918 = vsel %vm1298, %v3557, 0
      %3920 = vmatprep.subr.bf16.mxu0 0
      %3921 = vmatpush1.bf16.msra.mxu0 0
      %3922 = vmatprep.subr.bf16.mxu0 0
      %3923 = vmatpush1.bf16.msra.mxu0 0
      %3924 = vmatprep.subr.bf16.mxu0 0
      %3925 = vmatpush1.bf16.msra.mxu0 0
      %3926 = vmatprep.subr.bf16.mxu0 0
      %3927 = vmatpush1.bf16.msra.mxu0 0
      %3928 = vmatprep.subr.bf16.mxu0 0
      %3929 = vmatpush1.bf16.msra.mxu0 0
      %3930 = vmatprep.subr.bf16.mxu0 0
      %3931 = vmatpush1.bf16.msra.mxu0 0
      %3932 = vmatprep.subr.bf16.mxu0 0
      %3933 = vmatpush1.bf16.msra.mxu0 0
      %3934 = vmatprep.subr.bf16.mxu0 0
      %3935 = vmatpush1.bf16.msra.mxu0 %v3915
      %3936 = vmatprep.subr.bf16.mxu0 0
      %3937 = vmatpush2.bf16.msra.mxu0 0
      %3938 = vmatprep.subr.bf16.mxu0 0
      %3939 = vmatpush2.bf16.msra.mxu0 0
      %3940 = vmatprep.subr.bf16.mxu0 0
      %3941 = vmatpush2.bf16.msra.mxu0 0
      %3942 = vmatprep.subr.bf16.mxu0 0
      %3943 = vmatpush2.bf16.msra.mxu0 0
      %3944 = vmatprep.subr.bf16.mxu0 0
      %3945 = vmatpush2.bf16.msra.mxu0 0
      %3946 = vmatprep.subr.bf16.mxu0 0
      %3947 = vmatpush2.bf16.msra.mxu0 0
      %3948 = vmatprep.subr.bf16.mxu0 0
      %3949 = vmatpush2.bf16.msra.mxu0 0
      %3950 = vmatprep.subr.bf16.mxu0 0
      %3951 = vmatpush2.bf16.msra.mxu0 0
      %3952 = vmatprep.mubr.bf16.mxu0 0
      %3953 = vmatmul.mubr.bf16.gmra.mxu0 %v3918
      %v3954 = vpop.f32.mrf.mxu0
      %v3955 = vadd.f32 0.0, %v3954
      %v3956 = vpop.f32.mrf.mxu0
      %v3957 = vpop.f32.mrf.mxu0
      %v3958 = vpop.f32.mrf.mxu0
      %3959 = vdwg.mxu0
      %v3960 = vadd.f32 %v3387, %v3955
      %v3961 = vld [vmem:[%s0] sm:$0x8]
      %v3963 = vpack.i.b16 %v3961, %v3961
      %v3965 = vlaneseq
      %v3966 = vshrl.u32 %v3965, 7
      %v3967 = vsub.s32 3, %v3966
      %v3968 = vrot.slane %v3963, %v3967
      %v3971 = vunpack.c.l.s4 1966171168
      %v3972 = vunpack.c.0.s8 %v3971
      %v3973 = vlaneseq
      %v3974 = vshrl.u32 %v3973, 7
      %v3975 = vsub.s32 %v3972, %v3974
      %v3976 = vrot.slane %v3968, %v3975
      %v3977 = vcombine.high %v3976, %v3976
      %v3979 = vunpack.c.l.s4 1966171168
      %v3980 = vunpack.c.0.s8 %v3979
      %v3981 = vlaneseq
      %v3982 = vshrl.u32 %v3981, 7
      %v3983 = vsub.s32 %v3980, %v3982
      %v3984 = vrot.slane %v3976, %v3983
      %v3986 = vunpack.c.l.s4 1966171168
      %v3987 = vunpack.c.0.s8 %v3986
      %v3988 = vlaneseq
      %v3989 = vshrl.u32 %v3988, 7
      %v3990 = vsub.s32 %v3987, %v3989
      %v3991 = vrot.slane %v3977, %v3990
      %v3993 = vshrl.u32 %v3984, 16
      %v3996 = vshrl.u32 %v3991, 16
      %v4002 = vmul.bf16 %v197, %v3984
      %v4003 = vmul.bf16 %v198, %v3993
      %v4004 = vmul.bf16 %v199, %v3991
      %v4005 = vmul.bf16 %v200, %v3996
      %v4011 = vunpack.c.l.s4 1966171168
      %v4012 = vunpack.c.0.s8 %v4011
      %v4013 = vlaneseq
      %v4014 = vshrl.u32 %v4013, 7
      %v4015 = vsub.s32 %v4012, %v4014
      %v4016 = vrot.slane %v4002, %v4015
      %v4018 = vunpack.c.l.s4 1966171168
      %v4019 = vunpack.c.0.s8 %v4018
      %v4020 = vlaneseq
      %v4021 = vshrl.u32 %v4020, 7
      %v4022 = vsub.s32 %v4019, %v4021
      %v4023 = vrot.slane %v4016, %v4022
      %v4025 = vunpack.c.l.s4 1966171168
      %v4026 = vunpack.c.0.s8 %v4025
      %v4027 = vlaneseq
      %v4028 = vshrl.u32 %v4027, 7
      %v4029 = vsub.s32 %v4026, %v4028
      %v4030 = vrot.slane %v4003, %v4029
      %v4032 = vunpack.c.l.s4 1966171168
      %v4033 = vunpack.c.0.s8 %v4032
      %v4034 = vlaneseq
      %v4035 = vshrl.u32 %v4034, 7
      %v4036 = vsub.s32 %v4033, %v4035
      %v4037 = vrot.slane %v4030, %v4036
      %v4039 = vunpack.c.l.s4 1966171168
      %v4040 = vunpack.c.0.s8 %v4039
      %v4041 = vlaneseq
      %v4042 = vshrl.u32 %v4041, 7
      %v4043 = vsub.s32 %v4040, %v4042
      %v4044 = vrot.slane %v4004, %v4043
      %v4046 = vunpack.c.l.s4 1966171168
      %v4047 = vunpack.c.0.s8 %v4046
      %v4048 = vlaneseq
      %v4049 = vshrl.u32 %v4048, 7
      %v4050 = vsub.s32 %v4047, %v4049
      %v4051 = vrot.slane %v4044, %v4050
      %v4053 = vunpack.c.l.s4 1966171168
      %v4054 = vunpack.c.0.s8 %v4053
      %v4055 = vlaneseq
      %v4056 = vshrl.u32 %v4055, 7
      %v4057 = vsub.s32 %v4054, %v4056
      %v4058 = vrot.slane %v4005, %v4057
      %v4060 = vunpack.c.l.s4 1966171168
      %v4061 = vunpack.c.0.s8 %v4060
      %v4062 = vlaneseq
      %v4063 = vshrl.u32 %v4062, 7
      %v4064 = vsub.s32 %v4061, %v4063
      %v4065 = vrot.slane %v4058, %v4064
      %v4066 = vunpack.c.l.b16 %v4023
      %v4067 = vunpack.c.l.b16 %v4037
      %v4068 = vunpack.c.l.b16 %v4051
      %v4069 = vunpack.c.l.b16 %v4065
      %v4070 = vrot.slane %v4067, 7
      %v4071 = vsel %vm343, %v4070, %v4066
      %v4072 = vrot.slane %v4068, 6
      %v4073 = vsel %vm346, %v4072, %v4071
      %v4074 = vrot.slane %v4069, 5
      %v4075 = vsel %vm349, %v4074, %v4073
      %v4076 = vpack.c.b16 %v4075, %v4075
      %4078 = vmatprep.subr.bf16.mxu0 0
      %4079 = vmatpush1.bf16.xpose.msra.mxu0 0
      %4080 = vmatprep.subr.bf16.mxu0 0
      %4081 = vmatpush1.bf16.xpose.msra.mxu0 0
      %4082 = vmatprep.subr.bf16.mxu0 0
      %4083 = vmatpush1.bf16.xpose.msra.mxu0 0
      %4084 = vmatprep.subr.bf16.mxu0 0
      %4085 = vmatpush1.bf16.xpose.msra.mxu0 0
      %4086 = vmatprep.subr.bf16.mxu0 0
      %4087 = vmatpush1.bf16.xpose.msra.mxu0 0
      %4088 = vmatprep.subr.bf16.mxu0 0
      %4089 = vmatpush1.bf16.xpose.msra.mxu0 0
      %4090 = vmatprep.subr.bf16.mxu0 0
      %4091 = vmatpush1.bf16.xpose.msra.mxu0 0
      %4092 = vmatprep.subr.bf16.mxu0 0
      %4093 = vmatpush1.bf16.xpose.msra.mxu0 %v641
      %4094 = vmatprep.subr.bf16.mxu0 0
      %4095 = vmatpush2.bf16.xpose.msra.mxu0 0
      %4096 = vmatprep.subr.bf16.mxu0 0
      %4097 = vmatpush2.bf16.xpose.msra.mxu0 0
      %4098 = vmatprep.subr.bf16.mxu0 0
      %4099 = vmatpush2.bf16.xpose.msra.mxu0 0
      %4100 = vmatprep.subr.bf16.mxu0 0
      %4101 = vmatpush2.bf16.xpose.msra.mxu0 0
      %4102 = vmatprep.subr.bf16.mxu0 0
      %4103 = vmatpush2.bf16.xpose.msra.mxu0 0
      %4104 = vmatprep.subr.bf16.mxu0 0
      %4105 = vmatpush2.bf16.xpose.msra.mxu0 0
      %4106 = vmatprep.subr.bf16.mxu0 0
      %4107 = vmatpush2.bf16.xpose.msra.mxu0 0
      %4108 = vmatprep.subr.bf16.mxu0 0
      %4109 = vmatpush2.bf16.xpose.msra.mxu0 0
      %4110 = vmatprep.mubr.bf16.mxu0 0
      %4111 = vmatmul.mubr.bf16.gmra.mxu0 %v4076
      %v4112 = vpop.f32.mrf.mxu0
      %v4113 = vadd.f32 0.0, %v4112
      %v4114 = vpop.f32.mrf.mxu0
      %v4115 = vpop.f32.mrf.mxu0
      %v4116 = vpop.f32.mrf.mxu0
      %4117 = vdwg.mxu0
      %v4118 = vsel %vm683, %v4113, -inf
      %4119 = vmax.xlane.f32.xlu0 %v4118
      %v4120 = vpop.xlane.xlu0 %4119
      %v4121 = vsub.f32 %v4113, %v4120
      %v4122 = vmul.f32 %v4121, 1.442695
      %v4123 = vpow.pop %v4122
      %v4124 = vsel %vm683, %v4123, 0.0
      %4125 = vadd.xlane.f32.xlu0 %v4124
      %v4126 = vpop.xlane.xlu0 %4125
      %v4127 = vrcp.pop %v4126
      %v4128 = vmul.f32 %v4123, %v4127
      %v4129 = vpack.c.bf16 %v4128, %v4128
      %v4130 = vcombine.high %v3968, %v3968
      %v4132 = vunpack.c.l.s4 1966171168
      %v4133 = vunpack.c.0.s8 %v4132
      %v4134 = vlaneseq
      %v4135 = vshrl.u32 %v4134, 7
      %v4136 = vsub.s32 %v4133, %v4135
      %v4137 = vrot.slane %v4130, %v4136
      %v4138 = vcombine.high %v4137, %v4137
      %v4140 = vunpack.c.l.s4 1966171168
      %v4141 = vunpack.c.0.s8 %v4140
      %v4142 = vlaneseq
      %v4143 = vshrl.u32 %v4142, 7
      %v4144 = vsub.s32 %v4141, %v4143
      %v4145 = vrot.slane %v4137, %v4144
      %v4147 = vunpack.c.l.s4 1966171168
      %v4148 = vunpack.c.0.s8 %v4147
      %v4149 = vlaneseq
      %v4150 = vshrl.u32 %v4149, 7
      %v4151 = vsub.s32 %v4148, %v4150
      %v4152 = vrot.slane %v4138, %v4151
      %v4153 = vcombine.high %v3984, %v3984
      %v4154 = vcombine.high %v4145, %v4145
      %v4155 = vcombine.high %v3991, %v3991
      %v4156 = vcombine.high %v4152, %v4152
      %v4158 = vshrl.u32 %v4153, 16
      %v4161 = vshrl.u32 %v4155, 16
      %v4164 = vshrl.u32 %v4145, 16
      %v4167 = vshrl.u32 %v4152, 16
      %v4170 = vshrl.u32 %v4154, 16
      %v4173 = vshrl.u32 %v4156, 16
      %v4187 = vmul.bf16 %v217, %v3984
      %v4188 = vmul.bf16 %v218, %v3993
      %v4189 = vmul.bf16 %v219, %v3991
      %v4190 = vmul.bf16 %v220, %v3996
      %v4191 = vmul.bf16 %v221, %v4153
      %v4192 = vmul.bf16 %v222, %v4158
      %v4193 = vmul.bf16 %v223, %v4155
      %v4194 = vmul.bf16 %v224, %v4161
      %v4195 = vmul.bf16 %v225, %v4145
      %v4196 = vmul.bf16 %v226, %v4164
      %v4197 = vmul.bf16 %v227, %v4152
      %v4198 = vmul.bf16 %v228, %v4167
      %v4199 = vmul.bf16 %v229, %v4154
      %v4200 = vmul.bf16 %v230, %v4170
      %v4201 = vmul.bf16 %v231, %v4156
      %v4202 = vmul.bf16 %v232, %v4173
      %v4220 = vunpack.c.l.s4 1966171168
      %v4221 = vunpack.c.0.s8 %v4220
      %v4222 = vlaneseq
      %v4223 = vshrl.u32 %v4222, 7
      %v4224 = vsub.s32 %v4221, %v4223
      %v4225 = vrot.slane %v4187, %v4224
      %v4227 = vunpack.c.l.s4 1966171168
      %v4228 = vunpack.c.0.s8 %v4227
      %v4229 = vlaneseq
      %v4230 = vshrl.u32 %v4229, 7
      %v4231 = vsub.s32 %v4228, %v4230
      %v4232 = vrot.slane %v4225, %v4231
      %v4234 = vunpack.c.l.s4 1966171168
      %v4235 = vunpack.c.0.s8 %v4234
      %v4236 = vlaneseq
      %v4237 = vshrl.u32 %v4236, 7
      %v4238 = vsub.s32 %v4235, %v4237
      %v4239 = vrot.slane %v4188, %v4238
      %v4241 = vunpack.c.l.s4 1966171168
      %v4242 = vunpack.c.0.s8 %v4241
      %v4243 = vlaneseq
      %v4244 = vshrl.u32 %v4243, 7
      %v4245 = vsub.s32 %v4242, %v4244
      %v4246 = vrot.slane %v4239, %v4245
      %v4248 = vunpack.c.l.s4 1966171168
      %v4249 = vunpack.c.0.s8 %v4248
      %v4250 = vlaneseq
      %v4251 = vshrl.u32 %v4250, 7
      %v4252 = vsub.s32 %v4249, %v4251
      %v4253 = vrot.slane %v4189, %v4252
      %v4255 = vunpack.c.l.s4 1966171168
      %v4256 = vunpack.c.0.s8 %v4255
      %v4257 = vlaneseq
      %v4258 = vshrl.u32 %v4257, 7
      %v4259 = vsub.s32 %v4256, %v4258
      %v4260 = vrot.slane %v4253, %v4259
      %v4262 = vunpack.c.l.s4 1966171168
      %v4263 = vunpack.c.0.s8 %v4262
      %v4264 = vlaneseq
      %v4265 = vshrl.u32 %v4264, 7
      %v4266 = vsub.s32 %v4263, %v4265
      %v4267 = vrot.slane %v4190, %v4266
      %v4269 = vunpack.c.l.s4 1966171168
      %v4270 = vunpack.c.0.s8 %v4269
      %v4271 = vlaneseq
      %v4272 = vshrl.u32 %v4271, 7
      %v4273 = vsub.s32 %v4270, %v4272
      %v4274 = vrot.slane %v4267, %v4273
      %v4276 = vunpack.c.l.s4 1966171168
      %v4277 = vunpack.c.0.s8 %v4276
      %v4278 = vlaneseq
      %v4279 = vshrl.u32 %v4278, 7
      %v4280 = vsub.s32 %v4277, %v4279
      %v4281 = vrot.slane %v4191, %v4280
      %v4283 = vunpack.c.l.s4 1966171168
      %v4284 = vunpack.c.0.s8 %v4283
      %v4285 = vlaneseq
      %v4286 = vshrl.u32 %v4285, 7
      %v4287 = vsub.s32 %v4284, %v4286
      %v4288 = vrot.slane %v4281, %v4287
      %v4290 = vunpack.c.l.s4 1966171168
      %v4291 = vunpack.c.0.s8 %v4290
      %v4292 = vlaneseq
      %v4293 = vshrl.u32 %v4292, 7
      %v4294 = vsub.s32 %v4291, %v4293
      %v4295 = vrot.slane %v4192, %v4294
      %v4297 = vunpack.c.l.s4 1966171168
      %v4298 = vunpack.c.0.s8 %v4297
      %v4299 = vlaneseq
      %v4300 = vshrl.u32 %v4299, 7
      %v4301 = vsub.s32 %v4298, %v4300
      %v4302 = vrot.slane %v4295, %v4301
      %v4304 = vunpack.c.l.s4 1966171168
      %v4305 = vunpack.c.0.s8 %v4304
      %v4306 = vlaneseq
      %v4307 = vshrl.u32 %v4306, 7
      %v4308 = vsub.s32 %v4305, %v4307
      %v4309 = vrot.slane %v4193, %v4308
      %v4311 = vunpack.c.l.s4 1966171168
      %v4312 = vunpack.c.0.s8 %v4311
      %v4313 = vlaneseq
      %v4314 = vshrl.u32 %v4313, 7
      %v4315 = vsub.s32 %v4312, %v4314
      %v4316 = vrot.slane %v4309, %v4315
      %v4318 = vunpack.c.l.s4 1966171168
      %v4319 = vunpack.c.0.s8 %v4318
      %v4320 = vlaneseq
      %v4321 = vshrl.u32 %v4320, 7
      %v4322 = vsub.s32 %v4319, %v4321
      %v4323 = vrot.slane %v4194, %v4322
      %v4325 = vunpack.c.l.s4 1966171168
      %v4326 = vunpack.c.0.s8 %v4325
      %v4327 = vlaneseq
      %v4328 = vshrl.u32 %v4327, 7
      %v4329 = vsub.s32 %v4326, %v4328
      %v4330 = vrot.slane %v4323, %v4329
      %v4332 = vunpack.c.l.s4 1966171168
      %v4333 = vunpack.c.0.s8 %v4332
      %v4334 = vlaneseq
      %v4335 = vshrl.u32 %v4334, 7
      %v4336 = vsub.s32 %v4333, %v4335
      %v4337 = vrot.slane %v4195, %v4336
      %v4339 = vunpack.c.l.s4 1966171168
      %v4340 = vunpack.c.0.s8 %v4339
      %v4341 = vlaneseq
      %v4342 = vshrl.u32 %v4341, 7
      %v4343 = vsub.s32 %v4340, %v4342
      %v4344 = vrot.slane %v4337, %v4343
      %v4346 = vunpack.c.l.s4 1966171168
      %v4347 = vunpack.c.0.s8 %v4346
      %v4348 = vlaneseq
      %v4349 = vshrl.u32 %v4348, 7
      %v4350 = vsub.s32 %v4347, %v4349
      %v4351 = vrot.slane %v4196, %v4350
      %v4353 = vunpack.c.l.s4 1966171168
      %v4354 = vunpack.c.0.s8 %v4353
      %v4355 = vlaneseq
      %v4356 = vshrl.u32 %v4355, 7
      %v4357 = vsub.s32 %v4354, %v4356
      %v4358 = vrot.slane %v4351, %v4357
      %v4360 = vunpack.c.l.s4 1966171168
      %v4361 = vunpack.c.0.s8 %v4360
      %v4362 = vlaneseq
      %v4363 = vshrl.u32 %v4362, 7
      %v4364 = vsub.s32 %v4361, %v4363
      %v4365 = vrot.slane %v4197, %v4364
      %v4367 = vunpack.c.l.s4 1966171168
      %v4368 = vunpack.c.0.s8 %v4367
      %v4369 = vlaneseq
      %v4370 = vshrl.u32 %v4369, 7
      %v4371 = vsub.s32 %v4368, %v4370
      %v4372 = vrot.slane %v4365, %v4371
      %v4374 = vunpack.c.l.s4 1966171168
      %v4375 = vunpack.c.0.s8 %v4374
      %v4376 = vlaneseq
      %v4377 = vshrl.u32 %v4376, 7
      %v4378 = vsub.s32 %v4375, %v4377
      %v4379 = vrot.slane %v4198, %v4378
      %v4381 = vunpack.c.l.s4 1966171168
      %v4382 = vunpack.c.0.s8 %v4381
      %v4383 = vlaneseq
      %v4384 = vshrl.u32 %v4383, 7
      %v4385 = vsub.s32 %v4382, %v4384
      %v4386 = vrot.slane %v4379, %v4385
      %v4388 = vunpack.c.l.s4 1966171168
      %v4389 = vunpack.c.0.s8 %v4388
      %v4390 = vlaneseq
      %v4391 = vshrl.u32 %v4390, 7
      %v4392 = vsub.s32 %v4389, %v4391
      %v4393 = vrot.slane %v4199, %v4392
      %v4395 = vunpack.c.l.s4 1966171168
      %v4396 = vunpack.c.0.s8 %v4395
      %v4397 = vlaneseq
      %v4398 = vshrl.u32 %v4397, 7
      %v4399 = vsub.s32 %v4396, %v4398
      %v4400 = vrot.slane %v4393, %v4399
      %v4402 = vunpack.c.l.s4 1966171168
      %v4403 = vunpack.c.0.s8 %v4402
      %v4404 = vlaneseq
      %v4405 = vshrl.u32 %v4404, 7
      %v4406 = vsub.s32 %v4403, %v4405
      %v4407 = vrot.slane %v4200, %v4406
      %v4409 = vunpack.c.l.s4 1966171168
      %v4410 = vunpack.c.0.s8 %v4409
      %v4411 = vlaneseq
      %v4412 = vshrl.u32 %v4411, 7
      %v4413 = vsub.s32 %v4410, %v4412
      %v4414 = vrot.slane %v4407, %v4413
      %v4416 = vunpack.c.l.s4 1966171168
      %v4417 = vunpack.c.0.s8 %v4416
      %v4418 = vlaneseq
      %v4419 = vshrl.u32 %v4418, 7
      %v4420 = vsub.s32 %v4417, %v4419
      %v4421 = vrot.slane %v4201, %v4420
      %v4423 = vunpack.c.l.s4 1966171168
      %v4424 = vunpack.c.0.s8 %v4423
      %v4425 = vlaneseq
      %v4426 = vshrl.u32 %v4425, 7
      %v4427 = vsub.s32 %v4424, %v4426
      %v4428 = vrot.slane %v4421, %v4427
      %v4430 = vunpack.c.l.s4 1966171168
      %v4431 = vunpack.c.0.s8 %v4430
      %v4432 = vlaneseq
      %v4433 = vshrl.u32 %v4432, 7
      %v4434 = vsub.s32 %v4431, %v4433
      %v4435 = vrot.slane %v4202, %v4434
      %v4437 = vunpack.c.l.s4 1966171168
      %v4438 = vunpack.c.0.s8 %v4437
      %v4439 = vlaneseq
      %v4440 = vshrl.u32 %v4439, 7
      %v4441 = vsub.s32 %v4438, %v4440
      %v4442 = vrot.slane %v4435, %v4441
      %v4443 = vunpack.c.l.b16 %v4232
      %v4444 = vunpack.c.l.b16 %v4246
      %v4445 = vunpack.c.l.b16 %v4260
      %v4446 = vunpack.c.l.b16 %v4274
      %v4447 = vunpack.c.l.b16 %v4288
      %v4448 = vunpack.c.l.b16 %v4302
      %v4449 = vunpack.c.l.b16 %v4316
      %v4450 = vunpack.c.l.b16 %v4330
      %v4451 = vunpack.c.l.b16 %v4344
      %v4452 = vunpack.c.l.b16 %v4358
      %v4453 = vunpack.c.l.b16 %v4372
      %v4454 = vunpack.c.l.b16 %v4386
      %v4455 = vunpack.c.l.b16 %v4400
      %v4456 = vunpack.c.l.b16 %v4414
      %v4457 = vunpack.c.l.b16 %v4428
      %v4458 = vunpack.c.l.b16 %v4442
      %v4459 = vrot.slane %v4444, 7
      %v4460 = vsel %vm343, %v4459, %v4443
      %v4461 = vrot.slane %v4445, 6
      %v4462 = vsel %vm346, %v4461, %v4460
      %v4463 = vrot.slane %v4446, 5
      %v4464 = vsel %vm349, %v4463, %v4462
      %v4465 = vrot.slane %v4447, 4
      %v4466 = vsel %vm616, %v4465, %v4464
      %v4467 = vrot.slane %v4448, 3
      %v4468 = vsel %vm619, %v4467, %v4466
      %v4469 = vrot.slane %v4449, 2
      %v4470 = vsel %vm622, %v4469, %v4468
      %v4471 = vrot.slane %v4450, 1
      %v4472 = vsel %vm625, %v4471, %v4470
      %v4473 = vrot.slane %v4452, 7
      %v4474 = vsel %vm343, %v4473, %v4451
      %v4475 = vrot.slane %v4453, 6
      %v4476 = vsel %vm346, %v4475, %v4474
      %v4477 = vrot.slane %v4454, 5
      %v4478 = vsel %vm349, %v4477, %v4476
      %v4479 = vrot.slane %v4455, 4
      %v4480 = vsel %vm616, %v4479, %v4478
      %v4481 = vrot.slane %v4456, 3
      %v4482 = vsel %vm619, %v4481, %v4480
      %v4483 = vrot.slane %v4457, 2
      %v4484 = vsel %vm622, %v4483, %v4482
      %v4485 = vrot.slane %v4458, 1
      %v4486 = vsel %vm625, %v4485, %v4484
      %v4487 = vpack.c.b16 %v4486, %v4472
      %v4490 = vsel %vm1298, %v4129, 0
      %4492 = vmatprep.subr.bf16.mxu0 0
      %4493 = vmatpush1.bf16.msra.mxu0 0
      %4494 = vmatprep.subr.bf16.mxu0 0
      %4495 = vmatpush1.bf16.msra.mxu0 0
      %4496 = vmatprep.subr.bf16.mxu0 0
      %4497 = vmatpush1.bf16.msra.mxu0 0
      %4498 = vmatprep.subr.bf16.mxu0 0
      %4499 = vmatpush1.bf16.msra.mxu0 0
      %4500 = vmatprep.subr.bf16.mxu0 0
      %4501 = vmatpush1.bf16.msra.mxu0 0
      %4502 = vmatprep.subr.bf16.mxu0 0
      %4503 = vmatpush1.bf16.msra.mxu0 0
      %4504 = vmatprep.subr.bf16.mxu0 0
      %4505 = vmatpush1.bf16.msra.mxu0 0
      %4506 = vmatprep.subr.bf16.mxu0 0
      %4507 = vmatpush1.bf16.msra.mxu0 %v4487
      %4508 = vmatprep.subr.bf16.mxu0 0
      %4509 = vmatpush2.bf16.msra.mxu0 0
      %4510 = vmatprep.subr.bf16.mxu0 0
      %4511 = vmatpush2.bf16.msra.mxu0 0
      %4512 = vmatprep.subr.bf16.mxu0 0
      %4513 = vmatpush2.bf16.msra.mxu0 0
      %4514 = vmatprep.subr.bf16.mxu0 0
      %4515 = vmatpush2.bf16.msra.mxu0 0
      %4516 = vmatprep.subr.bf16.mxu0 0
      %4517 = vmatpush2.bf16.msra.mxu0 0
      %4518 = vmatprep.subr.bf16.mxu0 0
      %4519 = vmatpush2.bf16.msra.mxu0 0
      %4520 = vmatprep.subr.bf16.mxu0 0
      %4521 = vmatpush2.bf16.msra.mxu0 0
      %4522 = vmatprep.subr.bf16.mxu0 0
      %4523 = vmatpush2.bf16.msra.mxu0 0
      %4524 = vmatprep.mubr.bf16.mxu0 0
      %4525 = vmatmul.mubr.bf16.gmra.mxu0 %v4490
      %v4526 = vpop.f32.mrf.mxu0
      %v4527 = vadd.f32 0.0, %v4526
      %v4528 = vpop.f32.mrf.mxu0
      %v4529 = vpop.f32.mrf.mxu0
      %v4530 = vpop.f32.mrf.mxu0
      %4531 = vdwg.mxu0
      %v4532 = vadd.f32 %v3960, %v4527
      %v4533 = vld [vmem:[%s0] sm:$0x8]
      %v4535 = vshrl.u32 %v4533, 16
      %v4536 = vpack.i.b16 %v4535, %v4535
      %v4538 = vlaneseq
      %v4539 = vshrl.u32 %v4538, 7
      %v4540 = vsub.s32 3, %v4539
      %v4541 = vrot.slane %v4536, %v4540
      %v4544 = vunpack.c.l.s4 1966171168
      %v4545 = vunpack.c.0.s8 %v4544
      %v4546 = vlaneseq
      %v4547 = vshrl.u32 %v4546, 7
      %v4548 = vsub.s32 %v4545, %v4547
      %v4549 = vrot.slane %v4541, %v4548
      %v4550 = vcombine.high %v4549, %v4549
      %v4552 = vunpack.c.l.s4 1966171168
      %v4553 = vunpack.c.0.s8 %v4552
      %v4554 = vlaneseq
      %v4555 = vshrl.u32 %v4554, 7
      %v4556 = vsub.s32 %v4553, %v4555
      %v4557 = vrot.slane %v4549, %v4556
      %v4559 = vunpack.c.l.s4 1966171168
      %v4560 = vunpack.c.0.s8 %v4559
      %v4561 = vlaneseq
      %v4562 = vshrl.u32 %v4561, 7
      %v4563 = vsub.s32 %v4560, %v4562
      %v4564 = vrot.slane %v4550, %v4563
      %v4566 = vshrl.u32 %v4557, 16
      %v4569 = vshrl.u32 %v4564, 16
      %v4575 = vmul.bf16 %v197, %v4557
      %v4576 = vmul.bf16 %v198, %v4566
      %v4577 = vmul.bf16 %v199, %v4564
      %v4578 = vmul.bf16 %v200, %v4569
      %v4584 = vunpack.c.l.s4 1966171168
      %v4585 = vunpack.c.0.s8 %v4584
      %v4586 = vlaneseq
      %v4587 = vshrl.u32 %v4586, 7
      %v4588 = vsub.s32 %v4585, %v4587
      %v4589 = vrot.slane %v4575, %v4588
      %v4591 = vunpack.c.l.s4 1966171168
      %v4592 = vunpack.c.0.s8 %v4591
      %v4593 = vlaneseq
      %v4594 = vshrl.u32 %v4593, 7
      %v4595 = vsub.s32 %v4592, %v4594
      %v4596 = vrot.slane %v4589, %v4595
      %v4598 = vunpack.c.l.s4 1966171168
      %v4599 = vunpack.c.0.s8 %v4598
      %v4600 = vlaneseq
      %v4601 = vshrl.u32 %v4600, 7
      %v4602 = vsub.s32 %v4599, %v4601
      %v4603 = vrot.slane %v4576, %v4602
      %v4605 = vunpack.c.l.s4 1966171168
      %v4606 = vunpack.c.0.s8 %v4605
      %v4607 = vlaneseq
      %v4608 = vshrl.u32 %v4607, 7
      %v4609 = vsub.s32 %v4606, %v4608
      %v4610 = vrot.slane %v4603, %v4609
      %v4612 = vunpack.c.l.s4 1966171168
      %v4613 = vunpack.c.0.s8 %v4612
      %v4614 = vlaneseq
      %v4615 = vshrl.u32 %v4614, 7
      %v4616 = vsub.s32 %v4613, %v4615
      %v4617 = vrot.slane %v4577, %v4616
      %v4619 = vunpack.c.l.s4 1966171168
      %v4620 = vunpack.c.0.s8 %v4619
      %v4621 = vlaneseq
      %v4622 = vshrl.u32 %v4621, 7
      %v4623 = vsub.s32 %v4620, %v4622
      %v4624 = vrot.slane %v4617, %v4623
      %v4626 = vunpack.c.l.s4 1966171168
      %v4627 = vunpack.c.0.s8 %v4626
      %v4628 = vlaneseq
      %v4629 = vshrl.u32 %v4628, 7
      %v4630 = vsub.s32 %v4627, %v4629
      %v4631 = vrot.slane %v4578, %v4630
      %v4633 = vunpack.c.l.s4 1966171168
      %v4634 = vunpack.c.0.s8 %v4633
      %v4635 = vlaneseq
      %v4636 = vshrl.u32 %v4635, 7
      %v4637 = vsub.s32 %v4634, %v4636
      %v4638 = vrot.slane %v4631, %v4637
      %v4639 = vunpack.c.l.b16 %v4596
      %v4640 = vunpack.c.l.b16 %v4610
      %v4641 = vunpack.c.l.b16 %v4624
      %v4642 = vunpack.c.l.b16 %v4638
      %v4643 = vrot.slane %v4640, 7
      %v4644 = vsel %vm343, %v4643, %v4639
      %v4645 = vrot.slane %v4641, 6
      %v4646 = vsel %vm346, %v4645, %v4644
      %v4647 = vrot.slane %v4642, 5
      %v4648 = vsel %vm349, %v4647, %v4646
      %v4649 = vpack.c.b16 %v4648, %v4648
      %4651 = vmatprep.subr.bf16.mxu0 0
      %4652 = vmatpush1.bf16.xpose.msra.mxu0 0
      %4653 = vmatprep.subr.bf16.mxu0 0
      %4654 = vmatpush1.bf16.xpose.msra.mxu0 0
      %4655 = vmatprep.subr.bf16.mxu0 0
      %4656 = vmatpush1.bf16.xpose.msra.mxu0 0
      %4657 = vmatprep.subr.bf16.mxu0 0
      %4658 = vmatpush1.bf16.xpose.msra.mxu0 0
      %4659 = vmatprep.subr.bf16.mxu0 0
      %4660 = vmatpush1.bf16.xpose.msra.mxu0 0
      %4661 = vmatprep.subr.bf16.mxu0 0
      %4662 = vmatpush1.bf16.xpose.msra.mxu0 0
      %4663 = vmatprep.subr.bf16.mxu0 0
      %4664 = vmatpush1.bf16.xpose.msra.mxu0 0
      %4665 = vmatprep.subr.bf16.mxu0 0
      %4666 = vmatpush1.bf16.xpose.msra.mxu0 %v641
      %4667 = vmatprep.subr.bf16.mxu0 0
      %4668 = vmatpush2.bf16.xpose.msra.mxu0 0
      %4669 = vmatprep.subr.bf16.mxu0 0
      %4670 = vmatpush2.bf16.xpose.msra.mxu0 0
      %4671 = vmatprep.subr.bf16.mxu0 0
      %4672 = vmatpush2.bf16.xpose.msra.mxu0 0
      %4673 = vmatprep.subr.bf16.mxu0 0
      %4674 = vmatpush2.bf16.xpose.msra.mxu0 0
      %4675 = vmatprep.subr.bf16.mxu0 0
      %4676 = vmatpush2.bf16.xpose.msra.mxu0 0
      %4677 = vmatprep.subr.bf16.mxu0 0
      %4678 = vmatpush2.bf16.xpose.msra.mxu0 0
      %4679 = vmatprep.subr.bf16.mxu0 0
      %4680 = vmatpush2.bf16.xpose.msra.mxu0 0
      %4681 = vmatprep.subr.bf16.mxu0 0
      %4682 = vmatpush2.bf16.xpose.msra.mxu0 0
      %4683 = vmatprep.mubr.bf16.mxu0 0
      %4684 = vmatmul.mubr.bf16.gmra.mxu0 %v4649
      %v4685 = vpop.f32.mrf.mxu0
      %v4686 = vadd.f32 0.0, %v4685
      %v4687 = vpop.f32.mrf.mxu0
      %v4688 = vpop.f32.mrf.mxu0
      %v4689 = vpop.f32.mrf.mxu0
      %4690 = vdwg.mxu0
      %v4691 = vsel %vm683, %v4686, -inf
      %4692 = vmax.xlane.f32.xlu0 %v4691
      %v4693 = vpop.xlane.xlu0 %4692
      %v4694 = vsub.f32 %v4686, %v4693
      %v4695 = vmul.f32 %v4694, 1.442695
      %v4696 = vpow.pop %v4695
      %v4697 = vsel %vm683, %v4696, 0.0
      %4698 = vadd.xlane.f32.xlu0 %v4697
      %v4699 = vpop.xlane.xlu0 %4698
      %v4700 = vrcp.pop %v4699
      %v4701 = vmul.f32 %v4696, %v4700
      %v4702 = vpack.c.bf16 %v4701, %v4701
      %v4703 = vcombine.high %v4541, %v4541
      %v4705 = vunpack.c.l.s4 1966171168
      %v4706 = vunpack.c.0.s8 %v4705
      %v4707 = vlaneseq
      %v4708 = vshrl.u32 %v4707, 7
      %v4709 = vsub.s32 %v4706, %v4708
      %v4710 = vrot.slane %v4703, %v4709
      %v4711 = vcombine.high %v4710, %v4710
      %v4713 = vunpack.c.l.s4 1966171168
      %v4714 = vunpack.c.0.s8 %v4713
      %v4715 = vlaneseq
      %v4716 = vshrl.u32 %v4715, 7
      %v4717 = vsub.s32 %v4714, %v4716
      %v4718 = vrot.slane %v4710, %v4717
      %v4720 = vunpack.c.l.s4 1966171168
      %v4721 = vunpack.c.0.s8 %v4720
      %v4722 = vlaneseq
      %v4723 = vshrl.u32 %v4722, 7
      %v4724 = vsub.s32 %v4721, %v4723
      %v4725 = vrot.slane %v4711, %v4724
      %v4726 = vcombine.high %v4557, %v4557
      %v4727 = vcombine.high %v4718, %v4718
      %v4728 = vcombine.high %v4564, %v4564
      %v4729 = vcombine.high %v4725, %v4725
      %v4731 = vshrl.u32 %v4726, 16
      %v4734 = vshrl.u32 %v4728, 16
      %v4737 = vshrl.u32 %v4718, 16
      %v4740 = vshrl.u32 %v4725, 16
      %v4743 = vshrl.u32 %v4727, 16
      %v4746 = vshrl.u32 %v4729, 16
      %v4760 = vmul.bf16 %v217, %v4557
      %v4761 = vmul.bf16 %v218, %v4566
      %v4762 = vmul.bf16 %v219, %v4564
      %v4763 = vmul.bf16 %v220, %v4569
      %v4764 = vmul.bf16 %v221, %v4726
      %v4765 = vmul.bf16 %v222, %v4731
      %v4766 = vmul.bf16 %v223, %v4728
      %v4767 = vmul.bf16 %v224, %v4734
      %v4768 = vmul.bf16 %v225, %v4718
      %v4769 = vmul.bf16 %v226, %v4737
      %v4770 = vmul.bf16 %v227, %v4725
      %v4771 = vmul.bf16 %v228, %v4740
      %v4772 = vmul.bf16 %v229, %v4727
      %v4773 = vmul.bf16 %v230, %v4743
      %v4774 = vmul.bf16 %v231, %v4729
      %v4775 = vmul.bf16 %v232, %v4746
      %v4793 = vunpack.c.l.s4 1966171168
      %v4794 = vunpack.c.0.s8 %v4793
      %v4795 = vlaneseq
      %v4796 = vshrl.u32 %v4795, 7
      %v4797 = vsub.s32 %v4794, %v4796
      %v4798 = vrot.slane %v4760, %v4797
      %v4800 = vunpack.c.l.s4 1966171168
      %v4801 = vunpack.c.0.s8 %v4800
      %v4802 = vlaneseq
      %v4803 = vshrl.u32 %v4802, 7
      %v4804 = vsub.s32 %v4801, %v4803
      %v4805 = vrot.slane %v4798, %v4804
      %v4807 = vunpack.c.l.s4 1966171168
      %v4808 = vunpack.c.0.s8 %v4807
      %v4809 = vlaneseq
      %v4810 = vshrl.u32 %v4809, 7
      %v4811 = vsub.s32 %v4808, %v4810
      %v4812 = vrot.slane %v4761, %v4811
      %v4814 = vunpack.c.l.s4 1966171168
      %v4815 = vunpack.c.0.s8 %v4814
      %v4816 = vlaneseq
      %v4817 = vshrl.u32 %v4816, 7
      %v4818 = vsub.s32 %v4815, %v4817
      %v4819 = vrot.slane %v4812, %v4818
      %v4821 = vunpack.c.l.s4 1966171168
      %v4822 = vunpack.c.0.s8 %v4821
      %v4823 = vlaneseq
      %v4824 = vshrl.u32 %v4823, 7
      %v4825 = vsub.s32 %v4822, %v4824
      %v4826 = vrot.slane %v4762, %v4825
      %v4828 = vunpack.c.l.s4 1966171168
      %v4829 = vunpack.c.0.s8 %v4828
      %v4830 = vlaneseq
      %v4831 = vshrl.u32 %v4830, 7
      %v4832 = vsub.s32 %v4829, %v4831
      %v4833 = vrot.slane %v4826, %v4832
      %v4835 = vunpack.c.l.s4 1966171168
      %v4836 = vunpack.c.0.s8 %v4835
      %v4837 = vlaneseq
      %v4838 = vshrl.u32 %v4837, 7
      %v4839 = vsub.s32 %v4836, %v4838
      %v4840 = vrot.slane %v4763, %v4839
      %v4842 = vunpack.c.l.s4 1966171168
      %v4843 = vunpack.c.0.s8 %v4842
      %v4844 = vlaneseq
      %v4845 = vshrl.u32 %v4844, 7
      %v4846 = vsub.s32 %v4843, %v4845
      %v4847 = vrot.slane %v4840, %v4846
      %v4849 = vunpack.c.l.s4 1966171168
      %v4850 = vunpack.c.0.s8 %v4849
      %v4851 = vlaneseq
      %v4852 = vshrl.u32 %v4851, 7
      %v4853 = vsub.s32 %v4850, %v4852
      %v4854 = vrot.slane %v4764, %v4853
      %v4856 = vunpack.c.l.s4 1966171168
      %v4857 = vunpack.c.0.s8 %v4856
      %v4858 = vlaneseq
      %v4859 = vshrl.u32 %v4858, 7
      %v4860 = vsub.s32 %v4857, %v4859
      %v4861 = vrot.slane %v4854, %v4860
      %v4863 = vunpack.c.l.s4 1966171168
      %v4864 = vunpack.c.0.s8 %v4863
      %v4865 = vlaneseq
      %v4866 = vshrl.u32 %v4865, 7
      %v4867 = vsub.s32 %v4864, %v4866
      %v4868 = vrot.slane %v4765, %v4867
      %v4870 = vunpack.c.l.s4 1966171168
      %v4871 = vunpack.c.0.s8 %v4870
      %v4872 = vlaneseq
      %v4873 = vshrl.u32 %v4872, 7
      %v4874 = vsub.s32 %v4871, %v4873
      %v4875 = vrot.slane %v4868, %v4874
      %v4877 = vunpack.c.l.s4 1966171168
      %v4878 = vunpack.c.0.s8 %v4877
      %v4879 = vlaneseq
      %v4880 = vshrl.u32 %v4879, 7
      %v4881 = vsub.s32 %v4878, %v4880
      %v4882 = vrot.slane %v4766, %v4881
      %v4884 = vunpack.c.l.s4 1966171168
      %v4885 = vunpack.c.0.s8 %v4884
      %v4886 = vlaneseq
      %v4887 = vshrl.u32 %v4886, 7
      %v4888 = vsub.s32 %v4885, %v4887
      %v4889 = vrot.slane %v4882, %v4888
      %v4891 = vunpack.c.l.s4 1966171168
      %v4892 = vunpack.c.0.s8 %v4891
      %v4893 = vlaneseq
      %v4894 = vshrl.u32 %v4893, 7
      %v4895 = vsub.s32 %v4892, %v4894
      %v4896 = vrot.slane %v4767, %v4895
      %v4898 = vunpack.c.l.s4 1966171168
      %v4899 = vunpack.c.0.s8 %v4898
      %v4900 = vlaneseq
      %v4901 = vshrl.u32 %v4900, 7
      %v4902 = vsub.s32 %v4899, %v4901
      %v4903 = vrot.slane %v4896, %v4902
      %v4905 = vunpack.c.l.s4 1966171168
      %v4906 = vunpack.c.0.s8 %v4905
      %v4907 = vlaneseq
      %v4908 = vshrl.u32 %v4907, 7
      %v4909 = vsub.s32 %v4906, %v4908
      %v4910 = vrot.slane %v4768, %v4909
      %v4912 = vunpack.c.l.s4 1966171168
      %v4913 = vunpack.c.0.s8 %v4912
      %v4914 = vlaneseq
      %v4915 = vshrl.u32 %v4914, 7
      %v4916 = vsub.s32 %v4913, %v4915
      %v4917 = vrot.slane %v4910, %v4916
      %v4919 = vunpack.c.l.s4 1966171168
      %v4920 = vunpack.c.0.s8 %v4919
      %v4921 = vlaneseq
      %v4922 = vshrl.u32 %v4921, 7
      %v4923 = vsub.s32 %v4920, %v4922
      %v4924 = vrot.slane %v4769, %v4923
      %v4926 = vunpack.c.l.s4 1966171168
      %v4927 = vunpack.c.0.s8 %v4926
      %v4928 = vlaneseq
      %v4929 = vshrl.u32 %v4928, 7
      %v4930 = vsub.s32 %v4927, %v4929
      %v4931 = vrot.slane %v4924, %v4930
      %v4933 = vunpack.c.l.s4 1966171168
      %v4934 = vunpack.c.0.s8 %v4933
      %v4935 = vlaneseq
      %v4936 = vshrl.u32 %v4935, 7
      %v4937 = vsub.s32 %v4934, %v4936
      %v4938 = vrot.slane %v4770, %v4937
      %v4940 = vunpack.c.l.s4 1966171168
      %v4941 = vunpack.c.0.s8 %v4940
      %v4942 = vlaneseq
      %v4943 = vshrl.u32 %v4942, 7
      %v4944 = vsub.s32 %v4941, %v4943
      %v4945 = vrot.slane %v4938, %v4944
      %v4947 = vunpack.c.l.s4 1966171168
      %v4948 = vunpack.c.0.s8 %v4947
      %v4949 = vlaneseq
      %v4950 = vshrl.u32 %v4949, 7
      %v4951 = vsub.s32 %v4948, %v4950
      %v4952 = vrot.slane %v4771, %v4951
      %v4954 = vunpack.c.l.s4 1966171168
      %v4955 = vunpack.c.0.s8 %v4954
      %v4956 = vlaneseq
      %v4957 = vshrl.u32 %v4956, 7
      %v4958 = vsub.s32 %v4955, %v4957
      %v4959 = vrot.slane %v4952, %v4958
      %v4961 = vunpack.c.l.s4 1966171168
      %v4962 = vunpack.c.0.s8 %v4961
      %v4963 = vlaneseq
      %v4964 = vshrl.u32 %v4963, 7
      %v4965 = vsub.s32 %v4962, %v4964
      %v4966 = vrot.slane %v4772, %v4965
      %v4968 = vunpack.c.l.s4 1966171168
      %v4969 = vunpack.c.0.s8 %v4968
      %v4970 = vlaneseq
      %v4971 = vshrl.u32 %v4970, 7
      %v4972 = vsub.s32 %v4969, %v4971
      %v4973 = vrot.slane %v4966, %v4972
      %v4975 = vunpack.c.l.s4 1966171168
      %v4976 = vunpack.c.0.s8 %v4975
      %v4977 = vlaneseq
      %v4978 = vshrl.u32 %v4977, 7
      %v4979 = vsub.s32 %v4976, %v4978
      %v4980 = vrot.slane %v4773, %v4979
      %v4982 = vunpack.c.l.s4 1966171168
      %v4983 = vunpack.c.0.s8 %v4982
      %v4984 = vlaneseq
      %v4985 = vshrl.u32 %v4984, 7
      %v4986 = vsub.s32 %v4983, %v4985
      %v4987 = vrot.slane %v4980, %v4986
      %v4989 = vunpack.c.l.s4 1966171168
      %v4990 = vunpack.c.0.s8 %v4989
      %v4991 = vlaneseq
      %v4992 = vshrl.u32 %v4991, 7
      %v4993 = vsub.s32 %v4990, %v4992
      %v4994 = vrot.slane %v4774, %v4993
      %v4996 = vunpack.c.l.s4 1966171168
      %v4997 = vunpack.c.0.s8 %v4996
      %v4998 = vlaneseq
      %v4999 = vshrl.u32 %v4998, 7
      %v5000 = vsub.s32 %v4997, %v4999
      %v5001 = vrot.slane %v4994, %v5000
      %v5003 = vunpack.c.l.s4 1966171168
      %v5004 = vunpack.c.0.s8 %v5003
      %v5005 = vlaneseq
      %v5006 = vshrl.u32 %v5005, 7
      %v5007 = vsub.s32 %v5004, %v5006
      %v5008 = vrot.slane %v4775, %v5007
      %v5010 = vunpack.c.l.s4 1966171168
      %v5011 = vunpack.c.0.s8 %v5010
      %v5012 = vlaneseq
      %v5013 = vshrl.u32 %v5012, 7
      %v5014 = vsub.s32 %v5011, %v5013
      %v5015 = vrot.slane %v5008, %v5014
      %v5016 = vunpack.c.l.b16 %v4805
      %v5017 = vunpack.c.l.b16 %v4819
      %v5018 = vunpack.c.l.b16 %v4833
      %v5019 = vunpack.c.l.b16 %v4847
      %v5020 = vunpack.c.l.b16 %v4861
      %v5021 = vunpack.c.l.b16 %v4875
      %v5022 = vunpack.c.l.b16 %v4889
      %v5023 = vunpack.c.l.b16 %v4903
      %v5024 = vunpack.c.l.b16 %v4917
      %v5025 = vunpack.c.l.b16 %v4931
      %v5026 = vunpack.c.l.b16 %v4945
      %v5027 = vunpack.c.l.b16 %v4959
      %v5028 = vunpack.c.l.b16 %v4973
      %v5029 = vunpack.c.l.b16 %v4987
      %v5030 = vunpack.c.l.b16 %v5001
      %v5031 = vunpack.c.l.b16 %v5015
      %v5032 = vrot.slane %v5017, 7
      %v5033 = vsel %vm343, %v5032, %v5016
      %v5034 = vrot.slane %v5018, 6
      %v5035 = vsel %vm346, %v5034, %v5033
      %v5036 = vrot.slane %v5019, 5
      %v5037 = vsel %vm349, %v5036, %v5035
      %v5038 = vrot.slane %v5020, 4
      %v5039 = vsel %vm616, %v5038, %v5037
      %v5040 = vrot.slane %v5021, 3
      %v5041 = vsel %vm619, %v5040, %v5039
      %v5042 = vrot.slane %v5022, 2
      %v5043 = vsel %vm622, %v5042, %v5041
      %v5044 = vrot.slane %v5023, 1
      %v5045 = vsel %vm625, %v5044, %v5043
      %v5046 = vrot.slane %v5025, 7
      %v5047 = vsel %vm343, %v5046, %v5024
      %v5048 = vrot.slane %v5026, 6
      %v5049 = vsel %vm346, %v5048, %v5047
      %v5050 = vrot.slane %v5027, 5
      %v5051 = vsel %vm349, %v5050, %v5049
      %v5052 = vrot.slane %v5028, 4
      %v5053 = vsel %vm616, %v5052, %v5051
      %v5054 = vrot.slane %v5029, 3
      %v5055 = vsel %vm619, %v5054, %v5053
      %v5056 = vrot.slane %v5030, 2
      %v5057 = vsel %vm622, %v5056, %v5055
      %v5058 = vrot.slane %v5031, 1
      %v5059 = vsel %vm625, %v5058, %v5057
      %v5060 = vpack.c.b16 %v5059, %v5045
      %v5063 = vsel %vm1298, %v4702, 0
      %5065 = vmatprep.subr.bf16.mxu0 0
      %5066 = vmatpush1.bf16.msra.mxu0 0
      %5067 = vmatprep.subr.bf16.mxu0 0
      %5068 = vmatpush1.bf16.msra.mxu0 0
      %5069 = vmatprep.subr.bf16.mxu0 0
      %5070 = vmatpush1.bf16.msra.mxu0 0
      %5071 = vmatprep.subr.bf16.mxu0 0
      %5072 = vmatpush1.bf16.msra.mxu0 0
      %5073 = vmatprep.subr.bf16.mxu0 0
      %5074 = vmatpush1.bf16.msra.mxu0 0
      %5075 = vmatprep.subr.bf16.mxu0 0
      %5076 = vmatpush1.bf16.msra.mxu0 0
      %5077 = vmatprep.subr.bf16.mxu0 0
      %5078 = vmatpush1.bf16.msra.mxu0 0
      %5079 = vmatprep.subr.bf16.mxu0 0
      %5080 = vmatpush1.bf16.msra.mxu0 %v5060
      %5081 = vmatprep.subr.bf16.mxu0 0
      %5082 = vmatpush2.bf16.msra.mxu0 0
      %5083 = vmatprep.subr.bf16.mxu0 0
      %5084 = vmatpush2.bf16.msra.mxu0 0
      %5085 = vmatprep.subr.bf16.mxu0 0
      %5086 = vmatpush2.bf16.msra.mxu0 0
      %5087 = vmatprep.subr.bf16.mxu0 0
      %5088 = vmatpush2.bf16.msra.mxu0 0
      %5089 = vmatprep.subr.bf16.mxu0 0
      %5090 = vmatpush2.bf16.msra.mxu0 0
      %5091 = vmatprep.subr.bf16.mxu0 0
      %5092 = vmatpush2.bf16.msra.mxu0 0
      %5093 = vmatprep.subr.bf16.mxu0 0
      %5094 = vmatpush2.bf16.msra.mxu0 0
      %5095 = vmatprep.subr.bf16.mxu0 0
      %5096 = vmatpush2.bf16.msra.mxu0 0
      %5097 = vmatprep.mubr.bf16.mxu0 0
      %5098 = vmatmul.mubr.bf16.gmra.mxu0 %v5063
      %v5099 = vpop.f32.mrf.mxu0
      %v5100 = vadd.f32 0.0, %v5099
      %v5101 = vpop.f32.mrf.mxu0
      %v5102 = vpop.f32.mrf.mxu0
      %v5103 = vpop.f32.mrf.mxu0
      %5104 = vdwg.mxu0
      %v5105 = vadd.f32 %v4532, %v5100
      %v5106 = vpack.c.bf16 %v5105, %v5105
      %v5109 = vunpack.c.l.s4 1966171168
      %v5110 = vunpack.c.0.s8 %v5109
      %v5111 = vlaneseq
      %v5112 = vshrl.u32 %v5111, 7
      %v5113 = vsub.s32 %v5110, %v5112
      %v5114 = vrot.slane %v5106, %v5113
      %v5115 = vcombine.high %v5114, %v5114
      %v5117 = vunpack.c.l.s4 1966171168
      %v5118 = vunpack.c.0.s8 %v5117
      %v5119 = vlaneseq
      %v5120 = vshrl.u32 %v5119, 7
      %v5121 = vsub.s32 %v5118, %v5120
      %v5122 = vrot.slane %v5114, %v5121
      %v5124 = vunpack.c.l.s4 1966171168
      %v5125 = vunpack.c.0.s8 %v5124
      %v5126 = vlaneseq
      %v5127 = vshrl.u32 %v5126, 7
      %v5128 = vsub.s32 %v5125, %v5127
      %v5129 = vrot.slane %v5115, %v5128
      %v5130 = vunpack.i.l.s16 %v5122
      %v5131 = vunpack.i.h.s16 %v5122
      %v5132 = vunpack.i.l.s16 %v5129
      %v5133 = vunpack.i.h.s16 %v5129
      %v5134 = vpack.i.b16 %v5130, %v5130
      %v5135 = vpack.i.b16 %v5131, %v5131
      %v5136 = vpack.i.b16 %v5132, %v5132
      %v5137 = vpack.i.b16 %v5133, %v5133
      %vm5142 = vcmask 1040384
      %vm5143 = vsmask.f32 256
      %vm5144 = vmand %vm5142, %vm5143
      %v5145 = vld [vmem:[%s194] sm:$0x1]
      %v5146 = vsel %vm5144, %v5134, %v5145
      %5147 = vst [vmem:[%s194] sm:$0x1] %v5146
      %v5148 = vld [vmem:[%s194 + $0x1] sm:$0x1]
      %v5149 = vsel %vm5144, %v5135, %v5148
      %5150 = vst [vmem:[%s194 + $0x1] sm:$0x1] %v5149
      %v5151 = vld [vmem:[%s194 + $0x2] sm:$0x1]
      %v5152 = vsel %vm5144, %v5136, %v5151
      %5153 = vst [vmem:[%s194 + $0x2] sm:$0x1] %v5152
      %v5154 = vld [vmem:[%s194 + $0x3] sm:$0x1]
      %v5155 = vsel %vm5144, %v5137, %v5154
      %5156 = vst [vmem:[%s194 + $0x3] sm:$0x1] %v5155
      %v5157 = vld [vmem:[%s189] sm:$0x1]
      %v5158 = vld [vmem:[%s189 + $0x1] sm:$0x1]
      %v5159 = vld [vmem:[%s189 + $0x2] sm:$0x1]
      %v5160 = vld [vmem:[%s189 + $0x3] sm:$0x1]
      %v5161 = vld [vmem:[%s2] sm:$0x1]
      %v5162 = vld [vmem:[%s2 + $0x1] sm:$0x1]
      %v5163 = vld [vmem:[%s2 + $0x2] sm:$0x1]
      %v5164 = vld [vmem:[%s2 + $0x3] sm:$0x1]
      %v5165 = vld [vmem:[%s2 + $0x4] sm:$0x1]
      %v5166 = vld [vmem:[%s2 + $0x5] sm:$0x1]
      %v5167 = vld [vmem:[%s2 + $0x6] sm:$0x1]
      %v5168 = vld [vmem:[%s2 + $0x7] sm:$0x1]
      %v5169 = vld [vmem:[%s2 + $0x8] sm:$0x1]
      %v5170 = vld [vmem:[%s2 + $0x9] sm:$0x1]
      %v5171 = vld [vmem:[%s2 + $0xa] sm:$0x1]
      %v5172 = vld [vmem:[%s2 + $0xb] sm:$0x1]
      %v5173 = vld [vmem:[%s2 + $0xc] sm:$0x1]
      %v5174 = vld [vmem:[%s2 + $0xd] sm:$0x1]
      %v5175 = vld [vmem:[%s2 + $0xe] sm:$0x1]
      %v5176 = vld [vmem:[%s2 + $0xf] sm:$0x1]
      %v5177 = vld [vmem:[%s3] sm:$0x1]
      %v5178 = vld [vmem:[%s3 + $0x1] sm:$0x1]
      %v5179 = vld [vmem:[%s3 + $0x2] sm:$0x1]
      %v5180 = vld [vmem:[%s3 + $0x3] sm:$0x1]
      %v5181 = vld [vmem:[%s3 + $0x4] sm:$0x1]
      %v5182 = vld [vmem:[%s3 + $0x5] sm:$0x1]
      %v5183 = vld [vmem:[%s3 + $0x6] sm:$0x1]
      %v5184 = vld [vmem:[%s3 + $0x7] sm:$0x1]
      %v5185 = vld [vmem:[%s3 + $0x8] sm:$0x1]
      %v5186 = vld [vmem:[%s3 + $0x9] sm:$0x1]
      %v5187 = vld [vmem:[%s3 + $0xa] sm:$0x1]
      %v5188 = vld [vmem:[%s3 + $0xb] sm:$0x1]
      %v5189 = vld [vmem:[%s3 + $0xc] sm:$0x1]
      %v5190 = vld [vmem:[%s3 + $0xd] sm:$0x1]
      %v5191 = vld [vmem:[%s3 + $0xe] sm:$0x1]
      %v5192 = vld [vmem:[%s3 + $0xf] sm:$0x1]
      %v5193 = vld [vmem:[%s0] sm:$0x1]
      %v5195 = vpack.i.b16 %v5193, %v5193
      %v5197 = vlaneseq
      %v5198 = vshrl.u32 %v5197, 7
      %v5199 = vsub.s32 0, %v5198
      %v5200 = vrot.slane %v5195, %v5199
      %v5203 = vunpack.c.l.s4 1966171168
      %v5204 = vunpack.c.0.s8 %v5203
      %v5205 = vlaneseq
      %v5206 = vshrl.u32 %v5205, 7
      %v5207 = vsub.s32 %v5204, %v5206
      %v5208 = vrot.slane %v5200, %v5207
      %v5209 = vcombine.high %v5208, %v5208
      %v5211 = vunpack.c.l.s4 1966171168
      %v5212 = vunpack.c.0.s8 %v5211
      %v5213 = vlaneseq
      %v5214 = vshrl.u32 %v5213, 7
      %v5215 = vsub.s32 %v5212, %v5214
      %v5216 = vrot.slane %v5208, %v5215
      %v5218 = vunpack.c.l.s4 1966171168
      %v5219 = vunpack.c.0.s8 %v5218
      %v5220 = vlaneseq
      %v5221 = vshrl.u32 %v5220, 7
      %v5222 = vsub.s32 %v5219, %v5221
      %v5223 = vrot.slane %v5209, %v5222
      %v5225 = vshll.u32 %v5216, 16
      %v5228 = vshll.u32 %v5223, 16
      %v5234 = vmul.bf16 %v5157, %v5225
      %v5235 = vmul.bf16 %v5158, %v5216
      %v5236 = vmul.bf16 %v5159, %v5228
      %v5237 = vmul.bf16 %v5160, %v5223
      %v5243 = vunpack.c.l.s4 1966171168
      %v5244 = vunpack.c.0.s8 %v5243
      %v5245 = vlaneseq
      %v5246 = vshrl.u32 %v5245, 7
      %v5247 = vsub.s32 %v5244, %v5246
      %v5248 = vrot.slane %v5234, %v5247
      %v5250 = vunpack.c.l.s4 1966171168
      %v5251 = vunpack.c.0.s8 %v5250
      %v5252 = vlaneseq
      %v5253 = vshrl.u32 %v5252, 7
      %v5254 = vsub.s32 %v5251, %v5253
      %v5255 = vrot.slane %v5248, %v5254
      %v5257 = vunpack.c.l.s4 1966171168
      %v5258 = vunpack.c.0.s8 %v5257
      %v5259 = vlaneseq
      %v5260 = vshrl.u32 %v5259, 7
      %v5261 = vsub.s32 %v5258, %v5260
      %v5262 = vrot.slane %v5235, %v5261
      %v5264 = vunpack.c.l.s4 1966171168
      %v5265 = vunpack.c.0.s8 %v5264
      %v5266 = vlaneseq
      %v5267 = vshrl.u32 %v5266, 7
      %v5268 = vsub.s32 %v5265, %v5267
      %v5269 = vrot.slane %v5262, %v5268
      %v5271 = vunpack.c.l.s4 1966171168
      %v5272 = vunpack.c.0.s8 %v5271
      %v5273 = vlaneseq
      %v5274 = vshrl.u32 %v5273, 7
      %v5275 = vsub.s32 %v5272, %v5274
      %v5276 = vrot.slane %v5236, %v5275
      %v5278 = vunpack.c.l.s4 1966171168
      %v5279 = vunpack.c.0.s8 %v5278
      %v5280 = vlaneseq
      %v5281 = vshrl.u32 %v5280, 7
      %v5282 = vsub.s32 %v5279, %v5281
      %v5283 = vrot.slane %v5276, %v5282
      %v5285 = vunpack.c.l.s4 1966171168
      %v5286 = vunpack.c.0.s8 %v5285
      %v5287 = vlaneseq
      %v5288 = vshrl.u32 %v5287, 7
      %v5289 = vsub.s32 %v5286, %v5288
      %v5290 = vrot.slane %v5237, %v5289
      %v5292 = vunpack.c.l.s4 1966171168
      %v5293 = vunpack.c.0.s8 %v5292
      %v5294 = vlaneseq
      %v5295 = vshrl.u32 %v5294, 7
      %v5296 = vsub.s32 %v5293, %v5295
      %v5297 = vrot.slane %v5290, %v5296
      %v5298 = vunpack.c.l.b16 %v5255
      %v5299 = vunpack.c.l.b16 %v5269
      %v5300 = vunpack.c.l.b16 %v5283
      %v5301 = vunpack.c.l.b16 %v5297
      %v5302 = vrot.slane %v5298, 1
      %v5303 = vsel %vm343, %v5299, %v5302
      %v5304 = vrot.slane %v5300, 7
      %v5305 = vsel %vm346, %v5304, %v5303
      %v5306 = vrot.slane %v5301, 6
      %v5307 = vsel %vm349, %v5306, %v5305
      %v5308 = vpack.c.b16 %v5307, %v5307
      %v5327 = vunpack.c.l.s4 1966171168
      %v5328 = vunpack.c.0.s8 %v5327
      %v5329 = vlaneseq
      %v5330 = vshrl.u32 %v5329, 7
      %v5331 = vsub.s32 %v5328, %v5330
      %v5332 = vrot.slane %v5161, %v5331
      %v5334 = vunpack.c.l.s4 1966171168
      %v5335 = vunpack.c.0.s8 %v5334
      %v5336 = vlaneseq
      %v5337 = vshrl.u32 %v5336, 7
      %v5338 = vsub.s32 %v5335, %v5337
      %v5339 = vrot.slane %v5332, %v5338
      %v5341 = vunpack.c.l.s4 1966171168
      %v5342 = vunpack.c.0.s8 %v5341
      %v5343 = vlaneseq
      %v5344 = vshrl.u32 %v5343, 7
      %v5345 = vsub.s32 %v5342, %v5344
      %v5346 = vrot.slane %v5162, %v5345
      %v5348 = vunpack.c.l.s4 1966171168
      %v5349 = vunpack.c.0.s8 %v5348
      %v5350 = vlaneseq
      %v5351 = vshrl.u32 %v5350, 7
      %v5352 = vsub.s32 %v5349, %v5351
      %v5353 = vrot.slane %v5346, %v5352
      %v5355 = vunpack.c.l.s4 1966171168
      %v5356 = vunpack.c.0.s8 %v5355
      %v5357 = vlaneseq
      %v5358 = vshrl.u32 %v5357, 7
      %v5359 = vsub.s32 %v5356, %v5358
      %v5360 = vrot.slane %v5163, %v5359
      %v5362 = vunpack.c.l.s4 1966171168
      %v5363 = vunpack.c.0.s8 %v5362
      %v5364 = vlaneseq
      %v5365 = vshrl.u32 %v5364, 7
      %v5366 = vsub.s32 %v5363, %v5365
      %v5367 = vrot.slane %v5360, %v5366
      %v5369 = vunpack.c.l.s4 1966171168
      %v5370 = vunpack.c.0.s8 %v5369
      %v5371 = vlaneseq
      %v5372 = vshrl.u32 %v5371, 7
      %v5373 = vsub.s32 %v5370, %v5372
      %v5374 = vrot.slane %v5164, %v5373
      %v5376 = vunpack.c.l.s4 1966171168
      %v5377 = vunpack.c.0.s8 %v5376
      %v5378 = vlaneseq
      %v5379 = vshrl.u32 %v5378, 7
      %v5380 = vsub.s32 %v5377, %v5379
      %v5381 = vrot.slane %v5374, %v5380
      %v5383 = vunpack.c.l.s4 1966171168
      %v5384 = vunpack.c.0.s8 %v5383
      %v5385 = vlaneseq
      %v5386 = vshrl.u32 %v5385, 7
      %v5387 = vsub.s32 %v5384, %v5386
      %v5388 = vrot.slane %v5165, %v5387
      %v5390 = vunpack.c.l.s4 1966171168
      %v5391 = vunpack.c.0.s8 %v5390
      %v5392 = vlaneseq
      %v5393 = vshrl.u32 %v5392, 7
      %v5394 = vsub.s32 %v5391, %v5393
      %v5395 = vrot.slane %v5388, %v5394
      %v5397 = vunpack.c.l.s4 1966171168
      %v5398 = vunpack.c.0.s8 %v5397
      %v5399 = vlaneseq
      %v5400 = vshrl.u32 %v5399, 7
      %v5401 = vsub.s32 %v5398, %v5400
      %v5402 = vrot.slane %v5166, %v5401
      %v5404 = vunpack.c.l.s4 1966171168
      %v5405 = vunpack.c.0.s8 %v5404
      %v5406 = vlaneseq
      %v5407 = vshrl.u32 %v5406, 7
      %v5408 = vsub.s32 %v5405, %v5407
      %v5409 = vrot.slane %v5402, %v5408
      %v5411 = vunpack.c.l.s4 1966171168
      %v5412 = vunpack.c.0.s8 %v5411
      %v5413 = vlaneseq
      %v5414 = vshrl.u32 %v5413, 7
      %v5415 = vsub.s32 %v5412, %v5414
      %v5416 = vrot.slane %v5167, %v5415
      %v5418 = vunpack.c.l.s4 1966171168
      %v5419 = vunpack.c.0.s8 %v5418
      %v5420 = vlaneseq
      %v5421 = vshrl.u32 %v5420, 7
      %v5422 = vsub.s32 %v5419, %v5421
      %v5423 = vrot.slane %v5416, %v5422
      %v5425 = vunpack.c.l.s4 1966171168
      %v5426 = vunpack.c.0.s8 %v5425
      %v5427 = vlaneseq
      %v5428 = vshrl.u32 %v5427, 7
      %v5429 = vsub.s32 %v5426, %v5428
      %v5430 = vrot.slane %v5168, %v5429
      %v5432 = vunpack.c.l.s4 1966171168
      %v5433 = vunpack.c.0.s8 %v5432
      %v5434 = vlaneseq
      %v5435 = vshrl.u32 %v5434, 7
      %v5436 = vsub.s32 %v5433, %v5435
      %v5437 = vrot.slane %v5430, %v5436
      %v5439 = vunpack.c.l.s4 1966171168
      %v5440 = vunpack.c.0.s8 %v5439
      %v5441 = vlaneseq
      %v5442 = vshrl.u32 %v5441, 7
      %v5443 = vsub.s32 %v5440, %v5442
      %v5444 = vrot.slane %v5169, %v5443
      %v5446 = vunpack.c.l.s4 1966171168
      %v5447 = vunpack.c.0.s8 %v5446
      %v5448 = vlaneseq
      %v5449 = vshrl.u32 %v5448, 7
      %v5450 = vsub.s32 %v5447, %v5449
      %v5451 = vrot.slane %v5444, %v5450
      %v5453 = vunpack.c.l.s4 1966171168
      %v5454 = vunpack.c.0.s8 %v5453
      %v5455 = vlaneseq
      %v5456 = vshrl.u32 %v5455, 7
      %v5457 = vsub.s32 %v5454, %v5456
      %v5458 = vrot.slane %v5170, %v5457
      %v5460 = vunpack.c.l.s4 1966171168
      %v5461 = vunpack.c.0.s8 %v5460
      %v5462 = vlaneseq
      %v5463 = vshrl.u32 %v5462, 7
      %v5464 = vsub.s32 %v5461, %v5463
      %v5465 = vrot.slane %v5458, %v5464
      %v5467 = vunpack.c.l.s4 1966171168
      %v5468 = vunpack.c.0.s8 %v5467
      %v5469 = vlaneseq
      %v5470 = vshrl.u32 %v5469, 7
      %v5471 = vsub.s32 %v5468, %v5470
      %v5472 = vrot.slane %v5171, %v5471
      %v5474 = vunpack.c.l.s4 1966171168
      %v5475 = vunpack.c.0.s8 %v5474
      %v5476 = vlaneseq
      %v5477 = vshrl.u32 %v5476, 7
      %v5478 = vsub.s32 %v5475, %v5477
      %v5479 = vrot.slane %v5472, %v5478
      %v5481 = vunpack.c.l.s4 1966171168
      %v5482 = vunpack.c.0.s8 %v5481
      %v5483 = vlaneseq
      %v5484 = vshrl.u32 %v5483, 7
      %v5485 = vsub.s32 %v5482, %v5484
      %v5486 = vrot.slane %v5172, %v5485
      %v5488 = vunpack.c.l.s4 1966171168
      %v5489 = vunpack.c.0.s8 %v5488
      %v5490 = vlaneseq
      %v5491 = vshrl.u32 %v5490, 7
      %v5492 = vsub.s32 %v5489, %v5491
      %v5493 = vrot.slane %v5486, %v5492
      %v5495 = vunpack.c.l.s4 1966171168
      %v5496 = vunpack.c.0.s8 %v5495
      %v5497 = vlaneseq
      %v5498 = vshrl.u32 %v5497, 7
      %v5499 = vsub.s32 %v5496, %v5498
      %v5500 = vrot.slane %v5173, %v5499
      %v5502 = vunpack.c.l.s4 1966171168
      %v5503 = vunpack.c.0.s8 %v5502
      %v5504 = vlaneseq
      %v5505 = vshrl.u32 %v5504, 7
      %v5506 = vsub.s32 %v5503, %v5505
      %v5507 = vrot.slane %v5500, %v5506
      %v5509 = vunpack.c.l.s4 1966171168
      %v5510 = vunpack.c.0.s8 %v5509
      %v5511 = vlaneseq
      %v5512 = vshrl.u32 %v5511, 7
      %v5513 = vsub.s32 %v5510, %v5512
      %v5514 = vrot.slane %v5174, %v5513
      %v5516 = vunpack.c.l.s4 1966171168
      %v5517 = vunpack.c.0.s8 %v5516
      %v5518 = vlaneseq
      %v5519 = vshrl.u32 %v5518, 7
      %v5520 = vsub.s32 %v5517, %v5519
      %v5521 = vrot.slane %v5514, %v5520
      %v5523 = vunpack.c.l.s4 1966171168
      %v5524 = vunpack.c.0.s8 %v5523
      %v5525 = vlaneseq
      %v5526 = vshrl.u32 %v5525, 7
      %v5527 = vsub.s32 %v5524, %v5526
      %v5528 = vrot.slane %v5175, %v5527
      %v5530 = vunpack.c.l.s4 1966171168
      %v5531 = vunpack.c.0.s8 %v5530
      %v5532 = vlaneseq
      %v5533 = vshrl.u32 %v5532, 7
      %v5534 = vsub.s32 %v5531, %v5533
      %v5535 = vrot.slane %v5528, %v5534
      %v5537 = vunpack.c.l.s4 1966171168
      %v5538 = vunpack.c.0.s8 %v5537
      %v5539 = vlaneseq
      %v5540 = vshrl.u32 %v5539, 7
      %v5541 = vsub.s32 %v5538, %v5540
      %v5542 = vrot.slane %v5176, %v5541
      %v5544 = vunpack.c.l.s4 1966171168
      %v5545 = vunpack.c.0.s8 %v5544
      %v5546 = vlaneseq
      %v5547 = vshrl.u32 %v5546, 7
      %v5548 = vsub.s32 %v5545, %v5547
      %v5549 = vrot.slane %v5542, %v5548
      %v5550 = vunpack.c.l.b16 %v5339
      %v5551 = vunpack.c.l.b16 %v5353
      %v5552 = vunpack.c.l.b16 %v5367
      %v5553 = vunpack.c.l.b16 %v5381
      %v5554 = vunpack.c.l.b16 %v5395
      %v5555 = vunpack.c.l.b16 %v5409
      %v5556 = vunpack.c.l.b16 %v5423
      %v5557 = vunpack.c.l.b16 %v5437
      %v5558 = vunpack.c.l.b16 %v5451
      %v5559 = vunpack.c.l.b16 %v5465
      %v5560 = vunpack.c.l.b16 %v5479
      %v5561 = vunpack.c.l.b16 %v5493
      %v5562 = vunpack.c.l.b16 %v5507
      %v5563 = vunpack.c.l.b16 %v5521
      %v5564 = vunpack.c.l.b16 %v5535
      %v5565 = vunpack.c.l.b16 %v5549
      %v5566 = vrot.slane %v5550, 1
      %v5567 = vsel %vm343, %v5551, %v5566
      %v5568 = vrot.slane %v5552, 7
      %v5569 = vsel %vm346, %v5568, %v5567
      %v5570 = vrot.slane %v5553, 6
      %v5571 = vsel %vm349, %v5570, %v5569
      %v5572 = vrot.slane %v5554, 5
      %v5573 = vsel %vm616, %v5572, %v5571
      %v5574 = vrot.slane %v5555, 4
      %v5575 = vsel %vm619, %v5574, %v5573
      %v5576 = vrot.slane %v5556, 3
      %v5577 = vsel %vm622, %v5576, %v5575
      %v5578 = vrot.slane %v5557, 2
      %v5579 = vsel %vm625, %v5578, %v5577
      %v5580 = vrot.slane %v5558, 1
      %v5581 = vsel %vm343, %v5559, %v5580
      %v5582 = vrot.slane %v5560, 7
      %v5583 = vsel %vm346, %v5582, %v5581
      %v5584 = vrot.slane %v5561, 6
      %v5585 = vsel %vm349, %v5584, %v5583
      %v5586 = vrot.slane %v5562, 5
      %v5587 = vsel %vm616, %v5586, %v5585
      %v5588 = vrot.slane %v5563, 4
      %v5589 = vsel %vm619, %v5588, %v5587
      %v5590 = vrot.slane %v5564, 3
      %v5591 = vsel %vm622, %v5590, %v5589
      %v5592 = vrot.slane %v5565, 2
      %v5593 = vsel %vm625, %v5592, %v5591
      %v5594 = vpack.c.b16 %v5593, %v5579
      %5596 = vmatprep.subr.bf16.mxu0 0
      %5597 = vmatpush1.bf16.xpose.msra.mxu0 0
      %5598 = vmatprep.subr.bf16.mxu0 0
      %5599 = vmatpush1.bf16.xpose.msra.mxu0 0
      %5600 = vmatprep.subr.bf16.mxu0 0
      %5601 = vmatpush1.bf16.xpose.msra.mxu0 0
      %5602 = vmatprep.subr.bf16.mxu0 0
      %5603 = vmatpush1.bf16.xpose.msra.mxu0 0
      %5604 = vmatprep.subr.bf16.mxu0 0
      %5605 = vmatpush1.bf16.xpose.msra.mxu0 0
      %5606 = vmatprep.subr.bf16.mxu0 0
      %5607 = vmatpush1.bf16.xpose.msra.mxu0 0
      %5608 = vmatprep.subr.bf16.mxu0 0
      %5609 = vmatpush1.bf16.xpose.msra.mxu0 0
      %5610 = vmatprep.subr.bf16.mxu0 0
      %5611 = vmatpush1.bf16.xpose.msra.mxu0 %v5594
      %5612 = vmatprep.subr.bf16.mxu0 0
      %5613 = vmatpush2.bf16.xpose.msra.mxu0 0
      %5614 = vmatprep.subr.bf16.mxu0 0
      %5615 = vmatpush2.bf16.xpose.msra.mxu0 0
      %5616 = vmatprep.subr.bf16.mxu0 0
      %5617 = vmatpush2.bf16.xpose.msra.mxu0 0
      %5618 = vmatprep.subr.bf16.mxu0 0
      %5619 = vmatpush2.bf16.xpose.msra.mxu0 0
      %5620 = vmatprep.subr.bf16.mxu0 0
      %5621 = vmatpush2.bf16.xpose.msra.mxu0 0
      %5622 = vmatprep.subr.bf16.mxu0 0
      %5623 = vmatpush2.bf16.xpose.msra.mxu0 0
      %5624 = vmatprep.subr.bf16.mxu0 0
      %5625 = vmatpush2.bf16.xpose.msra.mxu0 0
      %5626 = vmatprep.subr.bf16.mxu0 0
      %5627 = vmatpush2.bf16.xpose.msra.mxu0 0
      %5628 = vmatprep.mubr.bf16.mxu0 0
      %5629 = vmatmul.mubr.bf16.gmra.mxu0 %v5308
      %v5630 = vpop.f32.mrf.mxu0
      %v5631 = vadd.f32 0.0, %v5630
      %v5632 = vpop.f32.mrf.mxu0
      %v5633 = vpop.f32.mrf.mxu0
      %v5634 = vpop.f32.mrf.mxu0
      %5635 = vdwg.mxu0
      %v5636 = vsel %vm683, %v5631, -inf
      %5637 = vmax.xlane.f32.xlu0 %v5636
      %v5638 = vpop.xlane.xlu0 %5637
      %v5639 = vsub.f32 %v5631, %v5638
      %v5640 = vmul.f32 %v5639, 1.442695
      %v5641 = vpow.pop %v5640
      %v5642 = vsel %vm683, %v5641, 0.0
      %5643 = vadd.xlane.f32.xlu0 %v5642
      %v5644 = vpop.xlane.xlu0 %5643
      %v5645 = vrcp.pop %v5644
      %v5646 = vmul.f32 %v5641, %v5645
      %v5647 = vpack.c.bf16 %v5646, %v5646
      %v5648 = vcombine.high %v5200, %v5200
      %v5650 = vunpack.c.l.s4 1966171168
      %v5651 = vunpack.c.0.s8 %v5650
      %v5652 = vlaneseq
      %v5653 = vshrl.u32 %v5652, 7
      %v5654 = vsub.s32 %v5651, %v5653
      %v5655 = vrot.slane %v5648, %v5654
      %v5656 = vcombine.high %v5655, %v5655
      %v5658 = vunpack.c.l.s4 1966171168
      %v5659 = vunpack.c.0.s8 %v5658
      %v5660 = vlaneseq
      %v5661 = vshrl.u32 %v5660, 7
      %v5662 = vsub.s32 %v5659, %v5661
      %v5663 = vrot.slane %v5655, %v5662
      %v5665 = vunpack.c.l.s4 1966171168
      %v5666 = vunpack.c.0.s8 %v5665
      %v5667 = vlaneseq
      %v5668 = vshrl.u32 %v5667, 7
      %v5669 = vsub.s32 %v5666, %v5668
      %v5670 = vrot.slane %v5656, %v5669
      %v5671 = vcombine.high %v5216, %v5216
      %v5672 = vcombine.high %v5663, %v5663
      %v5673 = vcombine.high %v5223, %v5223
      %v5674 = vcombine.high %v5670, %v5670
      %v5676 = vshll.u32 %v5671, 16
      %v5679 = vshll.u32 %v5673, 16
      %v5682 = vshll.u32 %v5663, 16
      %v5685 = vshll.u32 %v5670, 16
      %v5688 = vshll.u32 %v5672, 16
      %v5691 = vshll.u32 %v5674, 16
      %v5705 = vmul.bf16 %v5177, %v5225
      %v5706 = vmul.bf16 %v5178, %v5216
      %v5707 = vmul.bf16 %v5179, %v5228
      %v5708 = vmul.bf16 %v5180, %v5223
      %v5709 = vmul.bf16 %v5181, %v5676
      %v5710 = vmul.bf16 %v5182, %v5671
      %v5711 = vmul.bf16 %v5183, %v5679
      %v5712 = vmul.bf16 %v5184, %v5673
      %v5713 = vmul.bf16 %v5185, %v5682
      %v5714 = vmul.bf16 %v5186, %v5663
      %v5715 = vmul.bf16 %v5187, %v5685
      %v5716 = vmul.bf16 %v5188, %v5670
      %v5717 = vmul.bf16 %v5189, %v5688
      %v5718 = vmul.bf16 %v5190, %v5672
      %v5719 = vmul.bf16 %v5191, %v5691
      %v5720 = vmul.bf16 %v5192, %v5674
      %v5721 = vld [vmem:[%s0] sm:$0x1]
      %v5723 = vshrl.u32 %v5721, 16
      %v5724 = vpack.i.b16 %v5723, %v5723
      %v5726 = vlaneseq
      %v5727 = vshrl.u32 %v5726, 7
      %v5728 = vsub.s32 0, %v5727
      %v5729 = vrot.slane %v5724, %v5728
      %v5732 = vunpack.c.l.s4 1966171168
      %v5733 = vunpack.c.0.s8 %v5732
      %v5734 = vlaneseq
      %v5735 = vshrl.u32 %v5734, 7
      %v5736 = vsub.s32 %v5733, %v5735
      %v5737 = vrot.slane %v5729, %v5736
      %v5738 = vcombine.high %v5737, %v5737
      %v5740 = vunpack.c.l.s4 1966171168
      %v5741 = vunpack.c.0.s8 %v5740
      %v5742 = vlaneseq
      %v5743 = vshrl.u32 %v5742, 7
      %v5744 = vsub.s32 %v5741, %v5743
      %v5745 = vrot.slane %v5737, %v5744
      %v5747 = vunpack.c.l.s4 1966171168
      %v5748 = vunpack.c.0.s8 %v5747
      %v5749 = vlaneseq
      %v5750 = vshrl.u32 %v5749, 7
      %v5751 = vsub.s32 %v5748, %v5750
      %v5752 = vrot.slane %v5738, %v5751
      %v5754 = vshll.u32 %v5745, 16
      %v5757 = vshll.u32 %v5752, 16
      %v5763 = vmul.bf16 %v5157, %v5754
      %v5764 = vmul.bf16 %v5158, %v5745
      %v5765 = vmul.bf16 %v5159, %v5757
      %v5766 = vmul.bf16 %v5160, %v5752
      %v5772 = vunpack.c.l.s4 1966171168
      %v5773 = vunpack.c.0.s8 %v5772
      %v5774 = vlaneseq
      %v5775 = vshrl.u32 %v5774, 7
      %v5776 = vsub.s32 %v5773, %v5775
      %v5777 = vrot.slane %v5763, %v5776
      %v5779 = vunpack.c.l.s4 1966171168
      %v5780 = vunpack.c.0.s8 %v5779
      %v5781 = vlaneseq
      %v5782 = vshrl.u32 %v5781, 7
      %v5783 = vsub.s32 %v5780, %v5782
      %v5784 = vrot.slane %v5777, %v5783
      %v5786 = vunpack.c.l.s4 1966171168
      %v5787 = vunpack.c.0.s8 %v5786
      %v5788 = vlaneseq
      %v5789 = vshrl.u32 %v5788, 7
      %v5790 = vsub.s32 %v5787, %v5789
      %v5791 = vrot.slane %v5764, %v5790
      %v5793 = vunpack.c.l.s4 1966171168
      %v5794 = vunpack.c.0.s8 %v5793
      %v5795 = vlaneseq
      %v5796 = vshrl.u32 %v5795, 7
      %v5797 = vsub.s32 %v5794, %v5796
      %v5798 = vrot.slane %v5791, %v5797
      %v5800 = vunpack.c.l.s4 1966171168
      %v5801 = vunpack.c.0.s8 %v5800
      %v5802 = vlaneseq
      %v5803 = vshrl.u32 %v5802, 7
      %v5804 = vsub.s32 %v5801, %v5803
      %v5805 = vrot.slane %v5765, %v5804
      %v5807 = vunpack.c.l.s4 1966171168
      %v5808 = vunpack.c.0.s8 %v5807
      %v5809 = vlaneseq
      %v5810 = vshrl.u32 %v5809, 7
      %v5811 = vsub.s32 %v5808, %v5810
      %v5812 = vrot.slane %v5805, %v5811
      %v5814 = vunpack.c.l.s4 1966171168
      %v5815 = vunpack.c.0.s8 %v5814
      %v5816 = vlaneseq
      %v5817 = vshrl.u32 %v5816, 7
      %v5818 = vsub.s32 %v5815, %v5817
      %v5819 = vrot.slane %v5766, %v5818
      %v5821 = vunpack.c.l.s4 1966171168
      %v5822 = vunpack.c.0.s8 %v5821
      %v5823 = vlaneseq
      %v5824 = vshrl.u32 %v5823, 7
      %v5825 = vsub.s32 %v5822, %v5824
      %v5826 = vrot.slane %v5819, %v5825
      %v5827 = vunpack.c.l.b16 %v5784
      %v5828 = vunpack.c.l.b16 %v5798
      %v5829 = vunpack.c.l.b16 %v5812
      %v5830 = vunpack.c.l.b16 %v5826
      %v5831 = vrot.slane %v5827, 1
      %v5832 = vsel %vm343, %v5828, %v5831
      %v5833 = vrot.slane %v5829, 7
      %v5834 = vsel %vm346, %v5833, %v5832
      %v5835 = vrot.slane %v5830, 6
      %v5836 = vsel %vm349, %v5835, %v5834
      %v5837 = vpack.c.b16 %v5836, %v5836
      %5839 = vmatprep.subr.bf16.mxu0 0
      %5840 = vmatpush1.bf16.xpose.msra.mxu0 0
      %5841 = vmatprep.subr.bf16.mxu0 0
      %5842 = vmatpush1.bf16.xpose.msra.mxu0 0
      %5843 = vmatprep.subr.bf16.mxu0 0
      %5844 = vmatpush1.bf16.xpose.msra.mxu0 0
      %5845 = vmatprep.subr.bf16.mxu0 0
      %5846 = vmatpush1.bf16.xpose.msra.mxu0 0
      %5847 = vmatprep.subr.bf16.mxu0 0
      %5848 = vmatpush1.bf16.xpose.msra.mxu0 0
      %5849 = vmatprep.subr.bf16.mxu0 0
      %5850 = vmatpush1.bf16.xpose.msra.mxu0 0
      %5851 = vmatprep.subr.bf16.mxu0 0
      %5852 = vmatpush1.bf16.xpose.msra.mxu0 0
      %5853 = vmatprep.subr.bf16.mxu0 0
      %5854 = vmatpush1.bf16.xpose.msra.mxu0 %v5594
      %5855 = vmatprep.subr.bf16.mxu0 0
      %5856 = vmatpush2.bf16.xpose.msra.mxu0 0
      %5857 = vmatprep.subr.bf16.mxu0 0
      %5858 = vmatpush2.bf16.xpose.msra.mxu0 0
      %5859 = vmatprep.subr.bf16.mxu0 0
      %5860 = vmatpush2.bf16.xpose.msra.mxu0 0
      %5861 = vmatprep.subr.bf16.mxu0 0
      %5862 = vmatpush2.bf16.xpose.msra.mxu0 0
      %5863 = vmatprep.subr.bf16.mxu0 0
      %5864 = vmatpush2.bf16.xpose.msra.mxu0 0
      %5865 = vmatprep.subr.bf16.mxu0 0
      %5866 = vmatpush2.bf16.xpose.msra.mxu0 0
      %5867 = vmatprep.subr.bf16.mxu0 0
      %5868 = vmatpush2.bf16.xpose.msra.mxu0 0
      %5869 = vmatprep.subr.bf16.mxu0 0
      %5870 = vmatpush2.bf16.xpose.msra.mxu0 0
      %5871 = vmatprep.mubr.bf16.mxu0 0
      %5872 = vmatmul.mubr.bf16.gmra.mxu0 %v5837
      %v5873 = vpop.f32.mrf.mxu0
      %v5874 = vadd.f32 0.0, %v5873
      %v5875 = vpop.f32.mrf.mxu0
      %v5876 = vpop.f32.mrf.mxu0
      %v5877 = vpop.f32.mrf.mxu0
      %5878 = vdwg.mxu0
      %v5879 = vsel %vm683, %v5874, -inf
      %5880 = vmax.xlane.f32.xlu0 %v5879
      %v5881 = vpop.xlane.xlu0 %5880
      %v5882 = vsub.f32 %v5874, %v5881
      %v5883 = vmul.f32 %v5882, 1.442695
      %v5884 = vpow.pop %v5883
      %v5885 = vsel %vm683, %v5884, 0.0
      %5886 = vadd.xlane.f32.xlu0 %v5885
      %v5887 = vpop.xlane.xlu0 %5886
      %v5888 = vrcp.pop %v5887
      %v5889 = vmul.f32 %v5884, %v5888
      %v5890 = vpack.c.bf16 %v5889, %v5889
      %v5891 = vcombine.high %v5729, %v5729
      %v5893 = vunpack.c.l.s4 1966171168
      %v5894 = vunpack.c.0.s8 %v5893
      %v5895 = vlaneseq
      %v5896 = vshrl.u32 %v5895, 7
      %v5897 = vsub.s32 %v5894, %v5896
      %v5898 = vrot.slane %v5891, %v5897
      %v5899 = vcombine.high %v5898, %v5898
      %v5901 = vunpack.c.l.s4 1966171168
      %v5902 = vunpack.c.0.s8 %v5901
      %v5903 = vlaneseq
      %v5904 = vshrl.u32 %v5903, 7
      %v5905 = vsub.s32 %v5902, %v5904
      %v5906 = vrot.slane %v5898, %v5905
      %v5908 = vunpack.c.l.s4 1966171168
      %v5909 = vunpack.c.0.s8 %v5908
      %v5910 = vlaneseq
      %v5911 = vshrl.u32 %v5910, 7
      %v5912 = vsub.s32 %v5909, %v5911
      %v5913 = vrot.slane %v5899, %v5912
      %v5914 = vcombine.high %v5745, %v5745
      %v5915 = vcombine.high %v5906, %v5906
      %v5916 = vcombine.high %v5752, %v5752
      %v5917 = vcombine.high %v5913, %v5913
      %v5919 = vshll.u32 %v5914, 16
      %v5922 = vshll.u32 %v5916, 16
      %v5925 = vshll.u32 %v5906, 16
      %v5928 = vshll.u32 %v5913, 16
      %v5931 = vshll.u32 %v5915, 16
      %v5934 = vshll.u32 %v5917, 16
      %v5948 = vmul.bf16 %v5177, %v5754
      %v5949 = vmul.bf16 %v5178, %v5745
      %v5950 = vmul.bf16 %v5179, %v5757
      %v5951 = vmul.bf16 %v5180, %v5752
      %v5952 = vmul.bf16 %v5181, %v5919
      %v5953 = vmul.bf16 %v5182, %v5914
      %v5954 = vmul.bf16 %v5183, %v5922
      %v5955 = vmul.bf16 %v5184, %v5916
      %v5956 = vmul.bf16 %v5185, %v5925
      %v5957 = vmul.bf16 %v5186, %v5906
      %v5958 = vmul.bf16 %v5187, %v5928
      %v5959 = vmul.bf16 %v5188, %v5913
      %v5960 = vmul.bf16 %v5189, %v5931
      %v5961 = vmul.bf16 %v5190, %v5915
      %v5962 = vmul.bf16 %v5191, %v5934
      %v5963 = vmul.bf16 %v5192, %v5917
      %v5981 = vunpack.c.l.s4 1966171168
      %v5982 = vunpack.c.0.s8 %v5981
      %v5983 = vlaneseq
      %v5984 = vshrl.u32 %v5983, 7
      %v5985 = vsub.s32 %v5982, %v5984
      %v5986 = vrot.slane %v5948, %v5985
      %v5988 = vunpack.c.l.s4 1966171168
      %v5989 = vunpack.c.0.s8 %v5988
      %v5990 = vlaneseq
      %v5991 = vshrl.u32 %v5990, 7
      %v5992 = vsub.s32 %v5989, %v5991
      %v5993 = vrot.slane %v5986, %v5992
      %v5995 = vunpack.c.l.s4 1966171168
      %v5996 = vunpack.c.0.s8 %v5995
      %v5997 = vlaneseq
      %v5998 = vshrl.u32 %v5997, 7
      %v5999 = vsub.s32 %v5996, %v5998
      %v6000 = vrot.slane %v5949, %v5999
      %v6002 = vunpack.c.l.s4 1966171168
      %v6003 = vunpack.c.0.s8 %v6002
      %v6004 = vlaneseq
      %v6005 = vshrl.u32 %v6004, 7
      %v6006 = vsub.s32 %v6003, %v6005
      %v6007 = vrot.slane %v6000, %v6006
      %v6009 = vunpack.c.l.s4 1966171168
      %v6010 = vunpack.c.0.s8 %v6009
      %v6011 = vlaneseq
      %v6012 = vshrl.u32 %v6011, 7
      %v6013 = vsub.s32 %v6010, %v6012
      %v6014 = vrot.slane %v5950, %v6013
      %v6016 = vunpack.c.l.s4 1966171168
      %v6017 = vunpack.c.0.s8 %v6016
      %v6018 = vlaneseq
      %v6019 = vshrl.u32 %v6018, 7
      %v6020 = vsub.s32 %v6017, %v6019
      %v6021 = vrot.slane %v6014, %v6020
      %v6023 = vunpack.c.l.s4 1966171168
      %v6024 = vunpack.c.0.s8 %v6023
      %v6025 = vlaneseq
      %v6026 = vshrl.u32 %v6025, 7
      %v6027 = vsub.s32 %v6024, %v6026
      %v6028 = vrot.slane %v5951, %v6027
      %v6030 = vunpack.c.l.s4 1966171168
      %v6031 = vunpack.c.0.s8 %v6030
      %v6032 = vlaneseq
      %v6033 = vshrl.u32 %v6032, 7
      %v6034 = vsub.s32 %v6031, %v6033
      %v6035 = vrot.slane %v6028, %v6034
      %v6037 = vunpack.c.l.s4 1966171168
      %v6038 = vunpack.c.0.s8 %v6037
      %v6039 = vlaneseq
      %v6040 = vshrl.u32 %v6039, 7
      %v6041 = vsub.s32 %v6038, %v6040
      %v6042 = vrot.slane %v5952, %v6041
      %v6044 = vunpack.c.l.s4 1966171168
      %v6045 = vunpack.c.0.s8 %v6044
      %v6046 = vlaneseq
      %v6047 = vshrl.u32 %v6046, 7
      %v6048 = vsub.s32 %v6045, %v6047
      %v6049 = vrot.slane %v6042, %v6048
      %v6051 = vunpack.c.l.s4 1966171168
      %v6052 = vunpack.c.0.s8 %v6051
      %v6053 = vlaneseq
      %v6054 = vshrl.u32 %v6053, 7
      %v6055 = vsub.s32 %v6052, %v6054
      %v6056 = vrot.slane %v5953, %v6055
      %v6058 = vunpack.c.l.s4 1966171168
      %v6059 = vunpack.c.0.s8 %v6058
      %v6060 = vlaneseq
      %v6061 = vshrl.u32 %v6060, 7
      %v6062 = vsub.s32 %v6059, %v6061
      %v6063 = vrot.slane %v6056, %v6062
      %v6065 = vunpack.c.l.s4 1966171168
      %v6066 = vunpack.c.0.s8 %v6065
      %v6067 = vlaneseq
      %v6068 = vshrl.u32 %v6067, 7
      %v6069 = vsub.s32 %v6066, %v6068
      %v6070 = vrot.slane %v5954, %v6069
      %v6072 = vunpack.c.l.s4 1966171168
      %v6073 = vunpack.c.0.s8 %v6072
      %v6074 = vlaneseq
      %v6075 = vshrl.u32 %v6074, 7
      %v6076 = vsub.s32 %v6073, %v6075
      %v6077 = vrot.slane %v6070, %v6076
      %v6079 = vunpack.c.l.s4 1966171168
      %v6080 = vunpack.c.0.s8 %v6079
      %v6081 = vlaneseq
      %v6082 = vshrl.u32 %v6081, 7
      %v6083 = vsub.s32 %v6080, %v6082
      %v6084 = vrot.slane %v5955, %v6083
      %v6086 = vunpack.c.l.s4 1966171168
      %v6087 = vunpack.c.0.s8 %v6086
      %v6088 = vlaneseq
      %v6089 = vshrl.u32 %v6088, 7
      %v6090 = vsub.s32 %v6087, %v6089
      %v6091 = vrot.slane %v6084, %v6090
      %v6093 = vunpack.c.l.s4 1966171168
      %v6094 = vunpack.c.0.s8 %v6093
      %v6095 = vlaneseq
      %v6096 = vshrl.u32 %v6095, 7
      %v6097 = vsub.s32 %v6094, %v6096
      %v6098 = vrot.slane %v5956, %v6097
      %v6100 = vunpack.c.l.s4 1966171168
      %v6101 = vunpack.c.0.s8 %v6100
      %v6102 = vlaneseq
      %v6103 = vshrl.u32 %v6102, 7
      %v6104 = vsub.s32 %v6101, %v6103
      %v6105 = vrot.slane %v6098, %v6104
      %v6107 = vunpack.c.l.s4 1966171168
      %v6108 = vunpack.c.0.s8 %v6107
      %v6109 = vlaneseq
      %v6110 = vshrl.u32 %v6109, 7
      %v6111 = vsub.s32 %v6108, %v6110
      %v6112 = vrot.slane %v5957, %v6111
      %v6114 = vunpack.c.l.s4 1966171168
      %v6115 = vunpack.c.0.s8 %v6114
      %v6116 = vlaneseq
      %v6117 = vshrl.u32 %v6116, 7
      %v6118 = vsub.s32 %v6115, %v6117
      %v6119 = vrot.slane %v6112, %v6118
      %v6121 = vunpack.c.l.s4 1966171168
      %v6122 = vunpack.c.0.s8 %v6121
      %v6123 = vlaneseq
      %v6124 = vshrl.u32 %v6123, 7
      %v6125 = vsub.s32 %v6122, %v6124
      %v6126 = vrot.slane %v5958, %v6125
      %v6128 = vunpack.c.l.s4 1966171168
      %v6129 = vunpack.c.0.s8 %v6128
      %v6130 = vlaneseq
      %v6131 = vshrl.u32 %v6130, 7
      %v6132 = vsub.s32 %v6129, %v6131
      %v6133 = vrot.slane %v6126, %v6132
      %v6135 = vunpack.c.l.s4 1966171168
      %v6136 = vunpack.c.0.s8 %v6135
      %v6137 = vlaneseq
      %v6138 = vshrl.u32 %v6137, 7
      %v6139 = vsub.s32 %v6136, %v6138
      %v6140 = vrot.slane %v5959, %v6139
      %v6142 = vunpack.c.l.s4 1966171168
      %v6143 = vunpack.c.0.s8 %v6142
      %v6144 = vlaneseq
      %v6145 = vshrl.u32 %v6144, 7
      %v6146 = vsub.s32 %v6143, %v6145
      %v6147 = vrot.slane %v6140, %v6146
      %v6149 = vunpack.c.l.s4 1966171168
      %v6150 = vunpack.c.0.s8 %v6149
      %v6151 = vlaneseq
      %v6152 = vshrl.u32 %v6151, 7
      %v6153 = vsub.s32 %v6150, %v6152
      %v6154 = vrot.slane %v5960, %v6153
      %v6156 = vunpack.c.l.s4 1966171168
      %v6157 = vunpack.c.0.s8 %v6156
      %v6158 = vlaneseq
      %v6159 = vshrl.u32 %v6158, 7
      %v6160 = vsub.s32 %v6157, %v6159
      %v6161 = vrot.slane %v6154, %v6160
      %v6163 = vunpack.c.l.s4 1966171168
      %v6164 = vunpack.c.0.s8 %v6163
      %v6165 = vlaneseq
      %v6166 = vshrl.u32 %v6165, 7
      %v6167 = vsub.s32 %v6164, %v6166
      %v6168 = vrot.slane %v5961, %v6167
      %v6170 = vunpack.c.l.s4 1966171168
      %v6171 = vunpack.c.0.s8 %v6170
      %v6172 = vlaneseq
      %v6173 = vshrl.u32 %v6172, 7
      %v6174 = vsub.s32 %v6171, %v6173
      %v6175 = vrot.slane %v6168, %v6174
      %v6177 = vunpack.c.l.s4 1966171168
      %v6178 = vunpack.c.0.s8 %v6177
      %v6179 = vlaneseq
      %v6180 = vshrl.u32 %v6179, 7
      %v6181 = vsub.s32 %v6178, %v6180
      %v6182 = vrot.slane %v5962, %v6181
      %v6184 = vunpack.c.l.s4 1966171168
      %v6185 = vunpack.c.0.s8 %v6184
      %v6186 = vlaneseq
      %v6187 = vshrl.u32 %v6186, 7
      %v6188 = vsub.s32 %v6185, %v6187
      %v6189 = vrot.slane %v6182, %v6188
      %v6191 = vunpack.c.l.s4 1966171168
      %v6192 = vunpack.c.0.s8 %v6191
      %v6193 = vlaneseq
      %v6194 = vshrl.u32 %v6193, 7
      %v6195 = vsub.s32 %v6192, %v6194
      %v6196 = vrot.slane %v5963, %v6195
      %v6198 = vunpack.c.l.s4 1966171168
      %v6199 = vunpack.c.0.s8 %v6198
      %v6200 = vlaneseq
      %v6201 = vshrl.u32 %v6200, 7
      %v6202 = vsub.s32 %v6199, %v6201
      %v6203 = vrot.slane %v6196, %v6202
      %v6204 = vunpack.c.l.b16 %v5993
      %v6205 = vunpack.c.l.b16 %v6007
      %v6206 = vunpack.c.l.b16 %v6021
      %v6207 = vunpack.c.l.b16 %v6035
      %v6208 = vunpack.c.l.b16 %v6049
      %v6209 = vunpack.c.l.b16 %v6063
      %v6210 = vunpack.c.l.b16 %v6077
      %v6211 = vunpack.c.l.b16 %v6091
      %v6212 = vunpack.c.l.b16 %v6105
      %v6213 = vunpack.c.l.b16 %v6119
      %v6214 = vunpack.c.l.b16 %v6133
      %v6215 = vunpack.c.l.b16 %v6147
      %v6216 = vunpack.c.l.b16 %v6161
      %v6217 = vunpack.c.l.b16 %v6175
      %v6218 = vunpack.c.l.b16 %v6189
      %v6219 = vunpack.c.l.b16 %v6203
      %v6220 = vrot.slane %v6204, 1
      %v6221 = vsel %vm343, %v6205, %v6220
      %v6222 = vrot.slane %v6206, 7
      %v6223 = vsel %vm346, %v6222, %v6221
      %v6224 = vrot.slane %v6207, 6
      %v6225 = vsel %vm349, %v6224, %v6223
      %v6226 = vrot.slane %v6208, 5
      %v6227 = vsel %vm616, %v6226, %v6225
      %v6228 = vrot.slane %v6209, 4
      %v6229 = vsel %vm619, %v6228, %v6227
      %v6230 = vrot.slane %v6210, 3
      %v6231 = vsel %vm622, %v6230, %v6229
      %v6232 = vrot.slane %v6211, 2
      %v6233 = vsel %vm625, %v6232, %v6231
      %v6234 = vrot.slane %v6212, 1
      %v6235 = vsel %vm343, %v6213, %v6234
      %v6236 = vrot.slane %v6214, 7
      %v6237 = vsel %vm346, %v6236, %v6235
      %v6238 = vrot.slane %v6215, 6
      %v6239 = vsel %vm349, %v6238, %v6237
      %v6240 = vrot.slane %v6216, 5
      %v6241 = vsel %vm616, %v6240, %v6239
      %v6242 = vrot.slane %v6217, 4
      %v6243 = vsel %vm619, %v6242, %v6241
      %v6244 = vrot.slane %v6218, 3
      %v6245 = vsel %vm622, %v6244, %v6243
      %v6246 = vrot.slane %v6219, 2
      %v6247 = vsel %vm625, %v6246, %v6245
      %v6248 = vpack.c.b16 %v6247, %v6233
      %v6251 = vsel %vm1298, %v5890, 0
      %6253 = vmatprep.subr.bf16.mxu0 0
      %6254 = vmatpush1.bf16.msra.mxu0 0
      %6255 = vmatprep.subr.bf16.mxu0 0
      %6256 = vmatpush1.bf16.msra.mxu0 0
      %6257 = vmatprep.subr.bf16.mxu0 0
      %6258 = vmatpush1.bf16.msra.mxu0 0
      %6259 = vmatprep.subr.bf16.mxu0 0
      %6260 = vmatpush1.bf16.msra.mxu0 0
      %6261 = vmatprep.subr.bf16.mxu0 0
      %6262 = vmatpush1.bf16.msra.mxu0 0
      %6263 = vmatprep.subr.bf16.mxu0 0
      %6264 = vmatpush1.bf16.msra.mxu0 0
      %6265 = vmatprep.subr.bf16.mxu0 0
      %6266 = vmatpush1.bf16.msra.mxu0 0
      %6267 = vmatprep.subr.bf16.mxu0 0
      %6268 = vmatpush1.bf16.msra.mxu0 %v6248
      %6269 = vmatprep.subr.bf16.mxu0 0
      %6270 = vmatpush2.bf16.msra.mxu0 0
      %6271 = vmatprep.subr.bf16.mxu0 0
      %6272 = vmatpush2.bf16.msra.mxu0 0
      %6273 = vmatprep.subr.bf16.mxu0 0
      %6274 = vmatpush2.bf16.msra.mxu0 0
      %6275 = vmatprep.subr.bf16.mxu0 0
      %6276 = vmatpush2.bf16.msra.mxu0 0
      %6277 = vmatprep.subr.bf16.mxu0 0
      %6278 = vmatpush2.bf16.msra.mxu0 0
      %6279 = vmatprep.subr.bf16.mxu0 0
      %6280 = vmatpush2.bf16.msra.mxu0 0
      %6281 = vmatprep.subr.bf16.mxu0 0
      %6282 = vmatpush2.bf16.msra.mxu0 0
      %6283 = vmatprep.subr.bf16.mxu0 0
      %6284 = vmatpush2.bf16.msra.mxu0 0
      %6285 = vmatprep.mubr.bf16.mxu0 0
      %6286 = vmatmul.mubr.bf16.gmra.mxu0 %v6251
      %v6287 = vpop.f32.mrf.mxu0
      %v6288 = vadd.f32 0.0, %v6287
      %v6289 = vpop.f32.mrf.mxu0
      %v6290 = vpop.f32.mrf.mxu0
      %v6291 = vpop.f32.mrf.mxu0
      %6292 = vdwg.mxu0
      %v6310 = vunpack.c.l.s4 1966171168
      %v6311 = vunpack.c.0.s8 %v6310
      %v6312 = vlaneseq
      %v6313 = vshrl.u32 %v6312, 7
      %v6314 = vsub.s32 %v6311, %v6313
      %v6315 = vrot.slane %v5705, %v6314
      %v6317 = vunpack.c.l.s4 1966171168
      %v6318 = vunpack.c.0.s8 %v6317
      %v6319 = vlaneseq
      %v6320 = vshrl.u32 %v6319, 7
      %v6321 = vsub.s32 %v6318, %v6320
      %v6322 = vrot.slane %v6315, %v6321
      %v6324 = vunpack.c.l.s4 1966171168
      %v6325 = vunpack.c.0.s8 %v6324
      %v6326 = vlaneseq
      %v6327 = vshrl.u32 %v6326, 7
      %v6328 = vsub.s32 %v6325, %v6327
      %v6329 = vrot.slane %v5706, %v6328
      %v6331 = vunpack.c.l.s4 1966171168
      %v6332 = vunpack.c.0.s8 %v6331
      %v6333 = vlaneseq
      %v6334 = vshrl.u32 %v6333, 7
      %v6335 = vsub.s32 %v6332, %v6334
      %v6336 = vrot.slane %v6329, %v6335
      %v6338 = vunpack.c.l.s4 1966171168
      %v6339 = vunpack.c.0.s8 %v6338
      %v6340 = vlaneseq
      %v6341 = vshrl.u32 %v6340, 7
      %v6342 = vsub.s32 %v6339, %v6341
      %v6343 = vrot.slane %v5707, %v6342
      %v6345 = vunpack.c.l.s4 1966171168
      %v6346 = vunpack.c.0.s8 %v6345
      %v6347 = vlaneseq
      %v6348 = vshrl.u32 %v6347, 7
      %v6349 = vsub.s32 %v6346, %v6348
      %v6350 = vrot.slane %v6343, %v6349
      %v6352 = vunpack.c.l.s4 1966171168
      %v6353 = vunpack.c.0.s8 %v6352
      %v6354 = vlaneseq
      %v6355 = vshrl.u32 %v6354, 7
      %v6356 = vsub.s32 %v6353, %v6355
      %v6357 = vrot.slane %v5708, %v6356
      %v6359 = vunpack.c.l.s4 1966171168
      %v6360 = vunpack.c.0.s8 %v6359
      %v6361 = vlaneseq
      %v6362 = vshrl.u32 %v6361, 7
      %v6363 = vsub.s32 %v6360, %v6362
      %v6364 = vrot.slane %v6357, %v6363
      %v6366 = vunpack.c.l.s4 1966171168
      %v6367 = vunpack.c.0.s8 %v6366
      %v6368 = vlaneseq
      %v6369 = vshrl.u32 %v6368, 7
      %v6370 = vsub.s32 %v6367, %v6369
      %v6371 = vrot.slane %v5709, %v6370
      %v6373 = vunpack.c.l.s4 1966171168
      %v6374 = vunpack.c.0.s8 %v6373
      %v6375 = vlaneseq
      %v6376 = vshrl.u32 %v6375, 7
      %v6377 = vsub.s32 %v6374, %v6376
      %v6378 = vrot.slane %v6371, %v6377
      %v6380 = vunpack.c.l.s4 1966171168
      %v6381 = vunpack.c.0.s8 %v6380
      %v6382 = vlaneseq
      %v6383 = vshrl.u32 %v6382, 7
      %v6384 = vsub.s32 %v6381, %v6383
      %v6385 = vrot.slane %v5710, %v6384
      %v6387 = vunpack.c.l.s4 1966171168
      %v6388 = vunpack.c.0.s8 %v6387
      %v6389 = vlaneseq
      %v6390 = vshrl.u32 %v6389, 7
      %v6391 = vsub.s32 %v6388, %v6390
      %v6392 = vrot.slane %v6385, %v6391
      %v6394 = vunpack.c.l.s4 1966171168
      %v6395 = vunpack.c.0.s8 %v6394
      %v6396 = vlaneseq
      %v6397 = vshrl.u32 %v6396, 7
      %v6398 = vsub.s32 %v6395, %v6397
      %v6399 = vrot.slane %v5711, %v6398
      %v6401 = vunpack.c.l.s4 1966171168
      %v6402 = vunpack.c.0.s8 %v6401
      %v6403 = vlaneseq
      %v6404 = vshrl.u32 %v6403, 7
      %v6405 = vsub.s32 %v6402, %v6404
      %v6406 = vrot.slane %v6399, %v6405
      %v6408 = vunpack.c.l.s4 1966171168
      %v6409 = vunpack.c.0.s8 %v6408
      %v6410 = vlaneseq
      %v6411 = vshrl.u32 %v6410, 7
      %v6412 = vsub.s32 %v6409, %v6411
      %v6413 = vrot.slane %v5712, %v6412
      %v6415 = vunpack.c.l.s4 1966171168
      %v6416 = vunpack.c.0.s8 %v6415
      %v6417 = vlaneseq
      %v6418 = vshrl.u32 %v6417, 7
      %v6419 = vsub.s32 %v6416, %v6418
      %v6420 = vrot.slane %v6413, %v6419
      %v6422 = vunpack.c.l.s4 1966171168
      %v6423 = vunpack.c.0.s8 %v6422
      %v6424 = vlaneseq
      %v6425 = vshrl.u32 %v6424, 7
      %v6426 = vsub.s32 %v6423, %v6425
      %v6427 = vrot.slane %v5713, %v6426
      %v6429 = vunpack.c.l.s4 1966171168
      %v6430 = vunpack.c.0.s8 %v6429
      %v6431 = vlaneseq
      %v6432 = vshrl.u32 %v6431, 7
      %v6433 = vsub.s32 %v6430, %v6432
      %v6434 = vrot.slane %v6427, %v6433
      %v6436 = vunpack.c.l.s4 1966171168
      %v6437 = vunpack.c.0.s8 %v6436
      %v6438 = vlaneseq
      %v6439 = vshrl.u32 %v6438, 7
      %v6440 = vsub.s32 %v6437, %v6439
      %v6441 = vrot.slane %v5714, %v6440
      %v6443 = vunpack.c.l.s4 1966171168
      %v6444 = vunpack.c.0.s8 %v6443
      %v6445 = vlaneseq
      %v6446 = vshrl.u32 %v6445, 7
      %v6447 = vsub.s32 %v6444, %v6446
      %v6448 = vrot.slane %v6441, %v6447
      %v6450 = vunpack.c.l.s4 1966171168
      %v6451 = vunpack.c.0.s8 %v6450
      %v6452 = vlaneseq
      %v6453 = vshrl.u32 %v6452, 7
      %v6454 = vsub.s32 %v6451, %v6453
      %v6455 = vrot.slane %v5715, %v6454
      %v6457 = vunpack.c.l.s4 1966171168
      %v6458 = vunpack.c.0.s8 %v6457
      %v6459 = vlaneseq
      %v6460 = vshrl.u32 %v6459, 7
      %v6461 = vsub.s32 %v6458, %v6460
      %v6462 = vrot.slane %v6455, %v6461
      %v6464 = vunpack.c.l.s4 1966171168
      %v6465 = vunpack.c.0.s8 %v6464
      %v6466 = vlaneseq
      %v6467 = vshrl.u32 %v6466, 7
      %v6468 = vsub.s32 %v6465, %v6467
      %v6469 = vrot.slane %v5716, %v6468
      %v6471 = vunpack.c.l.s4 1966171168
      %v6472 = vunpack.c.0.s8 %v6471
      %v6473 = vlaneseq
      %v6474 = vshrl.u32 %v6473, 7
      %v6475 = vsub.s32 %v6472, %v6474
      %v6476 = vrot.slane %v6469, %v6475
      %v6478 = vunpack.c.l.s4 1966171168
      %v6479 = vunpack.c.0.s8 %v6478
      %v6480 = vlaneseq
      %v6481 = vshrl.u32 %v6480, 7
      %v6482 = vsub.s32 %v6479, %v6481
      %v6483 = vrot.slane %v5717, %v6482
      %v6485 = vunpack.c.l.s4 1966171168
      %v6486 = vunpack.c.0.s8 %v6485
      %v6487 = vlaneseq
      %v6488 = vshrl.u32 %v6487, 7
      %v6489 = vsub.s32 %v6486, %v6488
      %v6490 = vrot.slane %v6483, %v6489
      %v6492 = vunpack.c.l.s4 1966171168
      %v6493 = vunpack.c.0.s8 %v6492
      %v6494 = vlaneseq
      %v6495 = vshrl.u32 %v6494, 7
      %v6496 = vsub.s32 %v6493, %v6495
      %v6497 = vrot.slane %v5718, %v6496
      %v6499 = vunpack.c.l.s4 1966171168
      %v6500 = vunpack.c.0.s8 %v6499
      %v6501 = vlaneseq
      %v6502 = vshrl.u32 %v6501, 7
      %v6503 = vsub.s32 %v6500, %v6502
      %v6504 = vrot.slane %v6497, %v6503
      %v6506 = vunpack.c.l.s4 1966171168
      %v6507 = vunpack.c.0.s8 %v6506
      %v6508 = vlaneseq
      %v6509 = vshrl.u32 %v6508, 7
      %v6510 = vsub.s32 %v6507, %v6509
      %v6511 = vrot.slane %v5719, %v6510
      %v6513 = vunpack.c.l.s4 1966171168
      %v6514 = vunpack.c.0.s8 %v6513
      %v6515 = vlaneseq
      %v6516 = vshrl.u32 %v6515, 7
      %v6517 = vsub.s32 %v6514, %v6516
      %v6518 = vrot.slane %v6511, %v6517
      %v6520 = vunpack.c.l.s4 1966171168
      %v6521 = vunpack.c.0.s8 %v6520
      %v6522 = vlaneseq
      %v6523 = vshrl.u32 %v6522, 7
      %v6524 = vsub.s32 %v6521, %v6523
      %v6525 = vrot.slane %v5720, %v6524
      %v6527 = vunpack.c.l.s4 1966171168
      %v6528 = vunpack.c.0.s8 %v6527
      %v6529 = vlaneseq
      %v6530 = vshrl.u32 %v6529, 7
      %v6531 = vsub.s32 %v6528, %v6530
      %v6532 = vrot.slane %v6525, %v6531
      %v6533 = vunpack.c.l.b16 %v6322
      %v6534 = vunpack.c.l.b16 %v6336
      %v6535 = vunpack.c.l.b16 %v6350
      %v6536 = vunpack.c.l.b16 %v6364
      %v6537 = vunpack.c.l.b16 %v6378
      %v6538 = vunpack.c.l.b16 %v6392
      %v6539 = vunpack.c.l.b16 %v6406
      %v6540 = vunpack.c.l.b16 %v6420
      %v6541 = vunpack.c.l.b16 %v6434
      %v6542 = vunpack.c.l.b16 %v6448
      %v6543 = vunpack.c.l.b16 %v6462
      %v6544 = vunpack.c.l.b16 %v6476
      %v6545 = vunpack.c.l.b16 %v6490
      %v6546 = vunpack.c.l.b16 %v6504
      %v6547 = vunpack.c.l.b16 %v6518
      %v6548 = vunpack.c.l.b16 %v6532
      %v6549 = vrot.slane %v6533, 1
      %v6550 = vsel %vm343, %v6534, %v6549
      %v6551 = vrot.slane %v6535, 7
      %v6552 = vsel %vm346, %v6551, %v6550
      %v6553 = vrot.slane %v6536, 6
      %v6554 = vsel %vm349, %v6553, %v6552
      %v6555 = vrot.slane %v6537, 5
      %v6556 = vsel %vm616, %v6555, %v6554
      %v6557 = vrot.slane %v6538, 4
      %v6558 = vsel %vm619, %v6557, %v6556
      %v6559 = vrot.slane %v6539, 3
      %v6560 = vsel %vm622, %v6559, %v6558
      %v6561 = vrot.slane %v6540, 2
      %v6562 = vsel %vm625, %v6561, %v6560
      %v6563 = vrot.slane %v6541, 1
      %v6564 = vsel %vm343, %v6542, %v6563
      %v6565 = vrot.slane %v6543, 7
      %v6566 = vsel %vm346, %v6565, %v6564
      %v6567 = vrot.slane %v6544, 6
      %v6568 = vsel %vm349, %v6567, %v6566
      %v6569 = vrot.slane %v6545, 5
      %v6570 = vsel %vm616, %v6569, %v6568
      %v6571 = vrot.slane %v6546, 4
      %v6572 = vsel %vm619, %v6571, %v6570
      %v6573 = vrot.slane %v6547, 3
      %v6574 = vsel %vm622, %v6573, %v6572
      %v6575 = vrot.slane %v6548, 2
      %v6576 = vsel %vm625, %v6575, %v6574
      %v6577 = vpack.c.b16 %v6576, %v6562
      %v6580 = vsel %vm1298, %v5647, 0
      %6582 = vmatprep.subr.bf16.mxu0 0
      %6583 = vmatpush1.bf16.msra.mxu0 0
      %6584 = vmatprep.subr.bf16.mxu0 0
      %6585 = vmatpush1.bf16.msra.mxu0 0
      %6586 = vmatprep.subr.bf16.mxu0 0
      %6587 = vmatpush1.bf16.msra.mxu0 0
      %6588 = vmatprep.subr.bf16.mxu0 0
      %6589 = vmatpush1.bf16.msra.mxu0 0
      %6590 = vmatprep.subr.bf16.mxu0 0
      %6591 = vmatpush1.bf16.msra.mxu0 0
      %6592 = vmatprep.subr.bf16.mxu0 0
      %6593 = vmatpush1.bf16.msra.mxu0 0
      %6594 = vmatprep.subr.bf16.mxu0 0
      %6595 = vmatpush1.bf16.msra.mxu0 0
      %6596 = vmatprep.subr.bf16.mxu0 0
      %6597 = vmatpush1.bf16.msra.mxu0 %v6577
      %6598 = vmatprep.subr.bf16.mxu0 0
      %6599 = vmatpush2.bf16.msra.mxu0 0
      %6600 = vmatprep.subr.bf16.mxu0 0
      %6601 = vmatpush2.bf16.msra.mxu0 0
      %6602 = vmatprep.subr.bf16.mxu0 0
      %6603 = vmatpush2.bf16.msra.mxu0 0
      %6604 = vmatprep.subr.bf16.mxu0 0
      %6605 = vmatpush2.bf16.msra.mxu0 0
      %6606 = vmatprep.subr.bf16.mxu0 0
      %6607 = vmatpush2.bf16.msra.mxu0 0
      %6608 = vmatprep.subr.bf16.mxu0 0
      %6609 = vmatpush2.bf16.msra.mxu0 0
      %6610 = vmatprep.subr.bf16.mxu0 0
      %6611 = vmatpush2.bf16.msra.mxu0 0
      %6612 = vmatprep.subr.bf16.mxu0 0
      %6613 = vmatpush2.bf16.msra.mxu0 0
      %6614 = vmatprep.mubr.bf16.mxu0 0
      %6615 = vmatmul.mubr.bf16.gmra.mxu0 %v6580
      %v6616 = vpop.f32.mrf.mxu0
      %v6617 = vadd.f32 %v6288, %v6616
      %v6618 = vpop.f32.mrf.mxu0
      %v6619 = vpop.f32.mrf.mxu0
      %v6620 = vpop.f32.mrf.mxu0
      %6621 = vdwg.mxu0
      %v6622 = vld [vmem:[%s0] sm:$0x2]
      %v6624 = vpack.i.b16 %v6622, %v6622
      %v6626 = vlaneseq
      %v6627 = vshrl.u32 %v6626, 7
      %v6628 = vsub.s32 1, %v6627
      %v6629 = vrot.slane %v6624, %v6628
      %v6632 = vunpack.c.l.s4 1966171168
      %v6633 = vunpack.c.0.s8 %v6632
      %v6634 = vlaneseq
      %v6635 = vshrl.u32 %v6634, 7
      %v6636 = vsub.s32 %v6633, %v6635
      %v6637 = vrot.slane %v6629, %v6636
      %v6638 = vcombine.high %v6637, %v6637
      %v6640 = vunpack.c.l.s4 1966171168
      %v6641 = vunpack.c.0.s8 %v6640
      %v6642 = vlaneseq
      %v6643 = vshrl.u32 %v6642, 7
      %v6644 = vsub.s32 %v6641, %v6643
      %v6645 = vrot.slane %v6637, %v6644
      %v6647 = vunpack.c.l.s4 1966171168
      %v6648 = vunpack.c.0.s8 %v6647
      %v6649 = vlaneseq
      %v6650 = vshrl.u32 %v6649, 7
      %v6651 = vsub.s32 %v6648, %v6650
      %v6652 = vrot.slane %v6638, %v6651
      %v6654 = vshll.u32 %v6645, 16
      %v6657 = vshll.u32 %v6652, 16
      %v6663 = vmul.bf16 %v5157, %v6654
      %v6664 = vmul.bf16 %v5158, %v6645
      %v6665 = vmul.bf16 %v5159, %v6657
      %v6666 = vmul.bf16 %v5160, %v6652
      %v6672 = vunpack.c.l.s4 1966171168
      %v6673 = vunpack.c.0.s8 %v6672
      %v6674 = vlaneseq
      %v6675 = vshrl.u32 %v6674, 7
      %v6676 = vsub.s32 %v6673, %v6675
      %v6677 = vrot.slane %v6663, %v6676
      %v6679 = vunpack.c.l.s4 1966171168
      %v6680 = vunpack.c.0.s8 %v6679
      %v6681 = vlaneseq
      %v6682 = vshrl.u32 %v6681, 7
      %v6683 = vsub.s32 %v6680, %v6682
      %v6684 = vrot.slane %v6677, %v6683
      %v6686 = vunpack.c.l.s4 1966171168
      %v6687 = vunpack.c.0.s8 %v6686
      %v6688 = vlaneseq
      %v6689 = vshrl.u32 %v6688, 7
      %v6690 = vsub.s32 %v6687, %v6689
      %v6691 = vrot.slane %v6664, %v6690
      %v6693 = vunpack.c.l.s4 1966171168
      %v6694 = vunpack.c.0.s8 %v6693
      %v6695 = vlaneseq
      %v6696 = vshrl.u32 %v6695, 7
      %v6697 = vsub.s32 %v6694, %v6696
      %v6698 = vrot.slane %v6691, %v6697
      %v6700 = vunpack.c.l.s4 1966171168
      %v6701 = vunpack.c.0.s8 %v6700
      %v6702 = vlaneseq
      %v6703 = vshrl.u32 %v6702, 7
      %v6704 = vsub.s32 %v6701, %v6703
      %v6705 = vrot.slane %v6665, %v6704
      %v6707 = vunpack.c.l.s4 1966171168
      %v6708 = vunpack.c.0.s8 %v6707
      %v6709 = vlaneseq
      %v6710 = vshrl.u32 %v6709, 7
      %v6711 = vsub.s32 %v6708, %v6710
      %v6712 = vrot.slane %v6705, %v6711
      %v6714 = vunpack.c.l.s4 1966171168
      %v6715 = vunpack.c.0.s8 %v6714
      %v6716 = vlaneseq
      %v6717 = vshrl.u32 %v6716, 7
      %v6718 = vsub.s32 %v6715, %v6717
      %v6719 = vrot.slane %v6666, %v6718
      %v6721 = vunpack.c.l.s4 1966171168
      %v6722 = vunpack.c.0.s8 %v6721
      %v6723 = vlaneseq
      %v6724 = vshrl.u32 %v6723, 7
      %v6725 = vsub.s32 %v6722, %v6724
      %v6726 = vrot.slane %v6719, %v6725
      %v6727 = vunpack.c.l.b16 %v6684
      %v6728 = vunpack.c.l.b16 %v6698
      %v6729 = vunpack.c.l.b16 %v6712
      %v6730 = vunpack.c.l.b16 %v6726
      %v6731 = vrot.slane %v6727, 1
      %v6732 = vsel %vm343, %v6728, %v6731
      %v6733 = vrot.slane %v6729, 7
      %v6734 = vsel %vm346, %v6733, %v6732
      %v6735 = vrot.slane %v6730, 6
      %v6736 = vsel %vm349, %v6735, %v6734
      %v6737 = vpack.c.b16 %v6736, %v6736
      %6739 = vmatprep.subr.bf16.mxu0 0
      %6740 = vmatpush1.bf16.xpose.msra.mxu0 0
      %6741 = vmatprep.subr.bf16.mxu0 0
      %6742 = vmatpush1.bf16.xpose.msra.mxu0 0
      %6743 = vmatprep.subr.bf16.mxu0 0
      %6744 = vmatpush1.bf16.xpose.msra.mxu0 0
      %6745 = vmatprep.subr.bf16.mxu0 0
      %6746 = vmatpush1.bf16.xpose.msra.mxu0 0
      %6747 = vmatprep.subr.bf16.mxu0 0
      %6748 = vmatpush1.bf16.xpose.msra.mxu0 0
      %6749 = vmatprep.subr.bf16.mxu0 0
      %6750 = vmatpush1.bf16.xpose.msra.mxu0 0
      %6751 = vmatprep.subr.bf16.mxu0 0
      %6752 = vmatpush1.bf16.xpose.msra.mxu0 0
      %6753 = vmatprep.subr.bf16.mxu0 0
      %6754 = vmatpush1.bf16.xpose.msra.mxu0 %v5594
      %6755 = vmatprep.subr.bf16.mxu0 0
      %6756 = vmatpush2.bf16.xpose.msra.mxu0 0
      %6757 = vmatprep.subr.bf16.mxu0 0
      %6758 = vmatpush2.bf16.xpose.msra.mxu0 0
      %6759 = vmatprep.subr.bf16.mxu0 0
      %6760 = vmatpush2.bf16.xpose.msra.mxu0 0
      %6761 = vmatprep.subr.bf16.mxu0 0
      %6762 = vmatpush2.bf16.xpose.msra.mxu0 0
      %6763 = vmatprep.subr.bf16.mxu0 0
      %6764 = vmatpush2.bf16.xpose.msra.mxu0 0
      %6765 = vmatprep.subr.bf16.mxu0 0
      %6766 = vmatpush2.bf16.xpose.msra.mxu0 0
      %6767 = vmatprep.subr.bf16.mxu0 0
      %6768 = vmatpush2.bf16.xpose.msra.mxu0 0
      %6769 = vmatprep.subr.bf16.mxu0 0
      %6770 = vmatpush2.bf16.xpose.msra.mxu0 0
      %6771 = vmatprep.mubr.bf16.mxu0 0
      %6772 = vmatmul.mubr.bf16.gmra.mxu0 %v6737
      %v6773 = vpop.f32.mrf.mxu0
      %v6774 = vadd.f32 0.0, %v6773
      %v6775 = vpop.f32.mrf.mxu0
      %v6776 = vpop.f32.mrf.mxu0
      %v6777 = vpop.f32.mrf.mxu0
      %6778 = vdwg.mxu0
      %v6779 = vsel %vm683, %v6774, -inf
      %6780 = vmax.xlane.f32.xlu0 %v6779
      %v6781 = vpop.xlane.xlu0 %6780
      %v6782 = vsub.f32 %v6774, %v6781
      %v6783 = vmul.f32 %v6782, 1.442695
      %v6784 = vpow.pop %v6783
      %v6785 = vsel %vm683, %v6784, 0.0
      %6786 = vadd.xlane.f32.xlu0 %v6785
      %v6787 = vpop.xlane.xlu0 %6786
      %v6788 = vrcp.pop %v6787
      %v6789 = vmul.f32 %v6784, %v6788
      %v6790 = vpack.c.bf16 %v6789, %v6789
      %v6791 = vcombine.high %v6629, %v6629
      %v6793 = vunpack.c.l.s4 1966171168
      %v6794 = vunpack.c.0.s8 %v6793
      %v6795 = vlaneseq
      %v6796 = vshrl.u32 %v6795, 7
      %v6797 = vsub.s32 %v6794, %v6796
      %v6798 = vrot.slane %v6791, %v6797
      %v6799 = vcombine.high %v6798, %v6798
      %v6801 = vunpack.c.l.s4 1966171168
      %v6802 = vunpack.c.0.s8 %v6801
      %v6803 = vlaneseq
      %v6804 = vshrl.u32 %v6803, 7
      %v6805 = vsub.s32 %v6802, %v6804
      %v6806 = vrot.slane %v6798, %v6805
      %v6808 = vunpack.c.l.s4 1966171168
      %v6809 = vunpack.c.0.s8 %v6808
      %v6810 = vlaneseq
      %v6811 = vshrl.u32 %v6810, 7
      %v6812 = vsub.s32 %v6809, %v6811
      %v6813 = vrot.slane %v6799, %v6812
      %v6814 = vcombine.high %v6645, %v6645
      %v6815 = vcombine.high %v6806, %v6806
      %v6816 = vcombine.high %v6652, %v6652
      %v6817 = vcombine.high %v6813, %v6813
      %v6819 = vshll.u32 %v6814, 16
      %v6822 = vshll.u32 %v6816, 16
      %v6825 = vshll.u32 %v6806, 16
      %v6828 = vshll.u32 %v6813, 16
      %v6831 = vshll.u32 %v6815, 16
      %v6834 = vshll.u32 %v6817, 16
      %v6848 = vmul.bf16 %v5177, %v6654
      %v6849 = vmul.bf16 %v5178, %v6645
      %v6850 = vmul.bf16 %v5179, %v6657
      %v6851 = vmul.bf16 %v5180, %v6652
      %v6852 = vmul.bf16 %v5181, %v6819
      %v6853 = vmul.bf16 %v5182, %v6814
      %v6854 = vmul.bf16 %v5183, %v6822
      %v6855 = vmul.bf16 %v5184, %v6816
      %v6856 = vmul.bf16 %v5185, %v6825
      %v6857 = vmul.bf16 %v5186, %v6806
      %v6858 = vmul.bf16 %v5187, %v6828
      %v6859 = vmul.bf16 %v5188, %v6813
      %v6860 = vmul.bf16 %v5189, %v6831
      %v6861 = vmul.bf16 %v5190, %v6815
      %v6862 = vmul.bf16 %v5191, %v6834
      %v6863 = vmul.bf16 %v5192, %v6817
      %v6881 = vunpack.c.l.s4 1966171168
      %v6882 = vunpack.c.0.s8 %v6881
      %v6883 = vlaneseq
      %v6884 = vshrl.u32 %v6883, 7
      %v6885 = vsub.s32 %v6882, %v6884
      %v6886 = vrot.slane %v6848, %v6885
      %v6888 = vunpack.c.l.s4 1966171168
      %v6889 = vunpack.c.0.s8 %v6888
      %v6890 = vlaneseq
      %v6891 = vshrl.u32 %v6890, 7
      %v6892 = vsub.s32 %v6889, %v6891
      %v6893 = vrot.slane %v6886, %v6892
      %v6895 = vunpack.c.l.s4 1966171168
      %v6896 = vunpack.c.0.s8 %v6895
      %v6897 = vlaneseq
      %v6898 = vshrl.u32 %v6897, 7
      %v6899 = vsub.s32 %v6896, %v6898
      %v6900 = vrot.slane %v6849, %v6899
      %v6902 = vunpack.c.l.s4 1966171168
      %v6903 = vunpack.c.0.s8 %v6902
      %v6904 = vlaneseq
      %v6905 = vshrl.u32 %v6904, 7
      %v6906 = vsub.s32 %v6903, %v6905
      %v6907 = vrot.slane %v6900, %v6906
      %v6909 = vunpack.c.l.s4 1966171168
      %v6910 = vunpack.c.0.s8 %v6909
      %v6911 = vlaneseq
      %v6912 = vshrl.u32 %v6911, 7
      %v6913 = vsub.s32 %v6910, %v6912
      %v6914 = vrot.slane %v6850, %v6913
      %v6916 = vunpack.c.l.s4 1966171168
      %v6917 = vunpack.c.0.s8 %v6916
      %v6918 = vlaneseq
      %v6919 = vshrl.u32 %v6918, 7
      %v6920 = vsub.s32 %v6917, %v6919
      %v6921 = vrot.slane %v6914, %v6920
      %v6923 = vunpack.c.l.s4 1966171168
      %v6924 = vunpack.c.0.s8 %v6923
      %v6925 = vlaneseq
      %v6926 = vshrl.u32 %v6925, 7
      %v6927 = vsub.s32 %v6924, %v6926
      %v6928 = vrot.slane %v6851, %v6927
      %v6930 = vunpack.c.l.s4 1966171168
      %v6931 = vunpack.c.0.s8 %v6930
      %v6932 = vlaneseq
      %v6933 = vshrl.u32 %v6932, 7
      %v6934 = vsub.s32 %v6931, %v6933
      %v6935 = vrot.slane %v6928, %v6934
      %v6937 = vunpack.c.l.s4 1966171168
      %v6938 = vunpack.c.0.s8 %v6937
      %v6939 = vlaneseq
      %v6940 = vshrl.u32 %v6939, 7
      %v6941 = vsub.s32 %v6938, %v6940
      %v6942 = vrot.slane %v6852, %v6941
      %v6944 = vunpack.c.l.s4 1966171168
      %v6945 = vunpack.c.0.s8 %v6944
      %v6946 = vlaneseq
      %v6947 = vshrl.u32 %v6946, 7
      %v6948 = vsub.s32 %v6945, %v6947
      %v6949 = vrot.slane %v6942, %v6948
      %v6951 = vunpack.c.l.s4 1966171168
      %v6952 = vunpack.c.0.s8 %v6951
      %v6953 = vlaneseq
      %v6954 = vshrl.u32 %v6953, 7
      %v6955 = vsub.s32 %v6952, %v6954
      %v6956 = vrot.slane %v6853, %v6955
      %v6958 = vunpack.c.l.s4 1966171168
      %v6959 = vunpack.c.0.s8 %v6958
      %v6960 = vlaneseq
      %v6961 = vshrl.u32 %v6960, 7
      %v6962 = vsub.s32 %v6959, %v6961
      %v6963 = vrot.slane %v6956, %v6962
      %v6965 = vunpack.c.l.s4 1966171168
      %v6966 = vunpack.c.0.s8 %v6965
      %v6967 = vlaneseq
      %v6968 = vshrl.u32 %v6967, 7
      %v6969 = vsub.s32 %v6966, %v6968
      %v6970 = vrot.slane %v6854, %v6969
      %v6972 = vunpack.c.l.s4 1966171168
      %v6973 = vunpack.c.0.s8 %v6972
      %v6974 = vlaneseq
      %v6975 = vshrl.u32 %v6974, 7
      %v6976 = vsub.s32 %v6973, %v6975
      %v6977 = vrot.slane %v6970, %v6976
      %v6979 = vunpack.c.l.s4 1966171168
      %v6980 = vunpack.c.0.s8 %v6979
      %v6981 = vlaneseq
      %v6982 = vshrl.u32 %v6981, 7
      %v6983 = vsub.s32 %v6980, %v6982
      %v6984 = vrot.slane %v6855, %v6983
      %v6986 = vunpack.c.l.s4 1966171168
      %v6987 = vunpack.c.0.s8 %v6986
      %v6988 = vlaneseq
      %v6989 = vshrl.u32 %v6988, 7
      %v6990 = vsub.s32 %v6987, %v6989
      %v6991 = vrot.slane %v6984, %v6990
      %v6993 = vunpack.c.l.s4 1966171168
      %v6994 = vunpack.c.0.s8 %v6993
      %v6995 = vlaneseq
      %v6996 = vshrl.u32 %v6995, 7
      %v6997 = vsub.s32 %v6994, %v6996
      %v6998 = vrot.slane %v6856, %v6997
      %v7000 = vunpack.c.l.s4 1966171168
      %v7001 = vunpack.c.0.s8 %v7000
      %v7002 = vlaneseq
      %v7003 = vshrl.u32 %v7002, 7
      %v7004 = vsub.s32 %v7001, %v7003
      %v7005 = vrot.slane %v6998, %v7004
      %v7007 = vunpack.c.l.s4 1966171168
      %v7008 = vunpack.c.0.s8 %v7007
      %v7009 = vlaneseq
      %v7010 = vshrl.u32 %v7009, 7
      %v7011 = vsub.s32 %v7008, %v7010
      %v7012 = vrot.slane %v6857, %v7011
      %v7014 = vunpack.c.l.s4 1966171168
      %v7015 = vunpack.c.0.s8 %v7014
      %v7016 = vlaneseq
      %v7017 = vshrl.u32 %v7016, 7
      %v7018 = vsub.s32 %v7015, %v7017
      %v7019 = vrot.slane %v7012, %v7018
      %v7021 = vunpack.c.l.s4 1966171168
      %v7022 = vunpack.c.0.s8 %v7021
      %v7023 = vlaneseq
      %v7024 = vshrl.u32 %v7023, 7
      %v7025 = vsub.s32 %v7022, %v7024
      %v7026 = vrot.slane %v6858, %v7025
      %v7028 = vunpack.c.l.s4 1966171168
      %v7029 = vunpack.c.0.s8 %v7028
      %v7030 = vlaneseq
      %v7031 = vshrl.u32 %v7030, 7
      %v7032 = vsub.s32 %v7029, %v7031
      %v7033 = vrot.slane %v7026, %v7032
      %v7035 = vunpack.c.l.s4 1966171168
      %v7036 = vunpack.c.0.s8 %v7035
      %v7037 = vlaneseq
      %v7038 = vshrl.u32 %v7037, 7
      %v7039 = vsub.s32 %v7036, %v7038
      %v7040 = vrot.slane %v6859, %v7039
      %v7042 = vunpack.c.l.s4 1966171168
      %v7043 = vunpack.c.0.s8 %v7042
      %v7044 = vlaneseq
      %v7045 = vshrl.u32 %v7044, 7
      %v7046 = vsub.s32 %v7043, %v7045
      %v7047 = vrot.slane %v7040, %v7046
      %v7049 = vunpack.c.l.s4 1966171168
      %v7050 = vunpack.c.0.s8 %v7049
      %v7051 = vlaneseq
      %v7052 = vshrl.u32 %v7051, 7
      %v7053 = vsub.s32 %v7050, %v7052
      %v7054 = vrot.slane %v6860, %v7053
      %v7056 = vunpack.c.l.s4 1966171168
      %v7057 = vunpack.c.0.s8 %v7056
      %v7058 = vlaneseq
      %v7059 = vshrl.u32 %v7058, 7
      %v7060 = vsub.s32 %v7057, %v7059
      %v7061 = vrot.slane %v7054, %v7060
      %v7063 = vunpack.c.l.s4 1966171168
      %v7064 = vunpack.c.0.s8 %v7063
      %v7065 = vlaneseq
      %v7066 = vshrl.u32 %v7065, 7
      %v7067 = vsub.s32 %v7064, %v7066
      %v7068 = vrot.slane %v6861, %v7067
      %v7070 = vunpack.c.l.s4 1966171168
      %v7071 = vunpack.c.0.s8 %v7070
      %v7072 = vlaneseq
      %v7073 = vshrl.u32 %v7072, 7
      %v7074 = vsub.s32 %v7071, %v7073
      %v7075 = vrot.slane %v7068, %v7074
      %v7077 = vunpack.c.l.s4 1966171168
      %v7078 = vunpack.c.0.s8 %v7077
      %v7079 = vlaneseq
      %v7080 = vshrl.u32 %v7079, 7
      %v7081 = vsub.s32 %v7078, %v7080
      %v7082 = vrot.slane %v6862, %v7081
      %v7084 = vunpack.c.l.s4 1966171168
      %v7085 = vunpack.c.0.s8 %v7084
      %v7086 = vlaneseq
      %v7087 = vshrl.u32 %v7086, 7
      %v7088 = vsub.s32 %v7085, %v7087
      %v7089 = vrot.slane %v7082, %v7088
      %v7091 = vunpack.c.l.s4 1966171168
      %v7092 = vunpack.c.0.s8 %v7091
      %v7093 = vlaneseq
      %v7094 = vshrl.u32 %v7093, 7
      %v7095 = vsub.s32 %v7092, %v7094
      %v7096 = vrot.slane %v6863, %v7095
      %v7098 = vunpack.c.l.s4 1966171168
      %v7099 = vunpack.c.0.s8 %v7098
      %v7100 = vlaneseq
      %v7101 = vshrl.u32 %v7100, 7
      %v7102 = vsub.s32 %v7099, %v7101
      %v7103 = vrot.slane %v7096, %v7102
      %v7104 = vunpack.c.l.b16 %v6893
      %v7105 = vunpack.c.l.b16 %v6907
      %v7106 = vunpack.c.l.b16 %v6921
      %v7107 = vunpack.c.l.b16 %v6935
      %v7108 = vunpack.c.l.b16 %v6949
      %v7109 = vunpack.c.l.b16 %v6963
      %v7110 = vunpack.c.l.b16 %v6977
      %v7111 = vunpack.c.l.b16 %v6991
      %v7112 = vunpack.c.l.b16 %v7005
      %v7113 = vunpack.c.l.b16 %v7019
      %v7114 = vunpack.c.l.b16 %v7033
      %v7115 = vunpack.c.l.b16 %v7047
      %v7116 = vunpack.c.l.b16 %v7061
      %v7117 = vunpack.c.l.b16 %v7075
      %v7118 = vunpack.c.l.b16 %v7089
      %v7119 = vunpack.c.l.b16 %v7103
      %v7120 = vrot.slane %v7104, 1
      %v7121 = vsel %vm343, %v7105, %v7120
      %v7122 = vrot.slane %v7106, 7
      %v7123 = vsel %vm346, %v7122, %v7121
      %v7124 = vrot.slane %v7107, 6
      %v7125 = vsel %vm349, %v7124, %v7123
      %v7126 = vrot.slane %v7108, 5
      %v7127 = vsel %vm616, %v7126, %v7125
      %v7128 = vrot.slane %v7109, 4
      %v7129 = vsel %vm619, %v7128, %v7127
      %v7130 = vrot.slane %v7110, 3
      %v7131 = vsel %vm622, %v7130, %v7129
      %v7132 = vrot.slane %v7111, 2
      %v7133 = vsel %vm625, %v7132, %v7131
      %v7134 = vrot.slane %v7112, 1
      %v7135 = vsel %vm343, %v7113, %v7134
      %v7136 = vrot.slane %v7114, 7
      %v7137 = vsel %vm346, %v7136, %v7135
      %v7138 = vrot.slane %v7115, 6
      %v7139 = vsel %vm349, %v7138, %v7137
      %v7140 = vrot.slane %v7116, 5
      %v7141 = vsel %vm616, %v7140, %v7139
      %v7142 = vrot.slane %v7117, 4
      %v7143 = vsel %vm619, %v7142, %v7141
      %v7144 = vrot.slane %v7118, 3
      %v7145 = vsel %vm622, %v7144, %v7143
      %v7146 = vrot.slane %v7119, 2
      %v7147 = vsel %vm625, %v7146, %v7145
      %v7148 = vpack.c.b16 %v7147, %v7133
      %v7151 = vsel %vm1298, %v6790, 0
      %7153 = vmatprep.subr.bf16.mxu0 0
      %7154 = vmatpush1.bf16.msra.mxu0 0
      %7155 = vmatprep.subr.bf16.mxu0 0
      %7156 = vmatpush1.bf16.msra.mxu0 0
      %7157 = vmatprep.subr.bf16.mxu0 0
      %7158 = vmatpush1.bf16.msra.mxu0 0
      %7159 = vmatprep.subr.bf16.mxu0 0
      %7160 = vmatpush1.bf16.msra.mxu0 0
      %7161 = vmatprep.subr.bf16.mxu0 0
      %7162 = vmatpush1.bf16.msra.mxu0 0
      %7163 = vmatprep.subr.bf16.mxu0 0
      %7164 = vmatpush1.bf16.msra.mxu0 0
      %7165 = vmatprep.subr.bf16.mxu0 0
      %7166 = vmatpush1.bf16.msra.mxu0 0
      %7167 = vmatprep.subr.bf16.mxu0 0
      %7168 = vmatpush1.bf16.msra.mxu0 %v7148
      %7169 = vmatprep.subr.bf16.mxu0 0
      %7170 = vmatpush2.bf16.msra.mxu0 0
      %7171 = vmatprep.subr.bf16.mxu0 0
      %7172 = vmatpush2.bf16.msra.mxu0 0
      %7173 = vmatprep.subr.bf16.mxu0 0
      %7174 = vmatpush2.bf16.msra.mxu0 0
      %7175 = vmatprep.subr.bf16.mxu0 0
      %7176 = vmatpush2.bf16.msra.mxu0 0
      %7177 = vmatprep.subr.bf16.mxu0 0
      %7178 = vmatpush2.bf16.msra.mxu0 0
      %7179 = vmatprep.subr.bf16.mxu0 0
      %7180 = vmatpush2.bf16.msra.mxu0 0
      %7181 = vmatprep.subr.bf16.mxu0 0
      %7182 = vmatpush2.bf16.msra.mxu0 0
      %7183 = vmatprep.subr.bf16.mxu0 0
      %7184 = vmatpush2.bf16.msra.mxu0 0
      %7185 = vmatprep.mubr.bf16.mxu0 0
      %7186 = vmatmul.mubr.bf16.gmra.mxu0 %v7151
      %v7187 = vpop.f32.mrf.mxu0
      %v7188 = vadd.f32 0.0, %v7187
      %v7189 = vpop.f32.mrf.mxu0
      %v7190 = vpop.f32.mrf.mxu0
      %v7191 = vpop.f32.mrf.mxu0
      %7192 = vdwg.mxu0
      %v7193 = vadd.f32 %v6617, %v7188
      %v7194 = vld [vmem:[%s0] sm:$0x2]
      %v7196 = vshrl.u32 %v7194, 16
      %v7197 = vpack.i.b16 %v7196, %v7196
      %v7199 = vlaneseq
      %v7200 = vshrl.u32 %v7199, 7
      %v7201 = vsub.s32 1, %v7200
      %v7202 = vrot.slane %v7197, %v7201
      %v7205 = vunpack.c.l.s4 1966171168
      %v7206 = vunpack.c.0.s8 %v7205
      %v7207 = vlaneseq
      %v7208 = vshrl.u32 %v7207, 7
      %v7209 = vsub.s32 %v7206, %v7208
      %v7210 = vrot.slane %v7202, %v7209
      %v7211 = vcombine.high %v7210, %v7210
      %v7213 = vunpack.c.l.s4 1966171168
      %v7214 = vunpack.c.0.s8 %v7213
      %v7215 = vlaneseq
      %v7216 = vshrl.u32 %v7215, 7
      %v7217 = vsub.s32 %v7214, %v7216
      %v7218 = vrot.slane %v7210, %v7217
      %v7220 = vunpack.c.l.s4 1966171168
      %v7221 = vunpack.c.0.s8 %v7220
      %v7222 = vlaneseq
      %v7223 = vshrl.u32 %v7222, 7
      %v7224 = vsub.s32 %v7221, %v7223
      %v7225 = vrot.slane %v7211, %v7224
      %v7227 = vshll.u32 %v7218, 16
      %v7230 = vshll.u32 %v7225, 16
      %v7236 = vmul.bf16 %v5157, %v7227
      %v7237 = vmul.bf16 %v5158, %v7218
      %v7238 = vmul.bf16 %v5159, %v7230
      %v7239 = vmul.bf16 %v5160, %v7225
      %v7245 = vunpack.c.l.s4 1966171168
      %v7246 = vunpack.c.0.s8 %v7245
      %v7247 = vlaneseq
      %v7248 = vshrl.u32 %v7247, 7
      %v7249 = vsub.s32 %v7246, %v7248
      %v7250 = vrot.slane %v7236, %v7249
      %v7252 = vunpack.c.l.s4 1966171168
      %v7253 = vunpack.c.0.s8 %v7252
      %v7254 = vlaneseq
      %v7255 = vshrl.u32 %v7254, 7
      %v7256 = vsub.s32 %v7253, %v7255
      %v7257 = vrot.slane %v7250, %v7256
      %v7259 = vunpack.c.l.s4 1966171168
      %v7260 = vunpack.c.0.s8 %v7259
      %v7261 = vlaneseq
      %v7262 = vshrl.u32 %v7261, 7
      %v7263 = vsub.s32 %v7260, %v7262
      %v7264 = vrot.slane %v7237, %v7263
      %v7266 = vunpack.c.l.s4 1966171168
      %v7267 = vunpack.c.0.s8 %v7266
      %v7268 = vlaneseq
      %v7269 = vshrl.u32 %v7268, 7
      %v7270 = vsub.s32 %v7267, %v7269
      %v7271 = vrot.slane %v7264, %v7270
      %v7273 = vunpack.c.l.s4 1966171168
      %v7274 = vunpack.c.0.s8 %v7273
      %v7275 = vlaneseq
      %v7276 = vshrl.u32 %v7275, 7
      %v7277 = vsub.s32 %v7274, %v7276
      %v7278 = vrot.slane %v7238, %v7277
      %v7280 = vunpack.c.l.s4 1966171168
      %v7281 = vunpack.c.0.s8 %v7280
      %v7282 = vlaneseq
      %v7283 = vshrl.u32 %v7282, 7
      %v7284 = vsub.s32 %v7281, %v7283
      %v7285 = vrot.slane %v7278, %v7284
      %v7287 = vunpack.c.l.s4 1966171168
      %v7288 = vunpack.c.0.s8 %v7287
      %v7289 = vlaneseq
      %v7290 = vshrl.u32 %v7289, 7
      %v7291 = vsub.s32 %v7288, %v7290
      %v7292 = vrot.slane %v7239, %v7291
      %v7294 = vunpack.c.l.s4 1966171168
      %v7295 = vunpack.c.0.s8 %v7294
      %v7296 = vlaneseq
      %v7297 = vshrl.u32 %v7296, 7
      %v7298 = vsub.s32 %v7295, %v7297
      %v7299 = vrot.slane %v7292, %v7298
      %v7300 = vunpack.c.l.b16 %v7257
      %v7301 = vunpack.c.l.b16 %v7271
      %v7302 = vunpack.c.l.b16 %v7285
      %v7303 = vunpack.c.l.b16 %v7299
      %v7304 = vrot.slane %v7300, 1
      %v7305 = vsel %vm343, %v7301, %v7304
      %v7306 = vrot.slane %v7302, 7
      %v7307 = vsel %vm346, %v7306, %v7305
      %v7308 = vrot.slane %v7303, 6
      %v7309 = vsel %vm349, %v7308, %v7307
      %v7310 = vpack.c.b16 %v7309, %v7309
      %7312 = vmatprep.subr.bf16.mxu0 0
      %7313 = vmatpush1.bf16.xpose.msra.mxu0 0
      %7314 = vmatprep.subr.bf16.mxu0 0
      %7315 = vmatpush1.bf16.xpose.msra.mxu0 0
      %7316 = vmatprep.subr.bf16.mxu0 0
      %7317 = vmatpush1.bf16.xpose.msra.mxu0 0
      %7318 = vmatprep.subr.bf16.mxu0 0
      %7319 = vmatpush1.bf16.xpose.msra.mxu0 0
      %7320 = vmatprep.subr.bf16.mxu0 0
      %7321 = vmatpush1.bf16.xpose.msra.mxu0 0
      %7322 = vmatprep.subr.bf16.mxu0 0
      %7323 = vmatpush1.bf16.xpose.msra.mxu0 0
      %7324 = vmatprep.subr.bf16.mxu0 0
      %7325 = vmatpush1.bf16.xpose.msra.mxu0 0
      %7326 = vmatprep.subr.bf16.mxu0 0
      %7327 = vmatpush1.bf16.xpose.msra.mxu0 %v5594
      %7328 = vmatprep.subr.bf16.mxu0 0
      %7329 = vmatpush2.bf16.xpose.msra.mxu0 0
      %7330 = vmatprep.subr.bf16.mxu0 0
      %7331 = vmatpush2.bf16.xpose.msra.mxu0 0
      %7332 = vmatprep.subr.bf16.mxu0 0
      %7333 = vmatpush2.bf16.xpose.msra.mxu0 0
      %7334 = vmatprep.subr.bf16.mxu0 0
      %7335 = vmatpush2.bf16.xpose.msra.mxu0 0
      %7336 = vmatprep.subr.bf16.mxu0 0
      %7337 = vmatpush2.bf16.xpose.msra.mxu0 0
      %7338 = vmatprep.subr.bf16.mxu0 0
      %7339 = vmatpush2.bf16.xpose.msra.mxu0 0
      %7340 = vmatprep.subr.bf16.mxu0 0
      %7341 = vmatpush2.bf16.xpose.msra.mxu0 0
      %7342 = vmatprep.subr.bf16.mxu0 0
      %7343 = vmatpush2.bf16.xpose.msra.mxu0 0
      %7344 = vmatprep.mubr.bf16.mxu0 0
      %7345 = vmatmul.mubr.bf16.gmra.mxu0 %v7310
      %v7346 = vpop.f32.mrf.mxu0
      %v7347 = vadd.f32 0.0, %v7346
      %v7348 = vpop.f32.mrf.mxu0
      %v7349 = vpop.f32.mrf.mxu0
      %v7350 = vpop.f32.mrf.mxu0
      %7351 = vdwg.mxu0
      %v7352 = vsel %vm683, %v7347, -inf
      %7353 = vmax.xlane.f32.xlu0 %v7352
      %v7354 = vpop.xlane.xlu0 %7353
      %v7355 = vsub.f32 %v7347, %v7354
      %v7356 = vmul.f32 %v7355, 1.442695
      %v7357 = vpow.pop %v7356
      %v7358 = vsel %vm683, %v7357, 0.0
      %7359 = vadd.xlane.f32.xlu0 %v7358
      %v7360 = vpop.xlane.xlu0 %7359
      %v7361 = vrcp.pop %v7360
      %v7362 = vmul.f32 %v7357, %v7361
      %v7363 = vpack.c.bf16 %v7362, %v7362
      %v7364 = vcombine.high %v7202, %v7202
      %v7366 = vunpack.c.l.s4 1966171168
      %v7367 = vunpack.c.0.s8 %v7366
      %v7368 = vlaneseq
      %v7369 = vshrl.u32 %v7368, 7
      %v7370 = vsub.s32 %v7367, %v7369
      %v7371 = vrot.slane %v7364, %v7370
      %v7372 = vcombine.high %v7371, %v7371
      %v7374 = vunpack.c.l.s4 1966171168
      %v7375 = vunpack.c.0.s8 %v7374
      %v7376 = vlaneseq
      %v7377 = vshrl.u32 %v7376, 7
      %v7378 = vsub.s32 %v7375, %v7377
      %v7379 = vrot.slane %v7371, %v7378
      %v7381 = vunpack.c.l.s4 1966171168
      %v7382 = vunpack.c.0.s8 %v7381
      %v7383 = vlaneseq
      %v7384 = vshrl.u32 %v7383, 7
      %v7385 = vsub.s32 %v7382, %v7384
      %v7386 = vrot.slane %v7372, %v7385
      %v7387 = vcombine.high %v7218, %v7218
      %v7388 = vcombine.high %v7379, %v7379
      %v7389 = vcombine.high %v7225, %v7225
      %v7390 = vcombine.high %v7386, %v7386
      %v7392 = vshll.u32 %v7387, 16
      %v7395 = vshll.u32 %v7389, 16
      %v7398 = vshll.u32 %v7379, 16
      %v7401 = vshll.u32 %v7386, 16
      %v7404 = vshll.u32 %v7388, 16
      %v7407 = vshll.u32 %v7390, 16
      %v7421 = vmul.bf16 %v5177, %v7227
      %v7422 = vmul.bf16 %v5178, %v7218
      %v7423 = vmul.bf16 %v5179, %v7230
      %v7424 = vmul.bf16 %v5180, %v7225
      %v7425 = vmul.bf16 %v5181, %v7392
      %v7426 = vmul.bf16 %v5182, %v7387
      %v7427 = vmul.bf16 %v5183, %v7395
      %v7428 = vmul.bf16 %v5184, %v7389
      %v7429 = vmul.bf16 %v5185, %v7398
      %v7430 = vmul.bf16 %v5186, %v7379
      %v7431 = vmul.bf16 %v5187, %v7401
      %v7432 = vmul.bf16 %v5188, %v7386
      %v7433 = vmul.bf16 %v5189, %v7404
      %v7434 = vmul.bf16 %v5190, %v7388
      %v7435 = vmul.bf16 %v5191, %v7407
      %v7436 = vmul.bf16 %v5192, %v7390
      %v7454 = vunpack.c.l.s4 1966171168
      %v7455 = vunpack.c.0.s8 %v7454
      %v7456 = vlaneseq
      %v7457 = vshrl.u32 %v7456, 7
      %v7458 = vsub.s32 %v7455, %v7457
      %v7459 = vrot.slane %v7421, %v7458
      %v7461 = vunpack.c.l.s4 1966171168
      %v7462 = vunpack.c.0.s8 %v7461
      %v7463 = vlaneseq
      %v7464 = vshrl.u32 %v7463, 7
      %v7465 = vsub.s32 %v7462, %v7464
      %v7466 = vrot.slane %v7459, %v7465
      %v7468 = vunpack.c.l.s4 1966171168
      %v7469 = vunpack.c.0.s8 %v7468
      %v7470 = vlaneseq
      %v7471 = vshrl.u32 %v7470, 7
      %v7472 = vsub.s32 %v7469, %v7471
      %v7473 = vrot.slane %v7422, %v7472
      %v7475 = vunpack.c.l.s4 1966171168
      %v7476 = vunpack.c.0.s8 %v7475
      %v7477 = vlaneseq
      %v7478 = vshrl.u32 %v7477, 7
      %v7479 = vsub.s32 %v7476, %v7478
      %v7480 = vrot.slane %v7473, %v7479
      %v7482 = vunpack.c.l.s4 1966171168
      %v7483 = vunpack.c.0.s8 %v7482
      %v7484 = vlaneseq
      %v7485 = vshrl.u32 %v7484, 7
      %v7486 = vsub.s32 %v7483, %v7485
      %v7487 = vrot.slane %v7423, %v7486
      %v7489 = vunpack.c.l.s4 1966171168
      %v7490 = vunpack.c.0.s8 %v7489
      %v7491 = vlaneseq
      %v7492 = vshrl.u32 %v7491, 7
      %v7493 = vsub.s32 %v7490, %v7492
      %v7494 = vrot.slane %v7487, %v7493
      %v7496 = vunpack.c.l.s4 1966171168
      %v7497 = vunpack.c.0.s8 %v7496
      %v7498 = vlaneseq
      %v7499 = vshrl.u32 %v7498, 7
      %v7500 = vsub.s32 %v7497, %v7499
      %v7501 = vrot.slane %v7424, %v7500
      %v7503 = vunpack.c.l.s4 1966171168
      %v7504 = vunpack.c.0.s8 %v7503
      %v7505 = vlaneseq
      %v7506 = vshrl.u32 %v7505, 7
      %v7507 = vsub.s32 %v7504, %v7506
      %v7508 = vrot.slane %v7501, %v7507
      %v7510 = vunpack.c.l.s4 1966171168
      %v7511 = vunpack.c.0.s8 %v7510
      %v7512 = vlaneseq
      %v7513 = vshrl.u32 %v7512, 7
      %v7514 = vsub.s32 %v7511, %v7513
      %v7515 = vrot.slane %v7425, %v7514
      %v7517 = vunpack.c.l.s4 1966171168
      %v7518 = vunpack.c.0.s8 %v7517
      %v7519 = vlaneseq
      %v7520 = vshrl.u32 %v7519, 7
      %v7521 = vsub.s32 %v7518, %v7520
      %v7522 = vrot.slane %v7515, %v7521
      %v7524 = vunpack.c.l.s4 1966171168
      %v7525 = vunpack.c.0.s8 %v7524
      %v7526 = vlaneseq
      %v7527 = vshrl.u32 %v7526, 7
      %v7528 = vsub.s32 %v7525, %v7527
      %v7529 = vrot.slane %v7426, %v7528
      %v7531 = vunpack.c.l.s4 1966171168
      %v7532 = vunpack.c.0.s8 %v7531
      %v7533 = vlaneseq
      %v7534 = vshrl.u32 %v7533, 7
      %v7535 = vsub.s32 %v7532, %v7534
      %v7536 = vrot.slane %v7529, %v7535
      %v7538 = vunpack.c.l.s4 1966171168
      %v7539 = vunpack.c.0.s8 %v7538
      %v7540 = vlaneseq
      %v7541 = vshrl.u32 %v7540, 7
      %v7542 = vsub.s32 %v7539, %v7541
      %v7543 = vrot.slane %v7427, %v7542
      %v7545 = vunpack.c.l.s4 1966171168
      %v7546 = vunpack.c.0.s8 %v7545
      %v7547 = vlaneseq
      %v7548 = vshrl.u32 %v7547, 7
      %v7549 = vsub.s32 %v7546, %v7548
      %v7550 = vrot.slane %v7543, %v7549
      %v7552 = vunpack.c.l.s4 1966171168
      %v7553 = vunpack.c.0.s8 %v7552
      %v7554 = vlaneseq
      %v7555 = vshrl.u32 %v7554, 7
      %v7556 = vsub.s32 %v7553, %v7555
      %v7557 = vrot.slane %v7428, %v7556
      %v7559 = vunpack.c.l.s4 1966171168
      %v7560 = vunpack.c.0.s8 %v7559
      %v7561 = vlaneseq
      %v7562 = vshrl.u32 %v7561, 7
      %v7563 = vsub.s32 %v7560, %v7562
      %v7564 = vrot.slane %v7557, %v7563
      %v7566 = vunpack.c.l.s4 1966171168
      %v7567 = vunpack.c.0.s8 %v7566
      %v7568 = vlaneseq
      %v7569 = vshrl.u32 %v7568, 7
      %v7570 = vsub.s32 %v7567, %v7569
      %v7571 = vrot.slane %v7429, %v7570
      %v7573 = vunpack.c.l.s4 1966171168
      %v7574 = vunpack.c.0.s8 %v7573
      %v7575 = vlaneseq
      %v7576 = vshrl.u32 %v7575, 7
      %v7577 = vsub.s32 %v7574, %v7576
      %v7578 = vrot.slane %v7571, %v7577
      %v7580 = vunpack.c.l.s4 1966171168
      %v7581 = vunpack.c.0.s8 %v7580
      %v7582 = vlaneseq
      %v7583 = vshrl.u32 %v7582, 7
      %v7584 = vsub.s32 %v7581, %v7583
      %v7585 = vrot.slane %v7430, %v7584
      %v7587 = vunpack.c.l.s4 1966171168
      %v7588 = vunpack.c.0.s8 %v7587
      %v7589 = vlaneseq
      %v7590 = vshrl.u32 %v7589, 7
      %v7591 = vsub.s32 %v7588, %v7590
      %v7592 = vrot.slane %v7585, %v7591
      %v7594 = vunpack.c.l.s4 1966171168
      %v7595 = vunpack.c.0.s8 %v7594
      %v7596 = vlaneseq
      %v7597 = vshrl.u32 %v7596, 7
      %v7598 = vsub.s32 %v7595, %v7597
      %v7599 = vrot.slane %v7431, %v7598
      %v7601 = vunpack.c.l.s4 1966171168
      %v7602 = vunpack.c.0.s8 %v7601
      %v7603 = vlaneseq
      %v7604 = vshrl.u32 %v7603, 7
      %v7605 = vsub.s32 %v7602, %v7604
      %v7606 = vrot.slane %v7599, %v7605
      %v7608 = vunpack.c.l.s4 1966171168
      %v7609 = vunpack.c.0.s8 %v7608
      %v7610 = vlaneseq
      %v7611 = vshrl.u32 %v7610, 7
      %v7612 = vsub.s32 %v7609, %v7611
      %v7613 = vrot.slane %v7432, %v7612
      %v7615 = vunpack.c.l.s4 1966171168
      %v7616 = vunpack.c.0.s8 %v7615
      %v7617 = vlaneseq
      %v7618 = vshrl.u32 %v7617, 7
      %v7619 = vsub.s32 %v7616, %v7618
      %v7620 = vrot.slane %v7613, %v7619
      %v7622 = vunpack.c.l.s4 1966171168
      %v7623 = vunpack.c.0.s8 %v7622
      %v7624 = vlaneseq
      %v7625 = vshrl.u32 %v7624, 7
      %v7626 = vsub.s32 %v7623, %v7625
      %v7627 = vrot.slane %v7433, %v7626
      %v7629 = vunpack.c.l.s4 1966171168
      %v7630 = vunpack.c.0.s8 %v7629
      %v7631 = vlaneseq
      %v7632 = vshrl.u32 %v7631, 7
      %v7633 = vsub.s32 %v7630, %v7632
      %v7634 = vrot.slane %v7627, %v7633
      %v7636 = vunpack.c.l.s4 1966171168
      %v7637 = vunpack.c.0.s8 %v7636
      %v7638 = vlaneseq
      %v7639 = vshrl.u32 %v7638, 7
      %v7640 = vsub.s32 %v7637, %v7639
      %v7641 = vrot.slane %v7434, %v7640
      %v7643 = vunpack.c.l.s4 1966171168
      %v7644 = vunpack.c.0.s8 %v7643
      %v7645 = vlaneseq
      %v7646 = vshrl.u32 %v7645, 7
      %v7647 = vsub.s32 %v7644, %v7646
      %v7648 = vrot.slane %v7641, %v7647
      %v7650 = vunpack.c.l.s4 1966171168
      %v7651 = vunpack.c.0.s8 %v7650
      %v7652 = vlaneseq
      %v7653 = vshrl.u32 %v7652, 7
      %v7654 = vsub.s32 %v7651, %v7653
      %v7655 = vrot.slane %v7435, %v7654
      %v7657 = vunpack.c.l.s4 1966171168
      %v7658 = vunpack.c.0.s8 %v7657
      %v7659 = vlaneseq
      %v7660 = vshrl.u32 %v7659, 7
      %v7661 = vsub.s32 %v7658, %v7660
      %v7662 = vrot.slane %v7655, %v7661
      %v7664 = vunpack.c.l.s4 1966171168
      %v7665 = vunpack.c.0.s8 %v7664
      %v7666 = vlaneseq
      %v7667 = vshrl.u32 %v7666, 7
      %v7668 = vsub.s32 %v7665, %v7667
      %v7669 = vrot.slane %v7436, %v7668
      %v7671 = vunpack.c.l.s4 1966171168
      %v7672 = vunpack.c.0.s8 %v7671
      %v7673 = vlaneseq
      %v7674 = vshrl.u32 %v7673, 7
      %v7675 = vsub.s32 %v7672, %v7674
      %v7676 = vrot.slane %v7669, %v7675
      %v7677 = vunpack.c.l.b16 %v7466
      %v7678 = vunpack.c.l.b16 %v7480
      %v7679 = vunpack.c.l.b16 %v7494
      %v7680 = vunpack.c.l.b16 %v7508
      %v7681 = vunpack.c.l.b16 %v7522
      %v7682 = vunpack.c.l.b16 %v7536
      %v7683 = vunpack.c.l.b16 %v7550
      %v7684 = vunpack.c.l.b16 %v7564
      %v7685 = vunpack.c.l.b16 %v7578
      %v7686 = vunpack.c.l.b16 %v7592
      %v7687 = vunpack.c.l.b16 %v7606
      %v7688 = vunpack.c.l.b16 %v7620
      %v7689 = vunpack.c.l.b16 %v7634
      %v7690 = vunpack.c.l.b16 %v7648
      %v7691 = vunpack.c.l.b16 %v7662
      %v7692 = vunpack.c.l.b16 %v7676
      %v7693 = vrot.slane %v7677, 1
      %v7694 = vsel %vm343, %v7678, %v7693
      %v7695 = vrot.slane %v7679, 7
      %v7696 = vsel %vm346, %v7695, %v7694
      %v7697 = vrot.slane %v7680, 6
      %v7698 = vsel %vm349, %v7697, %v7696
      %v7699 = vrot.slane %v7681, 5
      %v7700 = vsel %vm616, %v7699, %v7698
      %v7701 = vrot.slane %v7682, 4
      %v7702 = vsel %vm619, %v7701, %v7700
      %v7703 = vrot.slane %v7683, 3
      %v7704 = vsel %vm622, %v7703, %v7702
      %v7705 = vrot.slane %v7684, 2
      %v7706 = vsel %vm625, %v7705, %v7704
      %v7707 = vrot.slane %v7685, 1
      %v7708 = vsel %vm343, %v7686, %v7707
      %v7709 = vrot.slane %v7687, 7
      %v7710 = vsel %vm346, %v7709, %v7708
      %v7711 = vrot.slane %v7688, 6
      %v7712 = vsel %vm349, %v7711, %v7710
      %v7713 = vrot.slane %v7689, 5
      %v7714 = vsel %vm616, %v7713, %v7712
      %v7715 = vrot.slane %v7690, 4
      %v7716 = vsel %vm619, %v7715, %v7714
      %v7717 = vrot.slane %v7691, 3
      %v7718 = vsel %vm622, %v7717, %v7716
      %v7719 = vrot.slane %v7692, 2
      %v7720 = vsel %vm625, %v7719, %v7718
      %v7721 = vpack.c.b16 %v7720, %v7706
      %v7724 = vsel %vm1298, %v7363, 0
      %7726 = vmatprep.subr.bf16.mxu0 0
      %7727 = vmatpush1.bf16.msra.mxu0 0
      %7728 = vmatprep.subr.bf16.mxu0 0
      %7729 = vmatpush1.bf16.msra.mxu0 0
      %7730 = vmatprep.subr.bf16.mxu0 0
      %7731 = vmatpush1.bf16.msra.mxu0 0
      %7732 = vmatprep.subr.bf16.mxu0 0
      %7733 = vmatpush1.bf16.msra.mxu0 0
      %7734 = vmatprep.subr.bf16.mxu0 0
      %7735 = vmatpush1.bf16.msra.mxu0 0
      %7736 = vmatprep.subr.bf16.mxu0 0
      %7737 = vmatpush1.bf16.msra.mxu0 0
      %7738 = vmatprep.subr.bf16.mxu0 0
      %7739 = vmatpush1.bf16.msra.mxu0 0
      %7740 = vmatprep.subr.bf16.mxu0 0
      %7741 = vmatpush1.bf16.msra.mxu0 %v7721
      %7742 = vmatprep.subr.bf16.mxu0 0
      %7743 = vmatpush2.bf16.msra.mxu0 0
      %7744 = vmatprep.subr.bf16.mxu0 0
      %7745 = vmatpush2.bf16.msra.mxu0 0
      %7746 = vmatprep.subr.bf16.mxu0 0
      %7747 = vmatpush2.bf16.msra.mxu0 0
      %7748 = vmatprep.subr.bf16.mxu0 0
      %7749 = vmatpush2.bf16.msra.mxu0 0
      %7750 = vmatprep.subr.bf16.mxu0 0
      %7751 = vmatpush2.bf16.msra.mxu0 0
      %7752 = vmatprep.subr.bf16.mxu0 0
      %7753 = vmatpush2.bf16.msra.mxu0 0
      %7754 = vmatprep.subr.bf16.mxu0 0
      %7755 = vmatpush2.bf16.msra.mxu0 0
      %7756 = vmatprep.subr.bf16.mxu0 0
      %7757 = vmatpush2.bf16.msra.mxu0 0
      %7758 = vmatprep.mubr.bf16.mxu0 0
      %7759 = vmatmul.mubr.bf16.gmra.mxu0 %v7724
      %v7760 = vpop.f32.mrf.mxu0
      %v7761 = vadd.f32 0.0, %v7760
      %v7762 = vpop.f32.mrf.mxu0
      %v7763 = vpop.f32.mrf.mxu0
      %v7764 = vpop.f32.mrf.mxu0
      %7765 = vdwg.mxu0
      %v7766 = vadd.f32 %v7193, %v7761
      %v7767 = vld [vmem:[%s0] sm:$0x4]
      %v7769 = vpack.i.b16 %v7767, %v7767
      %v7771 = vlaneseq
      %v7772 = vshrl.u32 %v7771, 7
      %v7773 = vsub.s32 2, %v7772
      %v7774 = vrot.slane %v7769, %v7773
      %v7777 = vunpack.c.l.s4 1966171168
      %v7778 = vunpack.c.0.s8 %v7777
      %v7779 = vlaneseq
      %v7780 = vshrl.u32 %v7779, 7
      %v7781 = vsub.s32 %v7778, %v7780
      %v7782 = vrot.slane %v7774, %v7781
      %v7783 = vcombine.high %v7782, %v7782
      %v7785 = vunpack.c.l.s4 1966171168
      %v7786 = vunpack.c.0.s8 %v7785
      %v7787 = vlaneseq
      %v7788 = vshrl.u32 %v7787, 7
      %v7789 = vsub.s32 %v7786, %v7788
      %v7790 = vrot.slane %v7782, %v7789
      %v7792 = vunpack.c.l.s4 1966171168
      %v7793 = vunpack.c.0.s8 %v7792
      %v7794 = vlaneseq
      %v7795 = vshrl.u32 %v7794, 7
      %v7796 = vsub.s32 %v7793, %v7795
      %v7797 = vrot.slane %v7783, %v7796
      %v7799 = vshll.u32 %v7790, 16
      %v7802 = vshll.u32 %v7797, 16
      %v7808 = vmul.bf16 %v5157, %v7799
      %v7809 = vmul.bf16 %v5158, %v7790
      %v7810 = vmul.bf16 %v5159, %v7802
      %v7811 = vmul.bf16 %v5160, %v7797
      %v7817 = vunpack.c.l.s4 1966171168
      %v7818 = vunpack.c.0.s8 %v7817
      %v7819 = vlaneseq
      %v7820 = vshrl.u32 %v7819, 7
      %v7821 = vsub.s32 %v7818, %v7820
      %v7822 = vrot.slane %v7808, %v7821
      %v7824 = vunpack.c.l.s4 1966171168
      %v7825 = vunpack.c.0.s8 %v7824
      %v7826 = vlaneseq
      %v7827 = vshrl.u32 %v7826, 7
      %v7828 = vsub.s32 %v7825, %v7827
      %v7829 = vrot.slane %v7822, %v7828
      %v7831 = vunpack.c.l.s4 1966171168
      %v7832 = vunpack.c.0.s8 %v7831
      %v7833 = vlaneseq
      %v7834 = vshrl.u32 %v7833, 7
      %v7835 = vsub.s32 %v7832, %v7834
      %v7836 = vrot.slane %v7809, %v7835
      %v7838 = vunpack.c.l.s4 1966171168
      %v7839 = vunpack.c.0.s8 %v7838
      %v7840 = vlaneseq
      %v7841 = vshrl.u32 %v7840, 7
      %v7842 = vsub.s32 %v7839, %v7841
      %v7843 = vrot.slane %v7836, %v7842
      %v7845 = vunpack.c.l.s4 1966171168
      %v7846 = vunpack.c.0.s8 %v7845
      %v7847 = vlaneseq
      %v7848 = vshrl.u32 %v7847, 7
      %v7849 = vsub.s32 %v7846, %v7848
      %v7850 = vrot.slane %v7810, %v7849
      %v7852 = vunpack.c.l.s4 1966171168
      %v7853 = vunpack.c.0.s8 %v7852
      %v7854 = vlaneseq
      %v7855 = vshrl.u32 %v7854, 7
      %v7856 = vsub.s32 %v7853, %v7855
      %v7857 = vrot.slane %v7850, %v7856
      %v7859 = vunpack.c.l.s4 1966171168
      %v7860 = vunpack.c.0.s8 %v7859
      %v7861 = vlaneseq
      %v7862 = vshrl.u32 %v7861, 7
      %v7863 = vsub.s32 %v7860, %v7862
      %v7864 = vrot.slane %v7811, %v7863
      %v7866 = vunpack.c.l.s4 1966171168
      %v7867 = vunpack.c.0.s8 %v7866
      %v7868 = vlaneseq
      %v7869 = vshrl.u32 %v7868, 7
      %v7870 = vsub.s32 %v7867, %v7869
      %v7871 = vrot.slane %v7864, %v7870
      %v7872 = vunpack.c.l.b16 %v7829
      %v7873 = vunpack.c.l.b16 %v7843
      %v7874 = vunpack.c.l.b16 %v7857
      %v7875 = vunpack.c.l.b16 %v7871
      %v7876 = vrot.slane %v7872, 1
      %v7877 = vsel %vm343, %v7873, %v7876
      %v7878 = vrot.slane %v7874, 7
      %v7879 = vsel %vm346, %v7878, %v7877
      %v7880 = vrot.slane %v7875, 6
      %v7881 = vsel %vm349, %v7880, %v7879
      %v7882 = vpack.c.b16 %v7881, %v7881
      %7884 = vmatprep.subr.bf16.mxu0 0
      %7885 = vmatpush1.bf16.xpose.msra.mxu0 0
      %7886 = vmatprep.subr.bf16.mxu0 0
      %7887 = vmatpush1.bf16.xpose.msra.mxu0 0
      %7888 = vmatprep.subr.bf16.mxu0 0
      %7889 = vmatpush1.bf16.xpose.msra.mxu0 0
      %7890 = vmatprep.subr.bf16.mxu0 0
      %7891 = vmatpush1.bf16.xpose.msra.mxu0 0
      %7892 = vmatprep.subr.bf16.mxu0 0
      %7893 = vmatpush1.bf16.xpose.msra.mxu0 0
      %7894 = vmatprep.subr.bf16.mxu0 0
      %7895 = vmatpush1.bf16.xpose.msra.mxu0 0
      %7896 = vmatprep.subr.bf16.mxu0 0
      %7897 = vmatpush1.bf16.xpose.msra.mxu0 0
      %7898 = vmatprep.subr.bf16.mxu0 0
      %7899 = vmatpush1.bf16.xpose.msra.mxu0 %v5594
      %7900 = vmatprep.subr.bf16.mxu0 0
      %7901 = vmatpush2.bf16.xpose.msra.mxu0 0
      %7902 = vmatprep.subr.bf16.mxu0 0
      %7903 = vmatpush2.bf16.xpose.msra.mxu0 0
      %7904 = vmatprep.subr.bf16.mxu0 0
      %7905 = vmatpush2.bf16.xpose.msra.mxu0 0
      %7906 = vmatprep.subr.bf16.mxu0 0
      %7907 = vmatpush2.bf16.xpose.msra.mxu0 0
      %7908 = vmatprep.subr.bf16.mxu0 0
      %7909 = vmatpush2.bf16.xpose.msra.mxu0 0
      %7910 = vmatprep.subr.bf16.mxu0 0
      %7911 = vmatpush2.bf16.xpose.msra.mxu0 0
      %7912 = vmatprep.subr.bf16.mxu0 0
      %7913 = vmatpush2.bf16.xpose.msra.mxu0 0
      %7914 = vmatprep.subr.bf16.mxu0 0
      %7915 = vmatpush2.bf16.xpose.msra.mxu0 0
      %7916 = vmatprep.mubr.bf16.mxu0 0
      %7917 = vmatmul.mubr.bf16.gmra.mxu0 %v7882
      %v7918 = vpop.f32.mrf.mxu0
      %v7919 = vadd.f32 0.0, %v7918
      %v7920 = vpop.f32.mrf.mxu0
      %v7921 = vpop.f32.mrf.mxu0
      %v7922 = vpop.f32.mrf.mxu0
      %7923 = vdwg.mxu0
      %v7924 = vsel %vm683, %v7919, -inf
      %7925 = vmax.xlane.f32.xlu0 %v7924
      %v7926 = vpop.xlane.xlu0 %7925
      %v7927 = vsub.f32 %v7919, %v7926
      %v7928 = vmul.f32 %v7927, 1.442695
      %v7929 = vpow.pop %v7928
      %v7930 = vsel %vm683, %v7929, 0.0
      %7931 = vadd.xlane.f32.xlu0 %v7930
      %v7932 = vpop.xlane.xlu0 %7931
      %v7933 = vrcp.pop %v7932
      %v7934 = vmul.f32 %v7929, %v7933
      %v7935 = vpack.c.bf16 %v7934, %v7934
      %v7936 = vcombine.high %v7774, %v7774
      %v7938 = vunpack.c.l.s4 1966171168
      %v7939 = vunpack.c.0.s8 %v7938
      %v7940 = vlaneseq
      %v7941 = vshrl.u32 %v7940, 7
      %v7942 = vsub.s32 %v7939, %v7941
      %v7943 = vrot.slane %v7936, %v7942
      %v7944 = vcombine.high %v7943, %v7943
      %v7946 = vunpack.c.l.s4 1966171168
      %v7947 = vunpack.c.0.s8 %v7946
      %v7948 = vlaneseq
      %v7949 = vshrl.u32 %v7948, 7
      %v7950 = vsub.s32 %v7947, %v7949
      %v7951 = vrot.slane %v7943, %v7950
      %v7953 = vunpack.c.l.s4 1966171168
      %v7954 = vunpack.c.0.s8 %v7953
      %v7955 = vlaneseq
      %v7956 = vshrl.u32 %v7955, 7
      %v7957 = vsub.s32 %v7954, %v7956
      %v7958 = vrot.slane %v7944, %v7957
      %v7959 = vcombine.high %v7790, %v7790
      %v7960 = vcombine.high %v7951, %v7951
      %v7961 = vcombine.high %v7797, %v7797
      %v7962 = vcombine.high %v7958, %v7958
      %v7964 = vshll.u32 %v7959, 16
      %v7967 = vshll.u32 %v7961, 16
      %v7970 = vshll.u32 %v7951, 16
      %v7973 = vshll.u32 %v7958, 16
      %v7976 = vshll.u32 %v7960, 16
      %v7979 = vshll.u32 %v7962, 16
      %v7993 = vmul.bf16 %v5177, %v7799
      %v7994 = vmul.bf16 %v5178, %v7790
      %v7995 = vmul.bf16 %v5179, %v7802
      %v7996 = vmul.bf16 %v5180, %v7797
      %v7997 = vmul.bf16 %v5181, %v7964
      %v7998 = vmul.bf16 %v5182, %v7959
      %v7999 = vmul.bf16 %v5183, %v7967
      %v8000 = vmul.bf16 %v5184, %v7961
      %v8001 = vmul.bf16 %v5185, %v7970
      %v8002 = vmul.bf16 %v5186, %v7951
      %v8003 = vmul.bf16 %v5187, %v7973
      %v8004 = vmul.bf16 %v5188, %v7958
      %v8005 = vmul.bf16 %v5189, %v7976
      %v8006 = vmul.bf16 %v5190, %v7960
      %v8007 = vmul.bf16 %v5191, %v7979
      %v8008 = vmul.bf16 %v5192, %v7962
      %v8026 = vunpack.c.l.s4 1966171168
      %v8027 = vunpack.c.0.s8 %v8026
      %v8028 = vlaneseq
      %v8029 = vshrl.u32 %v8028, 7
      %v8030 = vsub.s32 %v8027, %v8029
      %v8031 = vrot.slane %v7993, %v8030
      %v8033 = vunpack.c.l.s4 1966171168
      %v8034 = vunpack.c.0.s8 %v8033
      %v8035 = vlaneseq
      %v8036 = vshrl.u32 %v8035, 7
      %v8037 = vsub.s32 %v8034, %v8036
      %v8038 = vrot.slane %v8031, %v8037
      %v8040 = vunpack.c.l.s4 1966171168
      %v8041 = vunpack.c.0.s8 %v8040
      %v8042 = vlaneseq
      %v8043 = vshrl.u32 %v8042, 7
      %v8044 = vsub.s32 %v8041, %v8043
      %v8045 = vrot.slane %v7994, %v8044
      %v8047 = vunpack.c.l.s4 1966171168
      %v8048 = vunpack.c.0.s8 %v8047
      %v8049 = vlaneseq
      %v8050 = vshrl.u32 %v8049, 7
      %v8051 = vsub.s32 %v8048, %v8050
      %v8052 = vrot.slane %v8045, %v8051
      %v8054 = vunpack.c.l.s4 1966171168
      %v8055 = vunpack.c.0.s8 %v8054
      %v8056 = vlaneseq
      %v8057 = vshrl.u32 %v8056, 7
      %v8058 = vsub.s32 %v8055, %v8057
      %v8059 = vrot.slane %v7995, %v8058
      %v8061 = vunpack.c.l.s4 1966171168
      %v8062 = vunpack.c.0.s8 %v8061
      %v8063 = vlaneseq
      %v8064 = vshrl.u32 %v8063, 7
      %v8065 = vsub.s32 %v8062, %v8064
      %v8066 = vrot.slane %v8059, %v8065
      %v8068 = vunpack.c.l.s4 1966171168
      %v8069 = vunpack.c.0.s8 %v8068
      %v8070 = vlaneseq
      %v8071 = vshrl.u32 %v8070, 7
      %v8072 = vsub.s32 %v8069, %v8071
      %v8073 = vrot.slane %v7996, %v8072
      %v8075 = vunpack.c.l.s4 1966171168
      %v8076 = vunpack.c.0.s8 %v8075
      %v8077 = vlaneseq
      %v8078 = vshrl.u32 %v8077, 7
      %v8079 = vsub.s32 %v8076, %v8078
      %v8080 = vrot.slane %v8073, %v8079
      %v8082 = vunpack.c.l.s4 1966171168
      %v8083 = vunpack.c.0.s8 %v8082
      %v8084 = vlaneseq
      %v8085 = vshrl.u32 %v8084, 7
      %v8086 = vsub.s32 %v8083, %v8085
      %v8087 = vrot.slane %v7997, %v8086
      %v8089 = vunpack.c.l.s4 1966171168
      %v8090 = vunpack.c.0.s8 %v8089
      %v8091 = vlaneseq
      %v8092 = vshrl.u32 %v8091, 7
      %v8093 = vsub.s32 %v8090, %v8092
      %v8094 = vrot.slane %v8087, %v8093
      %v8096 = vunpack.c.l.s4 1966171168
      %v8097 = vunpack.c.0.s8 %v8096
      %v8098 = vlaneseq
      %v8099 = vshrl.u32 %v8098, 7
      %v8100 = vsub.s32 %v8097, %v8099
      %v8101 = vrot.slane %v7998, %v8100
      %v8103 = vunpack.c.l.s4 1966171168
      %v8104 = vunpack.c.0.s8 %v8103
      %v8105 = vlaneseq
      %v8106 = vshrl.u32 %v8105, 7
      %v8107 = vsub.s32 %v8104, %v8106
      %v8108 = vrot.slane %v8101, %v8107
      %v8110 = vunpack.c.l.s4 1966171168
      %v8111 = vunpack.c.0.s8 %v8110
      %v8112 = vlaneseq
      %v8113 = vshrl.u32 %v8112, 7
      %v8114 = vsub.s32 %v8111, %v8113
      %v8115 = vrot.slane %v7999, %v8114
      %v8117 = vunpack.c.l.s4 1966171168
      %v8118 = vunpack.c.0.s8 %v8117
      %v8119 = vlaneseq
      %v8120 = vshrl.u32 %v8119, 7
      %v8121 = vsub.s32 %v8118, %v8120
      %v8122 = vrot.slane %v8115, %v8121
      %v8124 = vunpack.c.l.s4 1966171168
      %v8125 = vunpack.c.0.s8 %v8124
      %v8126 = vlaneseq
      %v8127 = vshrl.u32 %v8126, 7
      %v8128 = vsub.s32 %v8125, %v8127
      %v8129 = vrot.slane %v8000, %v8128
      %v8131 = vunpack.c.l.s4 1966171168
      %v8132 = vunpack.c.0.s8 %v8131
      %v8133 = vlaneseq
      %v8134 = vshrl.u32 %v8133, 7
      %v8135 = vsub.s32 %v8132, %v8134
      %v8136 = vrot.slane %v8129, %v8135
      %v8138 = vunpack.c.l.s4 1966171168
      %v8139 = vunpack.c.0.s8 %v8138
      %v8140 = vlaneseq
      %v8141 = vshrl.u32 %v8140, 7
      %v8142 = vsub.s32 %v8139, %v8141
      %v8143 = vrot.slane %v8001, %v8142
      %v8145 = vunpack.c.l.s4 1966171168
      %v8146 = vunpack.c.0.s8 %v8145
      %v8147 = vlaneseq
      %v8148 = vshrl.u32 %v8147, 7
      %v8149 = vsub.s32 %v8146, %v8148
      %v8150 = vrot.slane %v8143, %v8149
      %v8152 = vunpack.c.l.s4 1966171168
      %v8153 = vunpack.c.0.s8 %v8152
      %v8154 = vlaneseq
      %v8155 = vshrl.u32 %v8154, 7
      %v8156 = vsub.s32 %v8153, %v8155
      %v8157 = vrot.slane %v8002, %v8156
      %v8159 = vunpack.c.l.s4 1966171168
      %v8160 = vunpack.c.0.s8 %v8159
      %v8161 = vlaneseq
      %v8162 = vshrl.u32 %v8161, 7
      %v8163 = vsub.s32 %v8160, %v8162
      %v8164 = vrot.slane %v8157, %v8163
      %v8166 = vunpack.c.l.s4 1966171168
      %v8167 = vunpack.c.0.s8 %v8166
      %v8168 = vlaneseq
      %v8169 = vshrl.u32 %v8168, 7
      %v8170 = vsub.s32 %v8167, %v8169
      %v8171 = vrot.slane %v8003, %v8170
      %v8173 = vunpack.c.l.s4 1966171168
      %v8174 = vunpack.c.0.s8 %v8173
      %v8175 = vlaneseq
      %v8176 = vshrl.u32 %v8175, 7
      %v8177 = vsub.s32 %v8174, %v8176
      %v8178 = vrot.slane %v8171, %v8177
      %v8180 = vunpack.c.l.s4 1966171168
      %v8181 = vunpack.c.0.s8 %v8180
      %v8182 = vlaneseq
      %v8183 = vshrl.u32 %v8182, 7
      %v8184 = vsub.s32 %v8181, %v8183
      %v8185 = vrot.slane %v8004, %v8184
      %v8187 = vunpack.c.l.s4 1966171168
      %v8188 = vunpack.c.0.s8 %v8187
      %v8189 = vlaneseq
      %v8190 = vshrl.u32 %v8189, 7
      %v8191 = vsub.s32 %v8188, %v8190
      %v8192 = vrot.slane %v8185, %v8191
      %v8194 = vunpack.c.l.s4 1966171168
      %v8195 = vunpack.c.0.s8 %v8194
      %v8196 = vlaneseq
      %v8197 = vshrl.u32 %v8196, 7
      %v8198 = vsub.s32 %v8195, %v8197
      %v8199 = vrot.slane %v8005, %v8198
      %v8201 = vunpack.c.l.s4 1966171168
      %v8202 = vunpack.c.0.s8 %v8201
      %v8203 = vlaneseq
      %v8204 = vshrl.u32 %v8203, 7
      %v8205 = vsub.s32 %v8202, %v8204
      %v8206 = vrot.slane %v8199, %v8205
      %v8208 = vunpack.c.l.s4 1966171168
      %v8209 = vunpack.c.0.s8 %v8208
      %v8210 = vlaneseq
      %v8211 = vshrl.u32 %v8210, 7
      %v8212 = vsub.s32 %v8209, %v8211
      %v8213 = vrot.slane %v8006, %v8212
      %v8215 = vunpack.c.l.s4 1966171168
      %v8216 = vunpack.c.0.s8 %v8215
      %v8217 = vlaneseq
      %v8218 = vshrl.u32 %v8217, 7
      %v8219 = vsub.s32 %v8216, %v8218
      %v8220 = vrot.slane %v8213, %v8219
      %v8222 = vunpack.c.l.s4 1966171168
      %v8223 = vunpack.c.0.s8 %v8222
      %v8224 = vlaneseq
      %v8225 = vshrl.u32 %v8224, 7
      %v8226 = vsub.s32 %v8223, %v8225
      %v8227 = vrot.slane %v8007, %v8226
      %v8229 = vunpack.c.l.s4 1966171168
      %v8230 = vunpack.c.0.s8 %v8229
      %v8231 = vlaneseq
      %v8232 = vshrl.u32 %v8231, 7
      %v8233 = vsub.s32 %v8230, %v8232
      %v8234 = vrot.slane %v8227, %v8233
      %v8236 = vunpack.c.l.s4 1966171168
      %v8237 = vunpack.c.0.s8 %v8236
      %v8238 = vlaneseq
      %v8239 = vshrl.u32 %v8238, 7
      %v8240 = vsub.s32 %v8237, %v8239
      %v8241 = vrot.slane %v8008, %v8240
      %v8243 = vunpack.c.l.s4 1966171168
      %v8244 = vunpack.c.0.s8 %v8243
      %v8245 = vlaneseq
      %v8246 = vshrl.u32 %v8245, 7
      %v8247 = vsub.s32 %v8244, %v8246
      %v8248 = vrot.slane %v8241, %v8247
      %v8249 = vunpack.c.l.b16 %v8038
      %v8250 = vunpack.c.l.b16 %v8052
      %v8251 = vunpack.c.l.b16 %v8066
      %v8252 = vunpack.c.l.b16 %v8080
      %v8253 = vunpack.c.l.b16 %v8094
      %v8254 = vunpack.c.l.b16 %v8108
      %v8255 = vunpack.c.l.b16 %v8122
      %v8256 = vunpack.c.l.b16 %v8136
      %v8257 = vunpack.c.l.b16 %v8150
      %v8258 = vunpack.c.l.b16 %v8164
      %v8259 = vunpack.c.l.b16 %v8178
      %v8260 = vunpack.c.l.b16 %v8192
      %v8261 = vunpack.c.l.b16 %v8206
      %v8262 = vunpack.c.l.b16 %v8220
      %v8263 = vunpack.c.l.b16 %v8234
      %v8264 = vunpack.c.l.b16 %v8248
      %v8265 = vrot.slane %v8249, 1
      %v8266 = vsel %vm343, %v8250, %v8265
      %v8267 = vrot.slane %v8251, 7
      %v8268 = vsel %vm346, %v8267, %v8266
      %v8269 = vrot.slane %v8252, 6
      %v8270 = vsel %vm349, %v8269, %v8268
      %v8271 = vrot.slane %v8253, 5
      %v8272 = vsel %vm616, %v8271, %v8270
      %v8273 = vrot.slane %v8254, 4
      %v8274 = vsel %vm619, %v8273, %v8272
      %v8275 = vrot.slane %v8255, 3
      %v8276 = vsel %vm622, %v8275, %v8274
      %v8277 = vrot.slane %v8256, 2
      %v8278 = vsel %vm625, %v8277, %v8276
      %v8279 = vrot.slane %v8257, 1
      %v8280 = vsel %vm343, %v8258, %v8279
      %v8281 = vrot.slane %v8259, 7
      %v8282 = vsel %vm346, %v8281, %v8280
      %v8283 = vrot.slane %v8260, 6
      %v8284 = vsel %vm349, %v8283, %v8282
      %v8285 = vrot.slane %v8261, 5
      %v8286 = vsel %vm616, %v8285, %v8284
      %v8287 = vrot.slane %v8262, 4
      %v8288 = vsel %vm619, %v8287, %v8286
      %v8289 = vrot.slane %v8263, 3
      %v8290 = vsel %vm622, %v8289, %v8288
      %v8291 = vrot.slane %v8264, 2
      %v8292 = vsel %vm625, %v8291, %v8290
      %v8293 = vpack.c.b16 %v8292, %v8278
      %v8296 = vsel %vm1298, %v7935, 0
      %8298 = vmatprep.subr.bf16.mxu0 0
      %8299 = vmatpush1.bf16.msra.mxu0 0
      %8300 = vmatprep.subr.bf16.mxu0 0
      %8301 = vmatpush1.bf16.msra.mxu0 0
      %8302 = vmatprep.subr.bf16.mxu0 0
      %8303 = vmatpush1.bf16.msra.mxu0 0
      %8304 = vmatprep.subr.bf16.mxu0 0
      %8305 = vmatpush1.bf16.msra.mxu0 0
      %8306 = vmatprep.subr.bf16.mxu0 0
      %8307 = vmatpush1.bf16.msra.mxu0 0
      %8308 = vmatprep.subr.bf16.mxu0 0
      %8309 = vmatpush1.bf16.msra.mxu0 0
      %8310 = vmatprep.subr.bf16.mxu0 0
      %8311 = vmatpush1.bf16.msra.mxu0 0
      %8312 = vmatprep.subr.bf16.mxu0 0
      %8313 = vmatpush1.bf16.msra.mxu0 %v8293
      %8314 = vmatprep.subr.bf16.mxu0 0
      %8315 = vmatpush2.bf16.msra.mxu0 0
      %8316 = vmatprep.subr.bf16.mxu0 0
      %8317 = vmatpush2.bf16.msra.mxu0 0
      %8318 = vmatprep.subr.bf16.mxu0 0
      %8319 = vmatpush2.bf16.msra.mxu0 0
      %8320 = vmatprep.subr.bf16.mxu0 0
      %8321 = vmatpush2.bf16.msra.mxu0 0
      %8322 = vmatprep.subr.bf16.mxu0 0
      %8323 = vmatpush2.bf16.msra.mxu0 0
      %8324 = vmatprep.subr.bf16.mxu0 0
      %8325 = vmatpush2.bf16.msra.mxu0 0
      %8326 = vmatprep.subr.bf16.mxu0 0
      %8327 = vmatpush2.bf16.msra.mxu0 0
      %8328 = vmatprep.subr.bf16.mxu0 0
      %8329 = vmatpush2.bf16.msra.mxu0 0
      %8330 = vmatprep.mubr.bf16.mxu0 0
      %8331 = vmatmul.mubr.bf16.gmra.mxu0 %v8296
      %v8332 = vpop.f32.mrf.mxu0
      %v8333 = vadd.f32 0.0, %v8332
      %v8334 = vpop.f32.mrf.mxu0
      %v8335 = vpop.f32.mrf.mxu0
      %v8336 = vpop.f32.mrf.mxu0
      %8337 = vdwg.mxu0
      %v8338 = vadd.f32 %v7766, %v8333
      %v8339 = vld [vmem:[%s0] sm:$0x4]
      %v8341 = vshrl.u32 %v8339, 16
      %v8342 = vpack.i.b16 %v8341, %v8341
      %v8344 = vlaneseq
      %v8345 = vshrl.u32 %v8344, 7
      %v8346 = vsub.s32 2, %v8345
      %v8347 = vrot.slane %v8342, %v8346
      %v8350 = vunpack.c.l.s4 1966171168
      %v8351 = vunpack.c.0.s8 %v8350
      %v8352 = vlaneseq
      %v8353 = vshrl.u32 %v8352, 7
      %v8354 = vsub.s32 %v8351, %v8353
      %v8355 = vrot.slane %v8347, %v8354
      %v8356 = vcombine.high %v8355, %v8355
      %v8358 = vunpack.c.l.s4 1966171168
      %v8359 = vunpack.c.0.s8 %v8358
      %v8360 = vlaneseq
      %v8361 = vshrl.u32 %v8360, 7
      %v8362 = vsub.s32 %v8359, %v8361
      %v8363 = vrot.slane %v8355, %v8362
      %v8365 = vunpack.c.l.s4 1966171168
      %v8366 = vunpack.c.0.s8 %v8365
      %v8367 = vlaneseq
      %v8368 = vshrl.u32 %v8367, 7
      %v8369 = vsub.s32 %v8366, %v8368
      %v8370 = vrot.slane %v8356, %v8369
      %v8372 = vshll.u32 %v8363, 16
      %v8375 = vshll.u32 %v8370, 16
      %v8381 = vmul.bf16 %v5157, %v8372
      %v8382 = vmul.bf16 %v5158, %v8363
      %v8383 = vmul.bf16 %v5159, %v8375
      %v8384 = vmul.bf16 %v5160, %v8370
      %v8390 = vunpack.c.l.s4 1966171168
      %v8391 = vunpack.c.0.s8 %v8390
      %v8392 = vlaneseq
      %v8393 = vshrl.u32 %v8392, 7
      %v8394 = vsub.s32 %v8391, %v8393
      %v8395 = vrot.slane %v8381, %v8394
      %v8397 = vunpack.c.l.s4 1966171168
      %v8398 = vunpack.c.0.s8 %v8397
      %v8399 = vlaneseq
      %v8400 = vshrl.u32 %v8399, 7
      %v8401 = vsub.s32 %v8398, %v8400
      %v8402 = vrot.slane %v8395, %v8401
      %v8404 = vunpack.c.l.s4 1966171168
      %v8405 = vunpack.c.0.s8 %v8404
      %v8406 = vlaneseq
      %v8407 = vshrl.u32 %v8406, 7
      %v8408 = vsub.s32 %v8405, %v8407
      %v8409 = vrot.slane %v8382, %v8408
      %v8411 = vunpack.c.l.s4 1966171168
      %v8412 = vunpack.c.0.s8 %v8411
      %v8413 = vlaneseq
      %v8414 = vshrl.u32 %v8413, 7
      %v8415 = vsub.s32 %v8412, %v8414
      %v8416 = vrot.slane %v8409, %v8415
      %v8418 = vunpack.c.l.s4 1966171168
      %v8419 = vunpack.c.0.s8 %v8418
      %v8420 = vlaneseq
      %v8421 = vshrl.u32 %v8420, 7
      %v8422 = vsub.s32 %v8419, %v8421
      %v8423 = vrot.slane %v8383, %v8422
      %v8425 = vunpack.c.l.s4 1966171168
      %v8426 = vunpack.c.0.s8 %v8425
      %v8427 = vlaneseq
      %v8428 = vshrl.u32 %v8427, 7
      %v8429 = vsub.s32 %v8426, %v8428
      %v8430 = vrot.slane %v8423, %v8429
      %v8432 = vunpack.c.l.s4 1966171168
      %v8433 = vunpack.c.0.s8 %v8432
      %v8434 = vlaneseq
      %v8435 = vshrl.u32 %v8434, 7
      %v8436 = vsub.s32 %v8433, %v8435
      %v8437 = vrot.slane %v8384, %v8436
      %v8439 = vunpack.c.l.s4 1966171168
      %v8440 = vunpack.c.0.s8 %v8439
      %v8441 = vlaneseq
      %v8442 = vshrl.u32 %v8441, 7
      %v8443 = vsub.s32 %v8440, %v8442
      %v8444 = vrot.slane %v8437, %v8443
      %v8445 = vunpack.c.l.b16 %v8402
      %v8446 = vunpack.c.l.b16 %v8416
      %v8447 = vunpack.c.l.b16 %v8430
      %v8448 = vunpack.c.l.b16 %v8444
      %v8449 = vrot.slane %v8445, 1
      %v8450 = vsel %vm343, %v8446, %v8449
      %v8451 = vrot.slane %v8447, 7
      %v8452 = vsel %vm346, %v8451, %v8450
      %v8453 = vrot.slane %v8448, 6
      %v8454 = vsel %vm349, %v8453, %v8452
      %v8455 = vpack.c.b16 %v8454, %v8454
      %8457 = vmatprep.subr.bf16.mxu0 0
      %8458 = vmatpush1.bf16.xpose.msra.mxu0 0
      %8459 = vmatprep.subr.bf16.mxu0 0
      %8460 = vmatpush1.bf16.xpose.msra.mxu0 0
      %8461 = vmatprep.subr.bf16.mxu0 0
      %8462 = vmatpush1.bf16.xpose.msra.mxu0 0
      %8463 = vmatprep.subr.bf16.mxu0 0
      %8464 = vmatpush1.bf16.xpose.msra.mxu0 0
      %8465 = vmatprep.subr.bf16.mxu0 0
      %8466 = vmatpush1.bf16.xpose.msra.mxu0 0
      %8467 = vmatprep.subr.bf16.mxu0 0
      %8468 = vmatpush1.bf16.xpose.msra.mxu0 0
      %8469 = vmatprep.subr.bf16.mxu0 0
      %8470 = vmatpush1.bf16.xpose.msra.mxu0 0
      %8471 = vmatprep.subr.bf16.mxu0 0
      %8472 = vmatpush1.bf16.xpose.msra.mxu0 %v5594
      %8473 = vmatprep.subr.bf16.mxu0 0
      %8474 = vmatpush2.bf16.xpose.msra.mxu0 0
      %8475 = vmatprep.subr.bf16.mxu0 0
      %8476 = vmatpush2.bf16.xpose.msra.mxu0 0
      %8477 = vmatprep.subr.bf16.mxu0 0
      %8478 = vmatpush2.bf16.xpose.msra.mxu0 0
      %8479 = vmatprep.subr.bf16.mxu0 0
      %8480 = vmatpush2.bf16.xpose.msra.mxu0 0
      %8481 = vmatprep.subr.bf16.mxu0 0
      %8482 = vmatpush2.bf16.xpose.msra.mxu0 0
      %8483 = vmatprep.subr.bf16.mxu0 0
      %8484 = vmatpush2.bf16.xpose.msra.mxu0 0
      %8485 = vmatprep.subr.bf16.mxu0 0
      %8486 = vmatpush2.bf16.xpose.msra.mxu0 0
      %8487 = vmatprep.subr.bf16.mxu0 0
      %8488 = vmatpush2.bf16.xpose.msra.mxu0 0
      %8489 = vmatprep.mubr.bf16.mxu0 0
      %8490 = vmatmul.mubr.bf16.gmra.mxu0 %v8455
      %v8491 = vpop.f32.mrf.mxu0
      %v8492 = vadd.f32 0.0, %v8491
      %v8493 = vpop.f32.mrf.mxu0
      %v8494 = vpop.f32.mrf.mxu0
      %v8495 = vpop.f32.mrf.mxu0
      %8496 = vdwg.mxu0
      %v8497 = vsel %vm683, %v8492, -inf
      %8498 = vmax.xlane.f32.xlu0 %v8497
      %v8499 = vpop.xlane.xlu0 %8498
      %v8500 = vsub.f32 %v8492, %v8499
      %v8501 = vmul.f32 %v8500, 1.442695
      %v8502 = vpow.pop %v8501
      %v8503 = vsel %vm683, %v8502, 0.0
      %8504 = vadd.xlane.f32.xlu0 %v8503
      %v8505 = vpop.xlane.xlu0 %8504
      %v8506 = vrcp.pop %v8505
      %v8507 = vmul.f32 %v8502, %v8506
      %v8508 = vpack.c.bf16 %v8507, %v8507
      %v8509 = vcombine.high %v8347, %v8347
      %v8511 = vunpack.c.l.s4 1966171168
      %v8512 = vunpack.c.0.s8 %v8511
      %v8513 = vlaneseq
      %v8514 = vshrl.u32 %v8513, 7
      %v8515 = vsub.s32 %v8512, %v8514
      %v8516 = vrot.slane %v8509, %v8515
      %v8517 = vcombine.high %v8516, %v8516
      %v8519 = vunpack.c.l.s4 1966171168
      %v8520 = vunpack.c.0.s8 %v8519
      %v8521 = vlaneseq
      %v8522 = vshrl.u32 %v8521, 7
      %v8523 = vsub.s32 %v8520, %v8522
      %v8524 = vrot.slane %v8516, %v8523
      %v8526 = vunpack.c.l.s4 1966171168
      %v8527 = vunpack.c.0.s8 %v8526
      %v8528 = vlaneseq
      %v8529 = vshrl.u32 %v8528, 7
      %v8530 = vsub.s32 %v8527, %v8529
      %v8531 = vrot.slane %v8517, %v8530
      %v8532 = vcombine.high %v8363, %v8363
      %v8533 = vcombine.high %v8524, %v8524
      %v8534 = vcombine.high %v8370, %v8370
      %v8535 = vcombine.high %v8531, %v8531
      %v8537 = vshll.u32 %v8532, 16
      %v8540 = vshll.u32 %v8534, 16
      %v8543 = vshll.u32 %v8524, 16
      %v8546 = vshll.u32 %v8531, 16
      %v8549 = vshll.u32 %v8533, 16
      %v8552 = vshll.u32 %v8535, 16
      %v8566 = vmul.bf16 %v5177, %v8372
      %v8567 = vmul.bf16 %v5178, %v8363
      %v8568 = vmul.bf16 %v5179, %v8375
      %v8569 = vmul.bf16 %v5180, %v8370
      %v8570 = vmul.bf16 %v5181, %v8537
      %v8571 = vmul.bf16 %v5182, %v8532
      %v8572 = vmul.bf16 %v5183, %v8540
      %v8573 = vmul.bf16 %v5184, %v8534
      %v8574 = vmul.bf16 %v5185, %v8543
      %v8575 = vmul.bf16 %v5186, %v8524
      %v8576 = vmul.bf16 %v5187, %v8546
      %v8577 = vmul.bf16 %v5188, %v8531
      %v8578 = vmul.bf16 %v5189, %v8549
      %v8579 = vmul.bf16 %v5190, %v8533
      %v8580 = vmul.bf16 %v5191, %v8552
      %v8581 = vmul.bf16 %v5192, %v8535
      %v8599 = vunpack.c.l.s4 1966171168
      %v8600 = vunpack.c.0.s8 %v8599
      %v8601 = vlaneseq
      %v8602 = vshrl.u32 %v8601, 7
      %v8603 = vsub.s32 %v8600, %v8602
      %v8604 = vrot.slane %v8566, %v8603
      %v8606 = vunpack.c.l.s4 1966171168
      %v8607 = vunpack.c.0.s8 %v8606
      %v8608 = vlaneseq
      %v8609 = vshrl.u32 %v8608, 7
      %v8610 = vsub.s32 %v8607, %v8609
      %v8611 = vrot.slane %v8604, %v8610
      %v8613 = vunpack.c.l.s4 1966171168
      %v8614 = vunpack.c.0.s8 %v8613
      %v8615 = vlaneseq
      %v8616 = vshrl.u32 %v8615, 7
      %v8617 = vsub.s32 %v8614, %v8616
      %v8618 = vrot.slane %v8567, %v8617
      %v8620 = vunpack.c.l.s4 1966171168
      %v8621 = vunpack.c.0.s8 %v8620
      %v8622 = vlaneseq
      %v8623 = vshrl.u32 %v8622, 7
      %v8624 = vsub.s32 %v8621, %v8623
      %v8625 = vrot.slane %v8618, %v8624
      %v8627 = vunpack.c.l.s4 1966171168
      %v8628 = vunpack.c.0.s8 %v8627
      %v8629 = vlaneseq
      %v8630 = vshrl.u32 %v8629, 7
      %v8631 = vsub.s32 %v8628, %v8630
      %v8632 = vrot.slane %v8568, %v8631
      %v8634 = vunpack.c.l.s4 1966171168
      %v8635 = vunpack.c.0.s8 %v8634
      %v8636 = vlaneseq
      %v8637 = vshrl.u32 %v8636, 7
      %v8638 = vsub.s32 %v8635, %v8637
      %v8639 = vrot.slane %v8632, %v8638
      %v8641 = vunpack.c.l.s4 1966171168
      %v8642 = vunpack.c.0.s8 %v8641
      %v8643 = vlaneseq
      %v8644 = vshrl.u32 %v8643, 7
      %v8645 = vsub.s32 %v8642, %v8644
      %v8646 = vrot.slane %v8569, %v8645
      %v8648 = vunpack.c.l.s4 1966171168
      %v8649 = vunpack.c.0.s8 %v8648
      %v8650 = vlaneseq
      %v8651 = vshrl.u32 %v8650, 7
      %v8652 = vsub.s32 %v8649, %v8651
      %v8653 = vrot.slane %v8646, %v8652
      %v8655 = vunpack.c.l.s4 1966171168
      %v8656 = vunpack.c.0.s8 %v8655
      %v8657 = vlaneseq
      %v8658 = vshrl.u32 %v8657, 7
      %v8659 = vsub.s32 %v8656, %v8658
      %v8660 = vrot.slane %v8570, %v8659
      %v8662 = vunpack.c.l.s4 1966171168
      %v8663 = vunpack.c.0.s8 %v8662
      %v8664 = vlaneseq
      %v8665 = vshrl.u32 %v8664, 7
      %v8666 = vsub.s32 %v8663, %v8665
      %v8667 = vrot.slane %v8660, %v8666
      %v8669 = vunpack.c.l.s4 1966171168
      %v8670 = vunpack.c.0.s8 %v8669
      %v8671 = vlaneseq
      %v8672 = vshrl.u32 %v8671, 7
      %v8673 = vsub.s32 %v8670, %v8672
      %v8674 = vrot.slane %v8571, %v8673
      %v8676 = vunpack.c.l.s4 1966171168
      %v8677 = vunpack.c.0.s8 %v8676
      %v8678 = vlaneseq
      %v8679 = vshrl.u32 %v8678, 7
      %v8680 = vsub.s32 %v8677, %v8679
      %v8681 = vrot.slane %v8674, %v8680
      %v8683 = vunpack.c.l.s4 1966171168
      %v8684 = vunpack.c.0.s8 %v8683
      %v8685 = vlaneseq
      %v8686 = vshrl.u32 %v8685, 7
      %v8687 = vsub.s32 %v8684, %v8686
      %v8688 = vrot.slane %v8572, %v8687
      %v8690 = vunpack.c.l.s4 1966171168
      %v8691 = vunpack.c.0.s8 %v8690
      %v8692 = vlaneseq
      %v8693 = vshrl.u32 %v8692, 7
      %v8694 = vsub.s32 %v8691, %v8693
      %v8695 = vrot.slane %v8688, %v8694
      %v8697 = vunpack.c.l.s4 1966171168
      %v8698 = vunpack.c.0.s8 %v8697
      %v8699 = vlaneseq
      %v8700 = vshrl.u32 %v8699, 7
      %v8701 = vsub.s32 %v8698, %v8700
      %v8702 = vrot.slane %v8573, %v8701
      %v8704 = vunpack.c.l.s4 1966171168
      %v8705 = vunpack.c.0.s8 %v8704
      %v8706 = vlaneseq
      %v8707 = vshrl.u32 %v8706, 7
      %v8708 = vsub.s32 %v8705, %v8707
      %v8709 = vrot.slane %v8702, %v8708
      %v8711 = vunpack.c.l.s4 1966171168
      %v8712 = vunpack.c.0.s8 %v8711
      %v8713 = vlaneseq
      %v8714 = vshrl.u32 %v8713, 7
      %v8715 = vsub.s32 %v8712, %v8714
      %v8716 = vrot.slane %v8574, %v8715
      %v8718 = vunpack.c.l.s4 1966171168
      %v8719 = vunpack.c.0.s8 %v8718
      %v8720 = vlaneseq
      %v8721 = vshrl.u32 %v8720, 7
      %v8722 = vsub.s32 %v8719, %v8721
      %v8723 = vrot.slane %v8716, %v8722
      %v8725 = vunpack.c.l.s4 1966171168
      %v8726 = vunpack.c.0.s8 %v8725
      %v8727 = vlaneseq
      %v8728 = vshrl.u32 %v8727, 7
      %v8729 = vsub.s32 %v8726, %v8728
      %v8730 = vrot.slane %v8575, %v8729
      %v8732 = vunpack.c.l.s4 1966171168
      %v8733 = vunpack.c.0.s8 %v8732
      %v8734 = vlaneseq
      %v8735 = vshrl.u32 %v8734, 7
      %v8736 = vsub.s32 %v8733, %v8735
      %v8737 = vrot.slane %v8730, %v8736
      %v8739 = vunpack.c.l.s4 1966171168
      %v8740 = vunpack.c.0.s8 %v8739
      %v8741 = vlaneseq
      %v8742 = vshrl.u32 %v8741, 7
      %v8743 = vsub.s32 %v8740, %v8742
      %v8744 = vrot.slane %v8576, %v8743
      %v8746 = vunpack.c.l.s4 1966171168
      %v8747 = vunpack.c.0.s8 %v8746
      %v8748 = vlaneseq
      %v8749 = vshrl.u32 %v8748, 7
      %v8750 = vsub.s32 %v8747, %v8749
      %v8751 = vrot.slane %v8744, %v8750
      %v8753 = vunpack.c.l.s4 1966171168
      %v8754 = vunpack.c.0.s8 %v8753
      %v8755 = vlaneseq
      %v8756 = vshrl.u32 %v8755, 7
      %v8757 = vsub.s32 %v8754, %v8756
      %v8758 = vrot.slane %v8577, %v8757
      %v8760 = vunpack.c.l.s4 1966171168
      %v8761 = vunpack.c.0.s8 %v8760
      %v8762 = vlaneseq
      %v8763 = vshrl.u32 %v8762, 7
      %v8764 = vsub.s32 %v8761, %v8763
      %v8765 = vrot.slane %v8758, %v8764
      %v8767 = vunpack.c.l.s4 1966171168
      %v8768 = vunpack.c.0.s8 %v8767
      %v8769 = vlaneseq
      %v8770 = vshrl.u32 %v8769, 7
      %v8771 = vsub.s32 %v8768, %v8770
      %v8772 = vrot.slane %v8578, %v8771
      %v8774 = vunpack.c.l.s4 1966171168
      %v8775 = vunpack.c.0.s8 %v8774
      %v8776 = vlaneseq
      %v8777 = vshrl.u32 %v8776, 7
      %v8778 = vsub.s32 %v8775, %v8777
      %v8779 = vrot.slane %v8772, %v8778
      %v8781 = vunpack.c.l.s4 1966171168
      %v8782 = vunpack.c.0.s8 %v8781
      %v8783 = vlaneseq
      %v8784 = vshrl.u32 %v8783, 7
      %v8785 = vsub.s32 %v8782, %v8784
      %v8786 = vrot.slane %v8579, %v8785
      %v8788 = vunpack.c.l.s4 1966171168
      %v8789 = vunpack.c.0.s8 %v8788
      %v8790 = vlaneseq
      %v8791 = vshrl.u32 %v8790, 7
      %v8792 = vsub.s32 %v8789, %v8791
      %v8793 = vrot.slane %v8786, %v8792
      %v8795 = vunpack.c.l.s4 1966171168
      %v8796 = vunpack.c.0.s8 %v8795
      %v8797 = vlaneseq
      %v8798 = vshrl.u32 %v8797, 7
      %v8799 = vsub.s32 %v8796, %v8798
      %v8800 = vrot.slane %v8580, %v8799
      %v8802 = vunpack.c.l.s4 1966171168
      %v8803 = vunpack.c.0.s8 %v8802
      %v8804 = vlaneseq
      %v8805 = vshrl.u32 %v8804, 7
      %v8806 = vsub.s32 %v8803, %v8805
      %v8807 = vrot.slane %v8800, %v8806
      %v8809 = vunpack.c.l.s4 1966171168
      %v8810 = vunpack.c.0.s8 %v8809
      %v8811 = vlaneseq
      %v8812 = vshrl.u32 %v8811, 7
      %v8813 = vsub.s32 %v8810, %v8812
      %v8814 = vrot.slane %v8581, %v8813
      %v8816 = vunpack.c.l.s4 1966171168
      %v8817 = vunpack.c.0.s8 %v8816
      %v8818 = vlaneseq
      %v8819 = vshrl.u32 %v8818, 7
      %v8820 = vsub.s32 %v8817, %v8819
      %v8821 = vrot.slane %v8814, %v8820
      %v8822 = vunpack.c.l.b16 %v8611
      %v8823 = vunpack.c.l.b16 %v8625
      %v8824 = vunpack.c.l.b16 %v8639
      %v8825 = vunpack.c.l.b16 %v8653
      %v8826 = vunpack.c.l.b16 %v8667
      %v8827 = vunpack.c.l.b16 %v8681
      %v8828 = vunpack.c.l.b16 %v8695
      %v8829 = vunpack.c.l.b16 %v8709
      %v8830 = vunpack.c.l.b16 %v8723
      %v8831 = vunpack.c.l.b16 %v8737
      %v8832 = vunpack.c.l.b16 %v8751
      %v8833 = vunpack.c.l.b16 %v8765
      %v8834 = vunpack.c.l.b16 %v8779
      %v8835 = vunpack.c.l.b16 %v8793
      %v8836 = vunpack.c.l.b16 %v8807
      %v8837 = vunpack.c.l.b16 %v8821
      %v8838 = vrot.slane %v8822, 1
      %v8839 = vsel %vm343, %v8823, %v8838
      %v8840 = vrot.slane %v8824, 7
      %v8841 = vsel %vm346, %v8840, %v8839
      %v8842 = vrot.slane %v8825, 6
      %v8843 = vsel %vm349, %v8842, %v8841
      %v8844 = vrot.slane %v8826, 5
      %v8845 = vsel %vm616, %v8844, %v8843
      %v8846 = vrot.slane %v8827, 4
      %v8847 = vsel %vm619, %v8846, %v8845
      %v8848 = vrot.slane %v8828, 3
      %v8849 = vsel %vm622, %v8848, %v8847
      %v8850 = vrot.slane %v8829, 2
      %v8851 = vsel %vm625, %v8850, %v8849
      %v8852 = vrot.slane %v8830, 1
      %v8853 = vsel %vm343, %v8831, %v8852
      %v8854 = vrot.slane %v8832, 7
      %v8855 = vsel %vm346, %v8854, %v8853
      %v8856 = vrot.slane %v8833, 6
      %v8857 = vsel %vm349, %v8856, %v8855
      %v8858 = vrot.slane %v8834, 5
      %v8859 = vsel %vm616, %v8858, %v8857
      %v8860 = vrot.slane %v8835, 4
      %v8861 = vsel %vm619, %v8860, %v8859
      %v8862 = vrot.slane %v8836, 3
      %v8863 = vsel %vm622, %v8862, %v8861
      %v8864 = vrot.slane %v8837, 2
      %v8865 = vsel %vm625, %v8864, %v8863
      %v8866 = vpack.c.b16 %v8865, %v8851
      %v8869 = vsel %vm1298, %v8508, 0
      %8871 = vmatprep.subr.bf16.mxu0 0
      %8872 = vmatpush1.bf16.msra.mxu0 0
      %8873 = vmatprep.subr.bf16.mxu0 0
      %8874 = vmatpush1.bf16.msra.mxu0 0
      %8875 = vmatprep.subr.bf16.mxu0 0
      %8876 = vmatpush1.bf16.msra.mxu0 0
      %8877 = vmatprep.subr.bf16.mxu0 0
      %8878 = vmatpush1.bf16.msra.mxu0 0
      %8879 = vmatprep.subr.bf16.mxu0 0
      %8880 = vmatpush1.bf16.msra.mxu0 0
      %8881 = vmatprep.subr.bf16.mxu0 0
      %8882 = vmatpush1.bf16.msra.mxu0 0
      %8883 = vmatprep.subr.bf16.mxu0 0
      %8884 = vmatpush1.bf16.msra.mxu0 0
      %8885 = vmatprep.subr.bf16.mxu0 0
      %8886 = vmatpush1.bf16.msra.mxu0 %v8866
      %8887 = vmatprep.subr.bf16.mxu0 0
      %8888 = vmatpush2.bf16.msra.mxu0 0
      %8889 = vmatprep.subr.bf16.mxu0 0
      %8890 = vmatpush2.bf16.msra.mxu0 0
      %8891 = vmatprep.subr.bf16.mxu0 0
      %8892 = vmatpush2.bf16.msra.mxu0 0
      %8893 = vmatprep.subr.bf16.mxu0 0
      %8894 = vmatpush2.bf16.msra.mxu0 0
      %8895 = vmatprep.subr.bf16.mxu0 0
      %8896 = vmatpush2.bf16.msra.mxu0 0
      %8897 = vmatprep.subr.bf16.mxu0 0
      %8898 = vmatpush2.bf16.msra.mxu0 0
      %8899 = vmatprep.subr.bf16.mxu0 0
      %8900 = vmatpush2.bf16.msra.mxu0 0
      %8901 = vmatprep.subr.bf16.mxu0 0
      %8902 = vmatpush2.bf16.msra.mxu0 0
      %8903 = vmatprep.mubr.bf16.mxu0 0
      %8904 = vmatmul.mubr.bf16.gmra.mxu0 %v8869
      %v8905 = vpop.f32.mrf.mxu0
      %v8906 = vadd.f32 0.0, %v8905
      %v8907 = vpop.f32.mrf.mxu0
      %v8908 = vpop.f32.mrf.mxu0
      %v8909 = vpop.f32.mrf.mxu0
      %8910 = vdwg.mxu0
      %v8911 = vadd.f32 %v8338, %v8906
      %v8912 = vld [vmem:[%s0] sm:$0x8]
      %v8914 = vpack.i.b16 %v8912, %v8912
      %v8916 = vlaneseq
      %v8917 = vshrl.u32 %v8916, 7
      %v8918 = vsub.s32 3, %v8917
      %v8919 = vrot.slane %v8914, %v8918
      %v8922 = vunpack.c.l.s4 1966171168
      %v8923 = vunpack.c.0.s8 %v8922
      %v8924 = vlaneseq
      %v8925 = vshrl.u32 %v8924, 7
      %v8926 = vsub.s32 %v8923, %v8925
      %v8927 = vrot.slane %v8919, %v8926
      %v8928 = vcombine.high %v8927, %v8927
      %v8930 = vunpack.c.l.s4 1966171168
      %v8931 = vunpack.c.0.s8 %v8930
      %v8932 = vlaneseq
      %v8933 = vshrl.u32 %v8932, 7
      %v8934 = vsub.s32 %v8931, %v8933
      %v8935 = vrot.slane %v8927, %v8934
      %v8937 = vunpack.c.l.s4 1966171168
      %v8938 = vunpack.c.0.s8 %v8937
      %v8939 = vlaneseq
      %v8940 = vshrl.u32 %v8939, 7
      %v8941 = vsub.s32 %v8938, %v8940
      %v8942 = vrot.slane %v8928, %v8941
      %v8944 = vshll.u32 %v8935, 16
      %v8947 = vshll.u32 %v8942, 16
      %v8953 = vmul.bf16 %v5157, %v8944
      %v8954 = vmul.bf16 %v5158, %v8935
      %v8955 = vmul.bf16 %v5159, %v8947
      %v8956 = vmul.bf16 %v5160, %v8942
      %v8962 = vunpack.c.l.s4 1966171168
      %v8963 = vunpack.c.0.s8 %v8962
      %v8964 = vlaneseq
      %v8965 = vshrl.u32 %v8964, 7
      %v8966 = vsub.s32 %v8963, %v8965
      %v8967 = vrot.slane %v8953, %v8966
      %v8969 = vunpack.c.l.s4 1966171168
      %v8970 = vunpack.c.0.s8 %v8969
      %v8971 = vlaneseq
      %v8972 = vshrl.u32 %v8971, 7
      %v8973 = vsub.s32 %v8970, %v8972
      %v8974 = vrot.slane %v8967, %v8973
      %v8976 = vunpack.c.l.s4 1966171168
      %v8977 = vunpack.c.0.s8 %v8976
      %v8978 = vlaneseq
      %v8979 = vshrl.u32 %v8978, 7
      %v8980 = vsub.s32 %v8977, %v8979
      %v8981 = vrot.slane %v8954, %v8980
      %v8983 = vunpack.c.l.s4 1966171168
      %v8984 = vunpack.c.0.s8 %v8983
      %v8985 = vlaneseq
      %v8986 = vshrl.u32 %v8985, 7
      %v8987 = vsub.s32 %v8984, %v8986
      %v8988 = vrot.slane %v8981, %v8987
      %v8990 = vunpack.c.l.s4 1966171168
      %v8991 = vunpack.c.0.s8 %v8990
      %v8992 = vlaneseq
      %v8993 = vshrl.u32 %v8992, 7
      %v8994 = vsub.s32 %v8991, %v8993
      %v8995 = vrot.slane %v8955, %v8994
      %v8997 = vunpack.c.l.s4 1966171168
      %v8998 = vunpack.c.0.s8 %v8997
      %v8999 = vlaneseq
      %v9000 = vshrl.u32 %v8999, 7
      %v9001 = vsub.s32 %v8998, %v9000
      %v9002 = vrot.slane %v8995, %v9001
      %v9004 = vunpack.c.l.s4 1966171168
      %v9005 = vunpack.c.0.s8 %v9004
      %v9006 = vlaneseq
      %v9007 = vshrl.u32 %v9006, 7
      %v9008 = vsub.s32 %v9005, %v9007
      %v9009 = vrot.slane %v8956, %v9008
      %v9011 = vunpack.c.l.s4 1966171168
      %v9012 = vunpack.c.0.s8 %v9011
      %v9013 = vlaneseq
      %v9014 = vshrl.u32 %v9013, 7
      %v9015 = vsub.s32 %v9012, %v9014
      %v9016 = vrot.slane %v9009, %v9015
      %v9017 = vunpack.c.l.b16 %v8974
      %v9018 = vunpack.c.l.b16 %v8988
      %v9019 = vunpack.c.l.b16 %v9002
      %v9020 = vunpack.c.l.b16 %v9016
      %v9021 = vrot.slane %v9017, 1
      %v9022 = vsel %vm343, %v9018, %v9021
      %v9023 = vrot.slane %v9019, 7
      %v9024 = vsel %vm346, %v9023, %v9022
      %v9025 = vrot.slane %v9020, 6
      %v9026 = vsel %vm349, %v9025, %v9024
      %v9027 = vpack.c.b16 %v9026, %v9026
      %9029 = vmatprep.subr.bf16.mxu0 0
      %9030 = vmatpush1.bf16.xpose.msra.mxu0 0
      %9031 = vmatprep.subr.bf16.mxu0 0
      %9032 = vmatpush1.bf16.xpose.msra.mxu0 0
      %9033 = vmatprep.subr.bf16.mxu0 0
      %9034 = vmatpush1.bf16.xpose.msra.mxu0 0
      %9035 = vmatprep.subr.bf16.mxu0 0
      %9036 = vmatpush1.bf16.xpose.msra.mxu0 0
      %9037 = vmatprep.subr.bf16.mxu0 0
      %9038 = vmatpush1.bf16.xpose.msra.mxu0 0
      %9039 = vmatprep.subr.bf16.mxu0 0
      %9040 = vmatpush1.bf16.xpose.msra.mxu0 0
      %9041 = vmatprep.subr.bf16.mxu0 0
      %9042 = vmatpush1.bf16.xpose.msra.mxu0 0
      %9043 = vmatprep.subr.bf16.mxu0 0
      %9044 = vmatpush1.bf16.xpose.msra.mxu0 %v5594
      %9045 = vmatprep.subr.bf16.mxu0 0
      %9046 = vmatpush2.bf16.xpose.msra.mxu0 0
      %9047 = vmatprep.subr.bf16.mxu0 0
      %9048 = vmatpush2.bf16.xpose.msra.mxu0 0
      %9049 = vmatprep.subr.bf16.mxu0 0
      %9050 = vmatpush2.bf16.xpose.msra.mxu0 0
      %9051 = vmatprep.subr.bf16.mxu0 0
      %9052 = vmatpush2.bf16.xpose.msra.mxu0 0
      %9053 = vmatprep.subr.bf16.mxu0 0
      %9054 = vmatpush2.bf16.xpose.msra.mxu0 0
      %9055 = vmatprep.subr.bf16.mxu0 0
      %9056 = vmatpush2.bf16.xpose.msra.mxu0 0
      %9057 = vmatprep.subr.bf16.mxu0 0
      %9058 = vmatpush2.bf16.xpose.msra.mxu0 0
      %9059 = vmatprep.subr.bf16.mxu0 0
      %9060 = vmatpush2.bf16.xpose.msra.mxu0 0
      %9061 = vmatprep.mubr.bf16.mxu0 0
      %9062 = vmatmul.mubr.bf16.gmra.mxu0 %v9027
      %v9063 = vpop.f32.mrf.mxu0
      %v9064 = vadd.f32 0.0, %v9063
      %v9065 = vpop.f32.mrf.mxu0
      %v9066 = vpop.f32.mrf.mxu0
      %v9067 = vpop.f32.mrf.mxu0
      %9068 = vdwg.mxu0
      %v9069 = vsel %vm683, %v9064, -inf
      %9070 = vmax.xlane.f32.xlu0 %v9069
      %v9071 = vpop.xlane.xlu0 %9070
      %v9072 = vsub.f32 %v9064, %v9071
      %v9073 = vmul.f32 %v9072, 1.442695
      %v9074 = vpow.pop %v9073
      %v9075 = vsel %vm683, %v9074, 0.0
      %9076 = vadd.xlane.f32.xlu0 %v9075
      %v9077 = vpop.xlane.xlu0 %9076
      %v9078 = vrcp.pop %v9077
      %v9079 = vmul.f32 %v9074, %v9078
      %v9080 = vpack.c.bf16 %v9079, %v9079
      %v9081 = vcombine.high %v8919, %v8919
      %v9083 = vunpack.c.l.s4 1966171168
      %v9084 = vunpack.c.0.s8 %v9083
      %v9085 = vlaneseq
      %v9086 = vshrl.u32 %v9085, 7
      %v9087 = vsub.s32 %v9084, %v9086
      %v9088 = vrot.slane %v9081, %v9087
      %v9089 = vcombine.high %v9088, %v9088
      %v9091 = vunpack.c.l.s4 1966171168
      %v9092 = vunpack.c.0.s8 %v9091
      %v9093 = vlaneseq
      %v9094 = vshrl.u32 %v9093, 7
      %v9095 = vsub.s32 %v9092, %v9094
      %v9096 = vrot.slane %v9088, %v9095
      %v9098 = vunpack.c.l.s4 1966171168
      %v9099 = vunpack.c.0.s8 %v9098
      %v9100 = vlaneseq
      %v9101 = vshrl.u32 %v9100, 7
      %v9102 = vsub.s32 %v9099, %v9101
      %v9103 = vrot.slane %v9089, %v9102
      %v9104 = vcombine.high %v8935, %v8935
      %v9105 = vcombine.high %v9096, %v9096
      %v9106 = vcombine.high %v8942, %v8942
      %v9107 = vcombine.high %v9103, %v9103
      %v9109 = vshll.u32 %v9104, 16
      %v9112 = vshll.u32 %v9106, 16
      %v9115 = vshll.u32 %v9096, 16
      %v9118 = vshll.u32 %v9103, 16
      %v9121 = vshll.u32 %v9105, 16
      %v9124 = vshll.u32 %v9107, 16
      %v9138 = vmul.bf16 %v5177, %v8944
      %v9139 = vmul.bf16 %v5178, %v8935
      %v9140 = vmul.bf16 %v5179, %v8947
      %v9141 = vmul.bf16 %v5180, %v8942
      %v9142 = vmul.bf16 %v5181, %v9109
      %v9143 = vmul.bf16 %v5182, %v9104
      %v9144 = vmul.bf16 %v5183, %v9112
      %v9145 = vmul.bf16 %v5184, %v9106
      %v9146 = vmul.bf16 %v5185, %v9115
      %v9147 = vmul.bf16 %v5186, %v9096
      %v9148 = vmul.bf16 %v5187, %v9118
      %v9149 = vmul.bf16 %v5188, %v9103
      %v9150 = vmul.bf16 %v5189, %v9121
      %v9151 = vmul.bf16 %v5190, %v9105
      %v9152 = vmul.bf16 %v5191, %v9124
      %v9153 = vmul.bf16 %v5192, %v9107
      %v9171 = vunpack.c.l.s4 1966171168
      %v9172 = vunpack.c.0.s8 %v9171
      %v9173 = vlaneseq
      %v9174 = vshrl.u32 %v9173, 7
      %v9175 = vsub.s32 %v9172, %v9174
      %v9176 = vrot.slane %v9138, %v9175
      %v9178 = vunpack.c.l.s4 1966171168
      %v9179 = vunpack.c.0.s8 %v9178
      %v9180 = vlaneseq
      %v9181 = vshrl.u32 %v9180, 7
      %v9182 = vsub.s32 %v9179, %v9181
      %v9183 = vrot.slane %v9176, %v9182
      %v9185 = vunpack.c.l.s4 1966171168
      %v9186 = vunpack.c.0.s8 %v9185
      %v9187 = vlaneseq
      %v9188 = vshrl.u32 %v9187, 7
      %v9189 = vsub.s32 %v9186, %v9188
      %v9190 = vrot.slane %v9139, %v9189
      %v9192 = vunpack.c.l.s4 1966171168
      %v9193 = vunpack.c.0.s8 %v9192
      %v9194 = vlaneseq
      %v9195 = vshrl.u32 %v9194, 7
      %v9196 = vsub.s32 %v9193, %v9195
      %v9197 = vrot.slane %v9190, %v9196
      %v9199 = vunpack.c.l.s4 1966171168
      %v9200 = vunpack.c.0.s8 %v9199
      %v9201 = vlaneseq
      %v9202 = vshrl.u32 %v9201, 7
      %v9203 = vsub.s32 %v9200, %v9202
      %v9204 = vrot.slane %v9140, %v9203
      %v9206 = vunpack.c.l.s4 1966171168
      %v9207 = vunpack.c.0.s8 %v9206
      %v9208 = vlaneseq
      %v9209 = vshrl.u32 %v9208, 7
      %v9210 = vsub.s32 %v9207, %v9209
      %v9211 = vrot.slane %v9204, %v9210
      %v9213 = vunpack.c.l.s4 1966171168
      %v9214 = vunpack.c.0.s8 %v9213
      %v9215 = vlaneseq
      %v9216 = vshrl.u32 %v9215, 7
      %v9217 = vsub.s32 %v9214, %v9216
      %v9218 = vrot.slane %v9141, %v9217
      %v9220 = vunpack.c.l.s4 1966171168
      %v9221 = vunpack.c.0.s8 %v9220
      %v9222 = vlaneseq
      %v9223 = vshrl.u32 %v9222, 7
      %v9224 = vsub.s32 %v9221, %v9223
      %v9225 = vrot.slane %v9218, %v9224
      %v9227 = vunpack.c.l.s4 1966171168
      %v9228 = vunpack.c.0.s8 %v9227
      %v9229 = vlaneseq
      %v9230 = vshrl.u32 %v9229, 7
      %v9231 = vsub.s32 %v9228, %v9230
      %v9232 = vrot.slane %v9142, %v9231
      %v9234 = vunpack.c.l.s4 1966171168
      %v9235 = vunpack.c.0.s8 %v9234
      %v9236 = vlaneseq
      %v9237 = vshrl.u32 %v9236, 7
      %v9238 = vsub.s32 %v9235, %v9237
      %v9239 = vrot.slane %v9232, %v9238
      %v9241 = vunpack.c.l.s4 1966171168
      %v9242 = vunpack.c.0.s8 %v9241
      %v9243 = vlaneseq
      %v9244 = vshrl.u32 %v9243, 7
      %v9245 = vsub.s32 %v9242, %v9244
      %v9246 = vrot.slane %v9143, %v9245
      %v9248 = vunpack.c.l.s4 1966171168
      %v9249 = vunpack.c.0.s8 %v9248
      %v9250 = vlaneseq
      %v9251 = vshrl.u32 %v9250, 7
      %v9252 = vsub.s32 %v9249, %v9251
      %v9253 = vrot.slane %v9246, %v9252
      %v9255 = vunpack.c.l.s4 1966171168
      %v9256 = vunpack.c.0.s8 %v9255
      %v9257 = vlaneseq
      %v9258 = vshrl.u32 %v9257, 7
      %v9259 = vsub.s32 %v9256, %v9258
      %v9260 = vrot.slane %v9144, %v9259
      %v9262 = vunpack.c.l.s4 1966171168
      %v9263 = vunpack.c.0.s8 %v9262
      %v9264 = vlaneseq
      %v9265 = vshrl.u32 %v9264, 7
      %v9266 = vsub.s32 %v9263, %v9265
      %v9267 = vrot.slane %v9260, %v9266
      %v9269 = vunpack.c.l.s4 1966171168
      %v9270 = vunpack.c.0.s8 %v9269
      %v9271 = vlaneseq
      %v9272 = vshrl.u32 %v9271, 7
      %v9273 = vsub.s32 %v9270, %v9272
      %v9274 = vrot.slane %v9145, %v9273
      %v9276 = vunpack.c.l.s4 1966171168
      %v9277 = vunpack.c.0.s8 %v9276
      %v9278 = vlaneseq
      %v9279 = vshrl.u32 %v9278, 7
      %v9280 = vsub.s32 %v9277, %v9279
      %v9281 = vrot.slane %v9274, %v9280
      %v9283 = vunpack.c.l.s4 1966171168
      %v9284 = vunpack.c.0.s8 %v9283
      %v9285 = vlaneseq
      %v9286 = vshrl.u32 %v9285, 7
      %v9287 = vsub.s32 %v9284, %v9286
      %v9288 = vrot.slane %v9146, %v9287
      %v9290 = vunpack.c.l.s4 1966171168
      %v9291 = vunpack.c.0.s8 %v9290
      %v9292 = vlaneseq
      %v9293 = vshrl.u32 %v9292, 7
      %v9294 = vsub.s32 %v9291, %v9293
      %v9295 = vrot.slane %v9288, %v9294
      %v9297 = vunpack.c.l.s4 1966171168
      %v9298 = vunpack.c.0.s8 %v9297
      %v9299 = vlaneseq
      %v9300 = vshrl.u32 %v9299, 7
      %v9301 = vsub.s32 %v9298, %v9300
      %v9302 = vrot.slane %v9147, %v9301
      %v9304 = vunpack.c.l.s4 1966171168
      %v9305 = vunpack.c.0.s8 %v9304
      %v9306 = vlaneseq
      %v9307 = vshrl.u32 %v9306, 7
      %v9308 = vsub.s32 %v9305, %v9307
      %v9309 = vrot.slane %v9302, %v9308
      %v9311 = vunpack.c.l.s4 1966171168
      %v9312 = vunpack.c.0.s8 %v9311
      %v9313 = vlaneseq
      %v9314 = vshrl.u32 %v9313, 7
      %v9315 = vsub.s32 %v9312, %v9314
      %v9316 = vrot.slane %v9148, %v9315
      %v9318 = vunpack.c.l.s4 1966171168
      %v9319 = vunpack.c.0.s8 %v9318
      %v9320 = vlaneseq
      %v9321 = vshrl.u32 %v9320, 7
      %v9322 = vsub.s32 %v9319, %v9321
      %v9323 = vrot.slane %v9316, %v9322
      %v9325 = vunpack.c.l.s4 1966171168
      %v9326 = vunpack.c.0.s8 %v9325
      %v9327 = vlaneseq
      %v9328 = vshrl.u32 %v9327, 7
      %v9329 = vsub.s32 %v9326, %v9328
      %v9330 = vrot.slane %v9149, %v9329
      %v9332 = vunpack.c.l.s4 1966171168
      %v9333 = vunpack.c.0.s8 %v9332
      %v9334 = vlaneseq
      %v9335 = vshrl.u32 %v9334, 7
      %v9336 = vsub.s32 %v9333, %v9335
      %v9337 = vrot.slane %v9330, %v9336
      %v9339 = vunpack.c.l.s4 1966171168
      %v9340 = vunpack.c.0.s8 %v9339
      %v9341 = vlaneseq
      %v9342 = vshrl.u32 %v9341, 7
      %v9343 = vsub.s32 %v9340, %v9342
      %v9344 = vrot.slane %v9150, %v9343
      %v9346 = vunpack.c.l.s4 1966171168
      %v9347 = vunpack.c.0.s8 %v9346
      %v9348 = vlaneseq
      %v9349 = vshrl.u32 %v9348, 7
      %v9350 = vsub.s32 %v9347, %v9349
      %v9351 = vrot.slane %v9344, %v9350
      %v9353 = vunpack.c.l.s4 1966171168
      %v9354 = vunpack.c.0.s8 %v9353
      %v9355 = vlaneseq
      %v9356 = vshrl.u32 %v9355, 7
      %v9357 = vsub.s32 %v9354, %v9356
      %v9358 = vrot.slane %v9151, %v9357
      %v9360 = vunpack.c.l.s4 1966171168
      %v9361 = vunpack.c.0.s8 %v9360
      %v9362 = vlaneseq
      %v9363 = vshrl.u32 %v9362, 7
      %v9364 = vsub.s32 %v9361, %v9363
      %v9365 = vrot.slane %v9358, %v9364
      %v9367 = vunpack.c.l.s4 1966171168
      %v9368 = vunpack.c.0.s8 %v9367
      %v9369 = vlaneseq
      %v9370 = vshrl.u32 %v9369, 7
      %v9371 = vsub.s32 %v9368, %v9370
      %v9372 = vrot.slane %v9152, %v9371
      %v9374 = vunpack.c.l.s4 1966171168
      %v9375 = vunpack.c.0.s8 %v9374
      %v9376 = vlaneseq
      %v9377 = vshrl.u32 %v9376, 7
      %v9378 = vsub.s32 %v9375, %v9377
      %v9379 = vrot.slane %v9372, %v9378
      %v9381 = vunpack.c.l.s4 1966171168
      %v9382 = vunpack.c.0.s8 %v9381
      %v9383 = vlaneseq
      %v9384 = vshrl.u32 %v9383, 7
      %v9385 = vsub.s32 %v9382, %v9384
      %v9386 = vrot.slane %v9153, %v9385
      %v9388 = vunpack.c.l.s4 1966171168
      %v9389 = vunpack.c.0.s8 %v9388
      %v9390 = vlaneseq
      %v9391 = vshrl.u32 %v9390, 7
      %v9392 = vsub.s32 %v9389, %v9391
      %v9393 = vrot.slane %v9386, %v9392
      %v9394 = vunpack.c.l.b16 %v9183
      %v9395 = vunpack.c.l.b16 %v9197
      %v9396 = vunpack.c.l.b16 %v9211
      %v9397 = vunpack.c.l.b16 %v9225
      %v9398 = vunpack.c.l.b16 %v9239
      %v9399 = vunpack.c.l.b16 %v9253
      %v9400 = vunpack.c.l.b16 %v9267
      %v9401 = vunpack.c.l.b16 %v9281
      %v9402 = vunpack.c.l.b16 %v9295
      %v9403 = vunpack.c.l.b16 %v9309
      %v9404 = vunpack.c.l.b16 %v9323
      %v9405 = vunpack.c.l.b16 %v9337
      %v9406 = vunpack.c.l.b16 %v9351
      %v9407 = vunpack.c.l.b16 %v9365
      %v9408 = vunpack.c.l.b16 %v9379
      %v9409 = vunpack.c.l.b16 %v9393
      %v9410 = vrot.slane %v9394, 1
      %v9411 = vsel %vm343, %v9395, %v9410
      %v9412 = vrot.slane %v9396, 7
      %v9413 = vsel %vm346, %v9412, %v9411
      %v9414 = vrot.slane %v9397, 6
      %v9415 = vsel %vm349, %v9414, %v9413
      %v9416 = vrot.slane %v9398, 5
      %v9417 = vsel %vm616, %v9416, %v9415
      %v9418 = vrot.slane %v9399, 4
      %v9419 = vsel %vm619, %v9418, %v9417
      %v9420 = vrot.slane %v9400, 3
      %v9421 = vsel %vm622, %v9420, %v9419
      %v9422 = vrot.slane %v9401, 2
      %v9423 = vsel %vm625, %v9422, %v9421
      %v9424 = vrot.slane %v9402, 1
      %v9425 = vsel %vm343, %v9403, %v9424
      %v9426 = vrot.slane %v9404, 7
      %v9427 = vsel %vm346, %v9426, %v9425
      %v9428 = vrot.slane %v9405, 6
      %v9429 = vsel %vm349, %v9428, %v9427
      %v9430 = vrot.slane %v9406, 5
      %v9431 = vsel %vm616, %v9430, %v9429
      %v9432 = vrot.slane %v9407, 4
      %v9433 = vsel %vm619, %v9432, %v9431
      %v9434 = vrot.slane %v9408, 3
      %v9435 = vsel %vm622, %v9434, %v9433
      %v9436 = vrot.slane %v9409, 2
      %v9437 = vsel %vm625, %v9436, %v9435
      %v9438 = vpack.c.b16 %v9437, %v9423
      %v9441 = vsel %vm1298, %v9080, 0
      %9443 = vmatprep.subr.bf16.mxu0 0
      %9444 = vmatpush1.bf16.msra.mxu0 0
      %9445 = vmatprep.subr.bf16.mxu0 0
      %9446 = vmatpush1.bf16.msra.mxu0 0
      %9447 = vmatprep.subr.bf16.mxu0 0
      %9448 = vmatpush1.bf16.msra.mxu0 0
      %9449 = vmatprep.subr.bf16.mxu0 0
      %9450 = vmatpush1.bf16.msra.mxu0 0
      %9451 = vmatprep.subr.bf16.mxu0 0
      %9452 = vmatpush1.bf16.msra.mxu0 0
      %9453 = vmatprep.subr.bf16.mxu0 0
      %9454 = vmatpush1.bf16.msra.mxu0 0
      %9455 = vmatprep.subr.bf16.mxu0 0
      %9456 = vmatpush1.bf16.msra.mxu0 0
      %9457 = vmatprep.subr.bf16.mxu0 0
      %9458 = vmatpush1.bf16.msra.mxu0 %v9438
      %9459 = vmatprep.subr.bf16.mxu0 0
      %9460 = vmatpush2.bf16.msra.mxu0 0
      %9461 = vmatprep.subr.bf16.mxu0 0
      %9462 = vmatpush2.bf16.msra.mxu0 0
      %9463 = vmatprep.subr.bf16.mxu0 0
      %9464 = vmatpush2.bf16.msra.mxu0 0
      %9465 = vmatprep.subr.bf16.mxu0 0
      %9466 = vmatpush2.bf16.msra.mxu0 0
      %9467 = vmatprep.subr.bf16.mxu0 0
      %9468 = vmatpush2.bf16.msra.mxu0 0
      %9469 = vmatprep.subr.bf16.mxu0 0
      %9470 = vmatpush2.bf16.msra.mxu0 0
      %9471 = vmatprep.subr.bf16.mxu0 0
      %9472 = vmatpush2.bf16.msra.mxu0 0
      %9473 = vmatprep.subr.bf16.mxu0 0
      %9474 = vmatpush2.bf16.msra.mxu0 0
      %9475 = vmatprep.mubr.bf16.mxu0 0
      %9476 = vmatmul.mubr.bf16.gmra.mxu0 %v9441
      %v9477 = vpop.f32.mrf.mxu0
      %v9478 = vadd.f32 0.0, %v9477
      %v9479 = vpop.f32.mrf.mxu0
      %v9480 = vpop.f32.mrf.mxu0
      %v9481 = vpop.f32.mrf.mxu0
      %9482 = vdwg.mxu0
      %v9483 = vadd.f32 %v8911, %v9478
      %v9484 = vld [vmem:[%s0] sm:$0x8]
      %v9486 = vshrl.u32 %v9484, 16
      %v9487 = vpack.i.b16 %v9486, %v9486
      %v9489 = vlaneseq
      %v9490 = vshrl.u32 %v9489, 7
      %v9491 = vsub.s32 3, %v9490
      %v9492 = vrot.slane %v9487, %v9491
      %v9495 = vunpack.c.l.s4 1966171168
      %v9496 = vunpack.c.0.s8 %v9495
      %v9497 = vlaneseq
      %v9498 = vshrl.u32 %v9497, 7
      %v9499 = vsub.s32 %v9496, %v9498
      %v9500 = vrot.slane %v9492, %v9499
      %v9501 = vcombine.high %v9500, %v9500
      %v9503 = vunpack.c.l.s4 1966171168
      %v9504 = vunpack.c.0.s8 %v9503
      %v9505 = vlaneseq
      %v9506 = vshrl.u32 %v9505, 7
      %v9507 = vsub.s32 %v9504, %v9506
      %v9508 = vrot.slane %v9500, %v9507
      %v9510 = vunpack.c.l.s4 1966171168
      %v9511 = vunpack.c.0.s8 %v9510
      %v9512 = vlaneseq
      %v9513 = vshrl.u32 %v9512, 7
      %v9514 = vsub.s32 %v9511, %v9513
      %v9515 = vrot.slane %v9501, %v9514
      %v9517 = vshll.u32 %v9508, 16
      %v9520 = vshll.u32 %v9515, 16
      %v9526 = vmul.bf16 %v5157, %v9517
      %v9527 = vmul.bf16 %v5158, %v9508
      %v9528 = vmul.bf16 %v5159, %v9520
      %v9529 = vmul.bf16 %v5160, %v9515
      %v9535 = vunpack.c.l.s4 1966171168
      %v9536 = vunpack.c.0.s8 %v9535
      %v9537 = vlaneseq
      %v9538 = vshrl.u32 %v9537, 7
      %v9539 = vsub.s32 %v9536, %v9538
      %v9540 = vrot.slane %v9526, %v9539
      %v9542 = vunpack.c.l.s4 1966171168
      %v9543 = vunpack.c.0.s8 %v9542
      %v9544 = vlaneseq
      %v9545 = vshrl.u32 %v9544, 7
      %v9546 = vsub.s32 %v9543, %v9545
      %v9547 = vrot.slane %v9540, %v9546
      %v9549 = vunpack.c.l.s4 1966171168
      %v9550 = vunpack.c.0.s8 %v9549
      %v9551 = vlaneseq
      %v9552 = vshrl.u32 %v9551, 7
      %v9553 = vsub.s32 %v9550, %v9552
      %v9554 = vrot.slane %v9527, %v9553
      %v9556 = vunpack.c.l.s4 1966171168
      %v9557 = vunpack.c.0.s8 %v9556
      %v9558 = vlaneseq
      %v9559 = vshrl.u32 %v9558, 7
      %v9560 = vsub.s32 %v9557, %v9559
      %v9561 = vrot.slane %v9554, %v9560
      %v9563 = vunpack.c.l.s4 1966171168
      %v9564 = vunpack.c.0.s8 %v9563
      %v9565 = vlaneseq
      %v9566 = vshrl.u32 %v9565, 7
      %v9567 = vsub.s32 %v9564, %v9566
      %v9568 = vrot.slane %v9528, %v9567
      %v9570 = vunpack.c.l.s4 1966171168
      %v9571 = vunpack.c.0.s8 %v9570
      %v9572 = vlaneseq
      %v9573 = vshrl.u32 %v9572, 7
      %v9574 = vsub.s32 %v9571, %v9573
      %v9575 = vrot.slane %v9568, %v9574
      %v9577 = vunpack.c.l.s4 1966171168
      %v9578 = vunpack.c.0.s8 %v9577
      %v9579 = vlaneseq
      %v9580 = vshrl.u32 %v9579, 7
      %v9581 = vsub.s32 %v9578, %v9580
      %v9582 = vrot.slane %v9529, %v9581
      %v9584 = vunpack.c.l.s4 1966171168
      %v9585 = vunpack.c.0.s8 %v9584
      %v9586 = vlaneseq
      %v9587 = vshrl.u32 %v9586, 7
      %v9588 = vsub.s32 %v9585, %v9587
      %v9589 = vrot.slane %v9582, %v9588
      %v9590 = vunpack.c.l.b16 %v9547
      %v9591 = vunpack.c.l.b16 %v9561
      %v9592 = vunpack.c.l.b16 %v9575
      %v9593 = vunpack.c.l.b16 %v9589
      %v9594 = vrot.slane %v9590, 1
      %v9595 = vsel %vm343, %v9591, %v9594
      %v9596 = vrot.slane %v9592, 7
      %v9597 = vsel %vm346, %v9596, %v9595
      %v9598 = vrot.slane %v9593, 6
      %v9599 = vsel %vm349, %v9598, %v9597
      %v9600 = vpack.c.b16 %v9599, %v9599
      %9602 = vmatprep.subr.bf16.mxu0 0
      %9603 = vmatpush1.bf16.xpose.msra.mxu0 0
      %9604 = vmatprep.subr.bf16.mxu0 0
      %9605 = vmatpush1.bf16.xpose.msra.mxu0 0
      %9606 = vmatprep.subr.bf16.mxu0 0
      %9607 = vmatpush1.bf16.xpose.msra.mxu0 0
      %9608 = vmatprep.subr.bf16.mxu0 0
      %9609 = vmatpush1.bf16.xpose.msra.mxu0 0
      %9610 = vmatprep.subr.bf16.mxu0 0
      %9611 = vmatpush1.bf16.xpose.msra.mxu0 0
      %9612 = vmatprep.subr.bf16.mxu0 0
      %9613 = vmatpush1.bf16.xpose.msra.mxu0 0
      %9614 = vmatprep.subr.bf16.mxu0 0
      %9615 = vmatpush1.bf16.xpose.msra.mxu0 0
      %9616 = vmatprep.subr.bf16.mxu0 0
      %9617 = vmatpush1.bf16.xpose.msra.mxu0 %v5594
      %9618 = vmatprep.subr.bf16.mxu0 0
      %9619 = vmatpush2.bf16.xpose.msra.mxu0 0
      %9620 = vmatprep.subr.bf16.mxu0 0
      %9621 = vmatpush2.bf16.xpose.msra.mxu0 0
      %9622 = vmatprep.subr.bf16.mxu0 0
      %9623 = vmatpush2.bf16.xpose.msra.mxu0 0
      %9624 = vmatprep.subr.bf16.mxu0 0
      %9625 = vmatpush2.bf16.xpose.msra.mxu0 0
      %9626 = vmatprep.subr.bf16.mxu0 0
      %9627 = vmatpush2.bf16.xpose.msra.mxu0 0
      %9628 = vmatprep.subr.bf16.mxu0 0
      %9629 = vmatpush2.bf16.xpose.msra.mxu0 0
      %9630 = vmatprep.subr.bf16.mxu0 0
      %9631 = vmatpush2.bf16.xpose.msra.mxu0 0
      %9632 = vmatprep.subr.bf16.mxu0 0
      %9633 = vmatpush2.bf16.xpose.msra.mxu0 0
      %9634 = vmatprep.mubr.bf16.mxu0 0
      %9635 = vmatmul.mubr.bf16.gmra.mxu0 %v9600
      %v9636 = vpop.f32.mrf.mxu0
      %v9637 = vadd.f32 0.0, %v9636
      %v9638 = vpop.f32.mrf.mxu0
      %v9639 = vpop.f32.mrf.mxu0
      %v9640 = vpop.f32.mrf.mxu0
      %9641 = vdwg.mxu0
      %v9642 = vsel %vm683, %v9637, -inf
      %9643 = vmax.xlane.f32.xlu0 %v9642
      %v9644 = vpop.xlane.xlu0 %9643
      %v9645 = vsub.f32 %v9637, %v9644
      %v9646 = vmul.f32 %v9645, 1.442695
      %v9647 = vpow.pop %v9646
      %v9648 = vsel %vm683, %v9647, 0.0
      %9649 = vadd.xlane.f32.xlu0 %v9648
      %v9650 = vpop.xlane.xlu0 %9649
      %v9651 = vrcp.pop %v9650
      %v9652 = vmul.f32 %v9647, %v9651
      %v9653 = vpack.c.bf16 %v9652, %v9652
      %v9654 = vcombine.high %v9492, %v9492
      %v9656 = vunpack.c.l.s4 1966171168
      %v9657 = vunpack.c.0.s8 %v9656
      %v9658 = vlaneseq
      %v9659 = vshrl.u32 %v9658, 7
      %v9660 = vsub.s32 %v9657, %v9659
      %v9661 = vrot.slane %v9654, %v9660
      %v9662 = vcombine.high %v9661, %v9661
      %v9664 = vunpack.c.l.s4 1966171168
      %v9665 = vunpack.c.0.s8 %v9664
      %v9666 = vlaneseq
      %v9667 = vshrl.u32 %v9666, 7
      %v9668 = vsub.s32 %v9665, %v9667
      %v9669 = vrot.slane %v9661, %v9668
      %v9671 = vunpack.c.l.s4 1966171168
      %v9672 = vunpack.c.0.s8 %v9671
      %v9673 = vlaneseq
      %v9674 = vshrl.u32 %v9673, 7
      %v9675 = vsub.s32 %v9672, %v9674
      %v9676 = vrot.slane %v9662, %v9675
      %v9677 = vcombine.high %v9508, %v9508
      %v9678 = vcombine.high %v9669, %v9669
      %v9679 = vcombine.high %v9515, %v9515
      %v9680 = vcombine.high %v9676, %v9676
      %v9682 = vshll.u32 %v9677, 16
      %v9685 = vshll.u32 %v9679, 16
      %v9688 = vshll.u32 %v9669, 16
      %v9691 = vshll.u32 %v9676, 16
      %v9694 = vshll.u32 %v9678, 16
      %v9697 = vshll.u32 %v9680, 16
      %v9711 = vmul.bf16 %v5177, %v9517
      %v9712 = vmul.bf16 %v5178, %v9508
      %v9713 = vmul.bf16 %v5179, %v9520
      %v9714 = vmul.bf16 %v5180, %v9515
      %v9715 = vmul.bf16 %v5181, %v9682
      %v9716 = vmul.bf16 %v5182, %v9677
      %v9717 = vmul.bf16 %v5183, %v9685
      %v9718 = vmul.bf16 %v5184, %v9679
      %v9719 = vmul.bf16 %v5185, %v9688
      %v9720 = vmul.bf16 %v5186, %v9669
      %v9721 = vmul.bf16 %v5187, %v9691
      %v9722 = vmul.bf16 %v5188, %v9676
      %v9723 = vmul.bf16 %v5189, %v9694
      %v9724 = vmul.bf16 %v5190, %v9678
      %v9725 = vmul.bf16 %v5191, %v9697
      %v9726 = vmul.bf16 %v5192, %v9680
      %v9744 = vunpack.c.l.s4 1966171168
      %v9745 = vunpack.c.0.s8 %v9744
      %v9746 = vlaneseq
      %v9747 = vshrl.u32 %v9746, 7
      %v9748 = vsub.s32 %v9745, %v9747
      %v9749 = vrot.slane %v9711, %v9748
      %v9751 = vunpack.c.l.s4 1966171168
      %v9752 = vunpack.c.0.s8 %v9751
      %v9753 = vlaneseq
      %v9754 = vshrl.u32 %v9753, 7
      %v9755 = vsub.s32 %v9752, %v9754
      %v9756 = vrot.slane %v9749, %v9755
      %v9758 = vunpack.c.l.s4 1966171168
      %v9759 = vunpack.c.0.s8 %v9758
      %v9760 = vlaneseq
      %v9761 = vshrl.u32 %v9760, 7
      %v9762 = vsub.s32 %v9759, %v9761
      %v9763 = vrot.slane %v9712, %v9762
      %v9765 = vunpack.c.l.s4 1966171168
      %v9766 = vunpack.c.0.s8 %v9765
      %v9767 = vlaneseq
      %v9768 = vshrl.u32 %v9767, 7
      %v9769 = vsub.s32 %v9766, %v9768
      %v9770 = vrot.slane %v9763, %v9769
      %v9772 = vunpack.c.l.s4 1966171168
      %v9773 = vunpack.c.0.s8 %v9772
      %v9774 = vlaneseq
      %v9775 = vshrl.u32 %v9774, 7
      %v9776 = vsub.s32 %v9773, %v9775
      %v9777 = vrot.slane %v9713, %v9776
      %v9779 = vunpack.c.l.s4 1966171168
      %v9780 = vunpack.c.0.s8 %v9779
      %v9781 = vlaneseq
      %v9782 = vshrl.u32 %v9781, 7
      %v9783 = vsub.s32 %v9780, %v9782
      %v9784 = vrot.slane %v9777, %v9783
      %v9786 = vunpack.c.l.s4 1966171168
      %v9787 = vunpack.c.0.s8 %v9786
      %v9788 = vlaneseq
      %v9789 = vshrl.u32 %v9788, 7
      %v9790 = vsub.s32 %v9787, %v9789
      %v9791 = vrot.slane %v9714, %v9790
      %v9793 = vunpack.c.l.s4 1966171168
      %v9794 = vunpack.c.0.s8 %v9793
      %v9795 = vlaneseq
      %v9796 = vshrl.u32 %v9795, 7
      %v9797 = vsub.s32 %v9794, %v9796
      %v9798 = vrot.slane %v9791, %v9797
      %v9800 = vunpack.c.l.s4 1966171168
      %v9801 = vunpack.c.0.s8 %v9800
      %v9802 = vlaneseq
      %v9803 = vshrl.u32 %v9802, 7
      %v9804 = vsub.s32 %v9801, %v9803
      %v9805 = vrot.slane %v9715, %v9804
      %v9807 = vunpack.c.l.s4 1966171168
      %v9808 = vunpack.c.0.s8 %v9807
      %v9809 = vlaneseq
      %v9810 = vshrl.u32 %v9809, 7
      %v9811 = vsub.s32 %v9808, %v9810
      %v9812 = vrot.slane %v9805, %v9811
      %v9814 = vunpack.c.l.s4 1966171168
      %v9815 = vunpack.c.0.s8 %v9814
      %v9816 = vlaneseq
      %v9817 = vshrl.u32 %v9816, 7
      %v9818 = vsub.s32 %v9815, %v9817
      %v9819 = vrot.slane %v9716, %v9818
      %v9821 = vunpack.c.l.s4 1966171168
      %v9822 = vunpack.c.0.s8 %v9821
      %v9823 = vlaneseq
      %v9824 = vshrl.u32 %v9823, 7
      %v9825 = vsub.s32 %v9822, %v9824
      %v9826 = vrot.slane %v9819, %v9825
      %v9828 = vunpack.c.l.s4 1966171168
      %v9829 = vunpack.c.0.s8 %v9828
      %v9830 = vlaneseq
      %v9831 = vshrl.u32 %v9830, 7
      %v9832 = vsub.s32 %v9829, %v9831
      %v9833 = vrot.slane %v9717, %v9832
      %v9835 = vunpack.c.l.s4 1966171168
      %v9836 = vunpack.c.0.s8 %v9835
      %v9837 = vlaneseq
      %v9838 = vshrl.u32 %v9837, 7
      %v9839 = vsub.s32 %v9836, %v9838
      %v9840 = vrot.slane %v9833, %v9839
      %v9842 = vunpack.c.l.s4 1966171168
      %v9843 = vunpack.c.0.s8 %v9842
      %v9844 = vlaneseq
      %v9845 = vshrl.u32 %v9844, 7
      %v9846 = vsub.s32 %v9843, %v9845
      %v9847 = vrot.slane %v9718, %v9846
      %v9849 = vunpack.c.l.s4 1966171168
      %v9850 = vunpack.c.0.s8 %v9849
      %v9851 = vlaneseq
      %v9852 = vshrl.u32 %v9851, 7
      %v9853 = vsub.s32 %v9850, %v9852
      %v9854 = vrot.slane %v9847, %v9853
      %v9856 = vunpack.c.l.s4 1966171168
      %v9857 = vunpack.c.0.s8 %v9856
      %v9858 = vlaneseq
      %v9859 = vshrl.u32 %v9858, 7
      %v9860 = vsub.s32 %v9857, %v9859
      %v9861 = vrot.slane %v9719, %v9860
      %v9863 = vunpack.c.l.s4 1966171168
      %v9864 = vunpack.c.0.s8 %v9863
      %v9865 = vlaneseq
      %v9866 = vshrl.u32 %v9865, 7
      %v9867 = vsub.s32 %v9864, %v9866
      %v9868 = vrot.slane %v9861, %v9867
      %v9870 = vunpack.c.l.s4 1966171168
      %v9871 = vunpack.c.0.s8 %v9870
      %v9872 = vlaneseq
      %v9873 = vshrl.u32 %v9872, 7
      %v9874 = vsub.s32 %v9871, %v9873
      %v9875 = vrot.slane %v9720, %v9874
      %v9877 = vunpack.c.l.s4 1966171168
      %v9878 = vunpack.c.0.s8 %v9877
      %v9879 = vlaneseq
      %v9880 = vshrl.u32 %v9879, 7
      %v9881 = vsub.s32 %v9878, %v9880
      %v9882 = vrot.slane %v9875, %v9881
      %v9884 = vunpack.c.l.s4 1966171168
      %v9885 = vunpack.c.0.s8 %v9884
      %v9886 = vlaneseq
      %v9887 = vshrl.u32 %v9886, 7
      %v9888 = vsub.s32 %v9885, %v9887
      %v9889 = vrot.slane %v9721, %v9888
      %v9891 = vunpack.c.l.s4 1966171168
      %v9892 = vunpack.c.0.s8 %v9891
      %v9893 = vlaneseq
      %v9894 = vshrl.u32 %v9893, 7
      %v9895 = vsub.s32 %v9892, %v9894
      %v9896 = vrot.slane %v9889, %v9895
      %v9898 = vunpack.c.l.s4 1966171168
      %v9899 = vunpack.c.0.s8 %v9898
      %v9900 = vlaneseq
      %v9901 = vshrl.u32 %v9900, 7
      %v9902 = vsub.s32 %v9899, %v9901
      %v9903 = vrot.slane %v9722, %v9902
      %v9905 = vunpack.c.l.s4 1966171168
      %v9906 = vunpack.c.0.s8 %v9905
      %v9907 = vlaneseq
      %v9908 = vshrl.u32 %v9907, 7
      %v9909 = vsub.s32 %v9906, %v9908
      %v9910 = vrot.slane %v9903, %v9909
      %v9912 = vunpack.c.l.s4 1966171168
      %v9913 = vunpack.c.0.s8 %v9912
      %v9914 = vlaneseq
      %v9915 = vshrl.u32 %v9914, 7
      %v9916 = vsub.s32 %v9913, %v9915
      %v9917 = vrot.slane %v9723, %v9916
      %v9919 = vunpack.c.l.s4 1966171168
      %v9920 = vunpack.c.0.s8 %v9919
      %v9921 = vlaneseq
      %v9922 = vshrl.u32 %v9921, 7
      %v9923 = vsub.s32 %v9920, %v9922
      %v9924 = vrot.slane %v9917, %v9923
      %v9926 = vunpack.c.l.s4 1966171168
      %v9927 = vunpack.c.0.s8 %v9926
      %v9928 = vlaneseq
      %v9929 = vshrl.u32 %v9928, 7
      %v9930 = vsub.s32 %v9927, %v9929
      %v9931 = vrot.slane %v9724, %v9930
      %v9933 = vunpack.c.l.s4 1966171168
      %v9934 = vunpack.c.0.s8 %v9933
      %v9935 = vlaneseq
      %v9936 = vshrl.u32 %v9935, 7
      %v9937 = vsub.s32 %v9934, %v9936
      %v9938 = vrot.slane %v9931, %v9937
      %v9940 = vunpack.c.l.s4 1966171168
      %v9941 = vunpack.c.0.s8 %v9940
      %v9942 = vlaneseq
      %v9943 = vshrl.u32 %v9942, 7
      %v9944 = vsub.s32 %v9941, %v9943
      %v9945 = vrot.slane %v9725, %v9944
      %v9947 = vunpack.c.l.s4 1966171168
      %v9948 = vunpack.c.0.s8 %v9947
      %v9949 = vlaneseq
      %v9950 = vshrl.u32 %v9949, 7
      %v9951 = vsub.s32 %v9948, %v9950
      %v9952 = vrot.slane %v9945, %v9951
      %v9954 = vunpack.c.l.s4 1966171168
      %v9955 = vunpack.c.0.s8 %v9954
      %v9956 = vlaneseq
      %v9957 = vshrl.u32 %v9956, 7
      %v9958 = vsub.s32 %v9955, %v9957
      %v9959 = vrot.slane %v9726, %v9958
      %v9961 = vunpack.c.l.s4 1966171168
      %v9962 = vunpack.c.0.s8 %v9961
      %v9963 = vlaneseq
      %v9964 = vshrl.u32 %v9963, 7
      %v9965 = vsub.s32 %v9962, %v9964
      %v9966 = vrot.slane %v9959, %v9965
      %v9967 = vunpack.c.l.b16 %v9756
      %v9968 = vunpack.c.l.b16 %v9770
      %v9969 = vunpack.c.l.b16 %v9784
      %v9970 = vunpack.c.l.b16 %v9798
      %v9971 = vunpack.c.l.b16 %v9812
      %v9972 = vunpack.c.l.b16 %v9826
      %v9973 = vunpack.c.l.b16 %v9840
      %v9974 = vunpack.c.l.b16 %v9854
      %v9975 = vunpack.c.l.b16 %v9868
      %v9976 = vunpack.c.l.b16 %v9882
      %v9977 = vunpack.c.l.b16 %v9896
      %v9978 = vunpack.c.l.b16 %v9910
      %v9979 = vunpack.c.l.b16 %v9924
      %v9980 = vunpack.c.l.b16 %v9938
      %v9981 = vunpack.c.l.b16 %v9952
      %v9982 = vunpack.c.l.b16 %v9966
      %v9983 = vrot.slane %v9967, 1
      %v9984 = vsel %vm343, %v9968, %v9983
      %v9985 = vrot.slane %v9969, 7
      %v9986 = vsel %vm346, %v9985, %v9984
      %v9987 = vrot.slane %v9970, 6
      %v9988 = vsel %vm349, %v9987, %v9986
      %v9989 = vrot.slane %v9971, 5
      %v9990 = vsel %vm616, %v9989, %v9988
      %v9991 = vrot.slane %v9972, 4
      %v9992 = vsel %vm619, %v9991, %v9990
      %v9993 = vrot.slane %v9973, 3
      %v9994 = vsel %vm622, %v9993, %v9992
      %v9995 = vrot.slane %v9974, 2
      %v9996 = vsel %vm625, %v9995, %v9994
      %v9997 = vrot.slane %v9975, 1
      %v9998 = vsel %vm343, %v9976, %v9997
      %v9999 = vrot.slane %v9977, 7
      %v10000 = vsel %vm346, %v9999, %v9998
      %v10001 = vrot.slane %v9978, 6
      %v10002 = vsel %vm349, %v10001, %v10000
      %v10003 = vrot.slane %v9979, 5
      %v10004 = vsel %vm616, %v10003, %v10002
      %v10005 = vrot.slane %v9980, 4
      %v10006 = vsel %vm619, %v10005, %v10004
      %v10007 = vrot.slane %v9981, 3
      %v10008 = vsel %vm622, %v10007, %v10006
      %v10009 = vrot.slane %v9982, 2
      %v10010 = vsel %vm625, %v10009, %v10008
      %v10011 = vpack.c.b16 %v10010, %v9996
      %v10014 = vsel %vm1298, %v9653, 0
      %10016 = vmatprep.subr.bf16.mxu0 0
      %10017 = vmatpush1.bf16.msra.mxu0 0
      %10018 = vmatprep.subr.bf16.mxu0 0
      %10019 = vmatpush1.bf16.msra.mxu0 0
      %10020 = vmatprep.subr.bf16.mxu0 0
      %10021 = vmatpush1.bf16.msra.mxu0 0
      %10022 = vmatprep.subr.bf16.mxu0 0
      %10023 = vmatpush1.bf16.msra.mxu0 0
      %10024 = vmatprep.subr.bf16.mxu0 0
      %10025 = vmatpush1.bf16.msra.mxu0 0
      %10026 = vmatprep.subr.bf16.mxu0 0
      %10027 = vmatpush1.bf16.msra.mxu0 0
      %10028 = vmatprep.subr.bf16.mxu0 0
      %10029 = vmatpush1.bf16.msra.mxu0 0
      %10030 = vmatprep.subr.bf16.mxu0 0
      %10031 = vmatpush1.bf16.msra.mxu0 %v10011
      %10032 = vmatprep.subr.bf16.mxu0 0
      %10033 = vmatpush2.bf16.msra.mxu0 0
      %10034 = vmatprep.subr.bf16.mxu0 0
      %10035 = vmatpush2.bf16.msra.mxu0 0
      %10036 = vmatprep.subr.bf16.mxu0 0
      %10037 = vmatpush2.bf16.msra.mxu0 0
      %10038 = vmatprep.subr.bf16.mxu0 0
      %10039 = vmatpush2.bf16.msra.mxu0 0
      %10040 = vmatprep.subr.bf16.mxu0 0
      %10041 = vmatpush2.bf16.msra.mxu0 0
      %10042 = vmatprep.subr.bf16.mxu0 0
      %10043 = vmatpush2.bf16.msra.mxu0 0
      %10044 = vmatprep.subr.bf16.mxu0 0
      %10045 = vmatpush2.bf16.msra.mxu0 0
      %10046 = vmatprep.subr.bf16.mxu0 0
      %10047 = vmatpush2.bf16.msra.mxu0 0
      %10048 = vmatprep.mubr.bf16.mxu0 0
      %10049 = vmatmul.mubr.bf16.gmra.mxu0 %v10014
      %v10050 = vpop.f32.mrf.mxu0
      %v10051 = vadd.f32 0.0, %v10050
      %v10052 = vpop.f32.mrf.mxu0
      %v10053 = vpop.f32.mrf.mxu0
      %v10054 = vpop.f32.mrf.mxu0
      %10055 = vdwg.mxu0
      %v10056 = vadd.f32 %v9483, %v10051
      %v10057 = vpack.c.bf16 %v10056, %v10056
      %v10060 = vunpack.c.l.s4 1966171168
      %v10061 = vunpack.c.0.s8 %v10060
      %v10062 = vlaneseq
      %v10063 = vshrl.u32 %v10062, 7
      %v10064 = vsub.s32 %v10061, %v10063
      %v10065 = vrot.slane %v10057, %v10064
      %v10066 = vcombine.high %v10065, %v10065
      %v10068 = vunpack.c.l.s4 1966171168
      %v10069 = vunpack.c.0.s8 %v10068
      %v10070 = vlaneseq
      %v10071 = vshrl.u32 %v10070, 7
      %v10072 = vsub.s32 %v10069, %v10071
      %v10073 = vrot.slane %v10065, %v10072
      %v10075 = vunpack.c.l.s4 1966171168
      %v10076 = vunpack.c.0.s8 %v10075
      %v10077 = vlaneseq
      %v10078 = vshrl.u32 %v10077, 7
      %v10079 = vsub.s32 %v10076, %v10078
      %v10080 = vrot.slane %v10066, %v10079
      %v10081 = vunpack.i.l.s16 %v10073
      %v10082 = vunpack.i.h.s16 %v10073
      %v10083 = vunpack.i.l.s16 %v10080
      %v10084 = vunpack.i.h.s16 %v10080
      %v10085 = vpack.i.b16 %v10081, %v10081
      %v10086 = vpack.i.b16 %v10082, %v10082
      %v10087 = vpack.i.b16 %v10083, %v10083
      %v10088 = vpack.i.b16 %v10084, %v10084
      %vm10093 = vsmask.f32 7938
      %vm10094 = vmand %vm5142, %vm10093
      %v10095 = vld [vmem:[%s194] sm:$0x1]
      %v10096 = vsel %vm10094, %v10085, %v10095
      %10097 = vst [vmem:[%s194] sm:$0x1] %v10096
      %v10098 = vld [vmem:[%s194 + $0x1] sm:$0x1]
      %v10099 = vsel %vm10094, %v10086, %v10098
      %10100 = vst [vmem:[%s194 + $0x1] sm:$0x1] %v10099
      %v10101 = vld [vmem:[%s194 + $0x2] sm:$0x1]
      %v10102 = vsel %vm10094, %v10087, %v10101
      %10103 = vst [vmem:[%s194 + $0x2] sm:$0x1] %v10102
      %v10104 = vld [vmem:[%s194 + $0x3] sm:$0x1]
      %v10105 = vsel %vm10094, %v10088, %v10104
      %10106 = vst [vmem:[%s194 + $0x3] sm:$0x1] %v10105
      %s10107 = smul.u32 4, %s15
      %p10108 = scmp.lt.s32.totalorder %s10107, 7
      %s10109 = scalar_select %p10108, %s10107, 7
      %s10110 = scalar_lea.vmem %s4, %s10109
      // Predicated region
      $region37: #{cross_attention_forward.8} parent=35 // pred_check
        %p10111 = pneg %p122
      $region38: #{cross_attention_forward.8} parent=35 // pred_check_branch
        %10113 = sbr.rel (%p10111) target = $region40
      $region39: #{cross_attention_forward.8} parent=35 // pred_region
        %s10114 = smul.u32 4, %s15
      $region40: #{cross_attention_forward.8} parent=35 // pred_fallthru
        _
    $region36: #{cross_attention_forward.8} parent=5 // pred_fallthru
      _
    %p10115 = scmp.le.s32.totalorder 2, %s10
    // Predicated region
    $region41: #{cross_attention_forward.8} parent=5 // pred_check
      %p10116 = pneg %p10115
    $region42: #{cross_attention_forward.8} parent=5 // pred_check_branch
      %10118 = sbr.rel (%p10116) target = $region44
    $region43: #{cross_attention_forward.8} parent=5 // pred_region
      %s10119 = ssub.s32 %s10, 2
      // Predicated region
      $region45: #{cross_attention_forward.8} parent=43 // pred_check
        %p10120 = pneg %p128
      $region46: #{cross_attention_forward.8} parent=43 // pred_check_branch
        %10122 = sbr.rel (%p10120) target = $region48
      $region47: #{cross_attention_forward.8} parent=43 // pred_region
        %s10123 = smul.u32 4, %s16
        %p10124 = scmp.lt.s32.totalorder %s10123, 7
        %s10125 = scalar_select %p10124, %s10123, 7
        %s10126 = scalar_lea.vmem %s4, %s10125
      $region48: #{cross_attention_forward.8} parent=43 // pred_fallthru
        _
    $region44: #{cross_attention_forward.8} parent=5 // pred_fallthru
      _
  $region6: #{cross_attention_forward.8} parent=0 // loop_footer
    %s14 = sadd.s32 1, %s10
  $region7: #{cross_attention_forward.8} parent=0 // loop_footer_branch
    %9 = sbr.rel target = $region3
  $region8: #{cross_attention_forward.8} parent=0 // loop_exit
    _

</llo_original>
